<compile_context>
chip_gen: v5e
topology: v5e:2x2
jax: 0.10.0
libtpu: 0.0.40
codegen_flags: <defaults>
</compile_context>

<pallas_src>
import math
from functools import partial

import jax
import jax.numpy as jnp
from jax.experimental import pallas as pl
from jax.experimental.pallas import tpu as pltpu

SQRT_2_OVER_PI = math.sqrt(2.0 / math.pi)
F32 = jnp.float32
BF16 = jnp.bfloat16


def _gelu(x):
    # torch "gelu" (tanh approximation) used by the module
    return 0.5 * x * (1.0 + jnp.tanh(SQRT_2_OVER_PI * (x + 0.044715 * x * x * x)))


def _round_up(x, m):
    return ((x + m - 1) // m) * m


def _full_spec(shape):
    n = len(shape)
    return pl.BlockSpec(shape, lambda *_: (0,) * n)


def _vmem_limit_bytes():
    # generation-aware scoped-VMEM limit: headroom under v7x's 64 MiB, bigger budget on
    # v5e/v6e's 128 MiB.  Falls back to a safe default if the query is unavailable.
    try:
        phys = pltpu.get_tpu_info().vmem_capacity_bytes
    except Exception:
        return 64 * 1024 * 1024
    if phys <= 64 * 1024 * 1024:
        return 40 * 1024 * 1024
    return 96 * 1024 * 1024


# --------------------------------------------------------------------------------------
# Kernel 1: node_type / node_score embeddings -> node_feature_extra   (node-row tiles)
# --------------------------------------------------------------------------------------
def node_extra_kernel(t_ref, score_ref, js_ref, w_nt_ref, b_nt_ref, w_sc_ref, b_sc_ref,
                      o_ref):
    half = w_nt_ref.shape[1]
    nt = _gelu(jnp.dot(t_ref[...], w_nt_ref[...],
                       preferred_element_type=F32) + b_nt_ref[...])
    b_sin = jnp.sin(js_ref[...] * score_ref[...])                      # (Mb, half) f32
    sc = _gelu(jnp.dot(b_sin.astype(BF16), w_sc_ref[...],
                       preferred_element_type=F32) + b_sc_ref[...])
    # write into disjoint column slices (no in-kernel concatenate)
    o_ref[:, :half] = nt.astype(o_ref.dtype)
    o_ref[:, half:] = sc.astype(o_ref.dtype)


# --------------------------------------------------------------------------------------
# Kernel 2: edge_encoder = Linear -> BN(eval, folded) -> ReLU -> Linear  (edge-row tiles)
# --------------------------------------------------------------------------------------
def edge_encoder_kernel(feat_ref, w1_ref, b1_ref, bn_s_ref, bn_b_ref, w2_ref, b2_ref,
                        o_ref):
    h = jnp.dot(feat_ref[...], w1_ref[...], preferred_element_type=F32) + b1_ref[...]
    h = jnp.maximum(h * bn_s_ref[...] + bn_b_ref[...], 0.0)
    o = jnp.dot(h.astype(BF16), w2_ref[...], preferred_element_type=F32) + b2_ref[...]
    o_ref[...] = o.astype(o_ref.dtype)


# --------------------------------------------------------------------------------------
# Kernel 3: per-edge messages + per-head attention scores (edge-row tiles, parallel)
#           weights split into row blocks ( X | node_feature_extra | edge_attr )
# --------------------------------------------------------------------------------------
def gat_edge_kernel(x_src_ref, x_tgt_ref, nfe_src_ref, nfe_tgt_ref, ee_ref,
                    wkx_ref, wkn_ref, wke_ref, bk_ref,
                    wmx_ref, wmn_ref, wme_ref, bm_ref,
                    wqx_ref, wqn_ref, bq_ref, hsel_ref,
                    msg_ref, s_ref, *, inv_sqrt_dph):
    # key from x_i = [X[tgt], nfe[tgt], edge_attr]
    key = (jnp.dot(x_tgt_ref[...], wkx_ref[...], preferred_element_type=F32)
           + jnp.dot(nfe_tgt_ref[...], wkn_ref[...], preferred_element_type=F32)
           + jnp.dot(ee_ref[...], wke_ref[...], preferred_element_type=F32)
           + bk_ref[...])
    # msg from x_j = [X[src], nfe[src], edge_attr]
    msg = (jnp.dot(x_src_ref[...], wmx_ref[...], preferred_element_type=F32)
           + jnp.dot(nfe_src_ref[...], wmn_ref[...], preferred_element_type=F32)
           + jnp.dot(ee_ref[...], wme_ref[...], preferred_element_type=F32)
           + bm_ref[...])
    # query from x_j
    query = (jnp.dot(x_src_ref[...], wqx_ref[...], preferred_element_type=F32)
             + jnp.dot(nfe_src_ref[...], wqn_ref[...], preferred_element_type=F32)
             + bq_ref[...]) * inv_sqrt_dph
    msg_ref[...] = msg.astype(msg_ref.dtype)
    # all-head scores at once: (query*key) @ block-diagonal head selector -> (Eb, Hc)
    s_ref[...] = jnp.dot(query * key, hsel_ref[...], preferred_element_type=F32)


# --------------------------------------------------------------------------------------
# Kernel 4: segment-softmax denominator grouped by SOURCE node.
#           Per-head *shared* max (mh) -> no per-segment max tracking needed; the max
#           cancels exactly in the softmax ratio.  Grid = (node cols, edge tiles).
# --------------------------------------------------------------------------------------
def gat_stats_kernel(s_ref, src_oh_ref, cnt_ref, mh_ref, fac_ref):
    e = pl.program_id(1)

    @pl.when(e == 0)
    def _():
        fac_ref[...] = jnp.zeros_like(fac_ref)

    ex = jnp.exp(s_ref[...] - mh_ref[...]).astype(BF16)           # (Eb, Hc), values <= 1
    # scatter-add exp into source segments: bf16 x bf16 -> f32 on the MXU
    fac_ref[...] += jax.lax.dot_general(src_oh_ref[...], ex,
                                        (((0,), (0,)), ((), ())),
                                        preferred_element_type=F32)   # (Mc, Hc)

    @pl.when(e == pl.num_programs(1) - 1)
    def _():
        den = fac_ref[...]
        fac = cnt_ref[...] * pl.reciprocal(den, approx=True)      # count / sum(exp)
        fac_ref[...] = jnp.where(den > 0.0, fac, 0.0)             # guard empty/underflow


# --------------------------------------------------------------------------------------
# Kernel 5: alpha = exp(s - mh) * fac[src], weighted messages (edge tiles, parallel)
# --------------------------------------------------------------------------------------
def gat_wmsg_kernel(s_ref, fac_ref, mh_ref, msg_ref, hselt_ref, wmsg_ref):
    alpha = jnp.exp(s_ref[...] - mh_ref[...]) * fac_ref[...]              # (Eb, Hc)
    alpha_full = jnp.dot(alpha, hselt_ref[...], preferred_element_type=F32)  # (Eb, D)
    wmsg_ref[...] = (msg_ref[...].astype(F32) * alpha_full).astype(wmsg_ref.dtype)


# --------------------------------------------------------------------------------------
# Kernel 6: scatter-add weighted messages to TARGET nodes.  Grid = (node cols, edge tiles)
# --------------------------------------------------------------------------------------
def gat_aggr_kernel(wmsg_ref, tgt_oh_ref, aggr_ref):
    e = pl.program_id(1)

    @pl.when(e == 0)
    def _():
        aggr_ref[...] = jnp.zeros_like(aggr_ref)

    aggr_ref[...] += jax.lax.dot_general(tgt_oh_ref[...], wmsg_ref[...],
                                         (((0,), (0,)), ((), ())),
                                         preferred_element_type=F32)      # (Mc, D)


# --------------------------------------------------------------------------------------
# Kernel 7: per-layer MLP: Linear -> BN(eval) -> ReLU -> Linear, then GELU  (node tiles)
# --------------------------------------------------------------------------------------
def gat_mlp_kernel(aggr_ref, w1_ref, b1_ref, bn_s_ref, bn_b_ref, w2_ref, b2_ref, o_ref):
    h = jnp.dot(aggr_ref[...].astype(BF16), w1_ref[...],
                preferred_element_type=F32) + b1_ref[...]
    h = jnp.maximum(h * bn_s_ref[...] + bn_b_ref[...], 0.0)
    h = jnp.dot(h.astype(BF16), w2_ref[...], preferred_element_type=F32) + b2_ref[...]
    o_ref[...] = _gelu(h).astype(o_ref.dtype)
    # TODO(synk): F.dropout in mp_helper (training mode) has no deterministic Pallas
    # equivalent here; inference semantics (identity) are used.


# --------------------------------------------------------------------------------------
# Kernel 8: output = gelu(Vh(H) + Vx(X))   (node tiles)
# --------------------------------------------------------------------------------------
def output_kernel(h_ref, x_ref, wvh_ref, bvh_ref, wvx_ref, bvx_ref, o_ref):
    o = (jnp.dot(h_ref[...], wvh_ref[...], preferred_element_type=F32) + bvh_ref[...]
         + jnp.dot(x_ref[...], wvx_ref[...], preferred_element_type=F32) + bvx_ref[...])
    o_ref[...] = _gelu(o)


# --------------------------------------------------------------------------------------
# pallas_call wrappers
# --------------------------------------------------------------------------------------
def _cp(sem, vmem):
    return pltpu.CompilerParams(dimension_semantics=sem, vmem_limit_bytes=vmem)


def _node_extra(T16, score, js, p, *, M_pad, M_blk, D, vmem):
    half = D // 2
    n_ntype = T16.shape[1]
    return pl.pallas_call(
        node_extra_kernel,
        out_shape=jax.ShapeDtypeStruct((M_pad, D), BF16),
        grid=(M_pad // M_blk,),
        in_specs=[pl.BlockSpec((M_blk, n_ntype), lambda i: (i, 0)),
                  pl.BlockSpec((M_blk, 1), lambda i: (i, 0)),
                  _full_spec((1, half)),
                  _full_spec((n_ntype, half)), _full_spec((1, half)),
                  _full_spec((half, half)), _full_spec((1, half))],
        out_specs=pl.BlockSpec((M_blk, D), lambda i: (i, 0)),
        compiler_params=_cp(("parallel",), vmem),
    )(T16, score, js, p['w_nt'], p['b_nt'], p['w_sc'], p['b_sc'])


def _edge_encoder(feat16, p, *, E_pad, E_blk, D, vmem):
    F_in = feat16.shape[1]
    return pl.pallas_call(
        edge_encoder_kernel,
        out_shape=jax.ShapeDtypeStruct((E_pad, D), BF16),
        grid=(E_pad // E_blk,),
        in_specs=[pl.BlockSpec((E_blk, F_in), lambda i: (i, 0)),
                  _full_spec((F_in, D)), _full_spec((1, D)),
                  _full_spec((1, D)), _full_spec((1, D)),
                  _full_spec((D, D)), _full_spec((1, D))],
        out_specs=pl.BlockSpec((E_blk, D), lambda i: (i, 0)),
        compiler_params=_cp(("parallel",), vmem),
    )(feat16, p['ee_w1'], p['ee_b1'], p['ee_bn_scale'], p['ee_bn_shift'],
      p['ee_w2'], p['ee_b2'])


def _gat_edge(x_src, x_tgt, nfe_src, nfe_tgt, ee, lw, head_sel,
              *, E_pad, E_blk, D, Hc, dph, vmem):
    edge_spec = pl.BlockSpec((E_blk, D), lambda i: (i, 0))
    return pl.pallas_call(
        partial(gat_edge_kernel, inv_sqrt_dph=1.0 / math.sqrt(dph)),
        out_shape=(jax.ShapeDtypeStruct((E_pad, D), BF16),
                   jax.ShapeDtypeStruct((E_pad, Hc), F32)),
        grid=(E_pad // E_blk,),
        in_specs=[edge_spec, edge_spec, edge_spec, edge_spec, edge_spec,
                  _full_spec((D, D)), _full_spec((D, D)), _full_spec((D, D)),
                  _full_spec((1, D)),
                  _full_spec((D, D)), _full_spec((D, D)), _full_spec((D, D)),
                  _full_spec((1, D)),
                  _full_spec((D, D)), _full_spec((D, D)), _full_spec((1, D)),
                  _full_spec((D, Hc))],
        out_specs=(pl.BlockSpec((E_blk, D), lambda i: (i, 0)),
                   pl.BlockSpec((E_blk, Hc), lambda i: (i, 0))),
        compiler_params=_cp(("parallel",), vmem),
    )(x_src, x_tgt, nfe_src, nfe_tgt, ee,
      lw['wk_x'], lw['wk_n'], lw['wk_e'], lw['bk'],
      lw['wm_x'], lw['wm_n'], lw['wm_e'], lw['bm'],
      lw['wq_x'], lw['wq_n'], lw['bq'], head_sel)


def _gat_stats(scores, src_oh, cnt, mh, *, E_pad, E_blk, M_pad, Mc_blk, Hc, vmem):
    return pl.pallas_call(
        gat_stats_kernel,
        out_shape=jax.ShapeDtypeStruct((M_pad, Hc), F32),
        grid=(M_pad // Mc_blk, E_pad // E_blk),
        in_specs=[pl.BlockSpec((E_blk, Hc), lambda m, e: (e, 0)),
                  pl.BlockSpec((E_blk, Mc_blk), lambda m, e: (e, m)),
                  pl.BlockSpec((Mc_blk, 1), lambda m, e: (m, 0)),
                  _full_spec((1, Hc))],
        out_specs=pl.BlockSpec((Mc_blk, Hc), lambda m, e: (m, 0)),
        compiler_params=_cp(("parallel", "arbitrary"), vmem),
    )(scores, src_oh, cnt, mh)


def _gat_wmsg(scores, edge_fac, mh, msg16, hsel_t, *, E_pad, E_blk, D, Hc, vmem):
    return pl.pallas_call(
        gat_wmsg_kernel,
        out_shape=jax.ShapeDtypeStruct((E_pad, D), BF16),
        grid=(E_pad // E_blk,),
        in_specs=[pl.BlockSpec((E_blk, Hc), lambda i: (i, 0)),
                  pl.BlockSpec((E_blk, Hc), lambda i: (i, 0)),
                  _full_spec((1, Hc)),
                  pl.BlockSpec((E_blk, D), lambda i: (i, 0)),
                  _full_spec((Hc, D))],
        out_specs=pl.BlockSpec((E_blk, D), lambda i: (i, 0)),
        compiler_params=_cp(("parallel",), vmem),
    )(scores, edge_fac, mh, msg16, hsel_t)


def _gat_aggr(wmsg16, tgt_oh, *, E_pad, E_blk, M_pad, Mc_blk, D, vmem):
    return pl.pallas_call(
        gat_aggr_kernel,
        out_shape=jax.ShapeDtypeStruct((M_pad, D), F32),
        grid=(M_pad // Mc_blk, E_pad // E_blk),
        in_specs=[pl.BlockSpec((E_blk, D), lambda m, e: (e, 0)),
                  pl.BlockSpec((E_blk, Mc_blk), lambda m, e: (e, m))],
        out_specs=pl.BlockSpec((Mc_blk, D), lambda m, e: (m, 0)),
        compiler_params=_cp(("parallel", "arbitrary"), vmem),
    )(wmsg16, tgt_oh)


def _gat_mlp(aggr, lw, *, M_pad, M_blk, D, vmem):
    return pl.pallas_call(
        gat_mlp_kernel,
        out_shape=jax.ShapeDtypeStruct((M_pad, D), BF16),
        grid=(M_pad // M_blk,),
        in_specs=[pl.BlockSpec((M_blk, D), lambda i: (i, 0)),
                  _full_spec((D, D)), _full_spec((1, D)),
                  _full_spec((1, D)), _full_spec((1, D)),
                  _full_spec((D, D)), _full_spec((1, D))],
        out_specs=pl.BlockSpec((M_blk, D), lambda i: (i, 0)),
        compiler_params=_cp(("parallel",), vmem),
    )(aggr, lw['mlp_w1'], lw['mlp_b1'], lw['bn_scale'], lw['bn_shift'],
      lw['mlp_w2'], lw['mlp_b2'])


def _output(H16, X16, p, *, M_pad, M_blk, D, vmem):
    return pl.pallas_call(
        output_kernel,
        out_shape=jax.ShapeDtypeStruct((M_pad, D), F32),
        grid=(M_pad // M_blk,),
        in_specs=[pl.BlockSpec((M_blk, D), lambda i: (i, 0)),
                  pl.BlockSpec((M_blk, D), lambda i: (i, 0)),
                  _full_spec((D, D)), _full_spec((1, D)),
                  _full_spec((D, D)), _full_spec((1, D))],
        out_specs=pl.BlockSpec((M_blk, D), lambda i: (i, 0)),
        compiler_params=_cp(("parallel",), vmem),
    )(H16, X16, p['vh_w'], p['vh_b'], p['vx_w'], p['vx_b'])


# --------------------------------------------------------------------------------------
# Parameter construction (deterministic, synthetic; BN folded to eval-mode scale/shift)
# --------------------------------------------------------------------------------------
def init_params(key, *, n_ntype, n_etype, hidden_size, k):
    D = hidden_size
    half = D // 2
    f_edge_in = n_etype + 1 + 2 * n_ntype

    def w(key, shape, scale=0.05):
        return scale * jax.random.normal(key, shape, dtype=F32)

    keys = iter(jax.random.split(key, 16 + 16 * k))
    bn_scale = jnp.full((1, D), 1.0 / math.sqrt(1.0 + 1e-5), F32)
    bn_shift = jnp.zeros((1, D), F32)

    params = {
        'w_nt': w(next(keys), (n_ntype, half)),
        'b_nt': jnp.zeros((1, half), F32),
        'w_sc': w(next(keys), (half, half)),
        'b_sc': jnp.zeros((1, half), F32),
        'ee_w1': w(next(keys), (f_edge_in, D)),
        'ee_b1': jnp.zeros((1, D), F32),
        'ee_bn_scale': bn_scale,
        'ee_bn_shift': bn_shift,
        'ee_w2': w(next(keys), (D, D)),
        'ee_b2': jnp.zeros((1, D), F32),
        'vh_w': w(next(keys), (D, D)),
        'vh_b': jnp.zeros((1, D), F32),
        'vx_w': w(next(keys), (D, D)),
        'vx_b': jnp.zeros((1, D), F32),
        'layers': [],
    }
    for _ in range(k):
        lw = {
            # linear_key / linear_msg / linear_query split into row blocks
            # ( X | node_feature_extra | edge_attr ) to avoid in-kernel concatenation
            'wk_x': w(next(keys), (D, D)), 'wk_n': w(next(keys), (D, D)),
            'wk_e': w(next(keys), (D, D)), 'bk': jnp.zeros((1, D), F32),
            'wm_x': w(next(keys), (D, D)), 'wm_n': w(next(keys), (D, D)),
            'wm_e': w(next(keys), (D, D)), 'bm': jnp.zeros((1, D), F32),
            'wq_x': w(next(keys), (D, D)), 'wq_n': w(next(keys), (D, D)),
            'bq': jnp.zeros((1, D), F32),
            'mlp_w1': w(next(keys), (D, D)), 'mlp_b1': jnp.zeros((1, D), F32),
            'bn_scale': bn_scale, 'bn_shift': bn_shift,
            'mlp_w2': w(next(keys), (D, D)), 'mlp_b2': jnp.zeros((1, D), F32),
        }
        params['layers'].append(lw)
    return params


_TOP_MM = ('w_nt', 'w_sc', 'ee_w1', 'ee_w2', 'vh_w', 'vx_w')
_LAYER_MM = ('wk_x', 'wk_n', 'wk_e', 'wm_x', 'wm_n', 'wm_e', 'wq_x', 'wq_n',
             'mlp_w1', 'mlp_w2')


# --------------------------------------------------------------------------------------
# Forward pass
# --------------------------------------------------------------------------------------
def qagnn_message_passing_forward(params, H, edge_index, edge_type, node_type, node_score,
                                  *, n_ntype, n_etype, hidden_size, k, head_count=4,
                                  edge_tile=512, node_tile=512):
    B, n_node, D = H.shape
    assert D == hidden_size and D % head_count == 0 and D % 2 == 0
    M = B * n_node
    half = D // 2
    Hc = head_count
    dph = D // Hc
    vmem = _vmem_limit_bytes()

    # ---- padded sizes: node tiles are 128-multiples so one-hot lane dims and the
    #      stats/aggr node-column tiles are lane-dense.
    T_n = max(128, (node_tile // 128) * 128)
    T_n = min(T_n, _round_up(M, 128))
    M_pad = _round_up(M, T_n)
    M_blk = Mc_blk = T_n

    E = edge_index.shape[1]
    E_real = E + M                                        # + one self-loop per node
    E_blk = min(_round_up(edge_tile, 8), _round_up(E_real, 8))
    E_pad = _round_up(E_real, E_blk)
    pad_e = E_pad - E_real

    # ---- bf16 weight copies (matmul operands); biases / BN stay f32
    p16 = {kk: (vv.astype(BF16) if kk in _TOP_MM else vv)
           for kk, vv in params.items() if kk != 'layers'}
    lw16 = [{kk: (vv.astype(BF16) if kk in _LAYER_MM else vv) for kk, vv in lw.items()}
            for lw in params['layers']]

    # ---- node-side tensors (rows padded to M_pad; padded rows never referenced)
    nt_flat = node_type.reshape(-1)
    nt_pad = jnp.pad(nt_flat, (0, M_pad - M))
    score_pad = jnp.pad(node_score.reshape(M, 1).astype(F32), ((0, M_pad - M), (0, 0)))
    H16 = jnp.pad(H.reshape(M, D), ((0, M_pad - M), (0, 0))).astype(BF16)

    T16 = jax.nn.one_hot(nt_pad, n_ntype, dtype=BF16)
    js = jnp.power(1.1, jnp.arange(half, dtype=F32)).reshape(1, half)
    nfe16 = _node_extra(T16, score_pad, js, p16, M_pad=M_pad, M_blk=M_blk, D=D, vmem=vmem)

    # ---- edge bookkeeping (JAX glue): self-loops, padding, bf16 one-hots
    loop = jnp.arange(M, dtype=edge_index.dtype)
    src = jnp.concatenate([edge_index[0], loop])
    tgt = jnp.concatenate([edge_index[1], loop])
    src_g = jnp.pad(src, (0, pad_e))                      # gather idx (pads -> node 0)
    tgt_g = jnp.pad(tgt, (0, pad_e))
    src_oh = jax.nn.one_hot(jnp.pad(src, (0, pad_e), constant_values=-1), M_pad, dtype=BF16)
    tgt_oh = jax.nn.one_hot(jnp.pad(tgt, (0, pad_e), constant_values=-1), M_pad, dtype=BF16)
    # per-source edge count: layer-invariant, computed once from indices (not one-hots)
    cnt_col = jnp.zeros((M_pad,), F32).at[src].add(1.0).reshape(M_pad, 1)

    # ---- shared edge embeddings (layer-invariant; computed once)
    edge_vec = jax.nn.one_hot(edge_type, n_etype + 1, dtype=F32)
    self_edge_vec = jnp.zeros((M, n_etype + 1), F32).at[:, n_etype].set(1.0)
    head_vec = jax.nn.one_hot(nt_flat[edge_index[0]], n_ntype, dtype=F32)
    tail_vec = jax.nn.one_hot(nt_flat[edge_index[1]], n_ntype, dtype=F32)
    self_head_vec = jax.nn.one_hot(nt_flat, n_ntype, dtype=F32)
    edge_feat = jnp.concatenate(
        [jnp.concatenate([edge_vec, self_edge_vec], axis=0),
         jnp.concatenate([head_vec, self_head_vec], axis=0),
         jnp.concatenate([tail_vec, self_head_vec], axis=0)], axis=1)
    edge_feat16 = jnp.pad(edge_feat, ((0, pad_e), (0, 0))).astype(BF16)
    ee16 = _edge_encoder(edge_feat16, p16, E_pad=E_pad, E_blk=E_blk, D=D, vmem=vmem)

    # ---- layer-invariant tensors hoisted out of the k-layer loop
    nfe_src = nfe16[src_g]
    nfe_tgt = nfe16[tgt_g]
    head_sel = (jnp.arange(D)[:, None] // dph == jnp.arange(Hc)[None, :]).astype(F32)  # (D,Hc)
    hsel_t = head_sel.T                                                                # (Hc,D)

    # ---- k GATConvE layers (+GELU); dropout = identity (inference)
    # TODO(synk): a fully sparse (scalar-prefetch / segment-sorted) formulation would
    # remove the O(E'*M) one-hot streams entirely; the dense bf16 one-hot path is kept.
    Xn16 = H16
    for li in range(k):
        lw = lw16[li]
        x_src = Xn16[src_g]
        x_tgt = Xn16[tgt_g]
        msg16, scores = _gat_edge(x_src, x_tgt, nfe_src, nfe_tgt, ee16, lw, head_sel,
                                  E_pad=E_pad, E_blk=E_blk, D=D, Hc=Hc, dph=dph, vmem=vmem)
        # per-head shared max (numerics only; cancels exactly in the softmax ratio)
        mh = jnp.max(scores, axis=0, keepdims=True)                     # (1, Hc)
        fac = _gat_stats(scores, src_oh, cnt_col, mh,
                         E_pad=E_pad, E_blk=E_blk, M_pad=M_pad, Mc_blk=Mc_blk,
                         Hc=Hc, vmem=vmem)                              # (M_pad, Hc)
        edge_fac = fac[src_g]                                           # tiny row gather
        wmsg16 = _gat_wmsg(scores, edge_fac, mh, msg16, hsel_t,
                           E_pad=E_pad, E_blk=E_blk, D=D, Hc=Hc, vmem=vmem)
        aggr = _gat_aggr(wmsg16, tgt_oh,
                         E_pad=E_pad, E_blk=E_blk, M_pad=M_pad, Mc_blk=Mc_blk,
                         D=D, vmem=vmem)
        Xn16 = _gat_mlp(aggr, lw, M_pad=M_pad, M_blk=M_blk, D=D, vmem=vmem)

    # ---- output = gelu(Vh(H) + Vx(X)); final Dropout = identity (inference)
    out = _output(H16, Xn16, p16, M_pad=M_pad, M_blk=M_blk, D=D, vmem=vmem)
    return out[:M].reshape(B, n_node, D)


# --------------------------------------------------------------------------------------
if __name__ == "__main__":
    B, n_node, hidden_size = 2, 8, 32
    n_ntype, n_etype, k, head_count = 4, 6, 2, 4
    E = 20
    M = B * n_node

    key = jax.random.PRNGKey(0)
    k_h, k_score, k_ntype, k_eidx, k_etype, k_params = jax.random.split(key, 6)

    H = jax.random.normal(k_h, (B, n_node, hidden_size), dtype=jnp.float32)
    node_score = jax.random.uniform(k_score, (B, n_node, 1), dtype=jnp.float32)
    node_type = jax.random.randint(k_ntype, (B, n_node), 0, n_ntype, dtype=jnp.int32)
    edge_index = jax.random.randint(k_eidx, (2, E), 0, M, dtype=jnp.int32)
    edge_type = jax.random.randint(k_etype, (E,), 0, n_etype, dtype=jnp.int32)

    params = init_params(k_params, n_ntype=n_ntype, n_etype=n_etype,
                         hidden_size=hidden_size, k=k)

    fwd = jax.jit(partial(qagnn_message_passing_forward,
                          n_ntype=n_ntype, n_etype=n_etype, hidden_size=hidden_size,
                          k=k, head_count=head_count))
    out = fwd(params, H, edge_index, edge_type, node_type, node_score)
    out = jax.block_until_ready(out)

    assert out.shape == (B, n_node, hidden_size)
    assert bool(jnp.all(jnp.isfinite(out)))
    print("KERNEL_OK")
</pallas_src>

<mosaic_0001>
module attributes {stable_mosaic.version = 11 : i64} {
  func.func @node_extra_kernel(%arg0: i32, %arg1: memref<128x4xbf16, #tpu.memory_space<vmem>>, %arg2: memref<128x1xf32, #tpu.memory_space<vmem>>, %arg3: memref<1x16xf32, #tpu.memory_space<vmem>>, %arg4: memref<4x16xbf16, #tpu.memory_space<vmem>>, %arg5: memref<1x16xf32, #tpu.memory_space<vmem>>, %arg6: memref<16x16xbf16, #tpu.memory_space<vmem>>, %arg7: memref<1x16xf32, #tpu.memory_space<vmem>>, %arg8: memref<128x32xbf16, #tpu.memory_space<vmem>>) attributes {dimension_semantics = [#tpu.dimension_semantics<parallel>], iteration_bounds = array<i64: 1>, scalar_prefetch = 0 : i64, scratch_operands = 0 : i64, tpu.core_type = #tpu.core_type<tc>, window_params = [{transform_indices = @transform_0, window_bounds = array<i64: 128, 4>}, {transform_indices = @transform_1, window_bounds = array<i64: 128, 1>}, {pipeline_mode = #tpu.pipeline_mode<synchronous>, transform_indices = @transform_2, window_bounds = array<i64: 1, 16>}, {pipeline_mode = #tpu.pipeline_mode<synchronous>, transform_indices = @transform_3, window_bounds = array<i64: 4, 16>}, {pipeline_mode = #tpu.pipeline_mode<synchronous>, transform_indices = @transform_4, window_bounds = array<i64: 1, 16>}, {pipeline_mode = #tpu.pipeline_mode<synchronous>, transform_indices = @transform_5, window_bounds = array<i64: 16, 16>}, {pipeline_mode = #tpu.pipeline_mode<synchronous>, transform_indices = @transform_6, window_bounds = array<i64: 1, 16>}, {transform_indices = @transform_7, window_bounds = array<i64: 128, 32>}]} {
    %c0 = arith.constant 0 : index
    %c0_0 = arith.constant 0 : index
    %0 = vector.load %arg1[%c0, %c0_0] : memref<128x4xbf16, #tpu.memory_space<vmem>>, vector<128x4xbf16>
    %c0_1 = arith.constant 0 : index
    %c0_2 = arith.constant 0 : index
    %1 = vector.load %arg4[%c0_1, %c0_2] : memref<4x16xbf16, #tpu.memory_space<vmem>>, vector<4x16xbf16>
    %cst = arith.constant dense<0.000000e+00> : vector<128x16xf32>
    %2 = tpu.matmul %0, %1, %cst {dimension_numbers = #tpu.dot_dimension_numbers<[1], [0], [0], [1], [0, 0, 1, 1], [], []>} : vector<128x4xbf16>, vector<4x16xbf16>, vector<128x16xf32> -> vector<128x16xf32>
    %c0_3 = arith.constant 0 : index
    %c0_4 = arith.constant 0 : index
    %3 = vector.load %arg5[%c0_3, %c0_4] : memref<1x16xf32, #tpu.memory_space<vmem>>, vector<1x16xf32>
    %4 = vector.broadcast %3 : vector<1x16xf32> to vector<128x16xf32>
    %5 = arith.addf %2, %4 : vector<128x16xf32>
    %cst_5 = arith.constant 5.000000e-01 : f32
    %6 = vector.broadcast %cst_5 : f32 to vector<128x16xf32>
    %7 = arith.mulf %6, %5 : vector<128x16xf32>
    %cst_6 = arith.constant 4.471500e-02 : f32
    %8 = vector.broadcast %cst_6 : f32 to vector<128x16xf32>
    %9 = arith.mulf %8, %5 : vector<128x16xf32>
    %10 = arith.mulf %9, %5 : vector<128x16xf32>
    %11 = arith.mulf %10, %5 : vector<128x16xf32>
    %12 = arith.addf %5, %11 : vector<128x16xf32>
    %cst_7 = arith.constant 0.797884583 : f32
    %13 = vector.broadcast %cst_7 : f32 to vector<128x16xf32>
    %14 = arith.mulf %13, %12 : vector<128x16xf32>
    %15 = math.tanh %14 : vector<128x16xf32>
    %cst_8 = arith.constant 1.000000e+00 : f32
    %16 = vector.broadcast %cst_8 : f32 to vector<128x16xf32>
    %17 = arith.addf %16, %15 : vector<128x16xf32>
    %18 = arith.mulf %7, %17 : vector<128x16xf32>
    %c0_9 = arith.constant 0 : index
    %c0_10 = arith.constant 0 : index
    %19 = vector.load %arg3[%c0_9, %c0_10] : memref<1x16xf32, #tpu.memory_space<vmem>>, vector<1x16xf32>
    %c0_11 = arith.constant 0 : index
    %c0_12 = arith.constant 0 : index
    %20 = vector.load %arg2[%c0_11, %c0_12] : memref<128x1xf32, #tpu.memory_space<vmem>>, vector<128x1xf32>
    %21 = vector.broadcast %19 : vector<1x16xf32> to vector<128x16xf32>
    %22 = vector.broadcast %20 : vector<128x1xf32> to vector<128x16xf32>
    %23 = arith.mulf %21, %22 : vector<128x16xf32>
    %24 = math.sin %23 : vector<128x16xf32>
    %25 = arith.truncf %24 : vector<128x16xf32> to vector<128x16xbf16>
    %c0_13 = arith.constant 0 : index
    %c0_14 = arith.constant 0 : index
    %26 = vector.load %arg6[%c0_13, %c0_14] : memref<16x16xbf16, #tpu.memory_space<vmem>>, vector<16x16xbf16>
    %cst_15 = arith.constant dense<0.000000e+00> : vector<128x16xf32>
    %27 = tpu.matmul %25, %26, %cst_15 {dimension_numbers = #tpu.dot_dimension_numbers<[1], [0], [0], [1], [0, 0, 1, 1], [], []>} : vector<128x16xbf16>, vector<16x16xbf16>, vector<128x16xf32> -> vector<128x16xf32>
    %c0_16 = arith.constant 0 : index
    %c0_17 = arith.constant 0 : index
    %28 = vector.load %arg7[%c0_16, %c0_17] : memref<1x16xf32, #tpu.memory_space<vmem>>, vector<1x16xf32>
    %29 = vector.broadcast %28 : vector<1x16xf32> to vector<128x16xf32>
    %30 = arith.addf %27, %29 : vector<128x16xf32>
    %cst_18 = arith.constant 5.000000e-01 : f32
    %31 = vector.broadcast %cst_18 : f32 to vector<128x16xf32>
    %32 = arith.mulf %31, %30 : vector<128x16xf32>
    %cst_19 = arith.constant 4.471500e-02 : f32
    %33 = vector.broadcast %cst_19 : f32 to vector<128x16xf32>
    %34 = arith.mulf %33, %30 : vector<128x16xf32>
    %35 = arith.mulf %34, %30 : vector<128x16xf32>
    %36 = arith.mulf %35, %30 : vector<128x16xf32>
    %37 = arith.addf %30, %36 : vector<128x16xf32>
    %cst_20 = arith.constant 0.797884583 : f32
    %38 = vector.broadcast %cst_20 : f32 to vector<128x16xf32>
    %39 = arith.mulf %38, %37 : vector<128x16xf32>
    %40 = math.tanh %39 : vector<128x16xf32>
    %cst_21 = arith.constant 1.000000e+00 : f32
    %41 = vector.broadcast %cst_21 : f32 to vector<128x16xf32>
    %42 = arith.addf %41, %40 : vector<128x16xf32>
    %43 = arith.mulf %32, %42 : vector<128x16xf32>
    %44 = arith.truncf %18 : vector<128x16xf32> to vector<128x16xbf16>
    %c0_22 = arith.constant 0 : index
    %c0_23 = arith.constant 0 : index
    %45 = vector.load %arg8[%c0_22, %c0_23] : memref<128x32xbf16, #tpu.memory_space<vmem>>, vector<128x16xbf16>
    tpu.vector_store %arg8[%c0_22, %c0_23], %44 {strides = array<i32>} : memref<128x32xbf16, #tpu.memory_space<vmem>>, vector<128x16xbf16>,
    %46 = arith.truncf %43 : vector<128x16xf32> to vector<128x16xbf16>
    %c0_24 = arith.constant 0 : index
    %c16 = arith.constant 16 : index
    %47 = vector.load %arg8[%c0_24, %c16] : memref<128x32xbf16, #tpu.memory_space<vmem>>, vector<128x16xbf16>
    tpu.vector_store %arg8[%c0_24, %c16], %46 {strides = array<i32>} : memref<128x32xbf16, #tpu.memory_space<vmem>>, vector<128x16xbf16>,
    return
  }
  func.func @transform_0(%arg0: i32) -> (i32, i32) {
    %c0_i32 = arith.constant 0 : i32
    %c0_i32_0 = arith.constant 0 : i32
    return %arg0, %c0_i32 : i32, i32
  }
  func.func @transform_1(%arg0: i32) -> (i32, i32) {
    %c0_i32 = arith.constant 0 : i32
    %c0_i32_0 = arith.constant 0 : i32
    return %arg0, %c0_i32 : i32, i32
  }
  func.func @transform_2(%arg0: i32) -> (i32, i32) {
    %c0_i32 = arith.constant 0 : i32
    %c0_i32_0 = arith.constant 0 : i32
    %c0_i32_1 = arith.constant 0 : i32
    return %c0_i32, %c0_i32_0 : i32, i32
  }
  func.func @transform_3(%arg0: i32) -> (i32, i32) {
    %c0_i32 = arith.constant 0 : i32
    %c0_i32_0 = arith.constant 0 : i32
    %c0_i32_1 = arith.constant 0 : i32
    return %c0_i32, %c0_i32_0 : i32, i32
  }
  func.func @transform_4(%arg0: i32) -> (i32, i32) {
    %c0_i32 = arith.constant 0 : i32
    %c0_i32_0 = arith.constant 0 : i32
    %c0_i32_1 = arith.constant 0 : i32
    return %c0_i32, %c0_i32_0 : i32, i32
  }
  func.func @transform_5(%arg0: i32) -> (i32, i32) {
    %c0_i32 = arith.constant 0 : i32
    %c0_i32_0 = arith.constant 0 : i32
    %c0_i32_1 = arith.constant 0 : i32
    return %c0_i32, %c0_i32_0 : i32, i32
  }
  func.func @transform_6(%arg0: i32) -> (i32, i32) {
    %c0_i32 = arith.constant 0 : i32
    %c0_i32_0 = arith.constant 0 : i32
    %c0_i32_1 = arith.constant 0 : i32
    return %c0_i32, %c0_i32_0 : i32, i32
  }
  func.func @transform_7(%arg0: i32) -> (i32, i32) {
    %c0_i32 = arith.constant 0 : i32
    %c0_i32_0 = arith.constant 0 : i32
    return %arg0, %c0_i32 : i32, i32
  }
}

module attributes {stable_mosaic.version = 11 : i64} {
  func.func @edge_encoder_kernel(%arg0: i32, %arg1: memref<40x15xbf16, #tpu.memory_space<vmem>>, %arg2: memref<15x32xbf16, #tpu.memory_space<vmem>>, %arg3: memref<1x32xf32, #tpu.memory_space<vmem>>, %arg4: memref<1x32xf32, #tpu.memory_space<vmem>>, %arg5: memref<1x32xf32, #tpu.memory_space<vmem>>, %arg6: memref<32x32xbf16, #tpu.memory_space<vmem>>, %arg7: memref<1x32xf32, #tpu.memory_space<vmem>>, %arg8: memref<40x32xbf16, #tpu.memory_space<vmem>>) attributes {dimension_semantics = [#tpu.dimension_semantics<parallel>], iteration_bounds = array<i64: 1>, scalar_prefetch = 0 : i64, scratch_operands = 0 : i64, tpu.core_type = #tpu.core_type<tc>, window_params = [{transform_indices = @transform_0, window_bounds = array<i64: 40, 15>}, {pipeline_mode = #tpu.pipeline_mode<synchronous>, transform_indices = @transform_1, window_bounds = array<i64: 15, 32>}, {pipeline_mode = #tpu.pipeline_mode<synchronous>, transform_indices = @transform_2, window_bounds = array<i64: 1, 32>}, {pipeline_mode = #tpu.pipeline_mode<synchronous>, transform_indices = @transform_3, window_bounds = array<i64: 1, 32>}, {pipeline_mode = #tpu.pipeline_mode<synchronous>, transform_indices = @transform_4, window_bounds = array<i64: 1, 32>}, {pipeline_mode = #tpu.pipeline_mode<synchronous>, transform_indices = @transform_5, window_bounds = array<i64: 32, 32>}, {pipeline_mode = #tpu.pipeline_mode<synchronous>, transform_indices = @transform_6, window_bounds = array<i64: 1, 32>}, {transform_indices = @transform_7, window_bounds = array<i64: 40, 32>}]} {
    %c0 = arith.constant 0 : index
    %c0_0 = arith.constant 0 : index
    %0 = vector.load %arg1[%c0, %c0_0] : memref<40x15xbf16, #tpu.memory_space<vmem>>, vector<40x15xbf16>
    %c0_1 = arith.constant 0 : index
    %c0_2 = arith.constant 0 : index
    %1 = vector.load %arg2[%c0_1, %c0_2] : memref<15x32xbf16, #tpu.memory_space<vmem>>, vector<15x32xbf16>
    %cst = arith.constant dense<0.000000e+00> : vector<40x32xf32>
    %2 = tpu.matmul %0, %1, %cst {dimension_numbers = #tpu.dot_dimension_numbers<[1], [0], [0], [1], [0, 0, 1, 1], [], []>} : vector<40x15xbf16>, vector<15x32xbf16>, vector<40x32xf32> -> vector<40x32xf32>
    %c0_3 = arith.constant 0 : index
    %c0_4 = arith.constant 0 : index
    %3 = vector.load %arg3[%c0_3, %c0_4] : memref<1x32xf32, #tpu.memory_space<vmem>>, vector<1x32xf32>
    %4 = vector.broadcast %3 : vector<1x32xf32> to vector<40x32xf32>
    %5 = arith.addf %2, %4 : vector<40x32xf32>
    %c0_5 = arith.constant 0 : index
    %c0_6 = arith.constant 0 : index
    %6 = vector.load %arg4[%c0_5, %c0_6] : memref<1x32xf32, #tpu.memory_space<vmem>>, vector<1x32xf32>
    %7 = vector.broadcast %6 : vector<1x32xf32> to vector<40x32xf32>
    %8 = arith.mulf %5, %7 : vector<40x32xf32>
    %c0_7 = arith.constant 0 : index
    %c0_8 = arith.constant 0 : index
    %9 = vector.load %arg5[%c0_7, %c0_8] : memref<1x32xf32, #tpu.memory_space<vmem>>, vector<1x32xf32>
    %10 = vector.broadcast %9 : vector<1x32xf32> to vector<40x32xf32>
    %11 = arith.addf %8, %10 : vector<40x32xf32>
    %cst_9 = arith.constant 0.000000e+00 : f32
    %12 = vector.broadcast %cst_9 : f32 to vector<40x32xf32>
    %13 = arith.maximumf %11, %12 : vector<40x32xf32>
    %14 = arith.truncf %13 : vector<40x32xf32> to vector<40x32xbf16>
    %c0_10 = arith.constant 0 : index
    %c0_11 = arith.constant 0 : index
    %15 = vector.load %arg6[%c0_10, %c0_11] : memref<32x32xbf16, #tpu.memory_space<vmem>>, vector<32x32xbf16>
    %cst_12 = arith.constant dense<0.000000e+00> : vector<40x32xf32>
    %16 = tpu.matmul %14, %15, %cst_12 {dimension_numbers = #tpu.dot_dimension_numbers<[1], [0], [0], [1], [0, 0, 1, 1], [], []>} : vector<40x32xbf16>, vector<32x32xbf16>, vector<40x32xf32> -> vector<40x32xf32>
    %c0_13 = arith.constant 0 : index
    %c0_14 = arith.constant 0 : index
    %17 = vector.load %arg7[%c0_13, %c0_14] : memref<1x32xf32, #tpu.memory_space<vmem>>, vector<1x32xf32>
    %18 = vector.broadcast %17 : vector<1x32xf32> to vector<40x32xf32>
    %19 = arith.addf %16, %18 : vector<40x32xf32>
    %20 = arith.truncf %19 : vector<40x32xf32> to vector<40x32xbf16>
    %c0_15 = arith.constant 0 : index
    %c0_16 = arith.constant 0 : index
    %21 = vector.load %arg8[%c0_15, %c0_16] : memref<40x32xbf16, #tpu.memory_space<vmem>>, vector<40x32xbf16>
    tpu.vector_store %arg8[%c0_15, %c0_16], %20 {strides = array<i32>} : memref<40x32xbf16, #tpu.memory_space<vmem>>, vector<40x32xbf16>,
    return
  }
  func.func @transform_0(%arg0: i32) -> (i32, i32) {
    %c0_i32 = arith.constant 0 : i32
    %c0_i32_0 = arith.constant 0 : i32
    return %arg0, %c0_i32 : i32, i32
  }
  func.func @transform_1(%arg0: i32) -> (i32, i32) {
    %c0_i32 = arith.constant 0 : i32
    %c0_i32_0 = arith.constant 0 : i32
    %c0_i32_1 = arith.constant 0 : i32
    return %c0_i32, %c0_i32_0 : i32, i32
  }
  func.func @transform_2(%arg0: i32) -> (i32, i32) {
    %c0_i32 = arith.constant 0 : i32
    %c0_i32_0 = arith.constant 0 : i32
    %c0_i32_1 = arith.constant 0 : i32
    return %c0_i32, %c0_i32_0 : i32, i32
  }
  func.func @transform_3(%arg0: i32) -> (i32, i32) {
    %c0_i32 = arith.constant 0 : i32
    %c0_i32_0 = arith.constant 0 : i32
    %c0_i32_1 = arith.constant 0 : i32
    return %c0_i32, %c0_i32_0 : i32, i32
  }
  func.func @transform_4(%arg0: i32) -> (i32, i32) {
    %c0_i32 = arith.constant 0 : i32
    %c0_i32_0 = arith.constant 0 : i32
    %c0_i32_1 = arith.constant 0 : i32
    return %c0_i32, %c0_i32_0 : i32, i32
  }
  func.func @transform_5(%arg0: i32) -> (i32, i32) {
    %c0_i32 = arith.constant 0 : i32
    %c0_i32_0 = arith.constant 0 : i32
    %c0_i32_1 = arith.constant 0 : i32
    return %c0_i32, %c0_i32_0 : i32, i32
  }
  func.func @transform_6(%arg0: i32) -> (i32, i32) {
    %c0_i32 = arith.constant 0 : i32
    %c0_i32_0 = arith.constant 0 : i32
    %c0_i32_1 = arith.constant 0 : i32
    return %c0_i32, %c0_i32_0 : i32, i32
  }
  func.func @transform_7(%arg0: i32) -> (i32, i32) {
    %c0_i32 = arith.constant 0 : i32
    %c0_i32_0 = arith.constant 0 : i32
    return %arg0, %c0_i32 : i32, i32
  }
}

module attributes {stable_mosaic.version = 11 : i64} {
  func.func @gat_edge_kernel(%arg0: i32, %arg1: memref<40x32xbf16, #tpu.memory_space<vmem>>, %arg2: memref<40x32xbf16, #tpu.memory_space<vmem>>, %arg3: memref<40x32xbf16, #tpu.memory_space<vmem>>, %arg4: memref<40x32xbf16, #tpu.memory_space<vmem>>, %arg5: memref<40x32xbf16, #tpu.memory_space<vmem>>, %arg6: memref<32x32xbf16, #tpu.memory_space<vmem>>, %arg7: memref<32x32xbf16, #tpu.memory_space<vmem>>, %arg8: memref<32x32xbf16, #tpu.memory_space<vmem>>, %arg9: memref<1x32xf32, #tpu.memory_space<vmem>>, %arg10: memref<32x32xbf16, #tpu.memory_space<vmem>>, %arg11: memref<32x32xbf16, #tpu.memory_space<vmem>>, %arg12: memref<32x32xbf16, #tpu.memory_space<vmem>>, %arg13: memref<1x32xf32, #tpu.memory_space<vmem>>, %arg14: memref<32x32xbf16, #tpu.memory_space<vmem>>, %arg15: memref<32x32xbf16, #tpu.memory_space<vmem>>, %arg16: memref<1x32xf32, #tpu.memory_space<vmem>>, %arg17: memref<32x4xf32, #tpu.memory_space<vmem>>, %arg18: memref<40x32xbf16, #tpu.memory_space<vmem>>, %arg19: memref<40x4xf32, #tpu.memory_space<vmem>>) attributes {dimension_semantics = [#tpu.dimension_semantics<parallel>], iteration_bounds = array<i64: 1>, scalar_prefetch = 0 : i64, scratch_operands = 0 : i64, tpu.core_type = #tpu.core_type<tc>, window_params = [{transform_indices = @transform_0, window_bounds = array<i64: 40, 32>}, {transform_indices = @transform_1, window_bounds = array<i64: 40, 32>}, {transform_indices = @transform_2, window_bounds = array<i64: 40, 32>}, {transform_indices = @transform_3, window_bounds = array<i64: 40, 32>}, {transform_indices = @transform_4, window_bounds = array<i64: 40, 32>}, {pipeline_mode = #tpu.pipeline_mode<synchronous>, transform_indices = @transform_5, window_bounds = array<i64: 32, 32>}, {pipeline_mode = #tpu.pipeline_mode<synchronous>, transform_indices = @transform_6, window_bounds = array<i64: 32, 32>}, {pipeline_mode = #tpu.pipeline_mode<synchronous>, transform_indices = @transform_7, window_bounds = array<i64: 32, 32>}, {pipeline_mode = #tpu.pipeline_mode<synchronous>, transform_indices = @transform_8, window_bounds = array<i64: 1, 32>}, {pipeline_mode = #tpu.pipeline_mode<synchronous>, transform_indices = @transform_9, window_bounds = array<i64: 32, 32>}, {pipeline_mode = #tpu.pipeline_mode<synchronous>, transform_indices = @transform_10, window_bounds = array<i64: 32, 32>}, {pipeline_mode = #tpu.pipeline_mode<synchronous>, transform_indices = @transform_11, window_bounds = array<i64: 32, 32>}, {pipeline_mode = #tpu.pipeline_mode<synchronous>, transform_indices = @transform_12, window_bounds = array<i64: 1, 32>}, {pipeline_mode = #tpu.pipeline_mode<synchronous>, transform_indices = @transform_13, window_bounds = array<i64: 32, 32>}, {pipeline_mode = #tpu.pipeline_mode<synchronous>, transform_indices = @transform_14, window_bounds = array<i64: 32, 32>}, {pipeline_mode = #tpu.pipeline_mode<synchronous>, transform_indices = @transform_15, window_bounds = array<i64: 1, 32>}, {pipeline_mode = #tpu.pipeline_mode<synchronous>, transform_indices = @transform_16, window_bounds = array<i64: 32, 4>}, {transform_indices = @transform_17, window_bounds = array<i64: 40, 32>}, {transform_indices = @transform_18, window_bounds = array<i64: 40, 4>}]} {
    %c0 = arith.constant 0 : index
    %c0_0 = arith.constant 0 : index
    %0 = vector.load %arg2[%c0, %c0_0] : memref<40x32xbf16, #tpu.memory_space<vmem>>, vector<40x32xbf16>
    %c0_1 = arith.constant 0 : index
    %c0_2 = arith.constant 0 : index
    %1 = vector.load %arg6[%c0_1, %c0_2] : memref<32x32xbf16, #tpu.memory_space<vmem>>, vector<32x32xbf16>
    %cst = arith.constant dense<0.000000e+00> : vector<40x32xf32>
    %2 = tpu.matmul %0, %1, %cst {dimension_numbers = #tpu.dot_dimension_numbers<[1], [0], [0], [1], [0, 0, 1, 1], [], []>} : vector<40x32xbf16>, vector<32x32xbf16>, vector<40x32xf32> -> vector<40x32xf32>
    %c0_3 = arith.constant 0 : index
    %c0_4 = arith.constant 0 : index
    %3 = vector.load %arg4[%c0_3, %c0_4] : memref<40x32xbf16, #tpu.memory_space<vmem>>, vector<40x32xbf16>
    %c0_5 = arith.constant 0 : index
    %c0_6 = arith.constant 0 : index
    %4 = vector.load %arg7[%c0_5, %c0_6] : memref<32x32xbf16, #tpu.memory_space<vmem>>, vector<32x32xbf16>
    %cst_7 = arith.constant dense<0.000000e+00> : vector<40x32xf32>
    %5 = tpu.matmul %3, %4, %cst_7 {dimension_numbers = #tpu.dot_dimension_numbers<[1], [0], [0], [1], [0, 0, 1, 1], [], []>} : vector<40x32xbf16>, vector<32x32xbf16>, vector<40x32xf32> -> vector<40x32xf32>
    %6 = arith.addf %2, %5 : vector<40x32xf32>
    %c0_8 = arith.constant 0 : index
    %c0_9 = arith.constant 0 : index
    %7 = vector.load %arg5[%c0_8, %c0_9] : memref<40x32xbf16, #tpu.memory_space<vmem>>, vector<40x32xbf16>
    %c0_10 = arith.constant 0 : index
    %c0_11 = arith.constant 0 : index
    %8 = vector.load %arg8[%c0_10, %c0_11] : memref<32x32xbf16, #tpu.memory_space<vmem>>, vector<32x32xbf16>
    %cst_12 = arith.constant dense<0.000000e+00> : vector<40x32xf32>
    %9 = tpu.matmul %7, %8, %cst_12 {dimension_numbers = #tpu.dot_dimension_numbers<[1], [0], [0], [1], [0, 0, 1, 1], [], []>} : vector<40x32xbf16>, vector<32x32xbf16>, vector<40x32xf32> -> vector<40x32xf32>
    %10 = arith.addf %6, %9 : vector<40x32xf32>
    %c0_13 = arith.constant 0 : index
    %c0_14 = arith.constant 0 : index
    %11 = vector.load %arg9[%c0_13, %c0_14] : memref<1x32xf32, #tpu.memory_space<vmem>>, vector<1x32xf32>
    %12 = vector.broadcast %11 : vector<1x32xf32> to vector<40x32xf32>
    %13 = arith.addf %10, %12 : vector<40x32xf32>
    %c0_15 = arith.constant 0 : index
    %c0_16 = arith.constant 0 : index
    %14 = vector.load %arg1[%c0_15, %c0_16] : memref<40x32xbf16, #tpu.memory_space<vmem>>, vector<40x32xbf16>
    %c0_17 = arith.constant 0 : index
    %c0_18 = arith.constant 0 : index
    %15 = vector.load %arg10[%c0_17, %c0_18] : memref<32x32xbf16, #tpu.memory_space<vmem>>, vector<32x32xbf16>
    %cst_19 = arith.constant dense<0.000000e+00> : vector<40x32xf32>
    %16 = tpu.matmul %14, %15, %cst_19 {dimension_numbers = #tpu.dot_dimension_numbers<[1], [0], [0], [1], [0, 0, 1, 1], [], []>} : vector<40x32xbf16>, vector<32x32xbf16>, vector<40x32xf32> -> vector<40x32xf32>
    %c0_20 = arith.constant 0 : index
    %c0_21 = arith.constant 0 : index
    %17 = vector.load %arg3[%c0_20, %c0_21] : memref<40x32xbf16, #tpu.memory_space<vmem>>, vector<40x32xbf16>
    %c0_22 = arith.constant 0 : index
    %c0_23 = arith.constant 0 : index
    %18 = vector.load %arg11[%c0_22, %c0_23] : memref<32x32xbf16, #tpu.memory_space<vmem>>, vector<32x32xbf16>
    %cst_24 = arith.constant dense<0.000000e+00> : vector<40x32xf32>
    %19 = tpu.matmul %17, %18, %cst_24 {dimension_numbers = #tpu.dot_dimension_numbers<[1], [0], [0], [1], [0, 0, 1, 1], [], []>} : vector<40x32xbf16>, vector<32x32xbf16>, vector<40x32xf32> -> vector<40x32xf32>
    %20 = arith.addf %16, %19 : vector<40x32xf32>
    %c0_25 = arith.constant 0 : index
    %c0_26 = arith.constant 0 : index
    %21 = vector.load %arg5[%c0_25, %c0_26] : memref<40x32xbf16, #tpu.memory_space<vmem>>, vector<40x32xbf16>
    %c0_27 = arith.constant 0 : index
    %c0_28 = arith.constant 0 : index
    %22 = vector.load %arg12[%c0_27, %c0_28] : memref<32x32xbf16, #tpu.memory_space<vmem>>, vector<32x32xbf16>
    %cst_29 = arith.constant dense<0.000000e+00> : vector<40x32xf32>
    %23 = tpu.matmul %21, %22, %cst_29 {dimension_numbers = #tpu.dot_dimension_numbers<[1], [0], [0], [1], [0, 0, 1, 1], [], []>} : vector<40x32xbf16>, vector<32x32xbf16>, vector<40x32xf32> -> vector<40x32xf32>
    %24 = arith.addf %20, %23 : vector<40x32xf32>
    %c0_30 = arith.constant 0 : index
    %c0_31 = arith.constant 0 : index
    %25 = vector.load %arg13[%c0_30, %c0_31] : memref<1x32xf32, #tpu.memory_space<vmem>>, vector<1x32xf32>
    %26 = vector.broadcast %25 : vector<1x32xf32> to vector<40x32xf32>
    %27 = arith.addf %24, %26 : vector<40x32xf32>
    %c0_32 = arith.constant 0 : index
    %c0_33 = arith.constant 0 : index
    %28 = vector.load %arg1[%c0_32, %c0_33] : memref<40x32xbf16, #tpu.memory_space<vmem>>, vector<40x32xbf16>
    %c0_34 = arith.constant 0 : index
    %c0_35 = arith.constant 0 : index
    %29 = vector.load %arg14[%c0_34, %c0_35] : memref<32x32xbf16, #tpu.memory_space<vmem>>, vector<32x32xbf16>
    %cst_36 = arith.constant dense<0.000000e+00> : vector<40x32xf32>
    %30 = tpu.matmul %28, %29, %cst_36 {dimension_numbers = #tpu.dot_dimension_numbers<[1], [0], [0], [1], [0, 0, 1, 1], [], []>} : vector<40x32xbf16>, vector<32x32xbf16>, vector<40x32xf32> -> vector<40x32xf32>
    %c0_37 = arith.constant 0 : index
    %c0_38 = arith.constant 0 : index
    %31 = vector.load %arg3[%c0_37, %c0_38] : memref<40x32xbf16, #tpu.memory_space<vmem>>, vector<40x32xbf16>
    %c0_39 = arith.constant 0 : index
    %c0_40 = arith.constant 0 : index
    %32 = vector.load %arg15[%c0_39, %c0_40] : memref<32x32xbf16, #tpu.memory_space<vmem>>, vector<32x32xbf16>
    %cst_41 = arith.constant dense<0.000000e+00> : vector<40x32xf32>
    %33 = tpu.matmul %31, %32, %cst_41 {dimension_numbers = #tpu.dot_dimension_numbers<[1], [0], [0], [1], [0, 0, 1, 1], [], []>} : vector<40x32xbf16>, vector<32x32xbf16>, vector<40x32xf32> -> vector<40x32xf32>
    %34 = arith.addf %30, %33 : vector<40x32xf32>
    %c0_42 = arith.constant 0 : index
    %c0_43 = arith.constant 0 : index
    %35 = vector.load %arg16[%c0_42, %c0_43] : memref<1x32xf32, #tpu.memory_space<vmem>>, vector<1x32xf32>
    %36 = vector.broadcast %35 : vector<1x32xf32> to vector<40x32xf32>
    %37 = arith.addf %34, %36 : vector<40x32xf32>
    %cst_44 = arith.constant 0.353553385 : f32
    %38 = vector.broadcast %cst_44 : f32 to vector<40x32xf32>
    %39 = arith.mulf %37, %38 : vector<40x32xf32>
    %40 = arith.truncf %27 : vector<40x32xf32> to vector<40x32xbf16>
    %c0_45 = arith.constant 0 : index
    %c0_46 = arith.constant 0 : index
    %41 = vector.load %arg18[%c0_45, %c0_46] : memref<40x32xbf16, #tpu.memory_space<vmem>>, vector<40x32xbf16>
    tpu.vector_store %arg18[%c0_45, %c0_46], %40 {strides = array<i32>} : memref<40x32xbf16, #tpu.memory_space<vmem>>, vector<40x32xbf16>,
    %42 = arith.mulf %39, %13 : vector<40x32xf32>
    %c0_47 = arith.constant 0 : index
    %c0_48 = arith.constant 0 : index
    %43 = vector.load %arg17[%c0_47, %c0_48] : memref<32x4xf32, #tpu.memory_space<vmem>>, vector<32x4xf32>
    %cst_49 = arith.constant dense<0.000000e+00> : vector<40x4xf32>
    %44 = tpu.matmul %42, %43, %cst_49 {dimension_numbers = #tpu.dot_dimension_numbers<[1], [0], [0], [1], [0, 0, 1, 1], [], []>} : vector<40x32xf32>, vector<32x4xf32>, vector<40x4xf32> -> vector<40x4xf32>
    %c0_50 = arith.constant 0 : index
    %c0_51 = arith.constant 0 : index
    %45 = vector.load %arg19[%c0_50, %c0_51] : memref<40x4xf32, #tpu.memory_space<vmem>>, vector<40x4xf32>
    tpu.vector_store %arg19[%c0_50, %c0_51], %44 {strides = array<i32>} : memref<40x4xf32, #tpu.memory_space<vmem>>, vector<40x4xf32>,
    return
  }
  func.func @transform_0(%arg0: i32) -> (i32, i32) {
    %c0_i32 = arith.constant 0 : i32
    %c0_i32_0 = arith.constant 0 : i32
    return %arg0, %c0_i32 : i32, i32
  }
  func.func @transform_1(%arg0: i32) -> (i32, i32) {
    %c0_i32 = arith.constant 0 : i32
    %c0_i32_0 = arith.constant 0 : i32
    return %arg0, %c0_i32 : i32, i32
  }
  func.func @transform_2(%arg0: i32) -> (i32, i32) {
    %c0_i32 = arith.constant 0 : i32
    %c0_i32_0 = arith.constant 0 : i32
    return %arg0, %c0_i32 : i32, i32
  }
  func.func @transform_3(%arg0: i32) -> (i32, i32) {
    %c0_i32 = arith.constant 0 : i32
    %c0_i32_0 = arith.constant 0 : i32
    return %arg0, %c0_i32 : i32, i32
  }
  func.func @transform_4(%arg0: i32) -> (i32, i32) {
    %c0_i32 = arith.constant 0 : i32
    %c0_i32_0 = arith.constant 0 : i32
    return %arg0, %c0_i32 : i32, i32
  }
  func.func @transform_5(%arg0: i32) -> (i32, i32) {
    %c0_i32 = arith.constant 0 : i32
    %c0_i32_0 = arith.constant 0 : i32
    %c0_i32_1 = arith.constant 0 : i32
    return %c0_i32, %c0_i32_0 : i32, i32
  }
  func.func @transform_6(%arg0: i32) -> (i32, i32) {
    %c0_i32 = arith.constant 0 : i32
    %c0_i32_0 = arith.constant 0 : i32
    %c0_i32_1 = arith.constant 0 : i32
    return %c0_i32, %c0_i32_0 : i32, i32
  }
  func.func @transform_7(%arg0: i32) -> (i32, i32) {
    %c0_i32 = arith.constant 0 : i32
    %c0_i32_0 = arith.constant 0 : i32
    %c0_i32_1 = arith.constant 0 : i32
    return %c0_i32, %c0_i32_0 : i32, i32
  }
  func.func @transform_8(%arg0: i32) -> (i32, i32) {
    %c0_i32 = arith.constant 0 : i32
    %c0_i32_0 = arith.constant 0 : i32
    %c0_i32_1 = arith.constant 0 : i32
    return %c0_i32, %c0_i32_0 : i32, i32
  }
  func.func @transform_9(%arg0: i32) -> (i32, i32) {
    %c0_i32 = arith.constant 0 : i32
    %c0_i32_0 = arith.constant 0 : i32
    %c0_i32_1 = arith.constant 0 : i32
    return %c0_i32, %c0_i32_0 : i32, i32
  }
  func.func @transform_10(%arg0: i32) -> (i32, i32) {
    %c0_i32 = arith.constant 0 : i32
    %c0_i32_0 = arith.constant 0 : i32
    %c0_i32_1 = arith.constant 0 : i32
    return %c0_i32, %c0_i32_0 : i32, i32
  }
  func.func @transform_11(%arg0: i32) -> (i32, i32) {
    %c0_i32 = arith.constant 0 : i32
    %c0_i32_0 = arith.constant 0 : i32
    %c0_i32_1 = arith.constant 0 : i32
    return %c0_i32, %c0_i32_0 : i32, i32
  }
  func.func @transform_12(%arg0: i32) -> (i32, i32) {
    %c0_i32 = arith.constant 0 : i32
    %c0_i32_0 = arith.constant 0 : i32
    %c0_i32_1 = arith.constant 0 : i32
    return %c0_i32, %c0_i32_0 : i32, i32
  }
  func.func @transform_13(%arg0: i32) -> (i32, i32) {
    %c0_i32 = arith.constant 0 : i32
    %c0_i32_0 = arith.constant 0 : i32
    %c0_i32_1 = arith.constant 0 : i32
    return %c0_i32, %c0_i32_0 : i32, i32
  }
  func.func @transform_14(%arg0: i32) -> (i32, i32) {
    %c0_i32 = arith.constant 0 : i32
    %c0_i32_0 = arith.constant 0 : i32
    %c0_i32_1 = arith.constant 0 : i32
    return %c0_i32, %c0_i32_0 : i32, i32
  }
  func.func @transform_15(%arg0: i32) -> (i32, i32) {
    %c0_i32 = arith.constant 0 : i32
    %c0_i32_0 = arith.constant 0 : i32
    %c0_i32_1 = arith.constant 0 : i32
    return %c0_i32, %c0_i32_0 : i32, i32
  }
  func.func @transform_16(%arg0: i32) -> (i32, i32) {
    %c0_i32 = arith.constant 0 : i32
    %c0_i32_0 = arith.constant 0 : i32
    %c0_i32_1 = arith.constant 0 : i32
    return %c0_i32, %c0_i32_0 : i32, i32
  }
  func.func @transform_17(%arg0: i32) -> (i32, i32) {
    %c0_i32 = arith.constant 0 : i32
    %c0_i32_0 = arith.constant 0 : i32
    return %arg0, %c0_i32 : i32, i32
  }
  func.func @transform_18(%arg0: i32) -> (i32, i32) {
    %c0_i32 = arith.constant 0 : i32
    %c0_i32_0 = arith.constant 0 : i32
    return %arg0, %c0_i32 : i32, i32
  }
}

module attributes {stable_mosaic.version = 11 : i64} {
  func.func @gat_stats_kernel(%arg0: i32, %arg1: i32, %arg2: memref<40x4xf32, #tpu.memory_space<vmem>>, %arg3: memref<40x128xbf16, #tpu.memory_space<vmem>>, %arg4: memref<128x1xf32, #tpu.memory_space<vmem>>, %arg5: memref<1x4xf32, #tpu.memory_space<vmem>>, %arg6: memref<128x4xf32, #tpu.memory_space<vmem>>) attributes {dimension_semantics = [#tpu.dimension_semantics<parallel>, #tpu.dimension_semantics<arbitrary>], iteration_bounds = array<i64: 1, 1>, scalar_prefetch = 0 : i64, scratch_operands = 0 : i64, tpu.core_type = #tpu.core_type<tc>, window_params = [{transform_indices = @transform_0, window_bounds = array<i64: 40, 4>}, {transform_indices = @transform_1, window_bounds = array<i64: 40, 128>}, {transform_indices = @transform_2, window_bounds = array<i64: 128, 1>}, {pipeline_mode = #tpu.pipeline_mode<synchronous>, transform_indices = @transform_3, window_bounds = array<i64: 1, 4>}, {transform_indices = @transform_4, window_bounds = array<i64: 128, 4>}]} {
    %c0_i32 = arith.constant 0 : i32
    %0 = arith.cmpi eq, %arg1, %c0_i32 : i32
    %1 = arith.extui %0 : i1 to i32
    %c0_i32_0 = arith.constant 0 : i32
    %2 = arith.cmpi ne, %1, %c0_i32_0 : i32
    scf.if %2 {
      %cst_12 = arith.constant 0.000000e+00 : f32
      %17 = vector.broadcast %cst_12 : f32 to vector<128x4xf32>
      %c0_13 = arith.constant 0 : index
      %c0_14 = arith.constant 0 : index
      %18 = vector.load %arg6[%c0_13, %c0_14] : memref<128x4xf32, #tpu.memory_space<vmem>>, vector<128x4xf32>
      tpu.vector_store %arg6[%c0_13, %c0_14], %17 {strides = array<i32>} : memref<128x4xf32, #tpu.memory_space<vmem>>, vector<128x4xf32>,
    } else {
    }
    %c0 = arith.constant 0 : index
    %c0_1 = arith.constant 0 : index
    %3 = vector.load %arg2[%c0, %c0_1] : memref<40x4xf32, #tpu.memory_space<vmem>>, vector<40x4xf32>
    %c0_2 = arith.constant 0 : index
    %c0_3 = arith.constant 0 : index
    %4 = vector.load %arg5[%c0_2, %c0_3] : memref<1x4xf32, #tpu.memory_space<vmem>>, vector<1x4xf32>
    %5 = vector.broadcast %4 : vector<1x4xf32> to vector<40x4xf32>
    %6 = arith.subf %3, %5 : vector<40x4xf32>
    %7 = math.exp %6 : vector<40x4xf32>
    %8 = arith.truncf %7 : vector<40x4xf32> to vector<40x4xbf16>
    %c0_4 = arith.constant 0 : index
    %c0_5 = arith.constant 0 : index
    %9 = vector.load %arg6[%c0_4, %c0_5] : memref<128x4xf32, #tpu.memory_space<vmem>>, vector<128x4xf32>
    %c0_6 = arith.constant 0 : index
    %c0_7 = arith.constant 0 : index
    %10 = vector.load %arg3[%c0_6, %c0_7] : memref<40x128xbf16, #tpu.memory_space<vmem>>, vector<40x128xbf16>
    %cst = arith.constant dense<0.000000e+00> : vector<128x4xf32>
    %11 = tpu.matmul %10, %8, %cst {dimension_numbers = #tpu.dot_dimension_numbers<[0], [0], [1], [1], [0, 1, 1, 1], [], []>} : vector<40x128xbf16>, vector<40x4xbf16>, vector<128x4xf32> -> vector<128x4xf32>
    %12 = arith.addf %9, %11 : vector<128x4xf32>
    %c0_8 = arith.constant 0 : index
    %c0_9 = arith.constant 0 : index
    %13 = vector.load %arg6[%c0_8, %c0_9] : memref<128x4xf32, #tpu.memory_space<vmem>>, vector<128x4xf32>
    tpu.vector_store %arg6[%c0_8, %c0_9], %12 {strides = array<i32>} : memref<128x4xf32, #tpu.memory_space<vmem>>, vector<128x4xf32>,
    %c0_i32_10 = arith.constant 0 : i32
    %14 = arith.cmpi eq, %arg1, %c0_i32_10 : i32
    %15 = arith.extui %14 : i1 to i32
    %c0_i32_11 = arith.constant 0 : i32
    %16 = arith.cmpi ne, %15, %c0_i32_11 : i32
    scf.if %16 {
      %c0_12 = arith.constant 0 : index
      %c0_13 = arith.constant 0 : index
      %17 = vector.load %arg6[%c0_12, %c0_13] : memref<128x4xf32, #tpu.memory_space<vmem>>, vector<128x4xf32>
      %c0_14 = arith.constant 0 : index
      %c0_15 = arith.constant 0 : index
      %18 = vector.load %arg4[%c0_14, %c0_15] : memref<128x1xf32, #tpu.memory_space<vmem>>, vector<128x1xf32>
      %19 = tpu.reciprocal %17 {approx = true} : vector<128x4xf32> -> vector<128x4xf32>
      %20 = vector.broadcast %18 : vector<128x1xf32> to vector<128x4xf32>
      %21 = arith.mulf %20, %19 : vector<128x4xf32>
      %cst_16 = arith.constant 0.000000e+00 : f32
      %22 = vector.broadcast %cst_16 : f32 to vector<128x4xf32>
      %23 = arith.cmpf ogt, %17, %22 : vector<128x4xf32>
      %cst_17 = arith.constant 0.000000e+00 : f32
      %24 = vector.broadcast %cst_17 : f32 to vector<128x4xf32>
      %25 = arith.select %23, %21, %24 : vector<128x4xi1>, vector<128x4xf32>
      %c0_18 = arith.constant 0 : index
      %c0_19 = arith.constant 0 : index
      %26 = vector.load %arg6[%c0_18, %c0_19] : memref<128x4xf32, #tpu.memory_space<vmem>>, vector<128x4xf32>
      tpu.vector_store %arg6[%c0_18, %c0_19], %25 {strides = array<i32>} : memref<128x4xf32, #tpu.memory_space<vmem>>, vector<128x4xf32>,
    } else {
    }
    return
  }
  func.func @transform_0(%arg0: i32, %arg1: i32) -> (i32, i32) {
    %c0_i32 = arith.constant 0 : i32
    %c0_i32_0 = arith.constant 0 : i32
    return %arg1, %c0_i32 : i32, i32
  }
  func.func @transform_1(%arg0: i32, %arg1: i32) -> (i32, i32) {
    %c0_i32 = arith.constant 0 : i32
    return %arg1, %arg0 : i32, i32
  }
  func.func @transform_2(%arg0: i32, %arg1: i32) -> (i32, i32) {
    %c0_i32 = arith.constant 0 : i32
    %c0_i32_0 = arith.constant 0 : i32
    return %arg0, %c0_i32 : i32, i32
  }
  func.func @transform_3(%arg0: i32, %arg1: i32) -> (i32, i32) {
    %c0_i32 = arith.constant 0 : i32
    %c0_i32_0 = arith.constant 0 : i32
    %c0_i32_1 = arith.constant 0 : i32
    return %c0_i32, %c0_i32_0 : i32, i32
  }
  func.func @transform_4(%arg0: i32, %arg1: i32) -> (i32, i32) {
    %c0_i32 = arith.constant 0 : i32
    %c0_i32_0 = arith.constant 0 : i32
    return %arg0, %c0_i32 : i32, i32
  }
}

module attributes {stable_mosaic.version = 11 : i64} {
  func.func @gat_wmsg_kernel(%arg0: i32, %arg1: memref<40x4xf32, #tpu.memory_space<vmem>>, %arg2: memref<40x4xf32, #tpu.memory_space<vmem>>, %arg3: memref<1x4xf32, #tpu.memory_space<vmem>>, %arg4: memref<40x32xbf16, #tpu.memory_space<vmem>>, %arg5: memref<4x32xf32, #tpu.memory_space<vmem>>, %arg6: memref<40x32xbf16, #tpu.memory_space<vmem>>) attributes {dimension_semantics = [#tpu.dimension_semantics<parallel>], iteration_bounds = array<i64: 1>, scalar_prefetch = 0 : i64, scratch_operands = 0 : i64, tpu.core_type = #tpu.core_type<tc>, window_params = [{transform_indices = @transform_0, window_bounds = array<i64: 40, 4>}, {transform_indices = @transform_1, window_bounds = array<i64: 40, 4>}, {pipeline_mode = #tpu.pipeline_mode<synchronous>, transform_indices = @transform_2, window_bounds = array<i64: 1, 4>}, {transform_indices = @transform_3, window_bounds = array<i64: 40, 32>}, {pipeline_mode = #tpu.pipeline_mode<synchronous>, transform_indices = @transform_4, window_bounds = array<i64: 4, 32>}, {transform_indices = @transform_5, window_bounds = array<i64: 40, 32>}]} {
    %c0 = arith.constant 0 : index
    %c0_0 = arith.constant 0 : index
    %0 = vector.load %arg1[%c0, %c0_0] : memref<40x4xf32, #tpu.memory_space<vmem>>, vector<40x4xf32>
    %c0_1 = arith.constant 0 : index
    %c0_2 = arith.constant 0 : index
    %1 = vector.load %arg3[%c0_1, %c0_2] : memref<1x4xf32, #tpu.memory_space<vmem>>, vector<1x4xf32>
    %2 = vector.broadcast %1 : vector<1x4xf32> to vector<40x4xf32>
    %3 = arith.subf %0, %2 : vector<40x4xf32>
    %4 = math.exp %3 : vector<40x4xf32>
    %c0_3 = arith.constant 0 : index
    %c0_4 = arith.constant 0 : index
    %5 = vector.load %arg2[%c0_3, %c0_4] : memref<40x4xf32, #tpu.memory_space<vmem>>, vector<40x4xf32>
    %6 = arith.mulf %4, %5 : vector<40x4xf32>
    %c0_5 = arith.constant 0 : index
    %c0_6 = arith.constant 0 : index
    %7 = vector.load %arg5[%c0_5, %c0_6] : memref<4x32xf32, #tpu.memory_space<vmem>>, vector<4x32xf32>
    %cst = arith.constant dense<0.000000e+00> : vector<40x32xf32>
    %8 = tpu.matmul %6, %7, %cst {dimension_numbers = #tpu.dot_dimension_numbers<[1], [0], [0], [1], [0, 0, 1, 1], [], []>} : vector<40x4xf32>, vector<4x32xf32>, vector<40x32xf32> -> vector<40x32xf32>
    %c0_7 = arith.constant 0 : index
    %c0_8 = arith.constant 0 : index
    %9 = vector.load %arg4[%c0_7, %c0_8] : memref<40x32xbf16, #tpu.memory_space<vmem>>, vector<40x32xbf16>
    %10 = arith.extf %9 : vector<40x32xbf16> to vector<40x32xf32>
    %11 = arith.mulf %10, %8 : vector<40x32xf32>
    %12 = arith.truncf %11 : vector<40x32xf32> to vector<40x32xbf16>
    %c0_9 = arith.constant 0 : index
    %c0_10 = arith.constant 0 : index
    %13 = vector.load %arg6[%c0_9, %c0_10] : memref<40x32xbf16, #tpu.memory_space<vmem>>, vector<40x32xbf16>
    tpu.vector_store %arg6[%c0_9, %c0_10], %12 {strides = array<i32>} : memref<40x32xbf16, #tpu.memory_space<vmem>>, vector<40x32xbf16>,
    return
  }
  func.func @transform_0(%arg0: i32) -> (i32, i32) {
    %c0_i32 = arith.constant 0 : i32
    %c0_i32_0 = arith.constant 0 : i32
    return %arg0, %c0_i32 : i32, i32
  }
  func.func @transform_1(%arg0: i32) -> (i32, i32) {
    %c0_i32 = arith.constant 0 : i32
    %c0_i32_0 = arith.constant 0 : i32
    return %arg0, %c0_i32 : i32, i32
  }
  func.func @transform_2(%arg0: i32) -> (i32, i32) {
    %c0_i32 = arith.constant 0 : i32
    %c0_i32_0 = arith.constant 0 : i32
    %c0_i32_1 = arith.constant 0 : i32
    return %c0_i32, %c0_i32_0 : i32, i32
  }
  func.func @transform_3(%arg0: i32) -> (i32, i32) {
    %c0_i32 = arith.constant 0 : i32
    %c0_i32_0 = arith.constant 0 : i32
    return %arg0, %c0_i32 : i32, i32
  }
  func.func @transform_4(%arg0: i32) -> (i32, i32) {
    %c0_i32 = arith.constant 0 : i32
    %c0_i32_0 = arith.constant 0 : i32
    %c0_i32_1 = arith.constant 0 : i32
    return %c0_i32, %c0_i32_0 : i32, i32
  }
  func.func @transform_5(%arg0: i32) -> (i32, i32) {
    %c0_i32 = arith.constant 0 : i32
    %c0_i32_0 = arith.constant 0 : i32
    return %arg0, %c0_i32 : i32, i32
  }
}

module attributes {stable_mosaic.version = 11 : i64} {
  func.func @gat_aggr_kernel(%arg0: i32, %arg1: i32, %arg2: memref<40x32xbf16, #tpu.memory_space<vmem>>, %arg3: memref<40x128xbf16, #tpu.memory_space<vmem>>, %arg4: memref<128x32xf32, #tpu.memory_space<vmem>>) attributes {dimension_semantics = [#tpu.dimension_semantics<parallel>, #tpu.dimension_semantics<arbitrary>], iteration_bounds = array<i64: 1, 1>, scalar_prefetch = 0 : i64, scratch_operands = 0 : i64, tpu.core_type = #tpu.core_type<tc>, window_params = [{transform_indices = @transform_0, window_bounds = array<i64: 40, 32>}, {transform_indices = @transform_1, window_bounds = array<i64: 40, 128>}, {transform_indices = @transform_2, window_bounds = array<i64: 128, 32>}]} {
    %c0_i32 = arith.constant 0 : i32
    %0 = arith.cmpi eq, %arg1, %c0_i32 : i32
    %1 = arith.extui %0 : i1 to i32
    %c0_i32_0 = arith.constant 0 : i32
    %2 = arith.cmpi ne, %1, %c0_i32_0 : i32
    scf.if %2 {
      %cst_8 = arith.constant 0.000000e+00 : f32
      %9 = vector.broadcast %cst_8 : f32 to vector<128x32xf32>
      %c0_9 = arith.constant 0 : index
      %c0_10 = arith.constant 0 : index
      %10 = vector.load %arg4[%c0_9, %c0_10] : memref<128x32xf32, #tpu.memory_space<vmem>>, vector<128x32xf32>
      tpu.vector_store %arg4[%c0_9, %c0_10], %9 {strides = array<i32>} : memref<128x32xf32, #tpu.memory_space<vmem>>, vector<128x32xf32>,
    } else {
    }
    %c0 = arith.constant 0 : index
    %c0_1 = arith.constant 0 : index
    %3 = vector.load %arg4[%c0, %c0_1] : memref<128x32xf32, #tpu.memory_space<vmem>>, vector<128x32xf32>
    %c0_2 = arith.constant 0 : index
    %c0_3 = arith.constant 0 : index
    %4 = vector.load %arg3[%c0_2, %c0_3] : memref<40x128xbf16, #tpu.memory_space<vmem>>, vector<40x128xbf16>
    %c0_4 = arith.constant 0 : index
    %c0_5 = arith.constant 0 : index
    %5 = vector.load %arg2[%c0_4, %c0_5] : memref<40x32xbf16, #tpu.memory_space<vmem>>, vector<40x32xbf16>
    %cst = arith.constant dense<0.000000e+00> : vector<128x32xf32>
    %6 = tpu.matmul %4, %5, %cst {dimension_numbers = #tpu.dot_dimension_numbers<[0], [0], [1], [1], [0, 1, 1, 1], [], []>} : vector<40x128xbf16>, vector<40x32xbf16>, vector<128x32xf32> -> vector<128x32xf32>
    %7 = arith.addf %3, %6 : vector<128x32xf32>
    %c0_6 = arith.constant 0 : index
    %c0_7 = arith.constant 0 : index
    %8 = vector.load %arg4[%c0_6, %c0_7] : memref<128x32xf32, #tpu.memory_space<vmem>>, vector<128x32xf32>
    tpu.vector_store %arg4[%c0_6, %c0_7], %7 {strides = array<i32>} : memref<128x32xf32, #tpu.memory_space<vmem>>, vector<128x32xf32>,
    return
  }
  func.func @transform_0(%arg0: i32, %arg1: i32) -> (i32, i32) {
    %c0_i32 = arith.constant 0 : i32
    %c0_i32_0 = arith.constant 0 : i32
    return %arg1, %c0_i32 : i32, i32
  }
  func.func @transform_1(%arg0: i32, %arg1: i32) -> (i32, i32) {
    %c0_i32 = arith.constant 0 : i32
    return %arg1, %arg0 : i32, i32
  }
  func.func @transform_2(%arg0: i32, %arg1: i32) -> (i32, i32) {
    %c0_i32 = arith.constant 0 : i32
    %c0_i32_0 = arith.constant 0 : i32
    return %arg0, %c0_i32 : i32, i32
  }
}

module attributes {stable_mosaic.version = 11 : i64} {
  func.func @gat_mlp_kernel(%arg0: i32, %arg1: memref<128x32xf32, #tpu.memory_space<vmem>>, %arg2: memref<32x32xbf16, #tpu.memory_space<vmem>>, %arg3: memref<1x32xf32, #tpu.memory_space<vmem>>, %arg4: memref<1x32xf32, #tpu.memory_space<vmem>>, %arg5: memref<1x32xf32, #tpu.memory_space<vmem>>, %arg6: memref<32x32xbf16, #tpu.memory_space<vmem>>, %arg7: memref<1x32xf32, #tpu.memory_space<vmem>>, %arg8: memref<128x32xbf16, #tpu.memory_space<vmem>>) attributes {dimension_semantics = [#tpu.dimension_semantics<parallel>], iteration_bounds = array<i64: 1>, scalar_prefetch = 0 : i64, scratch_operands = 0 : i64, tpu.core_type = #tpu.core_type<tc>, window_params = [{transform_indices = @transform_0, window_bounds = array<i64: 128, 32>}, {pipeline_mode = #tpu.pipeline_mode<synchronous>, transform_indices = @transform_1, window_bounds = array<i64: 32, 32>}, {pipeline_mode = #tpu.pipeline_mode<synchronous>, transform_indices = @transform_2, window_bounds = array<i64: 1, 32>}, {pipeline_mode = #tpu.pipeline_mode<synchronous>, transform_indices = @transform_3, window_bounds = array<i64: 1, 32>}, {pipeline_mode = #tpu.pipeline_mode<synchronous>, transform_indices = @transform_4, window_bounds = array<i64: 1, 32>}, {pipeline_mode = #tpu.pipeline_mode<synchronous>, transform_indices = @transform_5, window_bounds = array<i64: 32, 32>}, {pipeline_mode = #tpu.pipeline_mode<synchronous>, transform_indices = @transform_6, window_bounds = array<i64: 1, 32>}, {transform_indices = @transform_7, window_bounds = array<i64: 128, 32>}]} {
    %c0 = arith.constant 0 : index
    %c0_0 = arith.constant 0 : index
    %0 = vector.load %arg1[%c0, %c0_0] : memref<128x32xf32, #tpu.memory_space<vmem>>, vector<128x32xf32>
    %1 = arith.truncf %0 : vector<128x32xf32> to vector<128x32xbf16>
    %c0_1 = arith.constant 0 : index
    %c0_2 = arith.constant 0 : index
    %2 = vector.load %arg2[%c0_1, %c0_2] : memref<32x32xbf16, #tpu.memory_space<vmem>>, vector<32x32xbf16>
    %cst = arith.constant dense<0.000000e+00> : vector<128x32xf32>
    %3 = tpu.matmul %1, %2, %cst {dimension_numbers = #tpu.dot_dimension_numbers<[1], [0], [0], [1], [0, 0, 1, 1], [], []>} : vector<128x32xbf16>, vector<32x32xbf16>, vector<128x32xf32> -> vector<128x32xf32>
    %c0_3 = arith.constant 0 : index
    %c0_4 = arith.constant 0 : index
    %4 = vector.load %arg3[%c0_3, %c0_4] : memref<1x32xf32, #tpu.memory_space<vmem>>, vector<1x32xf32>
    %5 = vector.broadcast %4 : vector<1x32xf32> to vector<128x32xf32>
    %6 = arith.addf %3, %5 : vector<128x32xf32>
    %c0_5 = arith.constant 0 : index
    %c0_6 = arith.constant 0 : index
    %7 = vector.load %arg4[%c0_5, %c0_6] : memref<1x32xf32, #tpu.memory_space<vmem>>, vector<1x32xf32>
    %8 = vector.broadcast %7 : vector<1x32xf32> to vector<128x32xf32>
    %9 = arith.mulf %6, %8 : vector<128x32xf32>
    %c0_7 = arith.constant 0 : index
    %c0_8 = arith.constant 0 : index
    %10 = vector.load %arg5[%c0_7, %c0_8] : memref<1x32xf32, #tpu.memory_space<vmem>>, vector<1x32xf32>
    %11 = vector.broadcast %10 : vector<1x32xf32> to vector<128x32xf32>
    %12 = arith.addf %9, %11 : vector<128x32xf32>
    %cst_9 = arith.constant 0.000000e+00 : f32
    %13 = vector.broadcast %cst_9 : f32 to vector<128x32xf32>
    %14 = arith.maximumf %12, %13 : vector<128x32xf32>
    %15 = arith.truncf %14 : vector<128x32xf32> to vector<128x32xbf16>
    %c0_10 = arith.constant 0 : index
    %c0_11 = arith.constant 0 : index
    %16 = vector.load %arg6[%c0_10, %c0_11] : memref<32x32xbf16, #tpu.memory_space<vmem>>, vector<32x32xbf16>
    %cst_12 = arith.constant dense<0.000000e+00> : vector<128x32xf32>
    %17 = tpu.matmul %15, %16, %cst_12 {dimension_numbers = #tpu.dot_dimension_numbers<[1], [0], [0], [1], [0, 0, 1, 1], [], []>} : vector<128x32xbf16>, vector<32x32xbf16>, vector<128x32xf32> -> vector<128x32xf32>
    %c0_13 = arith.constant 0 : index
    %c0_14 = arith.constant 0 : index
    %18 = vector.load %arg7[%c0_13, %c0_14] : memref<1x32xf32, #tpu.memory_space<vmem>>, vector<1x32xf32>
    %19 = vector.broadcast %18 : vector<1x32xf32> to vector<128x32xf32>
    %20 = arith.addf %17, %19 : vector<128x32xf32>
    %cst_15 = arith.constant 5.000000e-01 : f32
    %21 = vector.broadcast %cst_15 : f32 to vector<128x32xf32>
    %22 = arith.mulf %21, %20 : vector<128x32xf32>
    %cst_16 = arith.constant 4.471500e-02 : f32
    %23 = vector.broadcast %cst_16 : f32 to vector<128x32xf32>
    %24 = arith.mulf %23, %20 : vector<128x32xf32>
    %25 = arith.mulf %24, %20 : vector<128x32xf32>
    %26 = arith.mulf %25, %20 : vector<128x32xf32>
    %27 = arith.addf %20, %26 : vector<128x32xf32>
    %cst_17 = arith.constant 0.797884583 : f32
    %28 = vector.broadcast %cst_17 : f32 to vector<128x32xf32>
    %29 = arith.mulf %28, %27 : vector<128x32xf32>
    %30 = math.tanh %29 : vector<128x32xf32>
    %cst_18 = arith.constant 1.000000e+00 : f32
    %31 = vector.broadcast %cst_18 : f32 to vector<128x32xf32>
    %32 = arith.addf %31, %30 : vector<128x32xf32>
    %33 = arith.mulf %22, %32 : vector<128x32xf32>
    %34 = arith.truncf %33 : vector<128x32xf32> to vector<128x32xbf16>
    %c0_19 = arith.constant 0 : index
    %c0_20 = arith.constant 0 : index
    %35 = vector.load %arg8[%c0_19, %c0_20] : memref<128x32xbf16, #tpu.memory_space<vmem>>, vector<128x32xbf16>
    tpu.vector_store %arg8[%c0_19, %c0_20], %34 {strides = array<i32>} : memref<128x32xbf16, #tpu.memory_space<vmem>>, vector<128x32xbf16>,
    return
  }
  func.func @transform_0(%arg0: i32) -> (i32, i32) {
    %c0_i32 = arith.constant 0 : i32
    %c0_i32_0 = arith.constant 0 : i32
    return %arg0, %c0_i32 : i32, i32
  }
  func.func @transform_1(%arg0: i32) -> (i32, i32) {
    %c0_i32 = arith.constant 0 : i32
    %c0_i32_0 = arith.constant 0 : i32
    %c0_i32_1 = arith.constant 0 : i32
    return %c0_i32, %c0_i32_0 : i32, i32
  }
  func.func @transform_2(%arg0: i32) -> (i32, i32) {
    %c0_i32 = arith.constant 0 : i32
    %c0_i32_0 = arith.constant 0 : i32
    %c0_i32_1 = arith.constant 0 : i32
    return %c0_i32, %c0_i32_0 : i32, i32
  }
  func.func @transform_3(%arg0: i32) -> (i32, i32) {
    %c0_i32 = arith.constant 0 : i32
    %c0_i32_0 = arith.constant 0 : i32
    %c0_i32_1 = arith.constant 0 : i32
    return %c0_i32, %c0_i32_0 : i32, i32
  }
  func.func @transform_4(%arg0: i32) -> (i32, i32) {
    %c0_i32 = arith.constant 0 : i32
    %c0_i32_0 = arith.constant 0 : i32
    %c0_i32_1 = arith.constant 0 : i32
    return %c0_i32, %c0_i32_0 : i32, i32
  }
  func.func @transform_5(%arg0: i32) -> (i32, i32) {
    %c0_i32 = arith.constant 0 : i32
    %c0_i32_0 = arith.constant 0 : i32
    %c0_i32_1 = arith.constant 0 : i32
    return %c0_i32, %c0_i32_0 : i32, i32
  }
  func.func @transform_6(%arg0: i32) -> (i32, i32) {
    %c0_i32 = arith.constant 0 : i32
    %c0_i32_0 = arith.constant 0 : i32
    %c0_i32_1 = arith.constant 0 : i32
    return %c0_i32, %c0_i32_0 : i32, i32
  }
  func.func @transform_7(%arg0: i32) -> (i32, i32) {
    %c0_i32 = arith.constant 0 : i32
    %c0_i32_0 = arith.constant 0 : i32
    return %arg0, %c0_i32 : i32, i32
  }
}

module attributes {stable_mosaic.version = 11 : i64} {
  func.func @output_kernel(%arg0: i32, %arg1: memref<128x32xbf16, #tpu.memory_space<vmem>>, %arg2: memref<128x32xbf16, #tpu.memory_space<vmem>>, %arg3: memref<32x32xbf16, #tpu.memory_space<vmem>>, %arg4: memref<1x32xf32, #tpu.memory_space<vmem>>, %arg5: memref<32x32xbf16, #tpu.memory_space<vmem>>, %arg6: memref<1x32xf32, #tpu.memory_space<vmem>>, %arg7: memref<128x32xf32, #tpu.memory_space<vmem>>) attributes {dimension_semantics = [#tpu.dimension_semantics<parallel>], iteration_bounds = array<i64: 1>, scalar_prefetch = 0 : i64, scratch_operands = 0 : i64, tpu.core_type = #tpu.core_type<tc>, window_params = [{transform_indices = @transform_0, window_bounds = array<i64: 128, 32>}, {transform_indices = @transform_1, window_bounds = array<i64: 128, 32>}, {pipeline_mode = #tpu.pipeline_mode<synchronous>, transform_indices = @transform_2, window_bounds = array<i64: 32, 32>}, {pipeline_mode = #tpu.pipeline_mode<synchronous>, transform_indices = @transform_3, window_bounds = array<i64: 1, 32>}, {pipeline_mode = #tpu.pipeline_mode<synchronous>, transform_indices = @transform_4, window_bounds = array<i64: 32, 32>}, {pipeline_mode = #tpu.pipeline_mode<synchronous>, transform_indices = @transform_5, window_bounds = array<i64: 1, 32>}, {transform_indices = @transform_6, window_bounds = array<i64: 128, 32>}]} {
    %c0 = arith.constant 0 : index
    %c0_0 = arith.constant 0 : index
    %0 = vector.load %arg1[%c0, %c0_0] : memref<128x32xbf16, #tpu.memory_space<vmem>>, vector<128x32xbf16>
    %c0_1 = arith.constant 0 : index
    %c0_2 = arith.constant 0 : index
    %1 = vector.load %arg3[%c0_1, %c0_2] : memref<32x32xbf16, #tpu.memory_space<vmem>>, vector<32x32xbf16>
    %cst = arith.constant dense<0.000000e+00> : vector<128x32xf32>
    %2 = tpu.matmul %0, %1, %cst {dimension_numbers = #tpu.dot_dimension_numbers<[1], [0], [0], [1], [0, 0, 1, 1], [], []>} : vector<128x32xbf16>, vector<32x32xbf16>, vector<128x32xf32> -> vector<128x32xf32>
    %c0_3 = arith.constant 0 : index
    %c0_4 = arith.constant 0 : index
    %3 = vector.load %arg4[%c0_3, %c0_4] : memref<1x32xf32, #tpu.memory_space<vmem>>, vector<1x32xf32>
    %4 = vector.broadcast %3 : vector<1x32xf32> to vector<128x32xf32>
    %5 = arith.addf %2, %4 : vector<128x32xf32>
    %c0_5 = arith.constant 0 : index
    %c0_6 = arith.constant 0 : index
    %6 = vector.load %arg2[%c0_5, %c0_6] : memref<128x32xbf16, #tpu.memory_space<vmem>>, vector<128x32xbf16>
    %c0_7 = arith.constant 0 : index
    %c0_8 = arith.constant 0 : index
    %7 = vector.load %arg5[%c0_7, %c0_8] : memref<32x32xbf16, #tpu.memory_space<vmem>>, vector<32x32xbf16>
    %cst_9 = arith.constant dense<0.000000e+00> : vector<128x32xf32>
    %8 = tpu.matmul %6, %7, %cst_9 {dimension_numbers = #tpu.dot_dimension_numbers<[1], [0], [0], [1], [0, 0, 1, 1], [], []>} : vector<128x32xbf16>, vector<32x32xbf16>, vector<128x32xf32> -> vector<128x32xf32>
    %9 = arith.addf %5, %8 : vector<128x32xf32>
    %c0_10 = arith.constant 0 : index
    %c0_11 = arith.constant 0 : index
    %10 = vector.load %arg6[%c0_10, %c0_11] : memref<1x32xf32, #tpu.memory_space<vmem>>, vector<1x32xf32>
    %11 = vector.broadcast %10 : vector<1x32xf32> to vector<128x32xf32>
    %12 = arith.addf %9, %11 : vector<128x32xf32>
    %cst_12 = arith.constant 5.000000e-01 : f32
    %13 = vector.broadcast %cst_12 : f32 to vector<128x32xf32>
    %14 = arith.mulf %13, %12 : vector<128x32xf32>
    %cst_13 = arith.constant 4.471500e-02 : f32
    %15 = vector.broadcast %cst_13 : f32 to vector<128x32xf32>
    %16 = arith.mulf %15, %12 : vector<128x32xf32>
    %17 = arith.mulf %16, %12 : vector<128x32xf32>
    %18 = arith.mulf %17, %12 : vector<128x32xf32>
    %19 = arith.addf %12, %18 : vector<128x32xf32>
    %cst_14 = arith.constant 0.797884583 : f32
    %20 = vector.broadcast %cst_14 : f32 to vector<128x32xf32>
    %21 = arith.mulf %20, %19 : vector<128x32xf32>
    %22 = math.tanh %21 : vector<128x32xf32>
    %cst_15 = arith.constant 1.000000e+00 : f32
    %23 = vector.broadcast %cst_15 : f32 to vector<128x32xf32>
    %24 = arith.addf %23, %22 : vector<128x32xf32>
    %25 = arith.mulf %14, %24 : vector<128x32xf32>
    %c0_16 = arith.constant 0 : index
    %c0_17 = arith.constant 0 : index
    %26 = vector.load %arg7[%c0_16, %c0_17] : memref<128x32xf32, #tpu.memory_space<vmem>>, vector<128x32xf32>
    tpu.vector_store %arg7[%c0_16, %c0_17], %25 {strides = array<i32>} : memref<128x32xf32, #tpu.memory_space<vmem>>, vector<128x32xf32>,
    return
  }
  func.func @transform_0(%arg0: i32) -> (i32, i32) {
    %c0_i32 = arith.constant 0 : i32
    %c0_i32_0 = arith.constant 0 : i32
    return %arg0, %c0_i32 : i32, i32
  }
  func.func @transform_1(%arg0: i32) -> (i32, i32) {
    %c0_i32 = arith.constant 0 : i32
    %c0_i32_0 = arith.constant 0 : i32
    return %arg0, %c0_i32 : i32, i32
  }
  func.func @transform_2(%arg0: i32) -> (i32, i32) {
    %c0_i32 = arith.constant 0 : i32
    %c0_i32_0 = arith.constant 0 : i32
    %c0_i32_1 = arith.constant 0 : i32
    return %c0_i32, %c0_i32_0 : i32, i32
  }
  func.func @transform_3(%arg0: i32) -> (i32, i32) {
    %c0_i32 = arith.constant 0 : i32
    %c0_i32_0 = arith.constant 0 : i32
    %c0_i32_1 = arith.constant 0 : i32
    return %c0_i32, %c0_i32_0 : i32, i32
  }
  func.func @transform_4(%arg0: i32) -> (i32, i32) {
    %c0_i32 = arith.constant 0 : i32
    %c0_i32_0 = arith.constant 0 : i32
    %c0_i32_1 = arith.constant 0 : i32
    return %c0_i32, %c0_i32_0 : i32, i32
  }
  func.func @transform_5(%arg0: i32) -> (i32, i32) {
    %c0_i32 = arith.constant 0 : i32
    %c0_i32_0 = arith.constant 0 : i32
    %c0_i32_1 = arith.constant 0 : i32
    return %c0_i32, %c0_i32_0 : i32, i32
  }
  func.func @transform_6(%arg0: i32) -> (i32, i32) {
    %c0_i32 = arith.constant 0 : i32
    %c0_i32_0 = arith.constant 0 : i32
    return %arg0, %c0_i32 : i32, i32
  }
}

</mosaic_0001>

<llo_original>
// kernel: qagnn_message_passing_forward.14
$region0: #{qagnn_message_passing_forward.14}
  #allocation0 [shape = 'u32[]', space=smem, size = 0x4, offset = 0x4, fixed_abs, tag = 'smem constant byte address 0x4 - core index']
  #allocation1 [shape = 'u32[72,128]{1,0:T(1,128)}', space=vmem, size = 0x9000, scoped, tag = 'internal scratch']
  %s0 = inlined_call_operand.vmem [shape: bf16[40,15], index: 0, kind: input, shape index: {}]
  %s1 = inlined_call_operand.vmem [shape: bf16[15,32], index: 1, kind: input, shape index: {}]
  %s2 = inlined_call_operand.vmem [shape: f32[1,32], index: 2, kind: input, shape index: {}]
  %s3 = inlined_call_operand.vmem [shape: f32[1,32], index: 3, kind: input, shape index: {}]
  %s4 = inlined_call_operand.vmem [shape: f32[1,32], index: 4, kind: input, shape index: {}]
  %s5 = inlined_call_operand.vmem [shape: bf16[32,32], index: 5, kind: input, shape index: {}]
  %s6 = inlined_call_operand.vmem [shape: f32[1,32], index: 6, kind: input, shape index: {}]
  %s7 = inlined_call_operand.vmem [shape: bf16[40,32], index: 7, kind: output, shape index: {}]
  %s8 = sld [smem:[#allocation0]]
  $region38: #{qagnn_message_passing_forward.14} parent=0
    _
  %s10 = ssub.s32 1, %s8
  %s11 = scalar_select 0, %s10, %s8
  // Predicated region
  $region2: #{qagnn_message_passing_forward.14} parent=0 // pred_check
    _
  $region3: #{qagnn_message_passing_forward.14} parent=0 // pred_check_branch
    %13 = sbr.rel (0) target = $region5
  $region4: #{qagnn_message_passing_forward.14} parent=0 // pred_region
    _
  $region5: #{qagnn_message_passing_forward.14} parent=0 // pred_fallthru
    _
  // Predicated region
  $region6: #{qagnn_message_passing_forward.14} parent=0 // pred_check
    _
  $region7: #{qagnn_message_passing_forward.14} parent=0 // pred_check_branch
    %15 = sbr.rel (0) target = $region9
  $region8: #{qagnn_message_passing_forward.14} parent=0 // pred_region
    _
  $region9: #{qagnn_message_passing_forward.14} parent=0 // pred_fallthru
    _
  // Predicated region
  $region10: #{qagnn_message_passing_forward.14} parent=0 // pred_check
    _
  $region11: #{qagnn_message_passing_forward.14} parent=0 // pred_check_branch
    %17 = sbr.rel (0) target = $region13
  $region12: #{qagnn_message_passing_forward.14} parent=0 // pred_region
    _
  $region13: #{qagnn_message_passing_forward.14} parent=0 // pred_fallthru
    _
  // Predicated region
  $region14: #{qagnn_message_passing_forward.14} parent=0 // pred_check
    _
  $region15: #{qagnn_message_passing_forward.14} parent=0 // pred_check_branch
    %19 = sbr.rel (0) target = $region17
  $region16: #{qagnn_message_passing_forward.14} parent=0 // pred_region
    _
  $region17: #{qagnn_message_passing_forward.14} parent=0 // pred_fallthru
    _
  // Predicated region
  $region18: #{qagnn_message_passing_forward.14} parent=0 // pred_check
    _
  $region19: #{qagnn_message_passing_forward.14} parent=0 // pred_check_branch
    %21 = sbr.rel (0) target = $region21
  $region20: #{qagnn_message_passing_forward.14} parent=0 // pred_region
    _
  $region21: #{qagnn_message_passing_forward.14} parent=0 // pred_fallthru
    _
  // Predicated region
  $region22: #{qagnn_message_passing_forward.14} parent=0 // pred_check
    _
  $region23: #{qagnn_message_passing_forward.14} parent=0 // pred_check_branch
    %23 = sbr.rel (0) target = $region25
  $region24: #{qagnn_message_passing_forward.14} parent=0 // pred_region
    _
  $region25: #{qagnn_message_passing_forward.14} parent=0 // pred_fallthru
    _
  // Predicated region
  $region26: #{qagnn_message_passing_forward.14} parent=0 // pred_check
    _
  $region27: #{qagnn_message_passing_forward.14} parent=0 // pred_check_branch
    %25 = sbr.rel (0) target = $region29
  $region28: #{qagnn_message_passing_forward.14} parent=0 // pred_region
    _
  $region29: #{qagnn_message_passing_forward.14} parent=0 // pred_fallthru
    _
  %v27 = vld [vmem:[%s0] sm:$0xf]
  %v28 = vld [vmem:[%s0 + $0x4] sm:$0xf]
  %v29 = vld [vmem:[%s0 + $0x8] sm:$0xf]
  %v30 = vld [vmem:[%s0 + $0xc] sm:$0xf]
  %v31 = vld [vmem:[%s0 + $0x10] sm:$0xf]
  %v32 = vld [vmem:[%s1] sm:$0xf]
  %v33 = vld [vmem:[%s1 + $0x4] sm:$0xf]
  %v34 = vld [vmem:[%s2] sm:$0x1]
  %v36 = vperm.slane %v34, 0
  %v43 = vunpack.c.l.b16 %v27
  %v44 = vunpack.c.l.b16 %v28
  %v45 = vunpack.c.l.b16 %v29
  %v46 = vunpack.c.l.b16 %v30
  %v47 = vunpack.c.l.b16 %v31
  %v48 = vpack.c.b16 %v44, %v43
  %v49 = vpack.c.b16 %v46, %v45
  %v50 = vpack.c.b16 %v47, %v47
  %v53 = vunpack.c.l.b16 %v32
  %v54 = vunpack.c.l.b16 %v33
  %v55 = vpack.c.b16 %v54, %v53
  %vm56 = vcmask 121856
  %v58 = vsel %vm56, %v48, 0
  %v61 = vsel %vm56, %v49, 0
  %v64 = vsel %vm56, %v50, 0
  %vm66 = vcmask 1046528
  %vm67 = vcmask 1047552
  %v68 = vsel %vm66, 4294967295, 65535
  %v69 = vsel %vm67, %v68, 0
  %v71 = vand.u32 %v55, %v69
  %73 = vmatpush.bf16.msra.mxu0 0
  %74 = vmatpush.bf16.msra.mxu0 0
  %75 = vmatpush.bf16.msra.mxu0 0
  %76 = vmatpush.bf16.msra.mxu0 0
  %77 = vmatpush.bf16.msra.mxu0 0
  %78 = vmatpush.bf16.msra.mxu0 0
  %79 = vmatpush.bf16.msra.mxu0 0
  %80 = vmatpush.bf16.msra.mxu0 %v71
  %81 = vmatmul.bf16.gmra.mxu0 %v58
  %v82 = vpop.f32.mrf.mxu0
  %v83 = vadd.f32 %v36, %v82
  %v84 = vpop.f32.mrf.mxu0
  %v85 = vadd.f32 %v36, %v84
  %86 = vmatmul.bf16.gmra.mxu0 %v61
  %v87 = vpop.f32.mrf.mxu0
  %v88 = vadd.f32 %v36, %v87
  %v89 = vpop.f32.mrf.mxu0
  %v90 = vadd.f32 %v36, %v89
  %91 = vmatmul.bf16.gmra.mxu0 %v64
  %v92 = vpop.f32.mrf.mxu0
  %v93 = vadd.f32 %v36, %v92
  %v94 = vpop.f32.mrf.mxu0
  %95 = vdwg.mxu0
  %v96 = vld [vmem:[%s3] sm:$0x1]
  %v98 = vperm.slane %v96, 0
  %v100 = vmul.f32 %v83, %v98
  %v101 = vmul.f32 %v85, %v98
  %v102 = vmul.f32 %v88, %v98
  %v103 = vmul.f32 %v90, %v98
  %v104 = vmul.f32 %v93, %v98
  %v105 = vld [vmem:[%s4] sm:$0x1]
  %v107 = vperm.slane %v105, 0
  %v109 = vadd.f32 %v100, %v107
  %v110 = vadd.f32 %v101, %v107
  %v111 = vadd.f32 %v102, %v107
  %v112 = vadd.f32 %v103, %v107
  %v113 = vadd.f32 %v104, %v107
  %v114 = vmax.f32 %v109, 0.0
  %v115 = vmax.f32 %v110, 0.0
  %v116 = vmax.f32 %v111, 0.0
  %v117 = vmax.f32 %v112, 0.0
  %v118 = vmax.f32 %v113, 0.0
  %v119 = vpack.c.bf16 %v115, %v114
  %v120 = vpack.c.bf16 %v117, %v116
  %v121 = vpack.c.bf16 %v118, %v118
  %v122 = vld [vmem:[%s5] sm:$0xf]
  %v123 = vld [vmem:[%s5 + $0x4] sm:$0xf]
  %v124 = vld [vmem:[%s5 + $0x8] sm:$0xf]
  %v125 = vld [vmem:[%s5 + $0xc] sm:$0xf]
  %v126 = vld [vmem:[%s6] sm:$0x1]
  %v128 = vperm.slane %v126, 0
  %v134 = vunpack.c.l.b16 %v122
  %v135 = vunpack.c.l.b16 %v123
  %v136 = vunpack.c.l.b16 %v124
  %v137 = vunpack.c.l.b16 %v125
  %v138 = vpack.c.b16 %v135, %v134
  %v139 = vpack.c.b16 %v137, %v136
  %vm142 = vcmask 261120
  %v144 = vsel %vm142, %v119, 0
  %v147 = vsel %vm142, %v120, 0
  %v150 = vsel %vm142, %v121, 0
  %152 = vmatpush.bf16.msra.mxu0 0
  %153 = vmatpush.bf16.msra.mxu0 0
  %154 = vmatpush.bf16.msra.mxu0 0
  %155 = vmatpush.bf16.msra.mxu0 0
  %156 = vmatpush.bf16.msra.mxu0 0
  %157 = vmatpush.bf16.msra.mxu0 0
  %158 = vmatpush.bf16.msra.mxu0 %v139
  %159 = vmatpush.bf16.msra.mxu0 %v138
  %160 = vmatmul.bf16.gmra.mxu0 %v144
  %v161 = vpop.f32.mrf.mxu0
  %v162 = vadd.f32 %v128, %v161
  %v163 = vpop.f32.mrf.mxu0
  %v164 = vadd.f32 %v128, %v163
  %165 = vmatmul.bf16.gmra.mxu0 %v147
  %v166 = vpop.f32.mrf.mxu0
  %v167 = vadd.f32 %v128, %v166
  %v168 = vpop.f32.mrf.mxu0
  %v169 = vadd.f32 %v128, %v168
  %170 = vmatmul.bf16.gmra.mxu0 %v150
  %v171 = vpop.f32.mrf.mxu0
  %v172 = vadd.f32 %v128, %v171
  %v173 = vpop.f32.mrf.mxu0
  %174 = vdwg.mxu0
  %v175 = vpack.c.bf16 %v162, %v162
  %v176 = vpack.c.bf16 %v164, %v164
  %v177 = vpack.c.bf16 %v167, %v167
  %v178 = vpack.c.bf16 %v169, %v169
  %v179 = vpack.c.bf16 %v172, %v172
  %vm180 = vcmask 257024
  %181 = vst.msk [vmem:[%s7] sm:$0xf] %vm180, %v175
  %182 = vst.msk [vmem:[%s7 + $0x4] sm:$0xf] %vm180, %v176
  %183 = vst.msk [vmem:[%s7 + $0x8] sm:$0xf] %vm180, %v177
  %184 = vst.msk [vmem:[%s7 + $0xc] sm:$0xf] %vm180, %v178
  %185 = vst.msk [vmem:[%s7 + $0x10] sm:$0xf] %vm180, %v179
  // Predicated region
  $region30: #{qagnn_message_passing_forward.14} parent=0 // pred_check
    _
  $region31: #{qagnn_message_passing_forward.14} parent=0 // pred_check_branch
    %187 = sbr.rel (0) target = $region33
  $region32: #{qagnn_message_passing_forward.14} parent=0 // pred_region
    _
  $region33: #{qagnn_message_passing_forward.14} parent=0 // pred_fallthru
    _
  // Predicated region
  $region34: #{qagnn_message_passing_forward.14} parent=0 // pred_check
    _
  $region35: #{qagnn_message_passing_forward.14} parent=0 // pred_check_branch
    %189 = sbr.rel (0) target = $region37
  $region36: #{qagnn_message_passing_forward.14} parent=0 // pred_region
    _
  $region37: #{qagnn_message_passing_forward.14} parent=0 // pred_fallthru
    _

// kernel: qagnn_message_passing_forward.13
$region0: #{qagnn_message_passing_forward.13}
  #allocation0 [shape = 'u32[]', space=smem, size = 0x4, offset = 0x4, fixed_abs, tag = 'smem constant byte address 0x4 - core index']
  #allocation1 [shape = 'u32[72,128]{1,0:T(1,128)}', space=vmem, size = 0x9000, scoped, tag = 'internal scratch']
  %s0 = inlined_call_operand.vmem [shape: bf16[128,4], index: 0, kind: input, shape index: {}]
  %s1 = inlined_call_operand.vmem [shape: f32[128,1], index: 1, kind: input, shape index: {}]
  %s2 = inlined_call_operand.vmem [shape: f32[1,16], index: 2, kind: input, shape index: {}]
  %s3 = inlined_call_operand.vmem [shape: bf16[4,16], index: 3, kind: input, shape index: {}]
  %s4 = inlined_call_operand.vmem [shape: f32[1,16], index: 4, kind: input, shape index: {}]
  %s5 = inlined_call_operand.vmem [shape: bf16[16,16], index: 5, kind: input, shape index: {}]
  %s6 = inlined_call_operand.vmem [shape: f32[1,16], index: 6, kind: input, shape index: {}]
  %s7 = inlined_call_operand.vmem [shape: bf16[128,32], index: 7, kind: output, shape index: {}]
  %s8 = sld [smem:[#allocation0]]
  $region38: #{qagnn_message_passing_forward.13} parent=0
    _
  %s10 = ssub.s32 1, %s8
  %s11 = scalar_select 0, %s10, %s8
  // Predicated region
  $region2: #{qagnn_message_passing_forward.13} parent=0 // pred_check
    _
  $region3: #{qagnn_message_passing_forward.13} parent=0 // pred_check_branch
    %13 = sbr.rel (0) target = $region5
  $region4: #{qagnn_message_passing_forward.13} parent=0 // pred_region
    _
  $region5: #{qagnn_message_passing_forward.13} parent=0 // pred_fallthru
    _
  // Predicated region
  $region6: #{qagnn_message_passing_forward.13} parent=0 // pred_check
    _
  $region7: #{qagnn_message_passing_forward.13} parent=0 // pred_check_branch
    %15 = sbr.rel (0) target = $region9
  $region8: #{qagnn_message_passing_forward.13} parent=0 // pred_region
    _
  $region9: #{qagnn_message_passing_forward.13} parent=0 // pred_fallthru
    _
  // Predicated region
  $region10: #{qagnn_message_passing_forward.13} parent=0 // pred_check
    _
  $region11: #{qagnn_message_passing_forward.13} parent=0 // pred_check_branch
    %17 = sbr.rel (0) target = $region13
  $region12: #{qagnn_message_passing_forward.13} parent=0 // pred_region
    _
  $region13: #{qagnn_message_passing_forward.13} parent=0 // pred_fallthru
    _
  // Predicated region
  $region14: #{qagnn_message_passing_forward.13} parent=0 // pred_check
    _
  $region15: #{qagnn_message_passing_forward.13} parent=0 // pred_check_branch
    %19 = sbr.rel (0) target = $region17
  $region16: #{qagnn_message_passing_forward.13} parent=0 // pred_region
    _
  $region17: #{qagnn_message_passing_forward.13} parent=0 // pred_fallthru
    _
  // Predicated region
  $region18: #{qagnn_message_passing_forward.13} parent=0 // pred_check
    _
  $region19: #{qagnn_message_passing_forward.13} parent=0 // pred_check_branch
    %21 = sbr.rel (0) target = $region21
  $region20: #{qagnn_message_passing_forward.13} parent=0 // pred_region
    _
  $region21: #{qagnn_message_passing_forward.13} parent=0 // pred_fallthru
    _
  // Predicated region
  $region22: #{qagnn_message_passing_forward.13} parent=0 // pred_check
    _
  $region23: #{qagnn_message_passing_forward.13} parent=0 // pred_check_branch
    %23 = sbr.rel (0) target = $region25
  $region24: #{qagnn_message_passing_forward.13} parent=0 // pred_region
    _
  $region25: #{qagnn_message_passing_forward.13} parent=0 // pred_fallthru
    _
  // Predicated region
  $region26: #{qagnn_message_passing_forward.13} parent=0 // pred_check
    _
  $region27: #{qagnn_message_passing_forward.13} parent=0 // pred_check_branch
    %25 = sbr.rel (0) target = $region29
  $region28: #{qagnn_message_passing_forward.13} parent=0 // pred_region
    _
  $region29: #{qagnn_message_passing_forward.13} parent=0 // pred_fallthru
    _
  %v27 = vld [vmem:[%s0] sm:$0xf]
  %v28 = vld [vmem:[%s0 + $0x4] sm:$0xf]
  %v29 = vld [vmem:[%s0 + $0x8] sm:$0xf]
  %v30 = vld [vmem:[%s0 + $0xc] sm:$0xf]
  %v31 = vld [vmem:[%s0 + $0x10] sm:$0xf]
  %v32 = vld [vmem:[%s0 + $0x14] sm:$0xf]
  %v33 = vld [vmem:[%s0 + $0x18] sm:$0xf]
  %v34 = vld [vmem:[%s0 + $0x1c] sm:$0xf]
  %v35 = vld [vmem:[%s0 + $0x20] sm:$0xf]
  %v36 = vld [vmem:[%s0 + $0x24] sm:$0xf]
  %v37 = vld [vmem:[%s0 + $0x28] sm:$0xf]
  %v38 = vld [vmem:[%s0 + $0x2c] sm:$0xf]
  %v39 = vld [vmem:[%s0 + $0x30] sm:$0xf]
  %v40 = vld [vmem:[%s0 + $0x34] sm:$0xf]
  %v41 = vld [vmem:[%s0 + $0x38] sm:$0xf]
  %v42 = vld [vmem:[%s0 + $0x3c] sm:$0xf]
  %v43 = vld [vmem:[%s3] sm:$0x3]
  %v44 = vld [vmem:[%s4] sm:$0x1]
  %v46 = vperm.slane %v44, 0
  %v64 = vunpack.c.l.b16 %v27
  %v65 = vunpack.c.l.b16 %v28
  %v66 = vunpack.c.l.b16 %v29
  %v67 = vunpack.c.l.b16 %v30
  %v68 = vunpack.c.l.b16 %v31
  %v69 = vunpack.c.l.b16 %v32
  %v70 = vunpack.c.l.b16 %v33
  %v71 = vunpack.c.l.b16 %v34
  %v72 = vunpack.c.l.b16 %v35
  %v73 = vunpack.c.l.b16 %v36
  %v74 = vunpack.c.l.b16 %v37
  %v75 = vunpack.c.l.b16 %v38
  %v76 = vunpack.c.l.b16 %v39
  %v77 = vunpack.c.l.b16 %v40
  %v78 = vunpack.c.l.b16 %v41
  %v79 = vunpack.c.l.b16 %v42
  %v80 = vpack.c.b16 %v65, %v64
  %v81 = vpack.c.b16 %v67, %v66
  %v82 = vpack.c.b16 %v69, %v68
  %v83 = vpack.c.b16 %v71, %v70
  %v84 = vpack.c.b16 %v73, %v72
  %v85 = vpack.c.b16 %v75, %v74
  %v86 = vpack.c.b16 %v77, %v76
  %v87 = vpack.c.b16 %v79, %v78
  %vm88 = vcmask 31744
  %v90 = vsel %vm88, %v80, 0
  %v93 = vsel %vm88, %v81, 0
  %v96 = vsel %vm88, %v82, 0
  %v99 = vsel %vm88, %v83, 0
  %v102 = vsel %vm88, %v84, 0
  %v105 = vsel %vm88, %v85, 0
  %v108 = vsel %vm88, %v86, 0
  %v111 = vsel %vm88, %v87, 0
  %vm113 = vcmask 1041408
  %v115 = vsel %vm113, %v43, 0
  %117 = vmatpush.bf16.msra.mxu0 0
  %118 = vmatpush.bf16.msra.mxu0 0
  %119 = vmatpush.bf16.msra.mxu0 0
  %120 = vmatpush.bf16.msra.mxu0 0
  %121 = vmatpush.bf16.msra.mxu0 0
  %122 = vmatpush.bf16.msra.mxu0 0
  %123 = vmatpush.bf16.msra.mxu0 0
  %124 = vmatpush.bf16.msra.mxu0 %v115
  %125 = vmatmul.bf16.gmra.mxu0 %v90
  %v126 = vpop.f32.mrf.mxu0
  %v127 = vadd.f32 %v46, %v126
  %v128 = vpop.f32.mrf.mxu0
  %v129 = vadd.f32 %v46, %v128
  %130 = vmatmul.bf16.gmra.mxu0 %v93
  %v131 = vpop.f32.mrf.mxu0
  %v132 = vadd.f32 %v46, %v131
  %v133 = vpop.f32.mrf.mxu0
  %v134 = vadd.f32 %v46, %v133
  %135 = vmatmul.bf16.gmra.mxu0 %v96
  %v136 = vpop.f32.mrf.mxu0
  %v137 = vadd.f32 %v46, %v136
  %v138 = vpop.f32.mrf.mxu0
  %v139 = vadd.f32 %v46, %v138
  %140 = vmatmul.bf16.gmra.mxu0 %v99
  %v141 = vpop.f32.mrf.mxu0
  %v142 = vadd.f32 %v46, %v141
  %v143 = vpop.f32.mrf.mxu0
  %v144 = vadd.f32 %v46, %v143
  %145 = vmatmul.bf16.gmra.mxu0 %v102
  %v146 = vpop.f32.mrf.mxu0
  %v147 = vadd.f32 %v46, %v146
  %v148 = vpop.f32.mrf.mxu0
  %v149 = vadd.f32 %v46, %v148
  %150 = vmatmul.bf16.gmra.mxu0 %v105
  %v151 = vpop.f32.mrf.mxu0
  %v152 = vadd.f32 %v46, %v151
  %v153 = vpop.f32.mrf.mxu0
  %v154 = vadd.f32 %v46, %v153
  %155 = vmatmul.bf16.gmra.mxu0 %v108
  %v156 = vpop.f32.mrf.mxu0
  %v157 = vadd.f32 %v46, %v156
  %v158 = vpop.f32.mrf.mxu0
  %v159 = vadd.f32 %v46, %v158
  %160 = vmatmul.bf16.gmra.mxu0 %v111
  %v161 = vpop.f32.mrf.mxu0
  %v162 = vadd.f32 %v46, %v161
  %v163 = vpop.f32.mrf.mxu0
  %v164 = vadd.f32 %v46, %v163
  %165 = vdwg.mxu0
  %v166 = vmul.f32 %v127, 0.5
  %v167 = vmul.f32 %v129, 0.5
  %v168 = vmul.f32 %v132, 0.5
  %v169 = vmul.f32 %v134, 0.5
  %v170 = vmul.f32 %v137, 0.5
  %v171 = vmul.f32 %v139, 0.5
  %v172 = vmul.f32 %v142, 0.5
  %v173 = vmul.f32 %v144, 0.5
  %v174 = vmul.f32 %v147, 0.5
  %v175 = vmul.f32 %v149, 0.5
  %v176 = vmul.f32 %v152, 0.5
  %v177 = vmul.f32 %v154, 0.5
  %v178 = vmul.f32 %v157, 0.5
  %v179 = vmul.f32 %v159, 0.5
  %v180 = vmul.f32 %v162, 0.5
  %v181 = vmul.f32 %v164, 0.5
  %v182 = vmul.f32 %v127, 0.044715
  %v183 = vmul.f32 %v129, 0.044715
  %v184 = vmul.f32 %v132, 0.044715
  %v185 = vmul.f32 %v134, 0.044715
  %v186 = vmul.f32 %v137, 0.044715
  %v187 = vmul.f32 %v139, 0.044715
  %v188 = vmul.f32 %v142, 0.044715
  %v189 = vmul.f32 %v144, 0.044715
  %v190 = vmul.f32 %v147, 0.044715
  %v191 = vmul.f32 %v149, 0.044715
  %v192 = vmul.f32 %v152, 0.044715
  %v193 = vmul.f32 %v154, 0.044715
  %v194 = vmul.f32 %v157, 0.044715
  %v195 = vmul.f32 %v159, 0.044715
  %v196 = vmul.f32 %v162, 0.044715
  %v197 = vmul.f32 %v164, 0.044715
  %v198 = vmul.f32 %v182, %v127
  %v199 = vmul.f32 %v183, %v129
  %v200 = vmul.f32 %v184, %v132
  %v201 = vmul.f32 %v185, %v134
  %v202 = vmul.f32 %v186, %v137
  %v203 = vmul.f32 %v187, %v139
  %v204 = vmul.f32 %v188, %v142
  %v205 = vmul.f32 %v189, %v144
  %v206 = vmul.f32 %v190, %v147
  %v207 = vmul.f32 %v191, %v149
  %v208 = vmul.f32 %v192, %v152
  %v209 = vmul.f32 %v193, %v154
  %v210 = vmul.f32 %v194, %v157
  %v211 = vmul.f32 %v195, %v159
  %v212 = vmul.f32 %v196, %v162
  %v213 = vmul.f32 %v197, %v164
  %v214 = vmul.f32 %v198, %v127
  %v215 = vmul.f32 %v199, %v129
  %v216 = vmul.f32 %v200, %v132
  %v217 = vmul.f32 %v201, %v134
  %v218 = vmul.f32 %v202, %v137
  %v219 = vmul.f32 %v203, %v139
  %v220 = vmul.f32 %v204, %v142
  %v221 = vmul.f32 %v205, %v144
  %v222 = vmul.f32 %v206, %v147
  %v223 = vmul.f32 %v207, %v149
  %v224 = vmul.f32 %v208, %v152
  %v225 = vmul.f32 %v209, %v154
  %v226 = vmul.f32 %v210, %v157
  %v227 = vmul.f32 %v211, %v159
  %v228 = vmul.f32 %v212, %v162
  %v229 = vmul.f32 %v213, %v164
  %v230 = vadd.f32 %v127, %v214
  %v231 = vadd.f32 %v129, %v215
  %v232 = vadd.f32 %v132, %v216
  %v233 = vadd.f32 %v134, %v217
  %v234 = vadd.f32 %v137, %v218
  %v235 = vadd.f32 %v139, %v219
  %v236 = vadd.f32 %v142, %v220
  %v237 = vadd.f32 %v144, %v221
  %v238 = vadd.f32 %v147, %v222
  %v239 = vadd.f32 %v149, %v223
  %v240 = vadd.f32 %v152, %v224
  %v241 = vadd.f32 %v154, %v225
  %v242 = vadd.f32 %v157, %v226
  %v243 = vadd.f32 %v159, %v227
  %v244 = vadd.f32 %v162, %v228
  %v245 = vadd.f32 %v164, %v229
  %v246 = vmul.f32 %v230, 0.7978846
  %v247 = vmul.f32 %v231, 0.7978846
  %v248 = vmul.f32 %v232, 0.7978846
  %v249 = vmul.f32 %v233, 0.7978846
  %v250 = vmul.f32 %v234, 0.7978846
  %v251 = vmul.f32 %v235, 0.7978846
  %v252 = vmul.f32 %v236, 0.7978846
  %v253 = vmul.f32 %v237, 0.7978846
  %v254 = vmul.f32 %v238, 0.7978846
  %v255 = vmul.f32 %v239, 0.7978846
  %v256 = vmul.f32 %v240, 0.7978846
  %v257 = vmul.f32 %v241, 0.7978846
  %v258 = vmul.f32 %v242, 0.7978846
  %v259 = vmul.f32 %v243, 0.7978846
  %v260 = vmul.f32 %v244, 0.7978846
  %v261 = vmul.f32 %v245, 0.7978846
  %v262 = vtanh.pop %v246
  %v263 = vtanh.pop %v247
  %v264 = vtanh.pop %v248
  %v265 = vtanh.pop %v249
  %v266 = vtanh.pop %v250
  %v267 = vtanh.pop %v251
  %v268 = vtanh.pop %v252
  %v269 = vtanh.pop %v253
  %v270 = vtanh.pop %v254
  %v271 = vtanh.pop %v255
  %v272 = vtanh.pop %v256
  %v273 = vtanh.pop %v257
  %v274 = vtanh.pop %v258
  %v275 = vtanh.pop %v259
  %v276 = vtanh.pop %v260
  %v277 = vtanh.pop %v261
  %v278 = vadd.f32 %v262, 1.0
  %v279 = vadd.f32 %v263, 1.0
  %v280 = vadd.f32 %v264, 1.0
  %v281 = vadd.f32 %v265, 1.0
  %v282 = vadd.f32 %v266, 1.0
  %v283 = vadd.f32 %v267, 1.0
  %v284 = vadd.f32 %v268, 1.0
  %v285 = vadd.f32 %v269, 1.0
  %v286 = vadd.f32 %v270, 1.0
  %v287 = vadd.f32 %v271, 1.0
  %v288 = vadd.f32 %v272, 1.0
  %v289 = vadd.f32 %v273, 1.0
  %v290 = vadd.f32 %v274, 1.0
  %v291 = vadd.f32 %v275, 1.0
  %v292 = vadd.f32 %v276, 1.0
  %v293 = vadd.f32 %v277, 1.0
  %v294 = vmul.f32 %v166, %v278
  %v295 = vmul.f32 %v167, %v279
  %v296 = vmul.f32 %v168, %v280
  %v297 = vmul.f32 %v169, %v281
  %v298 = vmul.f32 %v170, %v282
  %v299 = vmul.f32 %v171, %v283
  %v300 = vmul.f32 %v172, %v284
  %v301 = vmul.f32 %v173, %v285
  %v302 = vmul.f32 %v174, %v286
  %v303 = vmul.f32 %v175, %v287
  %v304 = vmul.f32 %v176, %v288
  %v305 = vmul.f32 %v177, %v289
  %v306 = vmul.f32 %v178, %v290
  %v307 = vmul.f32 %v179, %v291
  %v308 = vmul.f32 %v180, %v292
  %v309 = vmul.f32 %v181, %v293
  %v310 = vld [vmem:[%s2] sm:$0x1]
  %v311 = vld [vmem:[%s1] sm:$0xff]
  %v312 = vld [vmem:[%s1 + $0x8] sm:$0xff]
  %v313 = vld [vmem:[%s1 + $0x10] sm:$0xff]
  %v314 = vld [vmem:[%s1 + $0x18] sm:$0xff]
  %v315 = vld [vmem:[%s1 + $0x20] sm:$0xff]
  %v316 = vld [vmem:[%s1 + $0x28] sm:$0xff]
  %v317 = vld [vmem:[%s1 + $0x30] sm:$0xff]
  %v318 = vld [vmem:[%s1 + $0x38] sm:$0xff]
  %v319 = vld [vmem:[%s1 + $0x40] sm:$0xff]
  %v320 = vld [vmem:[%s1 + $0x48] sm:$0xff]
  %v321 = vld [vmem:[%s1 + $0x50] sm:$0xff]
  %v322 = vld [vmem:[%s1 + $0x58] sm:$0xff]
  %v323 = vld [vmem:[%s1 + $0x60] sm:$0xff]
  %v324 = vld [vmem:[%s1 + $0x68] sm:$0xff]
  %v325 = vld [vmem:[%s1 + $0x70] sm:$0xff]
  %v326 = vld [vmem:[%s1 + $0x78] sm:$0xff]
  %v328 = vperm.slane %v310, 0
  %331 = vset.pattern.permute.xlu0 0
  %332 = vperm.xlu0 %331, %v311
  %v333 = vpop.permute.xlu0 %332
  %336 = vset.pattern.permute.xlu0 0
  %337 = vperm.xlu0 %336, %v312
  %v338 = vpop.permute.xlu0 %337
  %341 = vset.pattern.permute.xlu0 0
  %342 = vperm.xlu0 %341, %v313
  %v343 = vpop.permute.xlu0 %342
  %346 = vset.pattern.permute.xlu0 0
  %347 = vperm.xlu0 %346, %v314
  %v348 = vpop.permute.xlu0 %347
  %351 = vset.pattern.permute.xlu0 0
  %352 = vperm.xlu0 %351, %v315
  %v353 = vpop.permute.xlu0 %352
  %356 = vset.pattern.permute.xlu0 0
  %357 = vperm.xlu0 %356, %v316
  %v358 = vpop.permute.xlu0 %357
  %361 = vset.pattern.permute.xlu0 0
  %362 = vperm.xlu0 %361, %v317
  %v363 = vpop.permute.xlu0 %362
  %366 = vset.pattern.permute.xlu0 0
  %367 = vperm.xlu0 %366, %v318
  %v368 = vpop.permute.xlu0 %367
  %371 = vset.pattern.permute.xlu0 0
  %372 = vperm.xlu0 %371, %v319
  %v373 = vpop.permute.xlu0 %372
  %376 = vset.pattern.permute.xlu0 0
  %377 = vperm.xlu0 %376, %v320
  %v378 = vpop.permute.xlu0 %377
  %381 = vset.pattern.permute.xlu0 0
  %382 = vperm.xlu0 %381, %v321
  %v383 = vpop.permute.xlu0 %382
  %386 = vset.pattern.permute.xlu0 0
  %387 = vperm.xlu0 %386, %v322
  %v388 = vpop.permute.xlu0 %387
  %391 = vset.pattern.permute.xlu0 0
  %392 = vperm.xlu0 %391, %v323
  %v393 = vpop.permute.xlu0 %392
  %396 = vset.pattern.permute.xlu0 0
  %397 = vperm.xlu0 %396, %v324
  %v398 = vpop.permute.xlu0 %397
  %401 = vset.pattern.permute.xlu0 0
  %402 = vperm.xlu0 %401, %v325
  %v403 = vpop.permute.xlu0 %402
  %406 = vset.pattern.permute.xlu0 0
  %407 = vperm.xlu0 %406, %v326
  %v408 = vpop.permute.xlu0 %407
  %v410 = vmul.f32 %v328, %v333
  %v411 = vmul.f32 %v328, %v338
  %v412 = vmul.f32 %v328, %v343
  %v413 = vmul.f32 %v328, %v348
  %v414 = vmul.f32 %v328, %v353
  %v415 = vmul.f32 %v328, %v358
  %v416 = vmul.f32 %v328, %v363
  %v417 = vmul.f32 %v328, %v368
  %v418 = vmul.f32 %v328, %v373
  %v419 = vmul.f32 %v328, %v378
  %v420 = vmul.f32 %v328, %v383
  %v421 = vmul.f32 %v328, %v388
  %v422 = vmul.f32 %v328, %v393
  %v423 = vmul.f32 %v328, %v398
  %v424 = vmul.f32 %v328, %v403
  %v425 = vmul.f32 %v328, %v408
  %v426 = vand.u32 2147483647, %v410
  %vm427 = vcmp.le.f32.partialorder %v426, 0.7853982
  %vm428 = vcmp.lt.s32.totalorder %v410, 0
  %v429 = vand.u32 %v410, 2139095040
  %v430 = vshrl.u32 %v429, 23
  %v431 = vsub.s32 %v430, 127
  %v432 = vand.u32 2147483647, %v410
  %v433 = vand.u32 %v432, 8388607
  %v434 = vor.u32 %v433, 8388608
  %v435 = vsub.s32 0, %v434
  %v436 = vadd.s32 %v431, 1
  %vm437 = vcmp.gt.s32.totalorder %v436, 0
  %v438 = vsel %vm437, %v436, 0
  %v439 = vshrl.u32 %v438, 5
  %v440 = vand.u32 %v438, 31
  %v441 = vsub.s32 32, %v440
  %v442 = vshrl.u32 683565275, %v441
  %v443 = vshll.u32 683565275, %v440
  %v444 = vshrl.u32 2475754826, %v441
  %v445 = vor.u32 %v443, %v444
  %v446 = vshll.u32 2475754826, %v440
  %v447 = vshrl.u32 2131351028, %v441
  %v448 = vor.u32 %v446, %v447
  %v449 = vshll.u32 2131351028, %v440
  %v450 = vshrl.u32 2102212464, %v441
  %v451 = vor.u32 %v449, %v450
  %v452 = vshll.u32 2102212464, %v440
  %v453 = vshrl.u32 920167782, %v441
  %v454 = vor.u32 %v452, %v453
  %v455 = vshll.u32 920167782, %v440
  %v456 = vshrl.u32 1326507024, %v441
  %v457 = vor.u32 %v455, %v456
  %vm458 = vcmp.lt.s32.totalorder %v439, 1
  %vm459 = vcmp.lt.s32.totalorder %v439, 2
  %vm460 = vcmp.lt.s32.totalorder %v439, 3
  %vm461 = vcmp.lt.s32.totalorder %v439, 4
  %v462 = vsel %vm458, %v442, %v445
  %v463 = vsel %vm461, %v451, 2102212464
  %v464 = vsel %vm460, %v448, %v463
  %v465 = vsel %vm459, %v462, %v464
  %v466 = vsel %vm458, %v445, %v448
  %v467 = vsel %vm461, %v454, 920167782
  %v468 = vsel %vm460, %v451, %v467
  %v469 = vsel %vm459, %v466, %v468
  %v470 = vsel %vm458, %v448, %v451
  %v471 = vsel %vm461, %v457, 1326507024
  %v472 = vsel %vm460, %v454, %v471
  %v473 = vsel %vm459, %v470, %v472
  %v474 = vshll.u32 %v434, 8
  %v475 = vand.u32 %v474, 65535
  %v476 = vshrl.u32 %v474, 16
  %v477 = vand.u32 %v473, 65535
  %v478 = vshrl.u32 %v473, 16
  %v479 = vmul.u32 %v475, %v477
  %v480 = vmul.u32 %v475, %v478
  %v481 = vmul.u32 %v476, %v477
  %v482 = vmul.u32 %v476, %v478
  %v483 = vshll.u32 %v480, 16
  %v484 = vshrl.u32 %v480, 16
  %v485 = vshll.u32 %v481, 16
  %v486 = vshrl.u32 %v481, 16
  %vm487 = vc.u32 %v479, %v483
  %v488 = vsel %vm487, 1, 0
  %v489 = vadd.s32 %v479, %v483
  %v490 = vadd.s32 %v482, %v488
  %vm491 = vc.u32 %v489, %v485
  %v492 = vsel %vm491, 1, 0
  %v493 = vadd.s32 %v489, %v485
  %v494 = vadd.s32 %v490, %v492
  %v495 = vadd.s32 %v494, %v484
  %v496 = vadd.s32 %v495, %v486
  %v497 = vand.u32 %v474, 65535
  %v498 = vshrl.u32 %v474, 16
  %v499 = vand.u32 %v469, 65535
  %v500 = vshrl.u32 %v469, 16
  %v501 = vmul.u32 %v497, %v499
  %v502 = vmul.u32 %v497, %v500
  %v503 = vmul.u32 %v498, %v499
  %v504 = vmul.u32 %v498, %v500
  %v505 = vshll.u32 %v502, 16
  %v506 = vshrl.u32 %v502, 16
  %v507 = vshll.u32 %v503, 16
  %v508 = vshrl.u32 %v503, 16
  %vm509 = vc.u32 %v501, %v505
  %v510 = vsel %vm509, 1, 0
  %v511 = vadd.s32 %v501, %v505
  %v512 = vadd.s32 %v504, %v510
  %vm513 = vc.u32 %v511, %v507
  %v514 = vsel %vm513, 1, 0
  %v515 = vadd.s32 %v511, %v507
  %v516 = vadd.s32 %v512, %v514
  %v517 = vadd.s32 %v516, %v506
  %v518 = vadd.s32 %v517, %v508
  %v519 = vmul.u32 %v474, %v465
  %v520 = vadd.s32 %v496, %v515
  %vm521 = vc.u32 %v496, %v515
  %v522 = vadd.s32 %v518, 1
  %v523 = vsel %vm521, %v522, %v518
  %v524 = vadd.s32 %v519, %v523
  %v525 = vadd.s32 %v524, 536870912
  %v526 = vshrl.u32 %v525, 30
  %v527 = vshll.u32 %v526, 30
  %v528 = vsub.s32 %v524, %v527
  %vm529 = vcmp.lt.s32.totalorder %v528, 0
  %v530 = vsub.s32 0, %v528
  %v531 = vsel %vm529, %v530, %v528
  %v532 = vclz %v531
  %v533 = vsub.s32 %v532, 2
  %vm534 = vcmp.gt.s32.totalorder 0, %v533
  %v535 = vsel %vm534, 0, %v533
  %v536 = vsub.s32 32, %v535
  %v537 = vshll.u32 %v528, %v535
  %v538 = vshrl.u32 %v520, %v536
  %v539 = vor.u32 %v537, %v538
  %v540 = vsub.s32 4294967266, %v535
  %v541 = vadd.s32 %v540, 127
  %v542 = vshll.u32 %v541, 23
  %v543 = vor.u32 4788187, %v542
  %v544 = vand.u32 2147483647, %v543
  %v546 = vcvt.s32.f32 %v539
  %v547 = vmul.f32 %v546, %v544
  %v548 = vxor.u32 %v547, 2147483648
  %v549 = vsel %vm428, %v548, %v547
  %v550 = vsub.s32 4, %v526
  %v551 = vsel %vm428, %v550, %v526
  %v552 = vsel %vm427, %v410, %v549
  %v553 = vsel %vm427, 0, %v551
  %v554 = vmul.f32 %v552, %v552
  %v555 = vmul.f32 %v554, -0.001358992
  %v556 = vadd.f32 %v555, 0.041655596
  %v557 = vmul.f32 %v554, %v556
  %v558 = vadd.f32 %v557, -0.4999988
  %v559 = vmul.f32 %v554, %v558
  %v560 = vadd.f32 1.0, %v559
  %v561 = vmul.f32 %v552, %v552
  %v562 = vmul.f32 %v561, -0.00019511016
  %v563 = vadd.f32 %v562, 0.008332121
  %v564 = vmul.f32 %v561, %v563
  %v565 = vadd.f32 %v564, -0.16666654
  %v566 = vmul.f32 %v561, %v565
  %v567 = vadd.f32 %v566, 1.0
  %v568 = vmul.f32 %v567, %v552
  %vm569 = vweird.f32 %v410
  %v570 = vadd.s32 %v553, 3
  %v571 = vand.u32 %v570, 3
  %vm572 = vcmp.lt.s32.totalorder %v571, 2
  %vm573 = vcmp.eq.s32.totalorder %v571, 0
  %v574 = vxor.u32 %v568, 2147483648
  %v575 = vsel %vm573, %v560, %v574
  %vm576 = vcmp.eq.s32.totalorder %v571, 2
  %v577 = vxor.u32 %v560, 2147483648
  %v578 = vsel %vm576, %v577, %v568
  %v579 = vsel %vm572, %v575, %v578
  %v580 = vsel %vm569, nan, %v579
  %v581 = vand.u32 2147483647, %v411
  %vm582 = vcmp.le.f32.partialorder %v581, 0.7853982
  %vm583 = vcmp.lt.s32.totalorder %v411, 0
  %v584 = vand.u32 %v411, 2139095040
  %v585 = vshrl.u32 %v584, 23
  %v586 = vsub.s32 %v585, 127
  %v587 = vand.u32 2147483647, %v411
  %v588 = vand.u32 %v587, 8388607
  %v589 = vor.u32 %v588, 8388608
  %v590 = vsub.s32 0, %v589
  %v591 = vadd.s32 %v586, 1
  %vm592 = vcmp.gt.s32.totalorder %v591, 0
  %v593 = vsel %vm592, %v591, 0
  %v594 = vshrl.u32 %v593, 5
  %v595 = vand.u32 %v593, 31
  %v596 = vsub.s32 32, %v595
  %v597 = vshrl.u32 683565275, %v596
  %v598 = vshll.u32 683565275, %v595
  %v599 = vshrl.u32 2475754826, %v596
  %v600 = vor.u32 %v598, %v599
  %v601 = vshll.u32 2475754826, %v595
  %v602 = vshrl.u32 2131351028, %v596
  %v603 = vor.u32 %v601, %v602
  %v604 = vshll.u32 2131351028, %v595
  %v605 = vshrl.u32 2102212464, %v596
  %v606 = vor.u32 %v604, %v605
  %v607 = vshll.u32 2102212464, %v595
  %v608 = vshrl.u32 920167782, %v596
  %v609 = vor.u32 %v607, %v608
  %v610 = vshll.u32 920167782, %v595
  %v611 = vshrl.u32 1326507024, %v596
  %v612 = vor.u32 %v610, %v611
  %vm613 = vcmp.lt.s32.totalorder %v594, 1
  %vm614 = vcmp.lt.s32.totalorder %v594, 2
  %vm615 = vcmp.lt.s32.totalorder %v594, 3
  %vm616 = vcmp.lt.s32.totalorder %v594, 4
  %v617 = vsel %vm613, %v597, %v600
  %v618 = vsel %vm616, %v606, 2102212464
  %v619 = vsel %vm615, %v603, %v618
  %v620 = vsel %vm614, %v617, %v619
  %v621 = vsel %vm613, %v600, %v603
  %v622 = vsel %vm616, %v609, 920167782
  %v623 = vsel %vm615, %v606, %v622
  %v624 = vsel %vm614, %v621, %v623
  %v625 = vsel %vm613, %v603, %v606
  %v626 = vsel %vm616, %v612, 1326507024
  %v627 = vsel %vm615, %v609, %v626
  %v628 = vsel %vm614, %v625, %v627
  %v629 = vshll.u32 %v589, 8
  %v630 = vand.u32 %v629, 65535
  %v631 = vshrl.u32 %v629, 16
  %v632 = vand.u32 %v628, 65535
  %v633 = vshrl.u32 %v628, 16
  %v634 = vmul.u32 %v630, %v632
  %v635 = vmul.u32 %v630, %v633
  %v636 = vmul.u32 %v631, %v632
  %v637 = vmul.u32 %v631, %v633
  %v638 = vshll.u32 %v635, 16
  %v639 = vshrl.u32 %v635, 16
  %v640 = vshll.u32 %v636, 16
  %v641 = vshrl.u32 %v636, 16
  %vm642 = vc.u32 %v634, %v638
  %v643 = vsel %vm642, 1, 0
  %v644 = vadd.s32 %v634, %v638
  %v645 = vadd.s32 %v637, %v643
  %vm646 = vc.u32 %v644, %v640
  %v647 = vsel %vm646, 1, 0
  %v648 = vadd.s32 %v644, %v640
  %v649 = vadd.s32 %v645, %v647
  %v650 = vadd.s32 %v649, %v639
  %v651 = vadd.s32 %v650, %v641
  %v652 = vand.u32 %v629, 65535
  %v653 = vshrl.u32 %v629, 16
  %v654 = vand.u32 %v624, 65535
  %v655 = vshrl.u32 %v624, 16
  %v656 = vmul.u32 %v652, %v654
  %v657 = vmul.u32 %v652, %v655
  %v658 = vmul.u32 %v653, %v654
  %v659 = vmul.u32 %v653, %v655
  %v660 = vshll.u32 %v657, 16
  %v661 = vshrl.u32 %v657, 16
  %v662 = vshll.u32 %v658, 16
  %v663 = vshrl.u32 %v658, 16
  %vm664 = vc.u32 %v656, %v660
  %v665 = vsel %vm664, 1, 0
  %v666 = vadd.s32 %v656, %v660
  %v667 = vadd.s32 %v659, %v665
  %vm668 = vc.u32 %v666, %v662
  %v669 = vsel %vm668, 1, 0
  %v670 = vadd.s32 %v666, %v662
  %v671 = vadd.s32 %v667, %v669
  %v672 = vadd.s32 %v671, %v661
  %v673 = vadd.s32 %v672, %v663
  %v674 = vmul.u32 %v629, %v620
  %v675 = vadd.s32 %v651, %v670
  %vm676 = vc.u32 %v651, %v670
  %v677 = vadd.s32 %v673, 1
  %v678 = vsel %vm676, %v677, %v673
  %v679 = vadd.s32 %v674, %v678
  %v680 = vadd.s32 %v679, 536870912
  %v681 = vshrl.u32 %v680, 30
  %v682 = vshll.u32 %v681, 30
  %v683 = vsub.s32 %v679, %v682
  %vm684 = vcmp.lt.s32.totalorder %v683, 0
  %v685 = vsub.s32 0, %v683
  %v686 = vsel %vm684, %v685, %v683
  %v687 = vclz %v686
  %v688 = vsub.s32 %v687, 2
  %vm689 = vcmp.gt.s32.totalorder 0, %v688
  %v690 = vsel %vm689, 0, %v688
  %v691 = vsub.s32 32, %v690
  %v692 = vshll.u32 %v683, %v690
  %v693 = vshrl.u32 %v675, %v691
  %v694 = vor.u32 %v692, %v693
  %v695 = vsub.s32 4294967266, %v690
  %v696 = vadd.s32 %v695, 127
  %v697 = vshll.u32 %v696, 23
  %v698 = vor.u32 4788187, %v697
  %v699 = vand.u32 2147483647, %v698
  %v701 = vcvt.s32.f32 %v694
  %v702 = vmul.f32 %v701, %v699
  %v703 = vxor.u32 %v702, 2147483648
  %v704 = vsel %vm583, %v703, %v702
  %v705 = vsub.s32 4, %v681
  %v706 = vsel %vm583, %v705, %v681
  %v707 = vsel %vm582, %v411, %v704
  %v708 = vsel %vm582, 0, %v706
  %v709 = vmul.f32 %v707, %v707
  %v710 = vmul.f32 %v709, -0.001358992
  %v711 = vadd.f32 %v710, 0.041655596
  %v712 = vmul.f32 %v709, %v711
  %v713 = vadd.f32 %v712, -0.4999988
  %v714 = vmul.f32 %v709, %v713
  %v715 = vadd.f32 1.0, %v714
  %v716 = vmul.f32 %v707, %v707
  %v717 = vmul.f32 %v716, -0.00019511016
  %v718 = vadd.f32 %v717, 0.008332121
  %v719 = vmul.f32 %v716, %v718
  %v720 = vadd.f32 %v719, -0.16666654
  %v721 = vmul.f32 %v716, %v720
  %v722 = vadd.f32 %v721, 1.0
  %v723 = vmul.f32 %v722, %v707
  %vm724 = vweird.f32 %v411
  %v725 = vadd.s32 %v708, 3
  %v726 = vand.u32 %v725, 3
  %vm727 = vcmp.lt.s32.totalorder %v726, 2
  %vm728 = vcmp.eq.s32.totalorder %v726, 0
  %v729 = vxor.u32 %v723, 2147483648
  %v730 = vsel %vm728, %v715, %v729
  %vm731 = vcmp.eq.s32.totalorder %v726, 2
  %v732 = vxor.u32 %v715, 2147483648
  %v733 = vsel %vm731, %v732, %v723
  %v734 = vsel %vm727, %v730, %v733
  %v735 = vsel %vm724, nan, %v734
  %v736 = vand.u32 2147483647, %v412
  %vm737 = vcmp.le.f32.partialorder %v736, 0.7853982
  %vm738 = vcmp.lt.s32.totalorder %v412, 0
  %v739 = vand.u32 %v412, 2139095040
  %v740 = vshrl.u32 %v739, 23
  %v741 = vsub.s32 %v740, 127
  %v742 = vand.u32 2147483647, %v412
  %v743 = vand.u32 %v742, 8388607
  %v744 = vor.u32 %v743, 8388608
  %v745 = vsub.s32 0, %v744
  %v746 = vadd.s32 %v741, 1
  %vm747 = vcmp.gt.s32.totalorder %v746, 0
  %v748 = vsel %vm747, %v746, 0
  %v749 = vshrl.u32 %v748, 5
  %v750 = vand.u32 %v748, 31
  %v751 = vsub.s32 32, %v750
  %v752 = vshrl.u32 683565275, %v751
  %v753 = vshll.u32 683565275, %v750
  %v754 = vshrl.u32 2475754826, %v751
  %v755 = vor.u32 %v753, %v754
  %v756 = vshll.u32 2475754826, %v750
  %v757 = vshrl.u32 2131351028, %v751
  %v758 = vor.u32 %v756, %v757
  %v759 = vshll.u32 2131351028, %v750
  %v760 = vshrl.u32 2102212464, %v751
  %v761 = vor.u32 %v759, %v760
  %v762 = vshll.u32 2102212464, %v750
  %v763 = vshrl.u32 920167782, %v751
  %v764 = vor.u32 %v762, %v763
  %v765 = vshll.u32 920167782, %v750
  %v766 = vshrl.u32 1326507024, %v751
  %v767 = vor.u32 %v765, %v766
  %vm768 = vcmp.lt.s32.totalorder %v749, 1
  %vm769 = vcmp.lt.s32.totalorder %v749, 2
  %vm770 = vcmp.lt.s32.totalorder %v749, 3
  %vm771 = vcmp.lt.s32.totalorder %v749, 4
  %v772 = vsel %vm768, %v752, %v755
  %v773 = vsel %vm771, %v761, 2102212464
  %v774 = vsel %vm770, %v758, %v773
  %v775 = vsel %vm769, %v772, %v774
  %v776 = vsel %vm768, %v755, %v758
  %v777 = vsel %vm771, %v764, 920167782
  %v778 = vsel %vm770, %v761, %v777
  %v779 = vsel %vm769, %v776, %v778
  %v780 = vsel %vm768, %v758, %v761
  %v781 = vsel %vm771, %v767, 1326507024
  %v782 = vsel %vm770, %v764, %v781
  %v783 = vsel %vm769, %v780, %v782
  %v784 = vshll.u32 %v744, 8
  %v785 = vand.u32 %v784, 65535
  %v786 = vshrl.u32 %v784, 16
  %v787 = vand.u32 %v783, 65535
  %v788 = vshrl.u32 %v783, 16
  %v789 = vmul.u32 %v785, %v787
  %v790 = vmul.u32 %v785, %v788
  %v791 = vmul.u32 %v786, %v787
  %v792 = vmul.u32 %v786, %v788
  %v793 = vshll.u32 %v790, 16
  %v794 = vshrl.u32 %v790, 16
  %v795 = vshll.u32 %v791, 16
  %v796 = vshrl.u32 %v791, 16
  %vm797 = vc.u32 %v789, %v793
  %v798 = vsel %vm797, 1, 0
  %v799 = vadd.s32 %v789, %v793
  %v800 = vadd.s32 %v792, %v798
  %vm801 = vc.u32 %v799, %v795
  %v802 = vsel %vm801, 1, 0
  %v803 = vadd.s32 %v799, %v795
  %v804 = vadd.s32 %v800, %v802
  %v805 = vadd.s32 %v804, %v794
  %v806 = vadd.s32 %v805, %v796
  %v807 = vand.u32 %v784, 65535
  %v808 = vshrl.u32 %v784, 16
  %v809 = vand.u32 %v779, 65535
  %v810 = vshrl.u32 %v779, 16
  %v811 = vmul.u32 %v807, %v809
  %v812 = vmul.u32 %v807, %v810
  %v813 = vmul.u32 %v808, %v809
  %v814 = vmul.u32 %v808, %v810
  %v815 = vshll.u32 %v812, 16
  %v816 = vshrl.u32 %v812, 16
  %v817 = vshll.u32 %v813, 16
  %v818 = vshrl.u32 %v813, 16
  %vm819 = vc.u32 %v811, %v815
  %v820 = vsel %vm819, 1, 0
  %v821 = vadd.s32 %v811, %v815
  %v822 = vadd.s32 %v814, %v820
  %vm823 = vc.u32 %v821, %v817
  %v824 = vsel %vm823, 1, 0
  %v825 = vadd.s32 %v821, %v817
  %v826 = vadd.s32 %v822, %v824
  %v827 = vadd.s32 %v826, %v816
  %v828 = vadd.s32 %v827, %v818
  %v829 = vmul.u32 %v784, %v775
  %v830 = vadd.s32 %v806, %v825
  %vm831 = vc.u32 %v806, %v825
  %v832 = vadd.s32 %v828, 1
  %v833 = vsel %vm831, %v832, %v828
  %v834 = vadd.s32 %v829, %v833
  %v835 = vadd.s32 %v834, 536870912
  %v836 = vshrl.u32 %v835, 30
  %v837 = vshll.u32 %v836, 30
  %v838 = vsub.s32 %v834, %v837
  %vm839 = vcmp.lt.s32.totalorder %v838, 0
  %v840 = vsub.s32 0, %v838
  %v841 = vsel %vm839, %v840, %v838
  %v842 = vclz %v841
  %v843 = vsub.s32 %v842, 2
  %vm844 = vcmp.gt.s32.totalorder 0, %v843
  %v845 = vsel %vm844, 0, %v843
  %v846 = vsub.s32 32, %v845
  %v847 = vshll.u32 %v838, %v845
  %v848 = vshrl.u32 %v830, %v846
  %v849 = vor.u32 %v847, %v848
  %v850 = vsub.s32 4294967266, %v845
  %v851 = vadd.s32 %v850, 127
  %v852 = vshll.u32 %v851, 23
  %v853 = vor.u32 4788187, %v852
  %v854 = vand.u32 2147483647, %v853
  %v856 = vcvt.s32.f32 %v849
  %v857 = vmul.f32 %v856, %v854
  %v858 = vxor.u32 %v857, 2147483648
  %v859 = vsel %vm738, %v858, %v857
  %v860 = vsub.s32 4, %v836
  %v861 = vsel %vm738, %v860, %v836
  %v862 = vsel %vm737, %v412, %v859
  %v863 = vsel %vm737, 0, %v861
  %v864 = vmul.f32 %v862, %v862
  %v865 = vmul.f32 %v864, -0.001358992
  %v866 = vadd.f32 %v865, 0.041655596
  %v867 = vmul.f32 %v864, %v866
  %v868 = vadd.f32 %v867, -0.4999988
  %v869 = vmul.f32 %v864, %v868
  %v870 = vadd.f32 1.0, %v869
  %v871 = vmul.f32 %v862, %v862
  %v872 = vmul.f32 %v871, -0.00019511016
  %v873 = vadd.f32 %v872, 0.008332121
  %v874 = vmul.f32 %v871, %v873
  %v875 = vadd.f32 %v874, -0.16666654
  %v876 = vmul.f32 %v871, %v875
  %v877 = vadd.f32 %v876, 1.0
  %v878 = vmul.f32 %v877, %v862
  %vm879 = vweird.f32 %v412
  %v880 = vadd.s32 %v863, 3
  %v881 = vand.u32 %v880, 3
  %vm882 = vcmp.lt.s32.totalorder %v881, 2
  %vm883 = vcmp.eq.s32.totalorder %v881, 0
  %v884 = vxor.u32 %v878, 2147483648
  %v885 = vsel %vm883, %v870, %v884
  %vm886 = vcmp.eq.s32.totalorder %v881, 2
  %v887 = vxor.u32 %v870, 2147483648
  %v888 = vsel %vm886, %v887, %v878
  %v889 = vsel %vm882, %v885, %v888
  %v890 = vsel %vm879, nan, %v889
  %v891 = vand.u32 2147483647, %v413
  %vm892 = vcmp.le.f32.partialorder %v891, 0.7853982
  %vm893 = vcmp.lt.s32.totalorder %v413, 0
  %v894 = vand.u32 %v413, 2139095040
  %v895 = vshrl.u32 %v894, 23
  %v896 = vsub.s32 %v895, 127
  %v897 = vand.u32 2147483647, %v413
  %v898 = vand.u32 %v897, 8388607
  %v899 = vor.u32 %v898, 8388608
  %v900 = vsub.s32 0, %v899
  %v901 = vadd.s32 %v896, 1
  %vm902 = vcmp.gt.s32.totalorder %v901, 0
  %v903 = vsel %vm902, %v901, 0
  %v904 = vshrl.u32 %v903, 5
  %v905 = vand.u32 %v903, 31
  %v906 = vsub.s32 32, %v905
  %v907 = vshrl.u32 683565275, %v906
  %v908 = vshll.u32 683565275, %v905
  %v909 = vshrl.u32 2475754826, %v906
  %v910 = vor.u32 %v908, %v909
  %v911 = vshll.u32 2475754826, %v905
  %v912 = vshrl.u32 2131351028, %v906
  %v913 = vor.u32 %v911, %v912
  %v914 = vshll.u32 2131351028, %v905
  %v915 = vshrl.u32 2102212464, %v906
  %v916 = vor.u32 %v914, %v915
  %v917 = vshll.u32 2102212464, %v905
  %v918 = vshrl.u32 920167782, %v906
  %v919 = vor.u32 %v917, %v918
  %v920 = vshll.u32 920167782, %v905
  %v921 = vshrl.u32 1326507024, %v906
  %v922 = vor.u32 %v920, %v921
  %vm923 = vcmp.lt.s32.totalorder %v904, 1
  %vm924 = vcmp.lt.s32.totalorder %v904, 2
  %vm925 = vcmp.lt.s32.totalorder %v904, 3
  %vm926 = vcmp.lt.s32.totalorder %v904, 4
  %v927 = vsel %vm923, %v907, %v910
  %v928 = vsel %vm926, %v916, 2102212464
  %v929 = vsel %vm925, %v913, %v928
  %v930 = vsel %vm924, %v927, %v929
  %v931 = vsel %vm923, %v910, %v913
  %v932 = vsel %vm926, %v919, 920167782
  %v933 = vsel %vm925, %v916, %v932
  %v934 = vsel %vm924, %v931, %v933
  %v935 = vsel %vm923, %v913, %v916
  %v936 = vsel %vm926, %v922, 1326507024
  %v937 = vsel %vm925, %v919, %v936
  %v938 = vsel %vm924, %v935, %v937
  %v939 = vshll.u32 %v899, 8
  %v940 = vand.u32 %v939, 65535
  %v941 = vshrl.u32 %v939, 16
  %v942 = vand.u32 %v938, 65535
  %v943 = vshrl.u32 %v938, 16
  %v944 = vmul.u32 %v940, %v942
  %v945 = vmul.u32 %v940, %v943
  %v946 = vmul.u32 %v941, %v942
  %v947 = vmul.u32 %v941, %v943
  %v948 = vshll.u32 %v945, 16
  %v949 = vshrl.u32 %v945, 16
  %v950 = vshll.u32 %v946, 16
  %v951 = vshrl.u32 %v946, 16
  %vm952 = vc.u32 %v944, %v948
  %v953 = vsel %vm952, 1, 0
  %v954 = vadd.s32 %v944, %v948
  %v955 = vadd.s32 %v947, %v953
  %vm956 = vc.u32 %v954, %v950
  %v957 = vsel %vm956, 1, 0
  %v958 = vadd.s32 %v954, %v950
  %v959 = vadd.s32 %v955, %v957
  %v960 = vadd.s32 %v959, %v949
  %v961 = vadd.s32 %v960, %v951
  %v962 = vand.u32 %v939, 65535
  %v963 = vshrl.u32 %v939, 16
  %v964 = vand.u32 %v934, 65535
  %v965 = vshrl.u32 %v934, 16
  %v966 = vmul.u32 %v962, %v964
  %v967 = vmul.u32 %v962, %v965
  %v968 = vmul.u32 %v963, %v964
  %v969 = vmul.u32 %v963, %v965
  %v970 = vshll.u32 %v967, 16
  %v971 = vshrl.u32 %v967, 16
  %v972 = vshll.u32 %v968, 16
  %v973 = vshrl.u32 %v968, 16
  %vm974 = vc.u32 %v966, %v970
  %v975 = vsel %vm974, 1, 0
  %v976 = vadd.s32 %v966, %v970
  %v977 = vadd.s32 %v969, %v975
  %vm978 = vc.u32 %v976, %v972
  %v979 = vsel %vm978, 1, 0
  %v980 = vadd.s32 %v976, %v972
  %v981 = vadd.s32 %v977, %v979
  %v982 = vadd.s32 %v981, %v971
  %v983 = vadd.s32 %v982, %v973
  %v984 = vmul.u32 %v939, %v930
  %v985 = vadd.s32 %v961, %v980
  %vm986 = vc.u32 %v961, %v980
  %v987 = vadd.s32 %v983, 1
  %v988 = vsel %vm986, %v987, %v983
  %v989 = vadd.s32 %v984, %v988
  %v990 = vadd.s32 %v989, 536870912
  %v991 = vshrl.u32 %v990, 30
  %v992 = vshll.u32 %v991, 30
  %v993 = vsub.s32 %v989, %v992
  %vm994 = vcmp.lt.s32.totalorder %v993, 0
  %v995 = vsub.s32 0, %v993
  %v996 = vsel %vm994, %v995, %v993
  %v997 = vclz %v996
  %v998 = vsub.s32 %v997, 2
  %vm999 = vcmp.gt.s32.totalorder 0, %v998
  %v1000 = vsel %vm999, 0, %v998
  %v1001 = vsub.s32 32, %v1000
  %v1002 = vshll.u32 %v993, %v1000
  %v1003 = vshrl.u32 %v985, %v1001
  %v1004 = vor.u32 %v1002, %v1003
  %v1005 = vsub.s32 4294967266, %v1000
  %v1006 = vadd.s32 %v1005, 127
  %v1007 = vshll.u32 %v1006, 23
  %v1008 = vor.u32 4788187, %v1007
  %v1009 = vand.u32 2147483647, %v1008
  %v1011 = vcvt.s32.f32 %v1004
  %v1012 = vmul.f32 %v1011, %v1009
  %v1013 = vxor.u32 %v1012, 2147483648
  %v1014 = vsel %vm893, %v1013, %v1012
  %v1015 = vsub.s32 4, %v991
  %v1016 = vsel %vm893, %v1015, %v991
  %v1017 = vsel %vm892, %v413, %v1014
  %v1018 = vsel %vm892, 0, %v1016
  %v1019 = vmul.f32 %v1017, %v1017
  %v1020 = vmul.f32 %v1019, -0.001358992
  %v1021 = vadd.f32 %v1020, 0.041655596
  %v1022 = vmul.f32 %v1019, %v1021
  %v1023 = vadd.f32 %v1022, -0.4999988
  %v1024 = vmul.f32 %v1019, %v1023
  %v1025 = vadd.f32 1.0, %v1024
  %v1026 = vmul.f32 %v1017, %v1017
  %v1027 = vmul.f32 %v1026, -0.00019511016
  %v1028 = vadd.f32 %v1027, 0.008332121
  %v1029 = vmul.f32 %v1026, %v1028
  %v1030 = vadd.f32 %v1029, -0.16666654
  %v1031 = vmul.f32 %v1026, %v1030
  %v1032 = vadd.f32 %v1031, 1.0
  %v1033 = vmul.f32 %v1032, %v1017
  %vm1034 = vweird.f32 %v413
  %v1035 = vadd.s32 %v1018, 3
  %v1036 = vand.u32 %v1035, 3
  %vm1037 = vcmp.lt.s32.totalorder %v1036, 2
  %vm1038 = vcmp.eq.s32.totalorder %v1036, 0
  %v1039 = vxor.u32 %v1033, 2147483648
  %v1040 = vsel %vm1038, %v1025, %v1039
  %vm1041 = vcmp.eq.s32.totalorder %v1036, 2
  %v1042 = vxor.u32 %v1025, 2147483648
  %v1043 = vsel %vm1041, %v1042, %v1033
  %v1044 = vsel %vm1037, %v1040, %v1043
  %v1045 = vsel %vm1034, nan, %v1044
  %v1046 = vand.u32 2147483647, %v414
  %vm1047 = vcmp.le.f32.partialorder %v1046, 0.7853982
  %vm1048 = vcmp.lt.s32.totalorder %v414, 0
  %v1049 = vand.u32 %v414, 2139095040
  %v1050 = vshrl.u32 %v1049, 23
  %v1051 = vsub.s32 %v1050, 127
  %v1052 = vand.u32 2147483647, %v414
  %v1053 = vand.u32 %v1052, 8388607
  %v1054 = vor.u32 %v1053, 8388608
  %v1055 = vsub.s32 0, %v1054
  %v1056 = vadd.s32 %v1051, 1
  %vm1057 = vcmp.gt.s32.totalorder %v1056, 0
  %v1058 = vsel %vm1057, %v1056, 0
  %v1059 = vshrl.u32 %v1058, 5
  %v1060 = vand.u32 %v1058, 31
  %v1061 = vsub.s32 32, %v1060
  %v1062 = vshrl.u32 683565275, %v1061
  %v1063 = vshll.u32 683565275, %v1060
  %v1064 = vshrl.u32 2475754826, %v1061
  %v1065 = vor.u32 %v1063, %v1064
  %v1066 = vshll.u32 2475754826, %v1060
  %v1067 = vshrl.u32 2131351028, %v1061
  %v1068 = vor.u32 %v1066, %v1067
  %v1069 = vshll.u32 2131351028, %v1060
  %v1070 = vshrl.u32 2102212464, %v1061
  %v1071 = vor.u32 %v1069, %v1070
  %v1072 = vshll.u32 2102212464, %v1060
  %v1073 = vshrl.u32 920167782, %v1061
  %v1074 = vor.u32 %v1072, %v1073
  %v1075 = vshll.u32 920167782, %v1060
  %v1076 = vshrl.u32 1326507024, %v1061
  %v1077 = vor.u32 %v1075, %v1076
  %vm1078 = vcmp.lt.s32.totalorder %v1059, 1
  %vm1079 = vcmp.lt.s32.totalorder %v1059, 2
  %vm1080 = vcmp.lt.s32.totalorder %v1059, 3
  %vm1081 = vcmp.lt.s32.totalorder %v1059, 4
  %v1082 = vsel %vm1078, %v1062, %v1065
  %v1083 = vsel %vm1081, %v1071, 2102212464
  %v1084 = vsel %vm1080, %v1068, %v1083
  %v1085 = vsel %vm1079, %v1082, %v1084
  %v1086 = vsel %vm1078, %v1065, %v1068
  %v1087 = vsel %vm1081, %v1074, 920167782
  %v1088 = vsel %vm1080, %v1071, %v1087
  %v1089 = vsel %vm1079, %v1086, %v1088
  %v1090 = vsel %vm1078, %v1068, %v1071
  %v1091 = vsel %vm1081, %v1077, 1326507024
  %v1092 = vsel %vm1080, %v1074, %v1091
  %v1093 = vsel %vm1079, %v1090, %v1092
  %v1094 = vshll.u32 %v1054, 8
  %v1095 = vand.u32 %v1094, 65535
  %v1096 = vshrl.u32 %v1094, 16
  %v1097 = vand.u32 %v1093, 65535
  %v1098 = vshrl.u32 %v1093, 16
  %v1099 = vmul.u32 %v1095, %v1097
  %v1100 = vmul.u32 %v1095, %v1098
  %v1101 = vmul.u32 %v1096, %v1097
  %v1102 = vmul.u32 %v1096, %v1098
  %v1103 = vshll.u32 %v1100, 16
  %v1104 = vshrl.u32 %v1100, 16
  %v1105 = vshll.u32 %v1101, 16
  %v1106 = vshrl.u32 %v1101, 16
  %vm1107 = vc.u32 %v1099, %v1103
  %v1108 = vsel %vm1107, 1, 0
  %v1109 = vadd.s32 %v1099, %v1103
  %v1110 = vadd.s32 %v1102, %v1108
  %vm1111 = vc.u32 %v1109, %v1105
  %v1112 = vsel %vm1111, 1, 0
  %v1113 = vadd.s32 %v1109, %v1105
  %v1114 = vadd.s32 %v1110, %v1112
  %v1115 = vadd.s32 %v1114, %v1104
  %v1116 = vadd.s32 %v1115, %v1106
  %v1117 = vand.u32 %v1094, 65535
  %v1118 = vshrl.u32 %v1094, 16
  %v1119 = vand.u32 %v1089, 65535
  %v1120 = vshrl.u32 %v1089, 16
  %v1121 = vmul.u32 %v1117, %v1119
  %v1122 = vmul.u32 %v1117, %v1120
  %v1123 = vmul.u32 %v1118, %v1119
  %v1124 = vmul.u32 %v1118, %v1120
  %v1125 = vshll.u32 %v1122, 16
  %v1126 = vshrl.u32 %v1122, 16
  %v1127 = vshll.u32 %v1123, 16
  %v1128 = vshrl.u32 %v1123, 16
  %vm1129 = vc.u32 %v1121, %v1125
  %v1130 = vsel %vm1129, 1, 0
  %v1131 = vadd.s32 %v1121, %v1125
  %v1132 = vadd.s32 %v1124, %v1130
  %vm1133 = vc.u32 %v1131, %v1127
  %v1134 = vsel %vm1133, 1, 0
  %v1135 = vadd.s32 %v1131, %v1127
  %v1136 = vadd.s32 %v1132, %v1134
  %v1137 = vadd.s32 %v1136, %v1126
  %v1138 = vadd.s32 %v1137, %v1128
  %v1139 = vmul.u32 %v1094, %v1085
  %v1140 = vadd.s32 %v1116, %v1135
  %vm1141 = vc.u32 %v1116, %v1135
  %v1142 = vadd.s32 %v1138, 1
  %v1143 = vsel %vm1141, %v1142, %v1138
  %v1144 = vadd.s32 %v1139, %v1143
  %v1145 = vadd.s32 %v1144, 536870912
  %v1146 = vshrl.u32 %v1145, 30
  %v1147 = vshll.u32 %v1146, 30
  %v1148 = vsub.s32 %v1144, %v1147
  %vm1149 = vcmp.lt.s32.totalorder %v1148, 0
  %v1150 = vsub.s32 0, %v1148
  %v1151 = vsel %vm1149, %v1150, %v1148
  %v1152 = vclz %v1151
  %v1153 = vsub.s32 %v1152, 2
  %vm1154 = vcmp.gt.s32.totalorder 0, %v1153
  %v1155 = vsel %vm1154, 0, %v1153
  %v1156 = vsub.s32 32, %v1155
  %v1157 = vshll.u32 %v1148, %v1155
  %v1158 = vshrl.u32 %v1140, %v1156
  %v1159 = vor.u32 %v1157, %v1158
  %v1160 = vsub.s32 4294967266, %v1155
  %v1161 = vadd.s32 %v1160, 127
  %v1162 = vshll.u32 %v1161, 23
  %v1163 = vor.u32 4788187, %v1162
  %v1164 = vand.u32 2147483647, %v1163
  %v1166 = vcvt.s32.f32 %v1159
  %v1167 = vmul.f32 %v1166, %v1164
  %v1168 = vxor.u32 %v1167, 2147483648
  %v1169 = vsel %vm1048, %v1168, %v1167
  %v1170 = vsub.s32 4, %v1146
  %v1171 = vsel %vm1048, %v1170, %v1146
  %v1172 = vsel %vm1047, %v414, %v1169
  %v1173 = vsel %vm1047, 0, %v1171
  %v1174 = vmul.f32 %v1172, %v1172
  %v1175 = vmul.f32 %v1174, -0.001358992
  %v1176 = vadd.f32 %v1175, 0.041655596
  %v1177 = vmul.f32 %v1174, %v1176
  %v1178 = vadd.f32 %v1177, -0.4999988
  %v1179 = vmul.f32 %v1174, %v1178
  %v1180 = vadd.f32 1.0, %v1179
  %v1181 = vmul.f32 %v1172, %v1172
  %v1182 = vmul.f32 %v1181, -0.00019511016
  %v1183 = vadd.f32 %v1182, 0.008332121
  %v1184 = vmul.f32 %v1181, %v1183
  %v1185 = vadd.f32 %v1184, -0.16666654
  %v1186 = vmul.f32 %v1181, %v1185
  %v1187 = vadd.f32 %v1186, 1.0
  %v1188 = vmul.f32 %v1187, %v1172
  %vm1189 = vweird.f32 %v414
  %v1190 = vadd.s32 %v1173, 3
  %v1191 = vand.u32 %v1190, 3
  %vm1192 = vcmp.lt.s32.totalorder %v1191, 2
  %vm1193 = vcmp.eq.s32.totalorder %v1191, 0
  %v1194 = vxor.u32 %v1188, 2147483648
  %v1195 = vsel %vm1193, %v1180, %v1194
  %vm1196 = vcmp.eq.s32.totalorder %v1191, 2
  %v1197 = vxor.u32 %v1180, 2147483648
  %v1198 = vsel %vm1196, %v1197, %v1188
  %v1199 = vsel %vm1192, %v1195, %v1198
  %v1200 = vsel %vm1189, nan, %v1199
  %v1201 = vand.u32 2147483647, %v415
  %vm1202 = vcmp.le.f32.partialorder %v1201, 0.7853982
  %vm1203 = vcmp.lt.s32.totalorder %v415, 0
  %v1204 = vand.u32 %v415, 2139095040
  %v1205 = vshrl.u32 %v1204, 23
  %v1206 = vsub.s32 %v1205, 127
  %v1207 = vand.u32 2147483647, %v415
  %v1208 = vand.u32 %v1207, 8388607
  %v1209 = vor.u32 %v1208, 8388608
  %v1210 = vsub.s32 0, %v1209
  %v1211 = vadd.s32 %v1206, 1
  %vm1212 = vcmp.gt.s32.totalorder %v1211, 0
  %v1213 = vsel %vm1212, %v1211, 0
  %v1214 = vshrl.u32 %v1213, 5
  %v1215 = vand.u32 %v1213, 31
  %v1216 = vsub.s32 32, %v1215
  %v1217 = vshrl.u32 683565275, %v1216
  %v1218 = vshll.u32 683565275, %v1215
  %v1219 = vshrl.u32 2475754826, %v1216
  %v1220 = vor.u32 %v1218, %v1219
  %v1221 = vshll.u32 2475754826, %v1215
  %v1222 = vshrl.u32 2131351028, %v1216
  %v1223 = vor.u32 %v1221, %v1222
  %v1224 = vshll.u32 2131351028, %v1215
  %v1225 = vshrl.u32 2102212464, %v1216
  %v1226 = vor.u32 %v1224, %v1225
  %v1227 = vshll.u32 2102212464, %v1215
  %v1228 = vshrl.u32 920167782, %v1216
  %v1229 = vor.u32 %v1227, %v1228
  %v1230 = vshll.u32 920167782, %v1215
  %v1231 = vshrl.u32 1326507024, %v1216
  %v1232 = vor.u32 %v1230, %v1231
  %vm1233 = vcmp.lt.s32.totalorder %v1214, 1
  %vm1234 = vcmp.lt.s32.totalorder %v1214, 2
  %vm1235 = vcmp.lt.s32.totalorder %v1214, 3
  %vm1236 = vcmp.lt.s32.totalorder %v1214, 4
  %v1237 = vsel %vm1233, %v1217, %v1220
  %v1238 = vsel %vm1236, %v1226, 2102212464
  %v1239 = vsel %vm1235, %v1223, %v1238
  %v1240 = vsel %vm1234, %v1237, %v1239
  %v1241 = vsel %vm1233, %v1220, %v1223
  %v1242 = vsel %vm1236, %v1229, 920167782
  %v1243 = vsel %vm1235, %v1226, %v1242
  %v1244 = vsel %vm1234, %v1241, %v1243
  %v1245 = vsel %vm1233, %v1223, %v1226
  %v1246 = vsel %vm1236, %v1232, 1326507024
  %v1247 = vsel %vm1235, %v1229, %v1246
  %v1248 = vsel %vm1234, %v1245, %v1247
  %v1249 = vshll.u32 %v1209, 8
  %v1250 = vand.u32 %v1249, 65535
  %v1251 = vshrl.u32 %v1249, 16
  %v1252 = vand.u32 %v1248, 65535
  %v1253 = vshrl.u32 %v1248, 16
  %v1254 = vmul.u32 %v1250, %v1252
  %v1255 = vmul.u32 %v1250, %v1253
  %v1256 = vmul.u32 %v1251, %v1252
  %v1257 = vmul.u32 %v1251, %v1253
  %v1258 = vshll.u32 %v1255, 16
  %v1259 = vshrl.u32 %v1255, 16
  %v1260 = vshll.u32 %v1256, 16
  %v1261 = vshrl.u32 %v1256, 16
  %vm1262 = vc.u32 %v1254, %v1258
  %v1263 = vsel %vm1262, 1, 0
  %v1264 = vadd.s32 %v1254, %v1258
  %v1265 = vadd.s32 %v1257, %v1263
  %vm1266 = vc.u32 %v1264, %v1260
  %v1267 = vsel %vm1266, 1, 0
  %v1268 = vadd.s32 %v1264, %v1260
  %v1269 = vadd.s32 %v1265, %v1267
  %v1270 = vadd.s32 %v1269, %v1259
  %v1271 = vadd.s32 %v1270, %v1261
  %v1272 = vand.u32 %v1249, 65535
  %v1273 = vshrl.u32 %v1249, 16
  %v1274 = vand.u32 %v1244, 65535
  %v1275 = vshrl.u32 %v1244, 16
  %v1276 = vmul.u32 %v1272, %v1274
  %v1277 = vmul.u32 %v1272, %v1275
  %v1278 = vmul.u32 %v1273, %v1274
  %v1279 = vmul.u32 %v1273, %v1275
  %v1280 = vshll.u32 %v1277, 16
  %v1281 = vshrl.u32 %v1277, 16
  %v1282 = vshll.u32 %v1278, 16
  %v1283 = vshrl.u32 %v1278, 16
  %vm1284 = vc.u32 %v1276, %v1280
  %v1285 = vsel %vm1284, 1, 0
  %v1286 = vadd.s32 %v1276, %v1280
  %v1287 = vadd.s32 %v1279, %v1285
  %vm1288 = vc.u32 %v1286, %v1282
  %v1289 = vsel %vm1288, 1, 0
  %v1290 = vadd.s32 %v1286, %v1282
  %v1291 = vadd.s32 %v1287, %v1289
  %v1292 = vadd.s32 %v1291, %v1281
  %v1293 = vadd.s32 %v1292, %v1283
  %v1294 = vmul.u32 %v1249, %v1240
  %v1295 = vadd.s32 %v1271, %v1290
  %vm1296 = vc.u32 %v1271, %v1290
  %v1297 = vadd.s32 %v1293, 1
  %v1298 = vsel %vm1296, %v1297, %v1293
  %v1299 = vadd.s32 %v1294, %v1298
  %v1300 = vadd.s32 %v1299, 536870912
  %v1301 = vshrl.u32 %v1300, 30
  %v1302 = vshll.u32 %v1301, 30
  %v1303 = vsub.s32 %v1299, %v1302
  %vm1304 = vcmp.lt.s32.totalorder %v1303, 0
  %v1305 = vsub.s32 0, %v1303
  %v1306 = vsel %vm1304, %v1305, %v1303
  %v1307 = vclz %v1306
  %v1308 = vsub.s32 %v1307, 2
  %vm1309 = vcmp.gt.s32.totalorder 0, %v1308
  %v1310 = vsel %vm1309, 0, %v1308
  %v1311 = vsub.s32 32, %v1310
  %v1312 = vshll.u32 %v1303, %v1310
  %v1313 = vshrl.u32 %v1295, %v1311
  %v1314 = vor.u32 %v1312, %v1313
  %v1315 = vsub.s32 4294967266, %v1310
  %v1316 = vadd.s32 %v1315, 127
  %v1317 = vshll.u32 %v1316, 23
  %v1318 = vor.u32 4788187, %v1317
  %v1319 = vand.u32 2147483647, %v1318
  %v1321 = vcvt.s32.f32 %v1314
  %v1322 = vmul.f32 %v1321, %v1319
  %v1323 = vxor.u32 %v1322, 2147483648
  %v1324 = vsel %vm1203, %v1323, %v1322
  %v1325 = vsub.s32 4, %v1301
  %v1326 = vsel %vm1203, %v1325, %v1301
  %v1327 = vsel %vm1202, %v415, %v1324
  %v1328 = vsel %vm1202, 0, %v1326
  %v1329 = vmul.f32 %v1327, %v1327
  %v1330 = vmul.f32 %v1329, -0.001358992
  %v1331 = vadd.f32 %v1330, 0.041655596
  %v1332 = vmul.f32 %v1329, %v1331
  %v1333 = vadd.f32 %v1332, -0.4999988
  %v1334 = vmul.f32 %v1329, %v1333
  %v1335 = vadd.f32 1.0, %v1334
  %v1336 = vmul.f32 %v1327, %v1327
  %v1337 = vmul.f32 %v1336, -0.00019511016
  %v1338 = vadd.f32 %v1337, 0.008332121
  %v1339 = vmul.f32 %v1336, %v1338
  %v1340 = vadd.f32 %v1339, -0.16666654
  %v1341 = vmul.f32 %v1336, %v1340
  %v1342 = vadd.f32 %v1341, 1.0
  %v1343 = vmul.f32 %v1342, %v1327
  %vm1344 = vweird.f32 %v415
  %v1345 = vadd.s32 %v1328, 3
  %v1346 = vand.u32 %v1345, 3
  %vm1347 = vcmp.lt.s32.totalorder %v1346, 2
  %vm1348 = vcmp.eq.s32.totalorder %v1346, 0
  %v1349 = vxor.u32 %v1343, 2147483648
  %v1350 = vsel %vm1348, %v1335, %v1349
  %vm1351 = vcmp.eq.s32.totalorder %v1346, 2
  %v1352 = vxor.u32 %v1335, 2147483648
  %v1353 = vsel %vm1351, %v1352, %v1343
  %v1354 = vsel %vm1347, %v1350, %v1353
  %v1355 = vsel %vm1344, nan, %v1354
  %v1356 = vand.u32 2147483647, %v416
  %vm1357 = vcmp.le.f32.partialorder %v1356, 0.7853982
  %vm1358 = vcmp.lt.s32.totalorder %v416, 0
  %v1359 = vand.u32 %v416, 2139095040
  %v1360 = vshrl.u32 %v1359, 23
  %v1361 = vsub.s32 %v1360, 127
  %v1362 = vand.u32 2147483647, %v416
  %v1363 = vand.u32 %v1362, 8388607
  %v1364 = vor.u32 %v1363, 8388608
  %v1365 = vsub.s32 0, %v1364
  %v1366 = vadd.s32 %v1361, 1
  %vm1367 = vcmp.gt.s32.totalorder %v1366, 0
  %v1368 = vsel %vm1367, %v1366, 0
  %v1369 = vshrl.u32 %v1368, 5
  %v1370 = vand.u32 %v1368, 31
  %v1371 = vsub.s32 32, %v1370
  %v1372 = vshrl.u32 683565275, %v1371
  %v1373 = vshll.u32 683565275, %v1370
  %v1374 = vshrl.u32 2475754826, %v1371
  %v1375 = vor.u32 %v1373, %v1374
  %v1376 = vshll.u32 2475754826, %v1370
  %v1377 = vshrl.u32 2131351028, %v1371
  %v1378 = vor.u32 %v1376, %v1377
  %v1379 = vshll.u32 2131351028, %v1370
  %v1380 = vshrl.u32 2102212464, %v1371
  %v1381 = vor.u32 %v1379, %v1380
  %v1382 = vshll.u32 2102212464, %v1370
  %v1383 = vshrl.u32 920167782, %v1371
  %v1384 = vor.u32 %v1382, %v1383
  %v1385 = vshll.u32 920167782, %v1370
  %v1386 = vshrl.u32 1326507024, %v1371
  %v1387 = vor.u32 %v1385, %v1386
  %vm1388 = vcmp.lt.s32.totalorder %v1369, 1
  %vm1389 = vcmp.lt.s32.totalorder %v1369, 2
  %vm1390 = vcmp.lt.s32.totalorder %v1369, 3
  %vm1391 = vcmp.lt.s32.totalorder %v1369, 4
  %v1392 = vsel %vm1388, %v1372, %v1375
  %v1393 = vsel %vm1391, %v1381, 2102212464
  %v1394 = vsel %vm1390, %v1378, %v1393
  %v1395 = vsel %vm1389, %v1392, %v1394
  %v1396 = vsel %vm1388, %v1375, %v1378
  %v1397 = vsel %vm1391, %v1384, 920167782
  %v1398 = vsel %vm1390, %v1381, %v1397
  %v1399 = vsel %vm1389, %v1396, %v1398
  %v1400 = vsel %vm1388, %v1378, %v1381
  %v1401 = vsel %vm1391, %v1387, 1326507024
  %v1402 = vsel %vm1390, %v1384, %v1401
  %v1403 = vsel %vm1389, %v1400, %v1402
  %v1404 = vshll.u32 %v1364, 8
  %v1405 = vand.u32 %v1404, 65535
  %v1406 = vshrl.u32 %v1404, 16
  %v1407 = vand.u32 %v1403, 65535
  %v1408 = vshrl.u32 %v1403, 16
  %v1409 = vmul.u32 %v1405, %v1407
  %v1410 = vmul.u32 %v1405, %v1408
  %v1411 = vmul.u32 %v1406, %v1407
  %v1412 = vmul.u32 %v1406, %v1408
  %v1413 = vshll.u32 %v1410, 16
  %v1414 = vshrl.u32 %v1410, 16
  %v1415 = vshll.u32 %v1411, 16
  %v1416 = vshrl.u32 %v1411, 16
  %vm1417 = vc.u32 %v1409, %v1413
  %v1418 = vsel %vm1417, 1, 0
  %v1419 = vadd.s32 %v1409, %v1413
  %v1420 = vadd.s32 %v1412, %v1418
  %vm1421 = vc.u32 %v1419, %v1415
  %v1422 = vsel %vm1421, 1, 0
  %v1423 = vadd.s32 %v1419, %v1415
  %v1424 = vadd.s32 %v1420, %v1422
  %v1425 = vadd.s32 %v1424, %v1414
  %v1426 = vadd.s32 %v1425, %v1416
  %v1427 = vand.u32 %v1404, 65535
  %v1428 = vshrl.u32 %v1404, 16
  %v1429 = vand.u32 %v1399, 65535
  %v1430 = vshrl.u32 %v1399, 16
  %v1431 = vmul.u32 %v1427, %v1429
  %v1432 = vmul.u32 %v1427, %v1430
  %v1433 = vmul.u32 %v1428, %v1429
  %v1434 = vmul.u32 %v1428, %v1430
  %v1435 = vshll.u32 %v1432, 16
  %v1436 = vshrl.u32 %v1432, 16
  %v1437 = vshll.u32 %v1433, 16
  %v1438 = vshrl.u32 %v1433, 16
  %vm1439 = vc.u32 %v1431, %v1435
  %v1440 = vsel %vm1439, 1, 0
  %v1441 = vadd.s32 %v1431, %v1435
  %v1442 = vadd.s32 %v1434, %v1440
  %vm1443 = vc.u32 %v1441, %v1437
  %v1444 = vsel %vm1443, 1, 0
  %v1445 = vadd.s32 %v1441, %v1437
  %v1446 = vadd.s32 %v1442, %v1444
  %v1447 = vadd.s32 %v1446, %v1436
  %v1448 = vadd.s32 %v1447, %v1438
  %v1449 = vmul.u32 %v1404, %v1395
  %v1450 = vadd.s32 %v1426, %v1445
  %vm1451 = vc.u32 %v1426, %v1445
  %v1452 = vadd.s32 %v1448, 1
  %v1453 = vsel %vm1451, %v1452, %v1448
  %v1454 = vadd.s32 %v1449, %v1453
  %v1455 = vadd.s32 %v1454, 536870912
  %v1456 = vshrl.u32 %v1455, 30
  %v1457 = vshll.u32 %v1456, 30
  %v1458 = vsub.s32 %v1454, %v1457
  %vm1459 = vcmp.lt.s32.totalorder %v1458, 0
  %v1460 = vsub.s32 0, %v1458
  %v1461 = vsel %vm1459, %v1460, %v1458
  %v1462 = vclz %v1461
  %v1463 = vsub.s32 %v1462, 2
  %vm1464 = vcmp.gt.s32.totalorder 0, %v1463
  %v1465 = vsel %vm1464, 0, %v1463
  %v1466 = vsub.s32 32, %v1465
  %v1467 = vshll.u32 %v1458, %v1465
  %v1468 = vshrl.u32 %v1450, %v1466
  %v1469 = vor.u32 %v1467, %v1468
  %v1470 = vsub.s32 4294967266, %v1465
  %v1471 = vadd.s32 %v1470, 127
  %v1472 = vshll.u32 %v1471, 23
  %v1473 = vor.u32 4788187, %v1472
  %v1474 = vand.u32 2147483647, %v1473
  %v1476 = vcvt.s32.f32 %v1469
  %v1477 = vmul.f32 %v1476, %v1474
  %v1478 = vxor.u32 %v1477, 2147483648
  %v1479 = vsel %vm1358, %v1478, %v1477
  %v1480 = vsub.s32 4, %v1456
  %v1481 = vsel %vm1358, %v1480, %v1456
  %v1482 = vsel %vm1357, %v416, %v1479
  %v1483 = vsel %vm1357, 0, %v1481
  %v1484 = vmul.f32 %v1482, %v1482
  %v1485 = vmul.f32 %v1484, -0.001358992
  %v1486 = vadd.f32 %v1485, 0.041655596
  %v1487 = vmul.f32 %v1484, %v1486
  %v1488 = vadd.f32 %v1487, -0.4999988
  %v1489 = vmul.f32 %v1484, %v1488
  %v1490 = vadd.f32 1.0, %v1489
  %v1491 = vmul.f32 %v1482, %v1482
  %v1492 = vmul.f32 %v1491, -0.00019511016
  %v1493 = vadd.f32 %v1492, 0.008332121
  %v1494 = vmul.f32 %v1491, %v1493
  %v1495 = vadd.f32 %v1494, -0.16666654
  %v1496 = vmul.f32 %v1491, %v1495
  %v1497 = vadd.f32 %v1496, 1.0
  %v1498 = vmul.f32 %v1497, %v1482
  %vm1499 = vweird.f32 %v416
  %v1500 = vadd.s32 %v1483, 3
  %v1501 = vand.u32 %v1500, 3
  %vm1502 = vcmp.lt.s32.totalorder %v1501, 2
  %vm1503 = vcmp.eq.s32.totalorder %v1501, 0
  %v1504 = vxor.u32 %v1498, 2147483648
  %v1505 = vsel %vm1503, %v1490, %v1504
  %vm1506 = vcmp.eq.s32.totalorder %v1501, 2
  %v1507 = vxor.u32 %v1490, 2147483648
  %v1508 = vsel %vm1506, %v1507, %v1498
  %v1509 = vsel %vm1502, %v1505, %v1508
  %v1510 = vsel %vm1499, nan, %v1509
  %v1511 = vand.u32 2147483647, %v417
  %vm1512 = vcmp.le.f32.partialorder %v1511, 0.7853982
  %vm1513 = vcmp.lt.s32.totalorder %v417, 0
  %v1514 = vand.u32 %v417, 2139095040
  %v1515 = vshrl.u32 %v1514, 23
  %v1516 = vsub.s32 %v1515, 127
  %v1517 = vand.u32 2147483647, %v417
  %v1518 = vand.u32 %v1517, 8388607
  %v1519 = vor.u32 %v1518, 8388608
  %v1520 = vsub.s32 0, %v1519
  %v1521 = vadd.s32 %v1516, 1
  %vm1522 = vcmp.gt.s32.totalorder %v1521, 0
  %v1523 = vsel %vm1522, %v1521, 0
  %v1524 = vshrl.u32 %v1523, 5
  %v1525 = vand.u32 %v1523, 31
  %v1526 = vsub.s32 32, %v1525
  %v1527 = vshrl.u32 683565275, %v1526
  %v1528 = vshll.u32 683565275, %v1525
  %v1529 = vshrl.u32 2475754826, %v1526
  %v1530 = vor.u32 %v1528, %v1529
  %v1531 = vshll.u32 2475754826, %v1525
  %v1532 = vshrl.u32 2131351028, %v1526
  %v1533 = vor.u32 %v1531, %v1532
  %v1534 = vshll.u32 2131351028, %v1525
  %v1535 = vshrl.u32 2102212464, %v1526
  %v1536 = vor.u32 %v1534, %v1535
  %v1537 = vshll.u32 2102212464, %v1525
  %v1538 = vshrl.u32 920167782, %v1526
  %v1539 = vor.u32 %v1537, %v1538
  %v1540 = vshll.u32 920167782, %v1525
  %v1541 = vshrl.u32 1326507024, %v1526
  %v1542 = vor.u32 %v1540, %v1541
  %vm1543 = vcmp.lt.s32.totalorder %v1524, 1
  %vm1544 = vcmp.lt.s32.totalorder %v1524, 2
  %vm1545 = vcmp.lt.s32.totalorder %v1524, 3
  %vm1546 = vcmp.lt.s32.totalorder %v1524, 4
  %v1547 = vsel %vm1543, %v1527, %v1530
  %v1548 = vsel %vm1546, %v1536, 2102212464
  %v1549 = vsel %vm1545, %v1533, %v1548
  %v1550 = vsel %vm1544, %v1547, %v1549
  %v1551 = vsel %vm1543, %v1530, %v1533
  %v1552 = vsel %vm1546, %v1539, 920167782
  %v1553 = vsel %vm1545, %v1536, %v1552
  %v1554 = vsel %vm1544, %v1551, %v1553
  %v1555 = vsel %vm1543, %v1533, %v1536
  %v1556 = vsel %vm1546, %v1542, 1326507024
  %v1557 = vsel %vm1545, %v1539, %v1556
  %v1558 = vsel %vm1544, %v1555, %v1557
  %v1559 = vshll.u32 %v1519, 8
  %v1560 = vand.u32 %v1559, 65535
  %v1561 = vshrl.u32 %v1559, 16
  %v1562 = vand.u32 %v1558, 65535
  %v1563 = vshrl.u32 %v1558, 16
  %v1564 = vmul.u32 %v1560, %v1562
  %v1565 = vmul.u32 %v1560, %v1563
  %v1566 = vmul.u32 %v1561, %v1562
  %v1567 = vmul.u32 %v1561, %v1563
  %v1568 = vshll.u32 %v1565, 16
  %v1569 = vshrl.u32 %v1565, 16
  %v1570 = vshll.u32 %v1566, 16
  %v1571 = vshrl.u32 %v1566, 16
  %vm1572 = vc.u32 %v1564, %v1568
  %v1573 = vsel %vm1572, 1, 0
  %v1574 = vadd.s32 %v1564, %v1568
  %v1575 = vadd.s32 %v1567, %v1573
  %vm1576 = vc.u32 %v1574, %v1570
  %v1577 = vsel %vm1576, 1, 0
  %v1578 = vadd.s32 %v1574, %v1570
  %v1579 = vadd.s32 %v1575, %v1577
  %v1580 = vadd.s32 %v1579, %v1569
  %v1581 = vadd.s32 %v1580, %v1571
  %v1582 = vand.u32 %v1559, 65535
  %v1583 = vshrl.u32 %v1559, 16
  %v1584 = vand.u32 %v1554, 65535
  %v1585 = vshrl.u32 %v1554, 16
  %v1586 = vmul.u32 %v1582, %v1584
  %v1587 = vmul.u32 %v1582, %v1585
  %v1588 = vmul.u32 %v1583, %v1584
  %v1589 = vmul.u32 %v1583, %v1585
  %v1590 = vshll.u32 %v1587, 16
  %v1591 = vshrl.u32 %v1587, 16
  %v1592 = vshll.u32 %v1588, 16
  %v1593 = vshrl.u32 %v1588, 16
  %vm1594 = vc.u32 %v1586, %v1590
  %v1595 = vsel %vm1594, 1, 0
  %v1596 = vadd.s32 %v1586, %v1590
  %v1597 = vadd.s32 %v1589, %v1595
  %vm1598 = vc.u32 %v1596, %v1592
  %v1599 = vsel %vm1598, 1, 0
  %v1600 = vadd.s32 %v1596, %v1592
  %v1601 = vadd.s32 %v1597, %v1599
  %v1602 = vadd.s32 %v1601, %v1591
  %v1603 = vadd.s32 %v1602, %v1593
  %v1604 = vmul.u32 %v1559, %v1550
  %v1605 = vadd.s32 %v1581, %v1600
  %vm1606 = vc.u32 %v1581, %v1600
  %v1607 = vadd.s32 %v1603, 1
  %v1608 = vsel %vm1606, %v1607, %v1603
  %v1609 = vadd.s32 %v1604, %v1608
  %v1610 = vadd.s32 %v1609, 536870912
  %v1611 = vshrl.u32 %v1610, 30
  %v1612 = vshll.u32 %v1611, 30
  %v1613 = vsub.s32 %v1609, %v1612
  %vm1614 = vcmp.lt.s32.totalorder %v1613, 0
  %v1615 = vsub.s32 0, %v1613
  %v1616 = vsel %vm1614, %v1615, %v1613
  %v1617 = vclz %v1616
  %v1618 = vsub.s32 %v1617, 2
  %vm1619 = vcmp.gt.s32.totalorder 0, %v1618
  %v1620 = vsel %vm1619, 0, %v1618
  %v1621 = vsub.s32 32, %v1620
  %v1622 = vshll.u32 %v1613, %v1620
  %v1623 = vshrl.u32 %v1605, %v1621
  %v1624 = vor.u32 %v1622, %v1623
  %v1625 = vsub.s32 4294967266, %v1620
  %v1626 = vadd.s32 %v1625, 127
  %v1627 = vshll.u32 %v1626, 23
  %v1628 = vor.u32 4788187, %v1627
  %v1629 = vand.u32 2147483647, %v1628
  %v1631 = vcvt.s32.f32 %v1624
  %v1632 = vmul.f32 %v1631, %v1629
  %v1633 = vxor.u32 %v1632, 2147483648
  %v1634 = vsel %vm1513, %v1633, %v1632
  %v1635 = vsub.s32 4, %v1611
  %v1636 = vsel %vm1513, %v1635, %v1611
  %v1637 = vsel %vm1512, %v417, %v1634
  %v1638 = vsel %vm1512, 0, %v1636
  %v1639 = vmul.f32 %v1637, %v1637
  %v1640 = vmul.f32 %v1639, -0.001358992
  %v1641 = vadd.f32 %v1640, 0.041655596
  %v1642 = vmul.f32 %v1639, %v1641
  %v1643 = vadd.f32 %v1642, -0.4999988
  %v1644 = vmul.f32 %v1639, %v1643
  %v1645 = vadd.f32 1.0, %v1644
  %v1646 = vmul.f32 %v1637, %v1637
  %v1647 = vmul.f32 %v1646, -0.00019511016
  %v1648 = vadd.f32 %v1647, 0.008332121
  %v1649 = vmul.f32 %v1646, %v1648
  %v1650 = vadd.f32 %v1649, -0.16666654
  %v1651 = vmul.f32 %v1646, %v1650
  %v1652 = vadd.f32 %v1651, 1.0
  %v1653 = vmul.f32 %v1652, %v1637
  %vm1654 = vweird.f32 %v417
  %v1655 = vadd.s32 %v1638, 3
  %v1656 = vand.u32 %v1655, 3
  %vm1657 = vcmp.lt.s32.totalorder %v1656, 2
  %vm1658 = vcmp.eq.s32.totalorder %v1656, 0
  %v1659 = vxor.u32 %v1653, 2147483648
  %v1660 = vsel %vm1658, %v1645, %v1659
  %vm1661 = vcmp.eq.s32.totalorder %v1656, 2
  %v1662 = vxor.u32 %v1645, 2147483648
  %v1663 = vsel %vm1661, %v1662, %v1653
  %v1664 = vsel %vm1657, %v1660, %v1663
  %v1665 = vsel %vm1654, nan, %v1664
  %v1666 = vand.u32 2147483647, %v418
  %vm1667 = vcmp.le.f32.partialorder %v1666, 0.7853982
  %vm1668 = vcmp.lt.s32.totalorder %v418, 0
  %v1669 = vand.u32 %v418, 2139095040
  %v1670 = vshrl.u32 %v1669, 23
  %v1671 = vsub.s32 %v1670, 127
  %v1672 = vand.u32 2147483647, %v418
  %v1673 = vand.u32 %v1672, 8388607
  %v1674 = vor.u32 %v1673, 8388608
  %v1675 = vsub.s32 0, %v1674
  %v1676 = vadd.s32 %v1671, 1
  %vm1677 = vcmp.gt.s32.totalorder %v1676, 0
  %v1678 = vsel %vm1677, %v1676, 0
  %v1679 = vshrl.u32 %v1678, 5
  %v1680 = vand.u32 %v1678, 31
  %v1681 = vsub.s32 32, %v1680
  %v1682 = vshrl.u32 683565275, %v1681
  %v1683 = vshll.u32 683565275, %v1680
  %v1684 = vshrl.u32 2475754826, %v1681
  %v1685 = vor.u32 %v1683, %v1684
  %v1686 = vshll.u32 2475754826, %v1680
  %v1687 = vshrl.u32 2131351028, %v1681
  %v1688 = vor.u32 %v1686, %v1687
  %v1689 = vshll.u32 2131351028, %v1680
  %v1690 = vshrl.u32 2102212464, %v1681
  %v1691 = vor.u32 %v1689, %v1690
  %v1692 = vshll.u32 2102212464, %v1680
  %v1693 = vshrl.u32 920167782, %v1681
  %v1694 = vor.u32 %v1692, %v1693
  %v1695 = vshll.u32 920167782, %v1680
  %v1696 = vshrl.u32 1326507024, %v1681
  %v1697 = vor.u32 %v1695, %v1696
  %vm1698 = vcmp.lt.s32.totalorder %v1679, 1
  %vm1699 = vcmp.lt.s32.totalorder %v1679, 2
  %vm1700 = vcmp.lt.s32.totalorder %v1679, 3
  %vm1701 = vcmp.lt.s32.totalorder %v1679, 4
  %v1702 = vsel %vm1698, %v1682, %v1685
  %v1703 = vsel %vm1701, %v1691, 2102212464
  %v1704 = vsel %vm1700, %v1688, %v1703
  %v1705 = vsel %vm1699, %v1702, %v1704
  %v1706 = vsel %vm1698, %v1685, %v1688
  %v1707 = vsel %vm1701, %v1694, 920167782
  %v1708 = vsel %vm1700, %v1691, %v1707
  %v1709 = vsel %vm1699, %v1706, %v1708
  %v1710 = vsel %vm1698, %v1688, %v1691
  %v1711 = vsel %vm1701, %v1697, 1326507024
  %v1712 = vsel %vm1700, %v1694, %v1711
  %v1713 = vsel %vm1699, %v1710, %v1712
  %v1714 = vshll.u32 %v1674, 8
  %v1715 = vand.u32 %v1714, 65535
  %v1716 = vshrl.u32 %v1714, 16
  %v1717 = vand.u32 %v1713, 65535
  %v1718 = vshrl.u32 %v1713, 16
  %v1719 = vmul.u32 %v1715, %v1717
  %v1720 = vmul.u32 %v1715, %v1718
  %v1721 = vmul.u32 %v1716, %v1717
  %v1722 = vmul.u32 %v1716, %v1718
  %v1723 = vshll.u32 %v1720, 16
  %v1724 = vshrl.u32 %v1720, 16
  %v1725 = vshll.u32 %v1721, 16
  %v1726 = vshrl.u32 %v1721, 16
  %vm1727 = vc.u32 %v1719, %v1723
  %v1728 = vsel %vm1727, 1, 0
  %v1729 = vadd.s32 %v1719, %v1723
  %v1730 = vadd.s32 %v1722, %v1728
  %vm1731 = vc.u32 %v1729, %v1725
  %v1732 = vsel %vm1731, 1, 0
  %v1733 = vadd.s32 %v1729, %v1725
  %v1734 = vadd.s32 %v1730, %v1732
  %v1735 = vadd.s32 %v1734, %v1724
  %v1736 = vadd.s32 %v1735, %v1726
  %v1737 = vand.u32 %v1714, 65535
  %v1738 = vshrl.u32 %v1714, 16
  %v1739 = vand.u32 %v1709, 65535
  %v1740 = vshrl.u32 %v1709, 16
  %v1741 = vmul.u32 %v1737, %v1739
  %v1742 = vmul.u32 %v1737, %v1740
  %v1743 = vmul.u32 %v1738, %v1739
  %v1744 = vmul.u32 %v1738, %v1740
  %v1745 = vshll.u32 %v1742, 16
  %v1746 = vshrl.u32 %v1742, 16
  %v1747 = vshll.u32 %v1743, 16
  %v1748 = vshrl.u32 %v1743, 16
  %vm1749 = vc.u32 %v1741, %v1745
  %v1750 = vsel %vm1749, 1, 0
  %v1751 = vadd.s32 %v1741, %v1745
  %v1752 = vadd.s32 %v1744, %v1750
  %vm1753 = vc.u32 %v1751, %v1747
  %v1754 = vsel %vm1753, 1, 0
  %v1755 = vadd.s32 %v1751, %v1747
  %v1756 = vadd.s32 %v1752, %v1754
  %v1757 = vadd.s32 %v1756, %v1746
  %v1758 = vadd.s32 %v1757, %v1748
  %v1759 = vmul.u32 %v1714, %v1705
  %v1760 = vadd.s32 %v1736, %v1755
  %vm1761 = vc.u32 %v1736, %v1755
  %v1762 = vadd.s32 %v1758, 1
  %v1763 = vsel %vm1761, %v1762, %v1758
  %v1764 = vadd.s32 %v1759, %v1763
  %v1765 = vadd.s32 %v1764, 536870912
  %v1766 = vshrl.u32 %v1765, 30
  %v1767 = vshll.u32 %v1766, 30
  %v1768 = vsub.s32 %v1764, %v1767
  %vm1769 = vcmp.lt.s32.totalorder %v1768, 0
  %v1770 = vsub.s32 0, %v1768
  %v1771 = vsel %vm1769, %v1770, %v1768
  %v1772 = vclz %v1771
  %v1773 = vsub.s32 %v1772, 2
  %vm1774 = vcmp.gt.s32.totalorder 0, %v1773
  %v1775 = vsel %vm1774, 0, %v1773
  %v1776 = vsub.s32 32, %v1775
  %v1777 = vshll.u32 %v1768, %v1775
  %v1778 = vshrl.u32 %v1760, %v1776
  %v1779 = vor.u32 %v1777, %v1778
  %v1780 = vsub.s32 4294967266, %v1775
  %v1781 = vadd.s32 %v1780, 127
  %v1782 = vshll.u32 %v1781, 23
  %v1783 = vor.u32 4788187, %v1782
  %v1784 = vand.u32 2147483647, %v1783
  %v1786 = vcvt.s32.f32 %v1779
  %v1787 = vmul.f32 %v1786, %v1784
  %v1788 = vxor.u32 %v1787, 2147483648
  %v1789 = vsel %vm1668, %v1788, %v1787
  %v1790 = vsub.s32 4, %v1766
  %v1791 = vsel %vm1668, %v1790, %v1766
  %v1792 = vsel %vm1667, %v418, %v1789
  %v1793 = vsel %vm1667, 0, %v1791
  %v1794 = vmul.f32 %v1792, %v1792
  %v1795 = vmul.f32 %v1794, -0.001358992
  %v1796 = vadd.f32 %v1795, 0.041655596
  %v1797 = vmul.f32 %v1794, %v1796
  %v1798 = vadd.f32 %v1797, -0.4999988
  %v1799 = vmul.f32 %v1794, %v1798
  %v1800 = vadd.f32 1.0, %v1799
  %v1801 = vmul.f32 %v1792, %v1792
  %v1802 = vmul.f32 %v1801, -0.00019511016
  %v1803 = vadd.f32 %v1802, 0.008332121
  %v1804 = vmul.f32 %v1801, %v1803
  %v1805 = vadd.f32 %v1804, -0.16666654
  %v1806 = vmul.f32 %v1801, %v1805
  %v1807 = vadd.f32 %v1806, 1.0
  %v1808 = vmul.f32 %v1807, %v1792
  %vm1809 = vweird.f32 %v418
  %v1810 = vadd.s32 %v1793, 3
  %v1811 = vand.u32 %v1810, 3
  %vm1812 = vcmp.lt.s32.totalorder %v1811, 2
  %vm1813 = vcmp.eq.s32.totalorder %v1811, 0
  %v1814 = vxor.u32 %v1808, 2147483648
  %v1815 = vsel %vm1813, %v1800, %v1814
  %vm1816 = vcmp.eq.s32.totalorder %v1811, 2
  %v1817 = vxor.u32 %v1800, 2147483648
  %v1818 = vsel %vm1816, %v1817, %v1808
  %v1819 = vsel %vm1812, %v1815, %v1818
  %v1820 = vsel %vm1809, nan, %v1819
  %v1821 = vand.u32 2147483647, %v419
  %vm1822 = vcmp.le.f32.partialorder %v1821, 0.7853982
  %vm1823 = vcmp.lt.s32.totalorder %v419, 0
  %v1824 = vand.u32 %v419, 2139095040
  %v1825 = vshrl.u32 %v1824, 23
  %v1826 = vsub.s32 %v1825, 127
  %v1827 = vand.u32 2147483647, %v419
  %v1828 = vand.u32 %v1827, 8388607
  %v1829 = vor.u32 %v1828, 8388608
  %v1830 = vsub.s32 0, %v1829
  %v1831 = vadd.s32 %v1826, 1
  %vm1832 = vcmp.gt.s32.totalorder %v1831, 0
  %v1833 = vsel %vm1832, %v1831, 0
  %v1834 = vshrl.u32 %v1833, 5
  %v1835 = vand.u32 %v1833, 31
  %v1836 = vsub.s32 32, %v1835
  %v1837 = vshrl.u32 683565275, %v1836
  %v1838 = vshll.u32 683565275, %v1835
  %v1839 = vshrl.u32 2475754826, %v1836
  %v1840 = vor.u32 %v1838, %v1839
  %v1841 = vshll.u32 2475754826, %v1835
  %v1842 = vshrl.u32 2131351028, %v1836
  %v1843 = vor.u32 %v1841, %v1842
  %v1844 = vshll.u32 2131351028, %v1835
  %v1845 = vshrl.u32 2102212464, %v1836
  %v1846 = vor.u32 %v1844, %v1845
  %v1847 = vshll.u32 2102212464, %v1835
  %v1848 = vshrl.u32 920167782, %v1836
  %v1849 = vor.u32 %v1847, %v1848
  %v1850 = vshll.u32 920167782, %v1835
  %v1851 = vshrl.u32 1326507024, %v1836
  %v1852 = vor.u32 %v1850, %v1851
  %vm1853 = vcmp.lt.s32.totalorder %v1834, 1
  %vm1854 = vcmp.lt.s32.totalorder %v1834, 2
  %vm1855 = vcmp.lt.s32.totalorder %v1834, 3
  %vm1856 = vcmp.lt.s32.totalorder %v1834, 4
  %v1857 = vsel %vm1853, %v1837, %v1840
  %v1858 = vsel %vm1856, %v1846, 2102212464
  %v1859 = vsel %vm1855, %v1843, %v1858
  %v1860 = vsel %vm1854, %v1857, %v1859
  %v1861 = vsel %vm1853, %v1840, %v1843
  %v1862 = vsel %vm1856, %v1849, 920167782
  %v1863 = vsel %vm1855, %v1846, %v1862
  %v1864 = vsel %vm1854, %v1861, %v1863
  %v1865 = vsel %vm1853, %v1843, %v1846
  %v1866 = vsel %vm1856, %v1852, 1326507024
  %v1867 = vsel %vm1855, %v1849, %v1866
  %v1868 = vsel %vm1854, %v1865, %v1867
  %v1869 = vshll.u32 %v1829, 8
  %v1870 = vand.u32 %v1869, 65535
  %v1871 = vshrl.u32 %v1869, 16
  %v1872 = vand.u32 %v1868, 65535
  %v1873 = vshrl.u32 %v1868, 16
  %v1874 = vmul.u32 %v1870, %v1872
  %v1875 = vmul.u32 %v1870, %v1873
  %v1876 = vmul.u32 %v1871, %v1872
  %v1877 = vmul.u32 %v1871, %v1873
  %v1878 = vshll.u32 %v1875, 16
  %v1879 = vshrl.u32 %v1875, 16
  %v1880 = vshll.u32 %v1876, 16
  %v1881 = vshrl.u32 %v1876, 16
  %vm1882 = vc.u32 %v1874, %v1878
  %v1883 = vsel %vm1882, 1, 0
  %v1884 = vadd.s32 %v1874, %v1878
  %v1885 = vadd.s32 %v1877, %v1883
  %vm1886 = vc.u32 %v1884, %v1880
  %v1887 = vsel %vm1886, 1, 0
  %v1888 = vadd.s32 %v1884, %v1880
  %v1889 = vadd.s32 %v1885, %v1887
  %v1890 = vadd.s32 %v1889, %v1879
  %v1891 = vadd.s32 %v1890, %v1881
  %v1892 = vand.u32 %v1869, 65535
  %v1893 = vshrl.u32 %v1869, 16
  %v1894 = vand.u32 %v1864, 65535
  %v1895 = vshrl.u32 %v1864, 16
  %v1896 = vmul.u32 %v1892, %v1894
  %v1897 = vmul.u32 %v1892, %v1895
  %v1898 = vmul.u32 %v1893, %v1894
  %v1899 = vmul.u32 %v1893, %v1895
  %v1900 = vshll.u32 %v1897, 16
  %v1901 = vshrl.u32 %v1897, 16
  %v1902 = vshll.u32 %v1898, 16
  %v1903 = vshrl.u32 %v1898, 16
  %vm1904 = vc.u32 %v1896, %v1900
  %v1905 = vsel %vm1904, 1, 0
  %v1906 = vadd.s32 %v1896, %v1900
  %v1907 = vadd.s32 %v1899, %v1905
  %vm1908 = vc.u32 %v1906, %v1902
  %v1909 = vsel %vm1908, 1, 0
  %v1910 = vadd.s32 %v1906, %v1902
  %v1911 = vadd.s32 %v1907, %v1909
  %v1912 = vadd.s32 %v1911, %v1901
  %v1913 = vadd.s32 %v1912, %v1903
  %v1914 = vmul.u32 %v1869, %v1860
  %v1915 = vadd.s32 %v1891, %v1910
  %vm1916 = vc.u32 %v1891, %v1910
  %v1917 = vadd.s32 %v1913, 1
  %v1918 = vsel %vm1916, %v1917, %v1913
  %v1919 = vadd.s32 %v1914, %v1918
  %v1920 = vadd.s32 %v1919, 536870912
  %v1921 = vshrl.u32 %v1920, 30
  %v1922 = vshll.u32 %v1921, 30
  %v1923 = vsub.s32 %v1919, %v1922
  %vm1924 = vcmp.lt.s32.totalorder %v1923, 0
  %v1925 = vsub.s32 0, %v1923
  %v1926 = vsel %vm1924, %v1925, %v1923
  %v1927 = vclz %v1926
  %v1928 = vsub.s32 %v1927, 2
  %vm1929 = vcmp.gt.s32.totalorder 0, %v1928
  %v1930 = vsel %vm1929, 0, %v1928
  %v1931 = vsub.s32 32, %v1930
  %v1932 = vshll.u32 %v1923, %v1930
  %v1933 = vshrl.u32 %v1915, %v1931
  %v1934 = vor.u32 %v1932, %v1933
  %v1935 = vsub.s32 4294967266, %v1930
  %v1936 = vadd.s32 %v1935, 127
  %v1937 = vshll.u32 %v1936, 23
  %v1938 = vor.u32 4788187, %v1937
  %v1939 = vand.u32 2147483647, %v1938
  %v1941 = vcvt.s32.f32 %v1934
  %v1942 = vmul.f32 %v1941, %v1939
  %v1943 = vxor.u32 %v1942, 2147483648
  %v1944 = vsel %vm1823, %v1943, %v1942
  %v1945 = vsub.s32 4, %v1921
  %v1946 = vsel %vm1823, %v1945, %v1921
  %v1947 = vsel %vm1822, %v419, %v1944
  %v1948 = vsel %vm1822, 0, %v1946
  %v1949 = vmul.f32 %v1947, %v1947
  %v1950 = vmul.f32 %v1949, -0.001358992
  %v1951 = vadd.f32 %v1950, 0.041655596
  %v1952 = vmul.f32 %v1949, %v1951
  %v1953 = vadd.f32 %v1952, -0.4999988
  %v1954 = vmul.f32 %v1949, %v1953
  %v1955 = vadd.f32 1.0, %v1954
  %v1956 = vmul.f32 %v1947, %v1947
  %v1957 = vmul.f32 %v1956, -0.00019511016
  %v1958 = vadd.f32 %v1957, 0.008332121
  %v1959 = vmul.f32 %v1956, %v1958
  %v1960 = vadd.f32 %v1959, -0.16666654
  %v1961 = vmul.f32 %v1956, %v1960
  %v1962 = vadd.f32 %v1961, 1.0
  %v1963 = vmul.f32 %v1962, %v1947
  %vm1964 = vweird.f32 %v419
  %v1965 = vadd.s32 %v1948, 3
  %v1966 = vand.u32 %v1965, 3
  %vm1967 = vcmp.lt.s32.totalorder %v1966, 2
  %vm1968 = vcmp.eq.s32.totalorder %v1966, 0
  %v1969 = vxor.u32 %v1963, 2147483648
  %v1970 = vsel %vm1968, %v1955, %v1969
  %vm1971 = vcmp.eq.s32.totalorder %v1966, 2
  %v1972 = vxor.u32 %v1955, 2147483648
  %v1973 = vsel %vm1971, %v1972, %v1963
  %v1974 = vsel %vm1967, %v1970, %v1973
  %v1975 = vsel %vm1964, nan, %v1974
  %v1976 = vand.u32 2147483647, %v420
  %vm1977 = vcmp.le.f32.partialorder %v1976, 0.7853982
  %vm1978 = vcmp.lt.s32.totalorder %v420, 0
  %v1979 = vand.u32 %v420, 2139095040
  %v1980 = vshrl.u32 %v1979, 23
  %v1981 = vsub.s32 %v1980, 127
  %v1982 = vand.u32 2147483647, %v420
  %v1983 = vand.u32 %v1982, 8388607
  %v1984 = vor.u32 %v1983, 8388608
  %v1985 = vsub.s32 0, %v1984
  %v1986 = vadd.s32 %v1981, 1
  %vm1987 = vcmp.gt.s32.totalorder %v1986, 0
  %v1988 = vsel %vm1987, %v1986, 0
  %v1989 = vshrl.u32 %v1988, 5
  %v1990 = vand.u32 %v1988, 31
  %v1991 = vsub.s32 32, %v1990
  %v1992 = vshrl.u32 683565275, %v1991
  %v1993 = vshll.u32 683565275, %v1990
  %v1994 = vshrl.u32 2475754826, %v1991
  %v1995 = vor.u32 %v1993, %v1994
  %v1996 = vshll.u32 2475754826, %v1990
  %v1997 = vshrl.u32 2131351028, %v1991
  %v1998 = vor.u32 %v1996, %v1997
  %v1999 = vshll.u32 2131351028, %v1990
  %v2000 = vshrl.u32 2102212464, %v1991
  %v2001 = vor.u32 %v1999, %v2000
  %v2002 = vshll.u32 2102212464, %v1990
  %v2003 = vshrl.u32 920167782, %v1991
  %v2004 = vor.u32 %v2002, %v2003
  %v2005 = vshll.u32 920167782, %v1990
  %v2006 = vshrl.u32 1326507024, %v1991
  %v2007 = vor.u32 %v2005, %v2006
  %vm2008 = vcmp.lt.s32.totalorder %v1989, 1
  %vm2009 = vcmp.lt.s32.totalorder %v1989, 2
  %vm2010 = vcmp.lt.s32.totalorder %v1989, 3
  %vm2011 = vcmp.lt.s32.totalorder %v1989, 4
  %v2012 = vsel %vm2008, %v1992, %v1995
  %v2013 = vsel %vm2011, %v2001, 2102212464
  %v2014 = vsel %vm2010, %v1998, %v2013
  %v2015 = vsel %vm2009, %v2012, %v2014
  %v2016 = vsel %vm2008, %v1995, %v1998
  %v2017 = vsel %vm2011, %v2004, 920167782
  %v2018 = vsel %vm2010, %v2001, %v2017
  %v2019 = vsel %vm2009, %v2016, %v2018
  %v2020 = vsel %vm2008, %v1998, %v2001
  %v2021 = vsel %vm2011, %v2007, 1326507024
  %v2022 = vsel %vm2010, %v2004, %v2021
  %v2023 = vsel %vm2009, %v2020, %v2022
  %v2024 = vshll.u32 %v1984, 8
  %v2025 = vand.u32 %v2024, 65535
  %v2026 = vshrl.u32 %v2024, 16
  %v2027 = vand.u32 %v2023, 65535
  %v2028 = vshrl.u32 %v2023, 16
  %v2029 = vmul.u32 %v2025, %v2027
  %v2030 = vmul.u32 %v2025, %v2028
  %v2031 = vmul.u32 %v2026, %v2027
  %v2032 = vmul.u32 %v2026, %v2028
  %v2033 = vshll.u32 %v2030, 16
  %v2034 = vshrl.u32 %v2030, 16
  %v2035 = vshll.u32 %v2031, 16
  %v2036 = vshrl.u32 %v2031, 16
  %vm2037 = vc.u32 %v2029, %v2033
  %v2038 = vsel %vm2037, 1, 0
  %v2039 = vadd.s32 %v2029, %v2033
  %v2040 = vadd.s32 %v2032, %v2038
  %vm2041 = vc.u32 %v2039, %v2035
  %v2042 = vsel %vm2041, 1, 0
  %v2043 = vadd.s32 %v2039, %v2035
  %v2044 = vadd.s32 %v2040, %v2042
  %v2045 = vadd.s32 %v2044, %v2034
  %v2046 = vadd.s32 %v2045, %v2036
  %v2047 = vand.u32 %v2024, 65535
  %v2048 = vshrl.u32 %v2024, 16
  %v2049 = vand.u32 %v2019, 65535
  %v2050 = vshrl.u32 %v2019, 16
  %v2051 = vmul.u32 %v2047, %v2049
  %v2052 = vmul.u32 %v2047, %v2050
  %v2053 = vmul.u32 %v2048, %v2049
  %v2054 = vmul.u32 %v2048, %v2050
  %v2055 = vshll.u32 %v2052, 16
  %v2056 = vshrl.u32 %v2052, 16
  %v2057 = vshll.u32 %v2053, 16
  %v2058 = vshrl.u32 %v2053, 16
  %vm2059 = vc.u32 %v2051, %v2055
  %v2060 = vsel %vm2059, 1, 0
  %v2061 = vadd.s32 %v2051, %v2055
  %v2062 = vadd.s32 %v2054, %v2060
  %vm2063 = vc.u32 %v2061, %v2057
  %v2064 = vsel %vm2063, 1, 0
  %v2065 = vadd.s32 %v2061, %v2057
  %v2066 = vadd.s32 %v2062, %v2064
  %v2067 = vadd.s32 %v2066, %v2056
  %v2068 = vadd.s32 %v2067, %v2058
  %v2069 = vmul.u32 %v2024, %v2015
  %v2070 = vadd.s32 %v2046, %v2065
  %vm2071 = vc.u32 %v2046, %v2065
  %v2072 = vadd.s32 %v2068, 1
  %v2073 = vsel %vm2071, %v2072, %v2068
  %v2074 = vadd.s32 %v2069, %v2073
  %v2075 = vadd.s32 %v2074, 536870912
  %v2076 = vshrl.u32 %v2075, 30
  %v2077 = vshll.u32 %v2076, 30
  %v2078 = vsub.s32 %v2074, %v2077
  %vm2079 = vcmp.lt.s32.totalorder %v2078, 0
  %v2080 = vsub.s32 0, %v2078
  %v2081 = vsel %vm2079, %v2080, %v2078
  %v2082 = vclz %v2081
  %v2083 = vsub.s32 %v2082, 2
  %vm2084 = vcmp.gt.s32.totalorder 0, %v2083
  %v2085 = vsel %vm2084, 0, %v2083
  %v2086 = vsub.s32 32, %v2085
  %v2087 = vshll.u32 %v2078, %v2085
  %v2088 = vshrl.u32 %v2070, %v2086
  %v2089 = vor.u32 %v2087, %v2088
  %v2090 = vsub.s32 4294967266, %v2085
  %v2091 = vadd.s32 %v2090, 127
  %v2092 = vshll.u32 %v2091, 23
  %v2093 = vor.u32 4788187, %v2092
  %v2094 = vand.u32 2147483647, %v2093
  %v2096 = vcvt.s32.f32 %v2089
  %v2097 = vmul.f32 %v2096, %v2094
  %v2098 = vxor.u32 %v2097, 2147483648
  %v2099 = vsel %vm1978, %v2098, %v2097
  %v2100 = vsub.s32 4, %v2076
  %v2101 = vsel %vm1978, %v2100, %v2076
  %v2102 = vsel %vm1977, %v420, %v2099
  %v2103 = vsel %vm1977, 0, %v2101
  %v2104 = vmul.f32 %v2102, %v2102
  %v2105 = vmul.f32 %v2104, -0.001358992
  %v2106 = vadd.f32 %v2105, 0.041655596
  %v2107 = vmul.f32 %v2104, %v2106
  %v2108 = vadd.f32 %v2107, -0.4999988
  %v2109 = vmul.f32 %v2104, %v2108
  %v2110 = vadd.f32 1.0, %v2109
  %v2111 = vmul.f32 %v2102, %v2102
  %v2112 = vmul.f32 %v2111, -0.00019511016
  %v2113 = vadd.f32 %v2112, 0.008332121
  %v2114 = vmul.f32 %v2111, %v2113
  %v2115 = vadd.f32 %v2114, -0.16666654
  %v2116 = vmul.f32 %v2111, %v2115
  %v2117 = vadd.f32 %v2116, 1.0
  %v2118 = vmul.f32 %v2117, %v2102
  %vm2119 = vweird.f32 %v420
  %v2120 = vadd.s32 %v2103, 3
  %v2121 = vand.u32 %v2120, 3
  %vm2122 = vcmp.lt.s32.totalorder %v2121, 2
  %vm2123 = vcmp.eq.s32.totalorder %v2121, 0
  %v2124 = vxor.u32 %v2118, 2147483648
  %v2125 = vsel %vm2123, %v2110, %v2124
  %vm2126 = vcmp.eq.s32.totalorder %v2121, 2
  %v2127 = vxor.u32 %v2110, 2147483648
  %v2128 = vsel %vm2126, %v2127, %v2118
  %v2129 = vsel %vm2122, %v2125, %v2128
  %v2130 = vsel %vm2119, nan, %v2129
  %v2131 = vand.u32 2147483647, %v421
  %vm2132 = vcmp.le.f32.partialorder %v2131, 0.7853982
  %vm2133 = vcmp.lt.s32.totalorder %v421, 0
  %v2134 = vand.u32 %v421, 2139095040
  %v2135 = vshrl.u32 %v2134, 23
  %v2136 = vsub.s32 %v2135, 127
  %v2137 = vand.u32 2147483647, %v421
  %v2138 = vand.u32 %v2137, 8388607
  %v2139 = vor.u32 %v2138, 8388608
  %v2140 = vsub.s32 0, %v2139
  %v2141 = vadd.s32 %v2136, 1
  %vm2142 = vcmp.gt.s32.totalorder %v2141, 0
  %v2143 = vsel %vm2142, %v2141, 0
  %v2144 = vshrl.u32 %v2143, 5
  %v2145 = vand.u32 %v2143, 31
  %v2146 = vsub.s32 32, %v2145
  %v2147 = vshrl.u32 683565275, %v2146
  %v2148 = vshll.u32 683565275, %v2145
  %v2149 = vshrl.u32 2475754826, %v2146
  %v2150 = vor.u32 %v2148, %v2149
  %v2151 = vshll.u32 2475754826, %v2145
  %v2152 = vshrl.u32 2131351028, %v2146
  %v2153 = vor.u32 %v2151, %v2152
  %v2154 = vshll.u32 2131351028, %v2145
  %v2155 = vshrl.u32 2102212464, %v2146
  %v2156 = vor.u32 %v2154, %v2155
  %v2157 = vshll.u32 2102212464, %v2145
  %v2158 = vshrl.u32 920167782, %v2146
  %v2159 = vor.u32 %v2157, %v2158
  %v2160 = vshll.u32 920167782, %v2145
  %v2161 = vshrl.u32 1326507024, %v2146
  %v2162 = vor.u32 %v2160, %v2161
  %vm2163 = vcmp.lt.s32.totalorder %v2144, 1
  %vm2164 = vcmp.lt.s32.totalorder %v2144, 2
  %vm2165 = vcmp.lt.s32.totalorder %v2144, 3
  %vm2166 = vcmp.lt.s32.totalorder %v2144, 4
  %v2167 = vsel %vm2163, %v2147, %v2150
  %v2168 = vsel %vm2166, %v2156, 2102212464
  %v2169 = vsel %vm2165, %v2153, %v2168
  %v2170 = vsel %vm2164, %v2167, %v2169
  %v2171 = vsel %vm2163, %v2150, %v2153
  %v2172 = vsel %vm2166, %v2159, 920167782
  %v2173 = vsel %vm2165, %v2156, %v2172
  %v2174 = vsel %vm2164, %v2171, %v2173
  %v2175 = vsel %vm2163, %v2153, %v2156
  %v2176 = vsel %vm2166, %v2162, 1326507024
  %v2177 = vsel %vm2165, %v2159, %v2176
  %v2178 = vsel %vm2164, %v2175, %v2177
  %v2179 = vshll.u32 %v2139, 8
  %v2180 = vand.u32 %v2179, 65535
  %v2181 = vshrl.u32 %v2179, 16
  %v2182 = vand.u32 %v2178, 65535
  %v2183 = vshrl.u32 %v2178, 16
  %v2184 = vmul.u32 %v2180, %v2182
  %v2185 = vmul.u32 %v2180, %v2183
  %v2186 = vmul.u32 %v2181, %v2182
  %v2187 = vmul.u32 %v2181, %v2183
  %v2188 = vshll.u32 %v2185, 16
  %v2189 = vshrl.u32 %v2185, 16
  %v2190 = vshll.u32 %v2186, 16
  %v2191 = vshrl.u32 %v2186, 16
  %vm2192 = vc.u32 %v2184, %v2188
  %v2193 = vsel %vm2192, 1, 0
  %v2194 = vadd.s32 %v2184, %v2188
  %v2195 = vadd.s32 %v2187, %v2193
  %vm2196 = vc.u32 %v2194, %v2190
  %v2197 = vsel %vm2196, 1, 0
  %v2198 = vadd.s32 %v2194, %v2190
  %v2199 = vadd.s32 %v2195, %v2197
  %v2200 = vadd.s32 %v2199, %v2189
  %v2201 = vadd.s32 %v2200, %v2191
  %v2202 = vand.u32 %v2179, 65535
  %v2203 = vshrl.u32 %v2179, 16
  %v2204 = vand.u32 %v2174, 65535
  %v2205 = vshrl.u32 %v2174, 16
  %v2206 = vmul.u32 %v2202, %v2204
  %v2207 = vmul.u32 %v2202, %v2205
  %v2208 = vmul.u32 %v2203, %v2204
  %v2209 = vmul.u32 %v2203, %v2205
  %v2210 = vshll.u32 %v2207, 16
  %v2211 = vshrl.u32 %v2207, 16
  %v2212 = vshll.u32 %v2208, 16
  %v2213 = vshrl.u32 %v2208, 16
  %vm2214 = vc.u32 %v2206, %v2210
  %v2215 = vsel %vm2214, 1, 0
  %v2216 = vadd.s32 %v2206, %v2210
  %v2217 = vadd.s32 %v2209, %v2215
  %vm2218 = vc.u32 %v2216, %v2212
  %v2219 = vsel %vm2218, 1, 0
  %v2220 = vadd.s32 %v2216, %v2212
  %v2221 = vadd.s32 %v2217, %v2219
  %v2222 = vadd.s32 %v2221, %v2211
  %v2223 = vadd.s32 %v2222, %v2213
  %v2224 = vmul.u32 %v2179, %v2170
  %v2225 = vadd.s32 %v2201, %v2220
  %vm2226 = vc.u32 %v2201, %v2220
  %v2227 = vadd.s32 %v2223, 1
  %v2228 = vsel %vm2226, %v2227, %v2223
  %v2229 = vadd.s32 %v2224, %v2228
  %v2230 = vadd.s32 %v2229, 536870912
  %v2231 = vshrl.u32 %v2230, 30
  %v2232 = vshll.u32 %v2231, 30
  %v2233 = vsub.s32 %v2229, %v2232
  %vm2234 = vcmp.lt.s32.totalorder %v2233, 0
  %v2235 = vsub.s32 0, %v2233
  %v2236 = vsel %vm2234, %v2235, %v2233
  %v2237 = vclz %v2236
  %v2238 = vsub.s32 %v2237, 2
  %vm2239 = vcmp.gt.s32.totalorder 0, %v2238
  %v2240 = vsel %vm2239, 0, %v2238
  %v2241 = vsub.s32 32, %v2240
  %v2242 = vshll.u32 %v2233, %v2240
  %v2243 = vshrl.u32 %v2225, %v2241
  %v2244 = vor.u32 %v2242, %v2243
  %v2245 = vsub.s32 4294967266, %v2240
  %v2246 = vadd.s32 %v2245, 127
  %v2247 = vshll.u32 %v2246, 23
  %v2248 = vor.u32 4788187, %v2247
  %v2249 = vand.u32 2147483647, %v2248
  %v2251 = vcvt.s32.f32 %v2244
  %v2252 = vmul.f32 %v2251, %v2249
  %v2253 = vxor.u32 %v2252, 2147483648
  %v2254 = vsel %vm2133, %v2253, %v2252
  %v2255 = vsub.s32 4, %v2231
  %v2256 = vsel %vm2133, %v2255, %v2231
  %v2257 = vsel %vm2132, %v421, %v2254
  %v2258 = vsel %vm2132, 0, %v2256
  %v2259 = vmul.f32 %v2257, %v2257
  %v2260 = vmul.f32 %v2259, -0.001358992
  %v2261 = vadd.f32 %v2260, 0.041655596
  %v2262 = vmul.f32 %v2259, %v2261
  %v2263 = vadd.f32 %v2262, -0.4999988
  %v2264 = vmul.f32 %v2259, %v2263
  %v2265 = vadd.f32 1.0, %v2264
  %v2266 = vmul.f32 %v2257, %v2257
  %v2267 = vmul.f32 %v2266, -0.00019511016
  %v2268 = vadd.f32 %v2267, 0.008332121
  %v2269 = vmul.f32 %v2266, %v2268
  %v2270 = vadd.f32 %v2269, -0.16666654
  %v2271 = vmul.f32 %v2266, %v2270
  %v2272 = vadd.f32 %v2271, 1.0
  %v2273 = vmul.f32 %v2272, %v2257
  %vm2274 = vweird.f32 %v421
  %v2275 = vadd.s32 %v2258, 3
  %v2276 = vand.u32 %v2275, 3
  %vm2277 = vcmp.lt.s32.totalorder %v2276, 2
  %vm2278 = vcmp.eq.s32.totalorder %v2276, 0
  %v2279 = vxor.u32 %v2273, 2147483648
  %v2280 = vsel %vm2278, %v2265, %v2279
  %vm2281 = vcmp.eq.s32.totalorder %v2276, 2
  %v2282 = vxor.u32 %v2265, 2147483648
  %v2283 = vsel %vm2281, %v2282, %v2273
  %v2284 = vsel %vm2277, %v2280, %v2283
  %v2285 = vsel %vm2274, nan, %v2284
  %v2286 = vand.u32 2147483647, %v422
  %vm2287 = vcmp.le.f32.partialorder %v2286, 0.7853982
  %vm2288 = vcmp.lt.s32.totalorder %v422, 0
  %v2289 = vand.u32 %v422, 2139095040
  %v2290 = vshrl.u32 %v2289, 23
  %v2291 = vsub.s32 %v2290, 127
  %v2292 = vand.u32 2147483647, %v422
  %v2293 = vand.u32 %v2292, 8388607
  %v2294 = vor.u32 %v2293, 8388608
  %v2295 = vsub.s32 0, %v2294
  %v2296 = vadd.s32 %v2291, 1
  %vm2297 = vcmp.gt.s32.totalorder %v2296, 0
  %v2298 = vsel %vm2297, %v2296, 0
  %v2299 = vshrl.u32 %v2298, 5
  %v2300 = vand.u32 %v2298, 31
  %v2301 = vsub.s32 32, %v2300
  %v2302 = vshrl.u32 683565275, %v2301
  %v2303 = vshll.u32 683565275, %v2300
  %v2304 = vshrl.u32 2475754826, %v2301
  %v2305 = vor.u32 %v2303, %v2304
  %v2306 = vshll.u32 2475754826, %v2300
  %v2307 = vshrl.u32 2131351028, %v2301
  %v2308 = vor.u32 %v2306, %v2307
  %v2309 = vshll.u32 2131351028, %v2300
  %v2310 = vshrl.u32 2102212464, %v2301
  %v2311 = vor.u32 %v2309, %v2310
  %v2312 = vshll.u32 2102212464, %v2300
  %v2313 = vshrl.u32 920167782, %v2301
  %v2314 = vor.u32 %v2312, %v2313
  %v2315 = vshll.u32 920167782, %v2300
  %v2316 = vshrl.u32 1326507024, %v2301
  %v2317 = vor.u32 %v2315, %v2316
  %vm2318 = vcmp.lt.s32.totalorder %v2299, 1
  %vm2319 = vcmp.lt.s32.totalorder %v2299, 2
  %vm2320 = vcmp.lt.s32.totalorder %v2299, 3
  %vm2321 = vcmp.lt.s32.totalorder %v2299, 4
  %v2322 = vsel %vm2318, %v2302, %v2305
  %v2323 = vsel %vm2321, %v2311, 2102212464
  %v2324 = vsel %vm2320, %v2308, %v2323
  %v2325 = vsel %vm2319, %v2322, %v2324
  %v2326 = vsel %vm2318, %v2305, %v2308
  %v2327 = vsel %vm2321, %v2314, 920167782
  %v2328 = vsel %vm2320, %v2311, %v2327
  %v2329 = vsel %vm2319, %v2326, %v2328
  %v2330 = vsel %vm2318, %v2308, %v2311
  %v2331 = vsel %vm2321, %v2317, 1326507024
  %v2332 = vsel %vm2320, %v2314, %v2331
  %v2333 = vsel %vm2319, %v2330, %v2332
  %v2334 = vshll.u32 %v2294, 8
  %v2335 = vand.u32 %v2334, 65535
  %v2336 = vshrl.u32 %v2334, 16
  %v2337 = vand.u32 %v2333, 65535
  %v2338 = vshrl.u32 %v2333, 16
  %v2339 = vmul.u32 %v2335, %v2337
  %v2340 = vmul.u32 %v2335, %v2338
  %v2341 = vmul.u32 %v2336, %v2337
  %v2342 = vmul.u32 %v2336, %v2338
  %v2343 = vshll.u32 %v2340, 16
  %v2344 = vshrl.u32 %v2340, 16
  %v2345 = vshll.u32 %v2341, 16
  %v2346 = vshrl.u32 %v2341, 16
  %vm2347 = vc.u32 %v2339, %v2343
  %v2348 = vsel %vm2347, 1, 0
  %v2349 = vadd.s32 %v2339, %v2343
  %v2350 = vadd.s32 %v2342, %v2348
  %vm2351 = vc.u32 %v2349, %v2345
  %v2352 = vsel %vm2351, 1, 0
  %v2353 = vadd.s32 %v2349, %v2345
  %v2354 = vadd.s32 %v2350, %v2352
  %v2355 = vadd.s32 %v2354, %v2344
  %v2356 = vadd.s32 %v2355, %v2346
  %v2357 = vand.u32 %v2334, 65535
  %v2358 = vshrl.u32 %v2334, 16
  %v2359 = vand.u32 %v2329, 65535
  %v2360 = vshrl.u32 %v2329, 16
  %v2361 = vmul.u32 %v2357, %v2359
  %v2362 = vmul.u32 %v2357, %v2360
  %v2363 = vmul.u32 %v2358, %v2359
  %v2364 = vmul.u32 %v2358, %v2360
  %v2365 = vshll.u32 %v2362, 16
  %v2366 = vshrl.u32 %v2362, 16
  %v2367 = vshll.u32 %v2363, 16
  %v2368 = vshrl.u32 %v2363, 16
  %vm2369 = vc.u32 %v2361, %v2365
  %v2370 = vsel %vm2369, 1, 0
  %v2371 = vadd.s32 %v2361, %v2365
  %v2372 = vadd.s32 %v2364, %v2370
  %vm2373 = vc.u32 %v2371, %v2367
  %v2374 = vsel %vm2373, 1, 0
  %v2375 = vadd.s32 %v2371, %v2367
  %v2376 = vadd.s32 %v2372, %v2374
  %v2377 = vadd.s32 %v2376, %v2366
  %v2378 = vadd.s32 %v2377, %v2368
  %v2379 = vmul.u32 %v2334, %v2325
  %v2380 = vadd.s32 %v2356, %v2375
  %vm2381 = vc.u32 %v2356, %v2375
  %v2382 = vadd.s32 %v2378, 1
  %v2383 = vsel %vm2381, %v2382, %v2378
  %v2384 = vadd.s32 %v2379, %v2383
  %v2385 = vadd.s32 %v2384, 536870912
  %v2386 = vshrl.u32 %v2385, 30
  %v2387 = vshll.u32 %v2386, 30
  %v2388 = vsub.s32 %v2384, %v2387
  %vm2389 = vcmp.lt.s32.totalorder %v2388, 0
  %v2390 = vsub.s32 0, %v2388
  %v2391 = vsel %vm2389, %v2390, %v2388
  %v2392 = vclz %v2391
  %v2393 = vsub.s32 %v2392, 2
  %vm2394 = vcmp.gt.s32.totalorder 0, %v2393
  %v2395 = vsel %vm2394, 0, %v2393
  %v2396 = vsub.s32 32, %v2395
  %v2397 = vshll.u32 %v2388, %v2395
  %v2398 = vshrl.u32 %v2380, %v2396
  %v2399 = vor.u32 %v2397, %v2398
  %v2400 = vsub.s32 4294967266, %v2395
  %v2401 = vadd.s32 %v2400, 127
  %v2402 = vshll.u32 %v2401, 23
  %v2403 = vor.u32 4788187, %v2402
  %v2404 = vand.u32 2147483647, %v2403
  %v2406 = vcvt.s32.f32 %v2399
  %v2407 = vmul.f32 %v2406, %v2404
  %v2408 = vxor.u32 %v2407, 2147483648
  %v2409 = vsel %vm2288, %v2408, %v2407
  %v2410 = vsub.s32 4, %v2386
  %v2411 = vsel %vm2288, %v2410, %v2386
  %v2412 = vsel %vm2287, %v422, %v2409
  %v2413 = vsel %vm2287, 0, %v2411
  %v2414 = vmul.f32 %v2412, %v2412
  %v2415 = vmul.f32 %v2414, -0.001358992
  %v2416 = vadd.f32 %v2415, 0.041655596
  %v2417 = vmul.f32 %v2414, %v2416
  %v2418 = vadd.f32 %v2417, -0.4999988
  %v2419 = vmul.f32 %v2414, %v2418
  %v2420 = vadd.f32 1.0, %v2419
  %v2421 = vmul.f32 %v2412, %v2412
  %v2422 = vmul.f32 %v2421, -0.00019511016
  %v2423 = vadd.f32 %v2422, 0.008332121
  %v2424 = vmul.f32 %v2421, %v2423
  %v2425 = vadd.f32 %v2424, -0.16666654
  %v2426 = vmul.f32 %v2421, %v2425
  %v2427 = vadd.f32 %v2426, 1.0
  %v2428 = vmul.f32 %v2427, %v2412
  %vm2429 = vweird.f32 %v422
  %v2430 = vadd.s32 %v2413, 3
  %v2431 = vand.u32 %v2430, 3
  %vm2432 = vcmp.lt.s32.totalorder %v2431, 2
  %vm2433 = vcmp.eq.s32.totalorder %v2431, 0
  %v2434 = vxor.u32 %v2428, 2147483648
  %v2435 = vsel %vm2433, %v2420, %v2434
  %vm2436 = vcmp.eq.s32.totalorder %v2431, 2
  %v2437 = vxor.u32 %v2420, 2147483648
  %v2438 = vsel %vm2436, %v2437, %v2428
  %v2439 = vsel %vm2432, %v2435, %v2438
  %v2440 = vsel %vm2429, nan, %v2439
  %v2441 = vand.u32 2147483647, %v423
  %vm2442 = vcmp.le.f32.partialorder %v2441, 0.7853982
  %vm2443 = vcmp.lt.s32.totalorder %v423, 0
  %v2444 = vand.u32 %v423, 2139095040
  %v2445 = vshrl.u32 %v2444, 23
  %v2446 = vsub.s32 %v2445, 127
  %v2447 = vand.u32 2147483647, %v423
  %v2448 = vand.u32 %v2447, 8388607
  %v2449 = vor.u32 %v2448, 8388608
  %v2450 = vsub.s32 0, %v2449
  %v2451 = vadd.s32 %v2446, 1
  %vm2452 = vcmp.gt.s32.totalorder %v2451, 0
  %v2453 = vsel %vm2452, %v2451, 0
  %v2454 = vshrl.u32 %v2453, 5
  %v2455 = vand.u32 %v2453, 31
  %v2456 = vsub.s32 32, %v2455
  %v2457 = vshrl.u32 683565275, %v2456
  %v2458 = vshll.u32 683565275, %v2455
  %v2459 = vshrl.u32 2475754826, %v2456
  %v2460 = vor.u32 %v2458, %v2459
  %v2461 = vshll.u32 2475754826, %v2455
  %v2462 = vshrl.u32 2131351028, %v2456
  %v2463 = vor.u32 %v2461, %v2462
  %v2464 = vshll.u32 2131351028, %v2455
  %v2465 = vshrl.u32 2102212464, %v2456
  %v2466 = vor.u32 %v2464, %v2465
  %v2467 = vshll.u32 2102212464, %v2455
  %v2468 = vshrl.u32 920167782, %v2456
  %v2469 = vor.u32 %v2467, %v2468
  %v2470 = vshll.u32 920167782, %v2455
  %v2471 = vshrl.u32 1326507024, %v2456
  %v2472 = vor.u32 %v2470, %v2471
  %vm2473 = vcmp.lt.s32.totalorder %v2454, 1
  %vm2474 = vcmp.lt.s32.totalorder %v2454, 2
  %vm2475 = vcmp.lt.s32.totalorder %v2454, 3
  %vm2476 = vcmp.lt.s32.totalorder %v2454, 4
  %v2477 = vsel %vm2473, %v2457, %v2460
  %v2478 = vsel %vm2476, %v2466, 2102212464
  %v2479 = vsel %vm2475, %v2463, %v2478
  %v2480 = vsel %vm2474, %v2477, %v2479
  %v2481 = vsel %vm2473, %v2460, %v2463
  %v2482 = vsel %vm2476, %v2469, 920167782
  %v2483 = vsel %vm2475, %v2466, %v2482
  %v2484 = vsel %vm2474, %v2481, %v2483
  %v2485 = vsel %vm2473, %v2463, %v2466
  %v2486 = vsel %vm2476, %v2472, 1326507024
  %v2487 = vsel %vm2475, %v2469, %v2486
  %v2488 = vsel %vm2474, %v2485, %v2487
  %v2489 = vshll.u32 %v2449, 8
  %v2490 = vand.u32 %v2489, 65535
  %v2491 = vshrl.u32 %v2489, 16
  %v2492 = vand.u32 %v2488, 65535
  %v2493 = vshrl.u32 %v2488, 16
  %v2494 = vmul.u32 %v2490, %v2492
  %v2495 = vmul.u32 %v2490, %v2493
  %v2496 = vmul.u32 %v2491, %v2492
  %v2497 = vmul.u32 %v2491, %v2493
  %v2498 = vshll.u32 %v2495, 16
  %v2499 = vshrl.u32 %v2495, 16
  %v2500 = vshll.u32 %v2496, 16
  %v2501 = vshrl.u32 %v2496, 16
  %vm2502 = vc.u32 %v2494, %v2498
  %v2503 = vsel %vm2502, 1, 0
  %v2504 = vadd.s32 %v2494, %v2498
  %v2505 = vadd.s32 %v2497, %v2503
  %vm2506 = vc.u32 %v2504, %v2500
  %v2507 = vsel %vm2506, 1, 0
  %v2508 = vadd.s32 %v2504, %v2500
  %v2509 = vadd.s32 %v2505, %v2507
  %v2510 = vadd.s32 %v2509, %v2499
  %v2511 = vadd.s32 %v2510, %v2501
  %v2512 = vand.u32 %v2489, 65535
  %v2513 = vshrl.u32 %v2489, 16
  %v2514 = vand.u32 %v2484, 65535
  %v2515 = vshrl.u32 %v2484, 16
  %v2516 = vmul.u32 %v2512, %v2514
  %v2517 = vmul.u32 %v2512, %v2515
  %v2518 = vmul.u32 %v2513, %v2514
  %v2519 = vmul.u32 %v2513, %v2515
  %v2520 = vshll.u32 %v2517, 16
  %v2521 = vshrl.u32 %v2517, 16
  %v2522 = vshll.u32 %v2518, 16
  %v2523 = vshrl.u32 %v2518, 16
  %vm2524 = vc.u32 %v2516, %v2520
  %v2525 = vsel %vm2524, 1, 0
  %v2526 = vadd.s32 %v2516, %v2520
  %v2527 = vadd.s32 %v2519, %v2525
  %vm2528 = vc.u32 %v2526, %v2522
  %v2529 = vsel %vm2528, 1, 0
  %v2530 = vadd.s32 %v2526, %v2522
  %v2531 = vadd.s32 %v2527, %v2529
  %v2532 = vadd.s32 %v2531, %v2521
  %v2533 = vadd.s32 %v2532, %v2523
  %v2534 = vmul.u32 %v2489, %v2480
  %v2535 = vadd.s32 %v2511, %v2530
  %vm2536 = vc.u32 %v2511, %v2530
  %v2537 = vadd.s32 %v2533, 1
  %v2538 = vsel %vm2536, %v2537, %v2533
  %v2539 = vadd.s32 %v2534, %v2538
  %v2540 = vadd.s32 %v2539, 536870912
  %v2541 = vshrl.u32 %v2540, 30
  %v2542 = vshll.u32 %v2541, 30
  %v2543 = vsub.s32 %v2539, %v2542
  %vm2544 = vcmp.lt.s32.totalorder %v2543, 0
  %v2545 = vsub.s32 0, %v2543
  %v2546 = vsel %vm2544, %v2545, %v2543
  %v2547 = vclz %v2546
  %v2548 = vsub.s32 %v2547, 2
  %vm2549 = vcmp.gt.s32.totalorder 0, %v2548
  %v2550 = vsel %vm2549, 0, %v2548
  %v2551 = vsub.s32 32, %v2550
  %v2552 = vshll.u32 %v2543, %v2550
  %v2553 = vshrl.u32 %v2535, %v2551
  %v2554 = vor.u32 %v2552, %v2553
  %v2555 = vsub.s32 4294967266, %v2550
  %v2556 = vadd.s32 %v2555, 127
  %v2557 = vshll.u32 %v2556, 23
  %v2558 = vor.u32 4788187, %v2557
  %v2559 = vand.u32 2147483647, %v2558
  %v2561 = vcvt.s32.f32 %v2554
  %v2562 = vmul.f32 %v2561, %v2559
  %v2563 = vxor.u32 %v2562, 2147483648
  %v2564 = vsel %vm2443, %v2563, %v2562
  %v2565 = vsub.s32 4, %v2541
  %v2566 = vsel %vm2443, %v2565, %v2541
  %v2567 = vsel %vm2442, %v423, %v2564
  %v2568 = vsel %vm2442, 0, %v2566
  %v2569 = vmul.f32 %v2567, %v2567
  %v2570 = vmul.f32 %v2569, -0.001358992
  %v2571 = vadd.f32 %v2570, 0.041655596
  %v2572 = vmul.f32 %v2569, %v2571
  %v2573 = vadd.f32 %v2572, -0.4999988
  %v2574 = vmul.f32 %v2569, %v2573
  %v2575 = vadd.f32 1.0, %v2574
  %v2576 = vmul.f32 %v2567, %v2567
  %v2577 = vmul.f32 %v2576, -0.00019511016
  %v2578 = vadd.f32 %v2577, 0.008332121
  %v2579 = vmul.f32 %v2576, %v2578
  %v2580 = vadd.f32 %v2579, -0.16666654
  %v2581 = vmul.f32 %v2576, %v2580
  %v2582 = vadd.f32 %v2581, 1.0
  %v2583 = vmul.f32 %v2582, %v2567
  %vm2584 = vweird.f32 %v423
  %v2585 = vadd.s32 %v2568, 3
  %v2586 = vand.u32 %v2585, 3
  %vm2587 = vcmp.lt.s32.totalorder %v2586, 2
  %vm2588 = vcmp.eq.s32.totalorder %v2586, 0
  %v2589 = vxor.u32 %v2583, 2147483648
  %v2590 = vsel %vm2588, %v2575, %v2589
  %vm2591 = vcmp.eq.s32.totalorder %v2586, 2
  %v2592 = vxor.u32 %v2575, 2147483648
  %v2593 = vsel %vm2591, %v2592, %v2583
  %v2594 = vsel %vm2587, %v2590, %v2593
  %v2595 = vsel %vm2584, nan, %v2594
  %v2596 = vand.u32 2147483647, %v424
  %vm2597 = vcmp.le.f32.partialorder %v2596, 0.7853982
  %vm2598 = vcmp.lt.s32.totalorder %v424, 0
  %v2599 = vand.u32 %v424, 2139095040
  %v2600 = vshrl.u32 %v2599, 23
  %v2601 = vsub.s32 %v2600, 127
  %v2602 = vand.u32 2147483647, %v424
  %v2603 = vand.u32 %v2602, 8388607
  %v2604 = vor.u32 %v2603, 8388608
  %v2605 = vsub.s32 0, %v2604
  %v2606 = vadd.s32 %v2601, 1
  %vm2607 = vcmp.gt.s32.totalorder %v2606, 0
  %v2608 = vsel %vm2607, %v2606, 0
  %v2609 = vshrl.u32 %v2608, 5
  %v2610 = vand.u32 %v2608, 31
  %v2611 = vsub.s32 32, %v2610
  %v2612 = vshrl.u32 683565275, %v2611
  %v2613 = vshll.u32 683565275, %v2610
  %v2614 = vshrl.u32 2475754826, %v2611
  %v2615 = vor.u32 %v2613, %v2614
  %v2616 = vshll.u32 2475754826, %v2610
  %v2617 = vshrl.u32 2131351028, %v2611
  %v2618 = vor.u32 %v2616, %v2617
  %v2619 = vshll.u32 2131351028, %v2610
  %v2620 = vshrl.u32 2102212464, %v2611
  %v2621 = vor.u32 %v2619, %v2620
  %v2622 = vshll.u32 2102212464, %v2610
  %v2623 = vshrl.u32 920167782, %v2611
  %v2624 = vor.u32 %v2622, %v2623
  %v2625 = vshll.u32 920167782, %v2610
  %v2626 = vshrl.u32 1326507024, %v2611
  %v2627 = vor.u32 %v2625, %v2626
  %vm2628 = vcmp.lt.s32.totalorder %v2609, 1
  %vm2629 = vcmp.lt.s32.totalorder %v2609, 2
  %vm2630 = vcmp.lt.s32.totalorder %v2609, 3
  %vm2631 = vcmp.lt.s32.totalorder %v2609, 4
  %v2632 = vsel %vm2628, %v2612, %v2615
  %v2633 = vsel %vm2631, %v2621, 2102212464
  %v2634 = vsel %vm2630, %v2618, %v2633
  %v2635 = vsel %vm2629, %v2632, %v2634
  %v2636 = vsel %vm2628, %v2615, %v2618
  %v2637 = vsel %vm2631, %v2624, 920167782
  %v2638 = vsel %vm2630, %v2621, %v2637
  %v2639 = vsel %vm2629, %v2636, %v2638
  %v2640 = vsel %vm2628, %v2618, %v2621
  %v2641 = vsel %vm2631, %v2627, 1326507024
  %v2642 = vsel %vm2630, %v2624, %v2641
  %v2643 = vsel %vm2629, %v2640, %v2642
  %v2644 = vshll.u32 %v2604, 8
  %v2645 = vand.u32 %v2644, 65535
  %v2646 = vshrl.u32 %v2644, 16
  %v2647 = vand.u32 %v2643, 65535
  %v2648 = vshrl.u32 %v2643, 16
  %v2649 = vmul.u32 %v2645, %v2647
  %v2650 = vmul.u32 %v2645, %v2648
  %v2651 = vmul.u32 %v2646, %v2647
  %v2652 = vmul.u32 %v2646, %v2648
  %v2653 = vshll.u32 %v2650, 16
  %v2654 = vshrl.u32 %v2650, 16
  %v2655 = vshll.u32 %v2651, 16
  %v2656 = vshrl.u32 %v2651, 16
  %vm2657 = vc.u32 %v2649, %v2653
  %v2658 = vsel %vm2657, 1, 0
  %v2659 = vadd.s32 %v2649, %v2653
  %v2660 = vadd.s32 %v2652, %v2658
  %vm2661 = vc.u32 %v2659, %v2655
  %v2662 = vsel %vm2661, 1, 0
  %v2663 = vadd.s32 %v2659, %v2655
  %v2664 = vadd.s32 %v2660, %v2662
  %v2665 = vadd.s32 %v2664, %v2654
  %v2666 = vadd.s32 %v2665, %v2656
  %v2667 = vand.u32 %v2644, 65535
  %v2668 = vshrl.u32 %v2644, 16
  %v2669 = vand.u32 %v2639, 65535
  %v2670 = vshrl.u32 %v2639, 16
  %v2671 = vmul.u32 %v2667, %v2669
  %v2672 = vmul.u32 %v2667, %v2670
  %v2673 = vmul.u32 %v2668, %v2669
  %v2674 = vmul.u32 %v2668, %v2670
  %v2675 = vshll.u32 %v2672, 16
  %v2676 = vshrl.u32 %v2672, 16
  %v2677 = vshll.u32 %v2673, 16
  %v2678 = vshrl.u32 %v2673, 16
  %vm2679 = vc.u32 %v2671, %v2675
  %v2680 = vsel %vm2679, 1, 0
  %v2681 = vadd.s32 %v2671, %v2675
  %v2682 = vadd.s32 %v2674, %v2680
  %vm2683 = vc.u32 %v2681, %v2677
  %v2684 = vsel %vm2683, 1, 0
  %v2685 = vadd.s32 %v2681, %v2677
  %v2686 = vadd.s32 %v2682, %v2684
  %v2687 = vadd.s32 %v2686, %v2676
  %v2688 = vadd.s32 %v2687, %v2678
  %v2689 = vmul.u32 %v2644, %v2635
  %v2690 = vadd.s32 %v2666, %v2685
  %vm2691 = vc.u32 %v2666, %v2685
  %v2692 = vadd.s32 %v2688, 1
  %v2693 = vsel %vm2691, %v2692, %v2688
  %v2694 = vadd.s32 %v2689, %v2693
  %v2695 = vadd.s32 %v2694, 536870912
  %v2696 = vshrl.u32 %v2695, 30
  %v2697 = vshll.u32 %v2696, 30
  %v2698 = vsub.s32 %v2694, %v2697
  %vm2699 = vcmp.lt.s32.totalorder %v2698, 0
  %v2700 = vsub.s32 0, %v2698
  %v2701 = vsel %vm2699, %v2700, %v2698
  %v2702 = vclz %v2701
  %v2703 = vsub.s32 %v2702, 2
  %vm2704 = vcmp.gt.s32.totalorder 0, %v2703
  %v2705 = vsel %vm2704, 0, %v2703
  %v2706 = vsub.s32 32, %v2705
  %v2707 = vshll.u32 %v2698, %v2705
  %v2708 = vshrl.u32 %v2690, %v2706
  %v2709 = vor.u32 %v2707, %v2708
  %v2710 = vsub.s32 4294967266, %v2705
  %v2711 = vadd.s32 %v2710, 127
  %v2712 = vshll.u32 %v2711, 23
  %v2713 = vor.u32 4788187, %v2712
  %v2714 = vand.u32 2147483647, %v2713
  %v2716 = vcvt.s32.f32 %v2709
  %v2717 = vmul.f32 %v2716, %v2714
  %v2718 = vxor.u32 %v2717, 2147483648
  %v2719 = vsel %vm2598, %v2718, %v2717
  %v2720 = vsub.s32 4, %v2696
  %v2721 = vsel %vm2598, %v2720, %v2696
  %v2722 = vsel %vm2597, %v424, %v2719
  %v2723 = vsel %vm2597, 0, %v2721
  %v2724 = vmul.f32 %v2722, %v2722
  %v2725 = vmul.f32 %v2724, -0.001358992
  %v2726 = vadd.f32 %v2725, 0.041655596
  %v2727 = vmul.f32 %v2724, %v2726
  %v2728 = vadd.f32 %v2727, -0.4999988
  %v2729 = vmul.f32 %v2724, %v2728
  %v2730 = vadd.f32 1.0, %v2729
  %v2731 = vmul.f32 %v2722, %v2722
  %v2732 = vmul.f32 %v2731, -0.00019511016
  %v2733 = vadd.f32 %v2732, 0.008332121
  %v2734 = vmul.f32 %v2731, %v2733
  %v2735 = vadd.f32 %v2734, -0.16666654
  %v2736 = vmul.f32 %v2731, %v2735
  %v2737 = vadd.f32 %v2736, 1.0
  %v2738 = vmul.f32 %v2737, %v2722
  %vm2739 = vweird.f32 %v424
  %v2740 = vadd.s32 %v2723, 3
  %v2741 = vand.u32 %v2740, 3
  %vm2742 = vcmp.lt.s32.totalorder %v2741, 2
  %vm2743 = vcmp.eq.s32.totalorder %v2741, 0
  %v2744 = vxor.u32 %v2738, 2147483648
  %v2745 = vsel %vm2743, %v2730, %v2744
  %vm2746 = vcmp.eq.s32.totalorder %v2741, 2
  %v2747 = vxor.u32 %v2730, 2147483648
  %v2748 = vsel %vm2746, %v2747, %v2738
  %v2749 = vsel %vm2742, %v2745, %v2748
  %v2750 = vsel %vm2739, nan, %v2749
  %v2751 = vand.u32 2147483647, %v425
  %vm2752 = vcmp.le.f32.partialorder %v2751, 0.7853982
  %vm2753 = vcmp.lt.s32.totalorder %v425, 0
  %v2754 = vand.u32 %v425, 2139095040
  %v2755 = vshrl.u32 %v2754, 23
  %v2756 = vsub.s32 %v2755, 127
  %v2757 = vand.u32 2147483647, %v425
  %v2758 = vand.u32 %v2757, 8388607
  %v2759 = vor.u32 %v2758, 8388608
  %v2760 = vsub.s32 0, %v2759
  %v2761 = vadd.s32 %v2756, 1
  %vm2762 = vcmp.gt.s32.totalorder %v2761, 0
  %v2763 = vsel %vm2762, %v2761, 0
  %v2764 = vshrl.u32 %v2763, 5
  %v2765 = vand.u32 %v2763, 31
  %v2766 = vsub.s32 32, %v2765
  %v2767 = vshrl.u32 683565275, %v2766
  %v2768 = vshll.u32 683565275, %v2765
  %v2769 = vshrl.u32 2475754826, %v2766
  %v2770 = vor.u32 %v2768, %v2769
  %v2771 = vshll.u32 2475754826, %v2765
  %v2772 = vshrl.u32 2131351028, %v2766
  %v2773 = vor.u32 %v2771, %v2772
  %v2774 = vshll.u32 2131351028, %v2765
  %v2775 = vshrl.u32 2102212464, %v2766
  %v2776 = vor.u32 %v2774, %v2775
  %v2777 = vshll.u32 2102212464, %v2765
  %v2778 = vshrl.u32 920167782, %v2766
  %v2779 = vor.u32 %v2777, %v2778
  %v2780 = vshll.u32 920167782, %v2765
  %v2781 = vshrl.u32 1326507024, %v2766
  %v2782 = vor.u32 %v2780, %v2781
  %vm2783 = vcmp.lt.s32.totalorder %v2764, 1
  %vm2784 = vcmp.lt.s32.totalorder %v2764, 2
  %vm2785 = vcmp.lt.s32.totalorder %v2764, 3
  %vm2786 = vcmp.lt.s32.totalorder %v2764, 4
  %v2787 = vsel %vm2783, %v2767, %v2770
  %v2788 = vsel %vm2786, %v2776, 2102212464
  %v2789 = vsel %vm2785, %v2773, %v2788
  %v2790 = vsel %vm2784, %v2787, %v2789
  %v2791 = vsel %vm2783, %v2770, %v2773
  %v2792 = vsel %vm2786, %v2779, 920167782
  %v2793 = vsel %vm2785, %v2776, %v2792
  %v2794 = vsel %vm2784, %v2791, %v2793
  %v2795 = vsel %vm2783, %v2773, %v2776
  %v2796 = vsel %vm2786, %v2782, 1326507024
  %v2797 = vsel %vm2785, %v2779, %v2796
  %v2798 = vsel %vm2784, %v2795, %v2797
  %v2799 = vshll.u32 %v2759, 8
  %v2800 = vand.u32 %v2799, 65535
  %v2801 = vshrl.u32 %v2799, 16
  %v2802 = vand.u32 %v2798, 65535
  %v2803 = vshrl.u32 %v2798, 16
  %v2804 = vmul.u32 %v2800, %v2802
  %v2805 = vmul.u32 %v2800, %v2803
  %v2806 = vmul.u32 %v2801, %v2802
  %v2807 = vmul.u32 %v2801, %v2803
  %v2808 = vshll.u32 %v2805, 16
  %v2809 = vshrl.u32 %v2805, 16
  %v2810 = vshll.u32 %v2806, 16
  %v2811 = vshrl.u32 %v2806, 16
  %vm2812 = vc.u32 %v2804, %v2808
  %v2813 = vsel %vm2812, 1, 0
  %v2814 = vadd.s32 %v2804, %v2808
  %v2815 = vadd.s32 %v2807, %v2813
  %vm2816 = vc.u32 %v2814, %v2810
  %v2817 = vsel %vm2816, 1, 0
  %v2818 = vadd.s32 %v2814, %v2810
  %v2819 = vadd.s32 %v2815, %v2817
  %v2820 = vadd.s32 %v2819, %v2809
  %v2821 = vadd.s32 %v2820, %v2811
  %v2822 = vand.u32 %v2799, 65535
  %v2823 = vshrl.u32 %v2799, 16
  %v2824 = vand.u32 %v2794, 65535
  %v2825 = vshrl.u32 %v2794, 16
  %v2826 = vmul.u32 %v2822, %v2824
  %v2827 = vmul.u32 %v2822, %v2825
  %v2828 = vmul.u32 %v2823, %v2824
  %v2829 = vmul.u32 %v2823, %v2825
  %v2830 = vshll.u32 %v2827, 16
  %v2831 = vshrl.u32 %v2827, 16
  %v2832 = vshll.u32 %v2828, 16
  %v2833 = vshrl.u32 %v2828, 16
  %vm2834 = vc.u32 %v2826, %v2830
  %v2835 = vsel %vm2834, 1, 0
  %v2836 = vadd.s32 %v2826, %v2830
  %v2837 = vadd.s32 %v2829, %v2835
  %vm2838 = vc.u32 %v2836, %v2832
  %v2839 = vsel %vm2838, 1, 0
  %v2840 = vadd.s32 %v2836, %v2832
  %v2841 = vadd.s32 %v2837, %v2839
  %v2842 = vadd.s32 %v2841, %v2831
  %v2843 = vadd.s32 %v2842, %v2833
  %v2844 = vmul.u32 %v2799, %v2790
  %v2845 = vadd.s32 %v2821, %v2840
  %vm2846 = vc.u32 %v2821, %v2840
  %v2847 = vadd.s32 %v2843, 1
  %v2848 = vsel %vm2846, %v2847, %v2843
  %v2849 = vadd.s32 %v2844, %v2848
  %v2850 = vadd.s32 %v2849, 536870912
  %v2851 = vshrl.u32 %v2850, 30
  %v2852 = vshll.u32 %v2851, 30
  %v2853 = vsub.s32 %v2849, %v2852
  %vm2854 = vcmp.lt.s32.totalorder %v2853, 0
  %v2855 = vsub.s32 0, %v2853
  %v2856 = vsel %vm2854, %v2855, %v2853
  %v2857 = vclz %v2856
  %v2858 = vsub.s32 %v2857, 2
  %vm2859 = vcmp.gt.s32.totalorder 0, %v2858
  %v2860 = vsel %vm2859, 0, %v2858
  %v2861 = vsub.s32 32, %v2860
  %v2862 = vshll.u32 %v2853, %v2860
  %v2863 = vshrl.u32 %v2845, %v2861
  %v2864 = vor.u32 %v2862, %v2863
  %v2865 = vsub.s32 4294967266, %v2860
  %v2866 = vadd.s32 %v2865, 127
  %v2867 = vshll.u32 %v2866, 23
  %v2868 = vor.u32 4788187, %v2867
  %v2869 = vand.u32 2147483647, %v2868
  %v2871 = vcvt.s32.f32 %v2864
  %v2872 = vmul.f32 %v2871, %v2869
  %v2873 = vxor.u32 %v2872, 2147483648
  %v2874 = vsel %vm2753, %v2873, %v2872
  %v2875 = vsub.s32 4, %v2851
  %v2876 = vsel %vm2753, %v2875, %v2851
  %v2877 = vsel %vm2752, %v425, %v2874
  %v2878 = vsel %vm2752, 0, %v2876
  %v2879 = vmul.f32 %v2877, %v2877
  %v2880 = vmul.f32 %v2879, -0.001358992
  %v2881 = vadd.f32 %v2880, 0.041655596
  %v2882 = vmul.f32 %v2879, %v2881
  %v2883 = vadd.f32 %v2882, -0.4999988
  %v2884 = vmul.f32 %v2879, %v2883
  %v2885 = vadd.f32 1.0, %v2884
  %v2886 = vmul.f32 %v2877, %v2877
  %v2887 = vmul.f32 %v2886, -0.00019511016
  %v2888 = vadd.f32 %v2887, 0.008332121
  %v2889 = vmul.f32 %v2886, %v2888
  %v2890 = vadd.f32 %v2889, -0.16666654
  %v2891 = vmul.f32 %v2886, %v2890
  %v2892 = vadd.f32 %v2891, 1.0
  %v2893 = vmul.f32 %v2892, %v2877
  %vm2894 = vweird.f32 %v425
  %v2895 = vadd.s32 %v2878, 3
  %v2896 = vand.u32 %v2895, 3
  %vm2897 = vcmp.lt.s32.totalorder %v2896, 2
  %vm2898 = vcmp.eq.s32.totalorder %v2896, 0
  %v2899 = vxor.u32 %v2893, 2147483648
  %v2900 = vsel %vm2898, %v2885, %v2899
  %vm2901 = vcmp.eq.s32.totalorder %v2896, 2
  %v2902 = vxor.u32 %v2885, 2147483648
  %v2903 = vsel %vm2901, %v2902, %v2893
  %v2904 = vsel %vm2897, %v2900, %v2903
  %v2905 = vsel %vm2894, nan, %v2904
  %v2906 = vpack.c.bf16 %v735, %v580
  %v2907 = vpack.c.bf16 %v1045, %v890
  %v2908 = vpack.c.bf16 %v1355, %v1200
  %v2909 = vpack.c.bf16 %v1665, %v1510
  %v2910 = vpack.c.bf16 %v1975, %v1820
  %v2911 = vpack.c.bf16 %v2285, %v2130
  %v2912 = vpack.c.bf16 %v2595, %v2440
  %v2913 = vpack.c.bf16 %v2905, %v2750
  %v2914 = vld [vmem:[%s5] sm:$0xf]
  %v2915 = vld [vmem:[%s5 + $0x4] sm:$0xf]
  %v2916 = vld [vmem:[%s6] sm:$0x1]
  %v2918 = vperm.slane %v2916, 0
  %v2922 = vunpack.c.l.b16 %v2914
  %v2923 = vunpack.c.l.b16 %v2915
  %v2924 = vpack.c.b16 %v2923, %v2922
  %vm2926 = vcmask 130048
  %v2928 = vsel %vm2926, %v2906, 0
  %v2931 = vsel %vm2926, %v2907, 0
  %v2934 = vsel %vm2926, %v2908, 0
  %v2937 = vsel %vm2926, %v2909, 0
  %v2940 = vsel %vm2926, %v2910, 0
  %v2943 = vsel %vm2926, %v2911, 0
  %v2946 = vsel %vm2926, %v2912, 0
  %v2949 = vsel %vm2926, %v2913, 0
  %2951 = vmatpush.bf16.msra.mxu0 0
  %2952 = vmatpush.bf16.msra.mxu0 0
  %2953 = vmatpush.bf16.msra.mxu0 0
  %2954 = vmatpush.bf16.msra.mxu0 0
  %2955 = vmatpush.bf16.msra.mxu0 0
  %2956 = vmatpush.bf16.msra.mxu0 0
  %2957 = vmatpush.bf16.msra.mxu0 0
  %2958 = vmatpush.bf16.msra.mxu0 %v2924
  %2959 = vmatmul.bf16.gmra.mxu0 %v2928
  %v2960 = vpop.f32.mrf.mxu0
  %v2961 = vadd.f32 %v2918, %v2960
  %v2962 = vpop.f32.mrf.mxu0
  %v2963 = vadd.f32 %v2918, %v2962
  %2964 = vmatmul.bf16.gmra.mxu0 %v2931
  %v2965 = vpop.f32.mrf.mxu0
  %v2966 = vadd.f32 %v2918, %v2965
  %v2967 = vpop.f32.mrf.mxu0
  %v2968 = vadd.f32 %v2918, %v2967
  %2969 = vmatmul.bf16.gmra.mxu0 %v2934
  %v2970 = vpop.f32.mrf.mxu0
  %v2971 = vadd.f32 %v2918, %v2970
  %v2972 = vpop.f32.mrf.mxu0
  %v2973 = vadd.f32 %v2918, %v2972
  %2974 = vmatmul.bf16.gmra.mxu0 %v2937
  %v2975 = vpop.f32.mrf.mxu0
  %v2976 = vadd.f32 %v2918, %v2975
  %v2977 = vpop.f32.mrf.mxu0
  %v2978 = vadd.f32 %v2918, %v2977
  %2979 = vmatmul.bf16.gmra.mxu0 %v2940
  %v2980 = vpop.f32.mrf.mxu0
  %v2981 = vadd.f32 %v2918, %v2980
  %v2982 = vpop.f32.mrf.mxu0
  %v2983 = vadd.f32 %v2918, %v2982
  %2984 = vmatmul.bf16.gmra.mxu0 %v2943
  %v2985 = vpop.f32.mrf.mxu0
  %v2986 = vadd.f32 %v2918, %v2985
  %v2987 = vpop.f32.mrf.mxu0
  %v2988 = vadd.f32 %v2918, %v2987
  %2989 = vmatmul.bf16.gmra.mxu0 %v2946
  %v2990 = vpop.f32.mrf.mxu0
  %v2991 = vadd.f32 %v2918, %v2990
  %v2992 = vpop.f32.mrf.mxu0
  %v2993 = vadd.f32 %v2918, %v2992
  %2994 = vmatmul.bf16.gmra.mxu0 %v2949
  %v2995 = vpop.f32.mrf.mxu0
  %v2996 = vadd.f32 %v2918, %v2995
  %v2997 = vpop.f32.mrf.mxu0
  %v2998 = vadd.f32 %v2918, %v2997
  %2999 = vdwg.mxu0
  %v3000 = vmul.f32 %v2961, 0.5
  %v3001 = vmul.f32 %v2963, 0.5
  %v3002 = vmul.f32 %v2966, 0.5
  %v3003 = vmul.f32 %v2968, 0.5
  %v3004 = vmul.f32 %v2971, 0.5
  %v3005 = vmul.f32 %v2973, 0.5
  %v3006 = vmul.f32 %v2976, 0.5
  %v3007 = vmul.f32 %v2978, 0.5
  %v3008 = vmul.f32 %v2981, 0.5
  %v3009 = vmul.f32 %v2983, 0.5
  %v3010 = vmul.f32 %v2986, 0.5
  %v3011 = vmul.f32 %v2988, 0.5
  %v3012 = vmul.f32 %v2991, 0.5
  %v3013 = vmul.f32 %v2993, 0.5
  %v3014 = vmul.f32 %v2996, 0.5
  %v3015 = vmul.f32 %v2998, 0.5
  %v3016 = vmul.f32 %v2961, 0.044715
  %v3017 = vmul.f32 %v2963, 0.044715
  %v3018 = vmul.f32 %v2966, 0.044715
  %v3019 = vmul.f32 %v2968, 0.044715
  %v3020 = vmul.f32 %v2971, 0.044715
  %v3021 = vmul.f32 %v2973, 0.044715
  %v3022 = vmul.f32 %v2976, 0.044715
  %v3023 = vmul.f32 %v2978, 0.044715
  %v3024 = vmul.f32 %v2981, 0.044715
  %v3025 = vmul.f32 %v2983, 0.044715
  %v3026 = vmul.f32 %v2986, 0.044715
  %v3027 = vmul.f32 %v2988, 0.044715
  %v3028 = vmul.f32 %v2991, 0.044715
  %v3029 = vmul.f32 %v2993, 0.044715
  %v3030 = vmul.f32 %v2996, 0.044715
  %v3031 = vmul.f32 %v2998, 0.044715
  %v3032 = vmul.f32 %v3016, %v2961
  %v3033 = vmul.f32 %v3017, %v2963
  %v3034 = vmul.f32 %v3018, %v2966
  %v3035 = vmul.f32 %v3019, %v2968
  %v3036 = vmul.f32 %v3020, %v2971
  %v3037 = vmul.f32 %v3021, %v2973
  %v3038 = vmul.f32 %v3022, %v2976
  %v3039 = vmul.f32 %v3023, %v2978
  %v3040 = vmul.f32 %v3024, %v2981
  %v3041 = vmul.f32 %v3025, %v2983
  %v3042 = vmul.f32 %v3026, %v2986
  %v3043 = vmul.f32 %v3027, %v2988
  %v3044 = vmul.f32 %v3028, %v2991
  %v3045 = vmul.f32 %v3029, %v2993
  %v3046 = vmul.f32 %v3030, %v2996
  %v3047 = vmul.f32 %v3031, %v2998
  %v3048 = vmul.f32 %v3032, %v2961
  %v3049 = vmul.f32 %v3033, %v2963
  %v3050 = vmul.f32 %v3034, %v2966
  %v3051 = vmul.f32 %v3035, %v2968
  %v3052 = vmul.f32 %v3036, %v2971
  %v3053 = vmul.f32 %v3037, %v2973
  %v3054 = vmul.f32 %v3038, %v2976
  %v3055 = vmul.f32 %v3039, %v2978
  %v3056 = vmul.f32 %v3040, %v2981
  %v3057 = vmul.f32 %v3041, %v2983
  %v3058 = vmul.f32 %v3042, %v2986
  %v3059 = vmul.f32 %v3043, %v2988
  %v3060 = vmul.f32 %v3044, %v2991
  %v3061 = vmul.f32 %v3045, %v2993
  %v3062 = vmul.f32 %v3046, %v2996
  %v3063 = vmul.f32 %v3047, %v2998
  %v3064 = vadd.f32 %v2961, %v3048
  %v3065 = vadd.f32 %v2963, %v3049
  %v3066 = vadd.f32 %v2966, %v3050
  %v3067 = vadd.f32 %v2968, %v3051
  %v3068 = vadd.f32 %v2971, %v3052
  %v3069 = vadd.f32 %v2973, %v3053
  %v3070 = vadd.f32 %v2976, %v3054
  %v3071 = vadd.f32 %v2978, %v3055
  %v3072 = vadd.f32 %v2981, %v3056
  %v3073 = vadd.f32 %v2983, %v3057
  %v3074 = vadd.f32 %v2986, %v3058
  %v3075 = vadd.f32 %v2988, %v3059
  %v3076 = vadd.f32 %v2991, %v3060
  %v3077 = vadd.f32 %v2993, %v3061
  %v3078 = vadd.f32 %v2996, %v3062
  %v3079 = vadd.f32 %v2998, %v3063
  %v3080 = vmul.f32 %v3064, 0.7978846
  %v3081 = vmul.f32 %v3065, 0.7978846
  %v3082 = vmul.f32 %v3066, 0.7978846
  %v3083 = vmul.f32 %v3067, 0.7978846
  %v3084 = vmul.f32 %v3068, 0.7978846
  %v3085 = vmul.f32 %v3069, 0.7978846
  %v3086 = vmul.f32 %v3070, 0.7978846
  %v3087 = vmul.f32 %v3071, 0.7978846
  %v3088 = vmul.f32 %v3072, 0.7978846
  %v3089 = vmul.f32 %v3073, 0.7978846
  %v3090 = vmul.f32 %v3074, 0.7978846
  %v3091 = vmul.f32 %v3075, 0.7978846
  %v3092 = vmul.f32 %v3076, 0.7978846
  %v3093 = vmul.f32 %v3077, 0.7978846
  %v3094 = vmul.f32 %v3078, 0.7978846
  %v3095 = vmul.f32 %v3079, 0.7978846
  %v3096 = vtanh.pop %v3080
  %v3097 = vtanh.pop %v3081
  %v3098 = vtanh.pop %v3082
  %v3099 = vtanh.pop %v3083
  %v3100 = vtanh.pop %v3084
  %v3101 = vtanh.pop %v3085
  %v3102 = vtanh.pop %v3086
  %v3103 = vtanh.pop %v3087
  %v3104 = vtanh.pop %v3088
  %v3105 = vtanh.pop %v3089
  %v3106 = vtanh.pop %v3090
  %v3107 = vtanh.pop %v3091
  %v3108 = vtanh.pop %v3092
  %v3109 = vtanh.pop %v3093
  %v3110 = vtanh.pop %v3094
  %v3111 = vtanh.pop %v3095
  %v3112 = vadd.f32 %v3096, 1.0
  %v3113 = vadd.f32 %v3097, 1.0
  %v3114 = vadd.f32 %v3098, 1.0
  %v3115 = vadd.f32 %v3099, 1.0
  %v3116 = vadd.f32 %v3100, 1.0
  %v3117 = vadd.f32 %v3101, 1.0
  %v3118 = vadd.f32 %v3102, 1.0
  %v3119 = vadd.f32 %v3103, 1.0
  %v3120 = vadd.f32 %v3104, 1.0
  %v3121 = vadd.f32 %v3105, 1.0
  %v3122 = vadd.f32 %v3106, 1.0
  %v3123 = vadd.f32 %v3107, 1.0
  %v3124 = vadd.f32 %v3108, 1.0
  %v3125 = vadd.f32 %v3109, 1.0
  %v3126 = vadd.f32 %v3110, 1.0
  %v3127 = vadd.f32 %v3111, 1.0
  %v3128 = vmul.f32 %v3000, %v3112
  %v3129 = vmul.f32 %v3001, %v3113
  %v3130 = vmul.f32 %v3002, %v3114
  %v3131 = vmul.f32 %v3003, %v3115
  %v3132 = vmul.f32 %v3004, %v3116
  %v3133 = vmul.f32 %v3005, %v3117
  %v3134 = vmul.f32 %v3006, %v3118
  %v3135 = vmul.f32 %v3007, %v3119
  %v3136 = vmul.f32 %v3008, %v3120
  %v3137 = vmul.f32 %v3009, %v3121
  %v3138 = vmul.f32 %v3010, %v3122
  %v3139 = vmul.f32 %v3011, %v3123
  %v3140 = vmul.f32 %v3012, %v3124
  %v3141 = vmul.f32 %v3013, %v3125
  %v3142 = vmul.f32 %v3014, %v3126
  %v3143 = vmul.f32 %v3015, %v3127
  %v3144 = vpack.c.bf16 %v294, %v294
  %v3145 = vpack.c.bf16 %v295, %v295
  %v3146 = vpack.c.bf16 %v296, %v296
  %v3147 = vpack.c.bf16 %v297, %v297
  %v3148 = vpack.c.bf16 %v298, %v298
  %v3149 = vpack.c.bf16 %v299, %v299
  %v3150 = vpack.c.bf16 %v300, %v300
  %v3151 = vpack.c.bf16 %v301, %v301
  %v3152 = vpack.c.bf16 %v302, %v302
  %v3153 = vpack.c.bf16 %v303, %v303
  %v3154 = vpack.c.bf16 %v304, %v304
  %v3155 = vpack.c.bf16 %v305, %v305
  %v3156 = vpack.c.bf16 %v306, %v306
  %v3157 = vpack.c.bf16 %v307, %v307
  %v3158 = vpack.c.bf16 %v308, %v308
  %v3159 = vpack.c.bf16 %v309, %v309
  %vm3160 = vcmask 125952
  %3161 = vst.msk [vmem:[%s7] sm:$0xf] %vm3160, %v3144
  %3162 = vst.msk [vmem:[%s7 + $0x4] sm:$0xf] %vm3160, %v3145
  %3163 = vst.msk [vmem:[%s7 + $0x8] sm:$0xf] %vm3160, %v3146
  %3164 = vst.msk [vmem:[%s7 + $0xc] sm:$0xf] %vm3160, %v3147
  %3165 = vst.msk [vmem:[%s7 + $0x10] sm:$0xf] %vm3160, %v3148
  %3166 = vst.msk [vmem:[%s7 + $0x14] sm:$0xf] %vm3160, %v3149
  %3167 = vst.msk [vmem:[%s7 + $0x18] sm:$0xf] %vm3160, %v3150
  %3168 = vst.msk [vmem:[%s7 + $0x1c] sm:$0xf] %vm3160, %v3151
  %3169 = vst.msk [vmem:[%s7 + $0x20] sm:$0xf] %vm3160, %v3152
  %3170 = vst.msk [vmem:[%s7 + $0x24] sm:$0xf] %vm3160, %v3153
  %3171 = vst.msk [vmem:[%s7 + $0x28] sm:$0xf] %vm3160, %v3154
  %3172 = vst.msk [vmem:[%s7 + $0x2c] sm:$0xf] %vm3160, %v3155
  %3173 = vst.msk [vmem:[%s7 + $0x30] sm:$0xf] %vm3160, %v3156
  %3174 = vst.msk [vmem:[%s7 + $0x34] sm:$0xf] %vm3160, %v3157
  %3175 = vst.msk [vmem:[%s7 + $0x38] sm:$0xf] %vm3160, %v3158
  %3176 = vst.msk [vmem:[%s7 + $0x3c] sm:$0xf] %vm3160, %v3159
  %v3177 = vpack.c.bf16 %v3128, %v3128
  %v3178 = vpack.c.bf16 %v3129, %v3129
  %v3179 = vpack.c.bf16 %v3130, %v3130
  %v3180 = vpack.c.bf16 %v3131, %v3131
  %v3181 = vpack.c.bf16 %v3132, %v3132
  %v3182 = vpack.c.bf16 %v3133, %v3133
  %v3183 = vpack.c.bf16 %v3134, %v3134
  %v3184 = vpack.c.bf16 %v3135, %v3135
  %v3185 = vpack.c.bf16 %v3136, %v3136
  %v3186 = vpack.c.bf16 %v3137, %v3137
  %v3187 = vpack.c.bf16 %v3138, %v3138
  %v3188 = vpack.c.bf16 %v3139, %v3139
  %v3189 = vpack.c.bf16 %v3140, %v3140
  %v3190 = vpack.c.bf16 %v3141, %v3141
  %v3191 = vpack.c.bf16 %v3142, %v3142
  %v3192 = vpack.c.bf16 %v3143, %v3143
  %3209 = vrot.lane.b32.xlu0 %v3177, 16
  %v3210 = vpop.permute.xlu0 %3209
  %3211 = vrot.lane.b32.xlu0 %v3178, 16
  %v3212 = vpop.permute.xlu0 %3211
  %3213 = vrot.lane.b32.xlu0 %v3179, 16
  %v3214 = vpop.permute.xlu0 %3213
  %3215 = vrot.lane.b32.xlu0 %v3180, 16
  %v3216 = vpop.permute.xlu0 %3215
  %3217 = vrot.lane.b32.xlu0 %v3181, 16
  %v3218 = vpop.permute.xlu0 %3217
  %3219 = vrot.lane.b32.xlu0 %v3182, 16
  %v3220 = vpop.permute.xlu0 %3219
  %3221 = vrot.lane.b32.xlu0 %v3183, 16
  %v3222 = vpop.permute.xlu0 %3221
  %3223 = vrot.lane.b32.xlu0 %v3184, 16
  %v3224 = vpop.permute.xlu0 %3223
  %3225 = vrot.lane.b32.xlu0 %v3185, 16
  %v3226 = vpop.permute.xlu0 %3225
  %3227 = vrot.lane.b32.xlu0 %v3186, 16
  %v3228 = vpop.permute.xlu0 %3227
  %3229 = vrot.lane.b32.xlu0 %v3187, 16
  %v3230 = vpop.permute.xlu0 %3229
  %3231 = vrot.lane.b32.xlu0 %v3188, 16
  %v3232 = vpop.permute.xlu0 %3231
  %3233 = vrot.lane.b32.xlu0 %v3189, 16
  %v3234 = vpop.permute.xlu0 %3233
  %3235 = vrot.lane.b32.xlu0 %v3190, 16
  %v3236 = vpop.permute.xlu0 %3235
  %3237 = vrot.lane.b32.xlu0 %v3191, 16
  %v3238 = vpop.permute.xlu0 %3237
  %3239 = vrot.lane.b32.xlu0 %v3192, 16
  %v3240 = vpop.permute.xlu0 %3239
  %vm3257 = vcmask 257152
  %3258 = vst.msk [vmem:[%s7] sm:$0xf] %vm3257, %v3210
  %3259 = vst.msk [vmem:[%s7 + $0x4] sm:$0xf] %vm3257, %v3212
  %3260 = vst.msk [vmem:[%s7 + $0x8] sm:$0xf] %vm3257, %v3214
  %3261 = vst.msk [vmem:[%s7 + $0xc] sm:$0xf] %vm3257, %v3216
  %3262 = vst.msk [vmem:[%s7 + $0x10] sm:$0xf] %vm3257, %v3218
  %3263 = vst.msk [vmem:[%s7 + $0x14] sm:$0xf] %vm3257, %v3220
  %3264 = vst.msk [vmem:[%s7 + $0x18] sm:$0xf] %vm3257, %v3222
  %3265 = vst.msk [vmem:[%s7 + $0x1c] sm:$0xf] %vm3257, %v3224
  %3266 = vst.msk [vmem:[%s7 + $0x20] sm:$0xf] %vm3257, %v3226
  %3267 = vst.msk [vmem:[%s7 + $0x24] sm:$0xf] %vm3257, %v3228
  %3268 = vst.msk [vmem:[%s7 + $0x28] sm:$0xf] %vm3257, %v3230
  %3269 = vst.msk [vmem:[%s7 + $0x2c] sm:$0xf] %vm3257, %v3232
  %3270 = vst.msk [vmem:[%s7 + $0x30] sm:$0xf] %vm3257, %v3234
  %3271 = vst.msk [vmem:[%s7 + $0x34] sm:$0xf] %vm3257, %v3236
  %3272 = vst.msk [vmem:[%s7 + $0x38] sm:$0xf] %vm3257, %v3238
  %3273 = vst.msk [vmem:[%s7 + $0x3c] sm:$0xf] %vm3257, %v3240
  // Predicated region
  $region30: #{qagnn_message_passing_forward.13} parent=0 // pred_check
    _
  $region31: #{qagnn_message_passing_forward.13} parent=0 // pred_check_branch
    %3275 = sbr.rel (0) target = $region33
  $region32: #{qagnn_message_passing_forward.13} parent=0 // pred_region
    _
  $region33: #{qagnn_message_passing_forward.13} parent=0 // pred_fallthru
    _
  // Predicated region
  $region34: #{qagnn_message_passing_forward.13} parent=0 // pred_check
    _
  $region35: #{qagnn_message_passing_forward.13} parent=0 // pred_check_branch
    %3277 = sbr.rel (0) target = $region37
  $region36: #{qagnn_message_passing_forward.13} parent=0 // pred_region
    _
  $region37: #{qagnn_message_passing_forward.13} parent=0 // pred_fallthru
    _

// kernel: qagnn_message_passing_forward.15
$region0: #{qagnn_message_passing_forward.15}
  #allocation0 [shape = 'u32[]', space=smem, size = 0x4, offset = 0x4, fixed_abs, tag = 'smem constant byte address 0x4 - core index']
  #allocation1 [shape = 'u32[72,128]{1,0:T(1,128)}', space=vmem, size = 0x9000, scoped, tag = 'internal scratch']
  %s0 = inlined_call_operand.vmem [shape: bf16[40,32], index: 0, kind: input, shape index: {}]
  %s1 = inlined_call_operand.vmem [shape: bf16[40,32], index: 1, kind: input, shape index: {}]
  %s2 = inlined_call_operand.vmem [shape: bf16[40,32], index: 2, kind: input, shape index: {}]
  %s3 = inlined_call_operand.vmem [shape: bf16[40,32], index: 3, kind: input, shape index: {}]
  %s4 = inlined_call_operand.vmem [shape: bf16[40,32], index: 4, kind: input, shape index: {}]
  %s5 = inlined_call_operand.vmem [shape: bf16[32,32], index: 5, kind: input, shape index: {}]
  %s6 = inlined_call_operand.vmem [shape: bf16[32,32], index: 6, kind: input, shape index: {}]
  %s7 = inlined_call_operand.vmem [shape: bf16[32,32], index: 7, kind: input, shape index: {}]
  %s8 = inlined_call_operand.vmem [shape: f32[1,32], index: 8, kind: input, shape index: {}]
  %s9 = inlined_call_operand.vmem [shape: bf16[32,32], index: 9, kind: input, shape index: {}]
  %s10 = inlined_call_operand.vmem [shape: bf16[32,32], index: 10, kind: input, shape index: {}]
  %s11 = inlined_call_operand.vmem [shape: bf16[32,32], index: 11, kind: input, shape index: {}]
  %s12 = inlined_call_operand.vmem [shape: f32[1,32], index: 12, kind: input, shape index: {}]
  %s13 = inlined_call_operand.vmem [shape: bf16[32,32], index: 13, kind: input, shape index: {}]
  %s14 = inlined_call_operand.vmem [shape: bf16[32,32], index: 14, kind: input, shape index: {}]
  %s15 = inlined_call_operand.vmem [shape: f32[1,32], index: 15, kind: input, shape index: {}]
  %s16 = inlined_call_operand.vmem [shape: f32[32,4], index: 16, kind: input, shape index: {}]
  %s17 = inlined_call_operand.vmem [shape: bf16[40,32], index: 17, kind: output, shape index: {0}]
  %s18 = inlined_call_operand.vmem [shape: f32[40,4], index: 18, kind: output, shape index: {1}]
  %19 = xla_tuple %s17, %s18
  %s20 = sld [smem:[#allocation0]]
  $region86: #{qagnn_message_passing_forward.15} parent=0
    _
  %s22 = ssub.s32 1, %s20
  %s23 = scalar_select 0, %s22, %s20
  // Predicated region
  $region2: #{qagnn_message_passing_forward.15} parent=0 // pred_check
    _
  $region3: #{qagnn_message_passing_forward.15} parent=0 // pred_check_branch
    %25 = sbr.rel (0) target = $region5
  $region4: #{qagnn_message_passing_forward.15} parent=0 // pred_region
    _
  $region5: #{qagnn_message_passing_forward.15} parent=0 // pred_fallthru
    _
  // Predicated region
  $region6: #{qagnn_message_passing_forward.15} parent=0 // pred_check
    _
  $region7: #{qagnn_message_passing_forward.15} parent=0 // pred_check_branch
    %27 = sbr.rel (0) target = $region9
  $region8: #{qagnn_message_passing_forward.15} parent=0 // pred_region
    _
  $region9: #{qagnn_message_passing_forward.15} parent=0 // pred_fallthru
    _
  // Predicated region
  $region10: #{qagnn_message_passing_forward.15} parent=0 // pred_check
    _
  $region11: #{qagnn_message_passing_forward.15} parent=0 // pred_check_branch
    %29 = sbr.rel (0) target = $region13
  $region12: #{qagnn_message_passing_forward.15} parent=0 // pred_region
    _
  $region13: #{qagnn_message_passing_forward.15} parent=0 // pred_fallthru
    _
  // Predicated region
  $region14: #{qagnn_message_passing_forward.15} parent=0 // pred_check
    _
  $region15: #{qagnn_message_passing_forward.15} parent=0 // pred_check_branch
    %31 = sbr.rel (0) target = $region17
  $region16: #{qagnn_message_passing_forward.15} parent=0 // pred_region
    _
  $region17: #{qagnn_message_passing_forward.15} parent=0 // pred_fallthru
    _
  // Predicated region
  $region18: #{qagnn_message_passing_forward.15} parent=0 // pred_check
    _
  $region19: #{qagnn_message_passing_forward.15} parent=0 // pred_check_branch
    %33 = sbr.rel (0) target = $region21
  $region20: #{qagnn_message_passing_forward.15} parent=0 // pred_region
    _
  $region21: #{qagnn_message_passing_forward.15} parent=0 // pred_fallthru
    _
  // Predicated region
  $region22: #{qagnn_message_passing_forward.15} parent=0 // pred_check
    _
  $region23: #{qagnn_message_passing_forward.15} parent=0 // pred_check_branch
    %35 = sbr.rel (0) target = $region25
  $region24: #{qagnn_message_passing_forward.15} parent=0 // pred_region
    _
  $region25: #{qagnn_message_passing_forward.15} parent=0 // pred_fallthru
    _
  // Predicated region
  $region26: #{qagnn_message_passing_forward.15} parent=0 // pred_check
    _
  $region27: #{qagnn_message_passing_forward.15} parent=0 // pred_check_branch
    %37 = sbr.rel (0) target = $region29
  $region28: #{qagnn_message_passing_forward.15} parent=0 // pred_region
    _
  $region29: #{qagnn_message_passing_forward.15} parent=0 // pred_fallthru
    _
  // Predicated region
  $region30: #{qagnn_message_passing_forward.15} parent=0 // pred_check
    _
  $region31: #{qagnn_message_passing_forward.15} parent=0 // pred_check_branch
    %39 = sbr.rel (0) target = $region33
  $region32: #{qagnn_message_passing_forward.15} parent=0 // pred_region
    _
  $region33: #{qagnn_message_passing_forward.15} parent=0 // pred_fallthru
    _
  // Predicated region
  $region34: #{qagnn_message_passing_forward.15} parent=0 // pred_check
    _
  $region35: #{qagnn_message_passing_forward.15} parent=0 // pred_check_branch
    %41 = sbr.rel (0) target = $region37
  $region36: #{qagnn_message_passing_forward.15} parent=0 // pred_region
    _
  $region37: #{qagnn_message_passing_forward.15} parent=0 // pred_fallthru
    _
  // Predicated region
  $region38: #{qagnn_message_passing_forward.15} parent=0 // pred_check
    _
  $region39: #{qagnn_message_passing_forward.15} parent=0 // pred_check_branch
    %43 = sbr.rel (0) target = $region41
  $region40: #{qagnn_message_passing_forward.15} parent=0 // pred_region
    _
  $region41: #{qagnn_message_passing_forward.15} parent=0 // pred_fallthru
    _
  // Predicated region
  $region42: #{qagnn_message_passing_forward.15} parent=0 // pred_check
    _
  $region43: #{qagnn_message_passing_forward.15} parent=0 // pred_check_branch
    %45 = sbr.rel (0) target = $region45
  $region44: #{qagnn_message_passing_forward.15} parent=0 // pred_region
    _
  $region45: #{qagnn_message_passing_forward.15} parent=0 // pred_fallthru
    _
  // Predicated region
  $region46: #{qagnn_message_passing_forward.15} parent=0 // pred_check
    _
  $region47: #{qagnn_message_passing_forward.15} parent=0 // pred_check_branch
    %47 = sbr.rel (0) target = $region49
  $region48: #{qagnn_message_passing_forward.15} parent=0 // pred_region
    _
  $region49: #{qagnn_message_passing_forward.15} parent=0 // pred_fallthru
    _
  // Predicated region
  $region50: #{qagnn_message_passing_forward.15} parent=0 // pred_check
    _
  $region51: #{qagnn_message_passing_forward.15} parent=0 // pred_check_branch
    %49 = sbr.rel (0) target = $region53
  $region52: #{qagnn_message_passing_forward.15} parent=0 // pred_region
    _
  $region53: #{qagnn_message_passing_forward.15} parent=0 // pred_fallthru
    _
  // Predicated region
  $region54: #{qagnn_message_passing_forward.15} parent=0 // pred_check
    _
  $region55: #{qagnn_message_passing_forward.15} parent=0 // pred_check_branch
    %51 = sbr.rel (0) target = $region57
  $region56: #{qagnn_message_passing_forward.15} parent=0 // pred_region
    _
  $region57: #{qagnn_message_passing_forward.15} parent=0 // pred_fallthru
    _
  // Predicated region
  $region58: #{qagnn_message_passing_forward.15} parent=0 // pred_check
    _
  $region59: #{qagnn_message_passing_forward.15} parent=0 // pred_check_branch
    %53 = sbr.rel (0) target = $region61
  $region60: #{qagnn_message_passing_forward.15} parent=0 // pred_region
    _
  $region61: #{qagnn_message_passing_forward.15} parent=0 // pred_fallthru
    _
  // Predicated region
  $region62: #{qagnn_message_passing_forward.15} parent=0 // pred_check
    _
  $region63: #{qagnn_message_passing_forward.15} parent=0 // pred_check_branch
    %55 = sbr.rel (0) target = $region65
  $region64: #{qagnn_message_passing_forward.15} parent=0 // pred_region
    _
  $region65: #{qagnn_message_passing_forward.15} parent=0 // pred_fallthru
    _
  // Predicated region
  $region66: #{qagnn_message_passing_forward.15} parent=0 // pred_check
    _
  $region67: #{qagnn_message_passing_forward.15} parent=0 // pred_check_branch
    %57 = sbr.rel (0) target = $region69
  $region68: #{qagnn_message_passing_forward.15} parent=0 // pred_region
    _
  $region69: #{qagnn_message_passing_forward.15} parent=0 // pred_fallthru
    _
  %v59 = vld [vmem:[%s1] sm:$0xf]
  %v60 = vld [vmem:[%s1 + $0x4] sm:$0xf]
  %v61 = vld [vmem:[%s1 + $0x8] sm:$0xf]
  %v62 = vld [vmem:[%s1 + $0xc] sm:$0xf]
  %v63 = vld [vmem:[%s1 + $0x10] sm:$0xf]
  %v64 = vld [vmem:[%s5] sm:$0xf]
  %v65 = vld [vmem:[%s5 + $0x4] sm:$0xf]
  %v66 = vld [vmem:[%s5 + $0x8] sm:$0xf]
  %v67 = vld [vmem:[%s5 + $0xc] sm:$0xf]
  %v68 = vld [vmem:[%s3] sm:$0xf]
  %v69 = vld [vmem:[%s3 + $0x4] sm:$0xf]
  %v70 = vld [vmem:[%s3 + $0x8] sm:$0xf]
  %v71 = vld [vmem:[%s3 + $0xc] sm:$0xf]
  %v72 = vld [vmem:[%s3 + $0x10] sm:$0xf]
  %v73 = vld [vmem:[%s6] sm:$0xf]
  %v74 = vld [vmem:[%s6 + $0x4] sm:$0xf]
  %v75 = vld [vmem:[%s6 + $0x8] sm:$0xf]
  %v76 = vld [vmem:[%s6 + $0xc] sm:$0xf]
  %v82 = vunpack.c.l.b16 %v68
  %v83 = vunpack.c.l.b16 %v69
  %v84 = vunpack.c.l.b16 %v70
  %v85 = vunpack.c.l.b16 %v71
  %v86 = vunpack.c.l.b16 %v72
  %v87 = vpack.c.b16 %v83, %v82
  %v88 = vpack.c.b16 %v85, %v84
  %v89 = vpack.c.b16 %v86, %v86
  %v94 = vunpack.c.l.b16 %v73
  %v95 = vunpack.c.l.b16 %v74
  %v96 = vunpack.c.l.b16 %v75
  %v97 = vunpack.c.l.b16 %v76
  %v98 = vpack.c.b16 %v95, %v94
  %v99 = vpack.c.b16 %v97, %v96
  %vm102 = vcmask 261120
  %v104 = vsel %vm102, %v87, 0
  %v107 = vsel %vm102, %v88, 0
  %v110 = vsel %vm102, %v89, 0
  %112 = vmatpush.bf16.msra.mxu0 0
  %113 = vmatpush.bf16.msra.mxu0 0
  %114 = vmatpush.bf16.msra.mxu0 0
  %115 = vmatpush.bf16.msra.mxu0 0
  %116 = vmatpush.bf16.msra.mxu0 0
  %117 = vmatpush.bf16.msra.mxu0 0
  %118 = vmatpush.bf16.msra.mxu0 %v99
  %119 = vmatpush.bf16.msra.mxu0 %v98
  %120 = vmatmul.bf16.gmra.mxu0 %v104
  %v121 = vpop.f32.mrf.mxu0
  %v122 = vadd.f32 0.0, %v121
  %v123 = vpop.f32.mrf.mxu0
  %v124 = vadd.f32 0.0, %v123
  %125 = vmatmul.bf16.gmra.mxu0 %v107
  %v126 = vpop.f32.mrf.mxu0
  %v127 = vadd.f32 0.0, %v126
  %v128 = vpop.f32.mrf.mxu0
  %v129 = vadd.f32 0.0, %v128
  %130 = vmatmul.bf16.gmra.mxu0 %v110
  %v131 = vpop.f32.mrf.mxu0
  %v132 = vadd.f32 0.0, %v131
  %v133 = vpop.f32.mrf.mxu0
  %134 = vdwg.mxu0
  %v140 = vunpack.c.l.b16 %v59
  %v141 = vunpack.c.l.b16 %v60
  %v142 = vunpack.c.l.b16 %v61
  %v143 = vunpack.c.l.b16 %v62
  %v144 = vunpack.c.l.b16 %v63
  %v145 = vpack.c.b16 %v141, %v140
  %v146 = vpack.c.b16 %v143, %v142
  %v147 = vpack.c.b16 %v144, %v144
  %v152 = vunpack.c.l.b16 %v64
  %v153 = vunpack.c.l.b16 %v65
  %v154 = vunpack.c.l.b16 %v66
  %v155 = vunpack.c.l.b16 %v67
  %v156 = vpack.c.b16 %v153, %v152
  %v157 = vpack.c.b16 %v155, %v154
  %v161 = vsel %vm102, %v145, 0
  %v164 = vsel %vm102, %v146, 0
  %v167 = vsel %vm102, %v147, 0
  %169 = vmatpush.bf16.msra.mxu0 0
  %170 = vmatpush.bf16.msra.mxu0 0
  %171 = vmatpush.bf16.msra.mxu0 0
  %172 = vmatpush.bf16.msra.mxu0 0
  %173 = vmatpush.bf16.msra.mxu0 0
  %174 = vmatpush.bf16.msra.mxu0 0
  %175 = vmatpush.bf16.msra.mxu0 %v157
  %176 = vmatpush.bf16.msra.mxu0 %v156
  %177 = vmatmul.bf16.gmra.mxu0 %v161
  %v178 = vpop.f32.mrf.mxu0
  %v179 = vadd.f32 %v122, %v178
  %v180 = vpop.f32.mrf.mxu0
  %v181 = vadd.f32 %v124, %v180
  %182 = vmatmul.bf16.gmra.mxu0 %v164
  %v183 = vpop.f32.mrf.mxu0
  %v184 = vadd.f32 %v127, %v183
  %v185 = vpop.f32.mrf.mxu0
  %v186 = vadd.f32 %v129, %v185
  %187 = vmatmul.bf16.gmra.mxu0 %v167
  %v188 = vpop.f32.mrf.mxu0
  %v189 = vadd.f32 %v132, %v188
  %v190 = vpop.f32.mrf.mxu0
  %191 = vdwg.mxu0
  %v192 = vld [vmem:[%s4] sm:$0xf]
  %v193 = vld [vmem:[%s4 + $0x4] sm:$0xf]
  %v194 = vld [vmem:[%s4 + $0x8] sm:$0xf]
  %v195 = vld [vmem:[%s4 + $0xc] sm:$0xf]
  %v196 = vld [vmem:[%s4 + $0x10] sm:$0xf]
  %v197 = vld [vmem:[%s7] sm:$0xf]
  %v198 = vld [vmem:[%s7 + $0x4] sm:$0xf]
  %v199 = vld [vmem:[%s7 + $0x8] sm:$0xf]
  %v200 = vld [vmem:[%s7 + $0xc] sm:$0xf]
  %v206 = vunpack.c.l.b16 %v192
  %v207 = vunpack.c.l.b16 %v193
  %v208 = vunpack.c.l.b16 %v194
  %v209 = vunpack.c.l.b16 %v195
  %v210 = vunpack.c.l.b16 %v196
  %v211 = vpack.c.b16 %v207, %v206
  %v212 = vpack.c.b16 %v209, %v208
  %v213 = vpack.c.b16 %v210, %v210
  %v218 = vunpack.c.l.b16 %v197
  %v219 = vunpack.c.l.b16 %v198
  %v220 = vunpack.c.l.b16 %v199
  %v221 = vunpack.c.l.b16 %v200
  %v222 = vpack.c.b16 %v219, %v218
  %v223 = vpack.c.b16 %v221, %v220
  %v227 = vsel %vm102, %v211, 0
  %v230 = vsel %vm102, %v212, 0
  %v233 = vsel %vm102, %v213, 0
  %235 = vmatpush.bf16.msra.mxu0 0
  %236 = vmatpush.bf16.msra.mxu0 0
  %237 = vmatpush.bf16.msra.mxu0 0
  %238 = vmatpush.bf16.msra.mxu0 0
  %239 = vmatpush.bf16.msra.mxu0 0
  %240 = vmatpush.bf16.msra.mxu0 0
  %241 = vmatpush.bf16.msra.mxu0 %v223
  %242 = vmatpush.bf16.msra.mxu0 %v222
  %243 = vmatmul.bf16.gmra.mxu0 %v227
  %v244 = vpop.f32.mrf.mxu0
  %v245 = vadd.f32 0.0, %v244
  %v246 = vpop.f32.mrf.mxu0
  %v247 = vadd.f32 0.0, %v246
  %248 = vmatmul.bf16.gmra.mxu0 %v230
  %v249 = vpop.f32.mrf.mxu0
  %v250 = vadd.f32 0.0, %v249
  %v251 = vpop.f32.mrf.mxu0
  %v252 = vadd.f32 0.0, %v251
  %253 = vmatmul.bf16.gmra.mxu0 %v233
  %v254 = vpop.f32.mrf.mxu0
  %v255 = vadd.f32 0.0, %v254
  %v256 = vpop.f32.mrf.mxu0
  %257 = vdwg.mxu0
  %v258 = vadd.f32 %v179, %v245
  %v259 = vadd.f32 %v181, %v247
  %v260 = vadd.f32 %v184, %v250
  %v261 = vadd.f32 %v186, %v252
  %v262 = vadd.f32 %v189, %v255
  %v263 = vld [vmem:[%s8] sm:$0x1]
  %v265 = vperm.slane %v263, 0
  %v267 = vadd.f32 %v258, %v265
  %v268 = vadd.f32 %v259, %v265
  %v269 = vadd.f32 %v260, %v265
  %v270 = vadd.f32 %v261, %v265
  %v271 = vadd.f32 %v262, %v265
  %v272 = vld [vmem:[%s0] sm:$0xf]
  %v273 = vld [vmem:[%s0 + $0x4] sm:$0xf]
  %v274 = vld [vmem:[%s0 + $0x8] sm:$0xf]
  %v275 = vld [vmem:[%s0 + $0xc] sm:$0xf]
  %v276 = vld [vmem:[%s0 + $0x10] sm:$0xf]
  %v277 = vld [vmem:[%s9] sm:$0xf]
  %v278 = vld [vmem:[%s9 + $0x4] sm:$0xf]
  %v279 = vld [vmem:[%s9 + $0x8] sm:$0xf]
  %v280 = vld [vmem:[%s9 + $0xc] sm:$0xf]
  %v281 = vld [vmem:[%s2] sm:$0xf]
  %v282 = vld [vmem:[%s2 + $0x4] sm:$0xf]
  %v283 = vld [vmem:[%s2 + $0x8] sm:$0xf]
  %v284 = vld [vmem:[%s2 + $0xc] sm:$0xf]
  %v285 = vld [vmem:[%s2 + $0x10] sm:$0xf]
  %v286 = vld [vmem:[%s10] sm:$0xf]
  %v287 = vld [vmem:[%s10 + $0x4] sm:$0xf]
  %v288 = vld [vmem:[%s10 + $0x8] sm:$0xf]
  %v289 = vld [vmem:[%s10 + $0xc] sm:$0xf]
  %v295 = vunpack.c.l.b16 %v281
  %v296 = vunpack.c.l.b16 %v282
  %v297 = vunpack.c.l.b16 %v283
  %v298 = vunpack.c.l.b16 %v284
  %v299 = vunpack.c.l.b16 %v285
  %v300 = vpack.c.b16 %v296, %v295
  %v301 = vpack.c.b16 %v298, %v297
  %v302 = vpack.c.b16 %v299, %v299
  %v307 = vunpack.c.l.b16 %v286
  %v308 = vunpack.c.l.b16 %v287
  %v309 = vunpack.c.l.b16 %v288
  %v310 = vunpack.c.l.b16 %v289
  %v311 = vpack.c.b16 %v308, %v307
  %v312 = vpack.c.b16 %v310, %v309
  %v316 = vsel %vm102, %v300, 0
  %v319 = vsel %vm102, %v301, 0
  %v322 = vsel %vm102, %v302, 0
  %324 = vmatpush.bf16.msra.mxu0 0
  %325 = vmatpush.bf16.msra.mxu0 0
  %326 = vmatpush.bf16.msra.mxu0 0
  %327 = vmatpush.bf16.msra.mxu0 0
  %328 = vmatpush.bf16.msra.mxu0 0
  %329 = vmatpush.bf16.msra.mxu0 0
  %330 = vmatpush.bf16.msra.mxu0 %v312
  %331 = vmatpush.bf16.msra.mxu0 %v311
  %332 = vmatmul.bf16.gmra.mxu0 %v316
  %v333 = vpop.f32.mrf.mxu0
  %v334 = vadd.f32 0.0, %v333
  %v335 = vpop.f32.mrf.mxu0
  %v336 = vadd.f32 0.0, %v335
  %337 = vmatmul.bf16.gmra.mxu0 %v319
  %v338 = vpop.f32.mrf.mxu0
  %v339 = vadd.f32 0.0, %v338
  %v340 = vpop.f32.mrf.mxu0
  %v341 = vadd.f32 0.0, %v340
  %342 = vmatmul.bf16.gmra.mxu0 %v322
  %v343 = vpop.f32.mrf.mxu0
  %v344 = vadd.f32 0.0, %v343
  %v345 = vpop.f32.mrf.mxu0
  %346 = vdwg.mxu0
  %v352 = vunpack.c.l.b16 %v272
  %v353 = vunpack.c.l.b16 %v273
  %v354 = vunpack.c.l.b16 %v274
  %v355 = vunpack.c.l.b16 %v275
  %v356 = vunpack.c.l.b16 %v276
  %v357 = vpack.c.b16 %v353, %v352
  %v358 = vpack.c.b16 %v355, %v354
  %v359 = vpack.c.b16 %v356, %v356
  %v364 = vunpack.c.l.b16 %v277
  %v365 = vunpack.c.l.b16 %v278
  %v366 = vunpack.c.l.b16 %v279
  %v367 = vunpack.c.l.b16 %v280
  %v368 = vpack.c.b16 %v365, %v364
  %v369 = vpack.c.b16 %v367, %v366
  %v373 = vsel %vm102, %v357, 0
  %v376 = vsel %vm102, %v358, 0
  %v379 = vsel %vm102, %v359, 0
  %381 = vmatpush.bf16.msra.mxu0 0
  %382 = vmatpush.bf16.msra.mxu0 0
  %383 = vmatpush.bf16.msra.mxu0 0
  %384 = vmatpush.bf16.msra.mxu0 0
  %385 = vmatpush.bf16.msra.mxu0 0
  %386 = vmatpush.bf16.msra.mxu0 0
  %387 = vmatpush.bf16.msra.mxu0 %v369
  %388 = vmatpush.bf16.msra.mxu0 %v368
  %389 = vmatmul.bf16.gmra.mxu0 %v373
  %v390 = vpop.f32.mrf.mxu0
  %v391 = vadd.f32 %v334, %v390
  %v392 = vpop.f32.mrf.mxu0
  %v393 = vadd.f32 %v336, %v392
  %394 = vmatmul.bf16.gmra.mxu0 %v376
  %v395 = vpop.f32.mrf.mxu0
  %v396 = vadd.f32 %v339, %v395
  %v397 = vpop.f32.mrf.mxu0
  %v398 = vadd.f32 %v341, %v397
  %399 = vmatmul.bf16.gmra.mxu0 %v379
  %v400 = vpop.f32.mrf.mxu0
  %v401 = vadd.f32 %v344, %v400
  %v402 = vpop.f32.mrf.mxu0
  %403 = vdwg.mxu0
  %v404 = vld [vmem:[%s11] sm:$0xf]
  %v405 = vld [vmem:[%s11 + $0x4] sm:$0xf]
  %v406 = vld [vmem:[%s11 + $0x8] sm:$0xf]
  %v407 = vld [vmem:[%s11 + $0xc] sm:$0xf]
  %v412 = vunpack.c.l.b16 %v404
  %v413 = vunpack.c.l.b16 %v405
  %v414 = vunpack.c.l.b16 %v406
  %v415 = vunpack.c.l.b16 %v407
  %v416 = vpack.c.b16 %v413, %v412
  %v417 = vpack.c.b16 %v415, %v414
  %420 = vmatpush.bf16.msra.mxu0 0
  %421 = vmatpush.bf16.msra.mxu0 0
  %422 = vmatpush.bf16.msra.mxu0 0
  %423 = vmatpush.bf16.msra.mxu0 0
  %424 = vmatpush.bf16.msra.mxu0 0
  %425 = vmatpush.bf16.msra.mxu0 0
  %426 = vmatpush.bf16.msra.mxu0 %v417
  %427 = vmatpush.bf16.msra.mxu0 %v416
  %428 = vmatmul.bf16.gmra.mxu0 %v227
  %v429 = vpop.f32.mrf.mxu0
  %v430 = vadd.f32 0.0, %v429
  %v431 = vpop.f32.mrf.mxu0
  %v432 = vadd.f32 0.0, %v431
  %433 = vmatmul.bf16.gmra.mxu0 %v230
  %v434 = vpop.f32.mrf.mxu0
  %v435 = vadd.f32 0.0, %v434
  %v436 = vpop.f32.mrf.mxu0
  %v437 = vadd.f32 0.0, %v436
  %438 = vmatmul.bf16.gmra.mxu0 %v233
  %v439 = vpop.f32.mrf.mxu0
  %v440 = vadd.f32 0.0, %v439
  %v441 = vpop.f32.mrf.mxu0
  %442 = vdwg.mxu0
  %v443 = vadd.f32 %v391, %v430
  %v444 = vadd.f32 %v393, %v432
  %v445 = vadd.f32 %v396, %v435
  %v446 = vadd.f32 %v398, %v437
  %v447 = vadd.f32 %v401, %v440
  %v448 = vld [vmem:[%s12] sm:$0x1]
  %v450 = vperm.slane %v448, 0
  %v452 = vadd.f32 %v443, %v450
  %v453 = vadd.f32 %v444, %v450
  %v454 = vadd.f32 %v445, %v450
  %v455 = vadd.f32 %v446, %v450
  %v456 = vadd.f32 %v447, %v450
  %v457 = vld [vmem:[%s13] sm:$0xf]
  %v458 = vld [vmem:[%s13 + $0x4] sm:$0xf]
  %v459 = vld [vmem:[%s13 + $0x8] sm:$0xf]
  %v460 = vld [vmem:[%s13 + $0xc] sm:$0xf]
  %v461 = vld [vmem:[%s14] sm:$0xf]
  %v462 = vld [vmem:[%s14 + $0x4] sm:$0xf]
  %v463 = vld [vmem:[%s14 + $0x8] sm:$0xf]
  %v464 = vld [vmem:[%s14 + $0xc] sm:$0xf]
  %v469 = vunpack.c.l.b16 %v461
  %v470 = vunpack.c.l.b16 %v462
  %v471 = vunpack.c.l.b16 %v463
  %v472 = vunpack.c.l.b16 %v464
  %v473 = vpack.c.b16 %v470, %v469
  %v474 = vpack.c.b16 %v472, %v471
  %477 = vmatpush.bf16.msra.mxu0 0
  %478 = vmatpush.bf16.msra.mxu0 0
  %479 = vmatpush.bf16.msra.mxu0 0
  %480 = vmatpush.bf16.msra.mxu0 0
  %481 = vmatpush.bf16.msra.mxu0 0
  %482 = vmatpush.bf16.msra.mxu0 0
  %483 = vmatpush.bf16.msra.mxu0 %v474
  %484 = vmatpush.bf16.msra.mxu0 %v473
  %485 = vmatmul.bf16.gmra.mxu0 %v316
  %v486 = vpop.f32.mrf.mxu0
  %v487 = vadd.f32 0.0, %v486
  %v488 = vpop.f32.mrf.mxu0
  %v489 = vadd.f32 0.0, %v488
  %490 = vmatmul.bf16.gmra.mxu0 %v319
  %v491 = vpop.f32.mrf.mxu0
  %v492 = vadd.f32 0.0, %v491
  %v493 = vpop.f32.mrf.mxu0
  %v494 = vadd.f32 0.0, %v493
  %495 = vmatmul.bf16.gmra.mxu0 %v322
  %v496 = vpop.f32.mrf.mxu0
  %v497 = vadd.f32 0.0, %v496
  %v498 = vpop.f32.mrf.mxu0
  %499 = vdwg.mxu0
  %v504 = vunpack.c.l.b16 %v457
  %v505 = vunpack.c.l.b16 %v458
  %v506 = vunpack.c.l.b16 %v459
  %v507 = vunpack.c.l.b16 %v460
  %v508 = vpack.c.b16 %v505, %v504
  %v509 = vpack.c.b16 %v507, %v506
  %512 = vmatpush.bf16.msra.mxu0 0
  %513 = vmatpush.bf16.msra.mxu0 0
  %514 = vmatpush.bf16.msra.mxu0 0
  %515 = vmatpush.bf16.msra.mxu0 0
  %516 = vmatpush.bf16.msra.mxu0 0
  %517 = vmatpush.bf16.msra.mxu0 0
  %518 = vmatpush.bf16.msra.mxu0 %v509
  %519 = vmatpush.bf16.msra.mxu0 %v508
  %520 = vmatmul.bf16.gmra.mxu0 %v373
  %v521 = vpop.f32.mrf.mxu0
  %v522 = vadd.f32 %v487, %v521
  %v523 = vpop.f32.mrf.mxu0
  %v524 = vadd.f32 %v489, %v523
  %525 = vmatmul.bf16.gmra.mxu0 %v376
  %v526 = vpop.f32.mrf.mxu0
  %v527 = vadd.f32 %v492, %v526
  %v528 = vpop.f32.mrf.mxu0
  %v529 = vadd.f32 %v494, %v528
  %530 = vmatmul.bf16.gmra.mxu0 %v379
  %v531 = vpop.f32.mrf.mxu0
  %v532 = vadd.f32 %v497, %v531
  %v533 = vpop.f32.mrf.mxu0
  %534 = vdwg.mxu0
  %v535 = vld [vmem:[%s15] sm:$0x1]
  %v537 = vperm.slane %v535, 0
  %v539 = vadd.f32 %v522, %v537
  %v540 = vadd.f32 %v524, %v537
  %v541 = vadd.f32 %v527, %v537
  %v542 = vadd.f32 %v529, %v537
  %v543 = vadd.f32 %v532, %v537
  %v544 = vmul.f32 %v539, 0.35355338
  %v545 = vmul.f32 %v540, 0.35355338
  %v546 = vmul.f32 %v541, 0.35355338
  %v547 = vmul.f32 %v542, 0.35355338
  %v548 = vmul.f32 %v543, 0.35355338
  %v549 = vpack.c.bf16 %v452, %v452
  %v550 = vpack.c.bf16 %v453, %v453
  %v551 = vpack.c.bf16 %v454, %v454
  %v552 = vpack.c.bf16 %v455, %v455
  %v553 = vpack.c.bf16 %v456, %v456
  %vm554 = vcmask 257024
  %555 = vst.msk [vmem:[%s17] sm:$0xf] %vm554, %v549
  %556 = vst.msk [vmem:[%s17 + $0x4] sm:$0xf] %vm554, %v550
  %557 = vst.msk [vmem:[%s17 + $0x8] sm:$0xf] %vm554, %v551
  %558 = vst.msk [vmem:[%s17 + $0xc] sm:$0xf] %vm554, %v552
  %559 = vst.msk [vmem:[%s17 + $0x10] sm:$0xf] %vm554, %v553
  %v560 = vmul.f32 %v544, %v267
  %v561 = vmul.f32 %v545, %v268
  %v562 = vmul.f32 %v546, %v269
  %v563 = vmul.f32 %v547, %v270
  %v564 = vmul.f32 %v548, %v271
  %v565 = vld [vmem:[%s16] sm:$0xff]
  %v566 = vld [vmem:[%s16 + $0x8] sm:$0xff]
  %v567 = vld [vmem:[%s16 + $0x10] sm:$0xff]
  %v568 = vld [vmem:[%s16 + $0x18] sm:$0xff]
  %v570 = vsel %vm102, %v560, 0
  %v573 = vsel %vm102, %v561, 0
  %v576 = vsel %vm102, %v562, 0
  %v579 = vsel %vm102, %v563, 0
  %v582 = vsel %vm102, %v564, 0
  %584 = vmatpush.msra.mxu0 0.0
  %585 = vmatpush.msra.mxu0 0.0
  %586 = vmatpush.msra.mxu0 0.0
  %587 = vmatpush.msra.mxu0 0.0
  %588 = vmatpush.msra.mxu0 0.0
  %589 = vmatpush.msra.mxu0 0.0
  %590 = vmatpush.msra.mxu0 0.0
  %591 = vmatpush.msra.mxu0 0.0
  %592 = vmatpush.msra.mxu0 0.0
  %593 = vmatpush.msra.mxu0 0.0
  %594 = vmatpush.msra.mxu0 0.0
  %595 = vmatpush.msra.mxu0 0.0
  %596 = vmatpush.msra.mxu0 %v568
  %597 = vmatpush.msra.mxu0 %v567
  %598 = vmatpush.msra.mxu0 %v566
  %599 = vmatpush.msra.mxu0 %v565
  %600 = vmatmul.f32.gmra.mxu0 %v570
  %v601 = vpop.f32.mrf.mxu0
  %v602 = vadd.f32 0.0, %v601
  %603 = vmatmul.f32.gmra.mxu0 %v573
  %v604 = vpop.f32.mrf.mxu0
  %v605 = vadd.f32 0.0, %v604
  %606 = vmatmul.f32.gmra.mxu0 %v576
  %v607 = vpop.f32.mrf.mxu0
  %v608 = vadd.f32 0.0, %v607
  %609 = vmatmul.f32.gmra.mxu0 %v579
  %v610 = vpop.f32.mrf.mxu0
  %v611 = vadd.f32 0.0, %v610
  %612 = vmatmul.f32.gmra.mxu0 %v582
  %v613 = vpop.f32.mrf.mxu0
  %v614 = vadd.f32 0.0, %v613
  %615 = vdwg.mxu0
  %vm616 = vcmask 31744
  %617 = vst.msk [vmem:[%s18] sm:$0xff] %vm616, %v602
  %618 = vst.msk [vmem:[%s18 + $0x8] sm:$0xff] %vm616, %v605
  %619 = vst.msk [vmem:[%s18 + $0x10] sm:$0xff] %vm616, %v608
  %620 = vst.msk [vmem:[%s18 + $0x18] sm:$0xff] %vm616, %v611
  %621 = vst.msk [vmem:[%s18 + $0x20] sm:$0xff] %vm616, %v614
  // Predicated region
  $region70: #{qagnn_message_passing_forward.15} parent=0 // pred_check
    _
  $region71: #{qagnn_message_passing_forward.15} parent=0 // pred_check_branch
    %623 = sbr.rel (0) target = $region73
  $region72: #{qagnn_message_passing_forward.15} parent=0 // pred_region
    _
  $region73: #{qagnn_message_passing_forward.15} parent=0 // pred_fallthru
    _
  // Predicated region
  $region74: #{qagnn_message_passing_forward.15} parent=0 // pred_check
    _
  $region75: #{qagnn_message_passing_forward.15} parent=0 // pred_check_branch
    %625 = sbr.rel (0) target = $region77
  $region76: #{qagnn_message_passing_forward.15} parent=0 // pred_region
    _
  $region77: #{qagnn_message_passing_forward.15} parent=0 // pred_fallthru
    _
  // Predicated region
  $region78: #{qagnn_message_passing_forward.15} parent=0 // pred_check
    _
  $region79: #{qagnn_message_passing_forward.15} parent=0 // pred_check_branch
    %627 = sbr.rel (0) target = $region81
  $region80: #{qagnn_message_passing_forward.15} parent=0 // pred_region
    _
  $region81: #{qagnn_message_passing_forward.15} parent=0 // pred_fallthru
    _
  // Predicated region
  $region82: #{qagnn_message_passing_forward.15} parent=0 // pred_check
    _
  $region83: #{qagnn_message_passing_forward.15} parent=0 // pred_check_branch
    %629 = sbr.rel (0) target = $region85
  $region84: #{qagnn_message_passing_forward.15} parent=0 // pred_region
    _
  $region85: #{qagnn_message_passing_forward.15} parent=0 // pred_fallthru
    _

// kernel: qagnn_message_passing_forward.16
$region0: #{qagnn_message_passing_forward.16}
  #allocation0 [shape = 'u32[]', space=smem, size = 0x4, offset = 0x4, fixed_abs, tag = 'smem constant byte address 0x4 - core index']
  #allocation1 [shape = 'u32[72,128]{1,0:T(1,128)}', space=vmem, size = 0x9000, scoped, tag = 'internal scratch']
  %s0 = inlined_call_operand.vmem [shape: f32[40,4], index: 0, kind: input, shape index: {}]
  %s1 = inlined_call_operand.vmem [shape: bf16[40,128], index: 1, kind: input, shape index: {}]
  %s2 = inlined_call_operand.vmem [shape: f32[128,1], index: 2, kind: input, shape index: {}]
  %s3 = inlined_call_operand.vmem [shape: f32[1,4], index: 3, kind: input, shape index: {}]
  %s4 = inlined_call_operand.vmem [shape: f32[128,4], index: 4, kind: output, shape index: {}]
  %s5 = sld [smem:[#allocation0]]
  $region34: #{qagnn_message_passing_forward.16} parent=0
    _
  %s7 = ssub.s32 1, %s5
  %s8 = scalar_select 0, %s7, %s5
  // Predicated region
  $region2: #{qagnn_message_passing_forward.16} parent=0 // pred_check
    _
  $region3: #{qagnn_message_passing_forward.16} parent=0 // pred_check_branch
    %10 = sbr.rel (0) target = $region5
  $region4: #{qagnn_message_passing_forward.16} parent=0 // pred_region
    _
  $region5: #{qagnn_message_passing_forward.16} parent=0 // pred_fallthru
    _
  // Predicated region
  $region6: #{qagnn_message_passing_forward.16} parent=0 // pred_check
    _
  $region7: #{qagnn_message_passing_forward.16} parent=0 // pred_check_branch
    %12 = sbr.rel (0) target = $region9
  $region8: #{qagnn_message_passing_forward.16} parent=0 // pred_region
    _
  $region9: #{qagnn_message_passing_forward.16} parent=0 // pred_fallthru
    _
  // Predicated region
  $region10: #{qagnn_message_passing_forward.16} parent=0 // pred_check
    _
  $region11: #{qagnn_message_passing_forward.16} parent=0 // pred_check_branch
    %14 = sbr.rel (0) target = $region13
  $region12: #{qagnn_message_passing_forward.16} parent=0 // pred_region
    _
  $region13: #{qagnn_message_passing_forward.16} parent=0 // pred_fallthru
    _
  // Predicated region
  $region14: #{qagnn_message_passing_forward.16} parent=0 // pred_check
    _
  $region15: #{qagnn_message_passing_forward.16} parent=0 // pred_check_branch
    %16 = sbr.rel (0) target = $region17
  $region16: #{qagnn_message_passing_forward.16} parent=0 // pred_region
    _
  $region17: #{qagnn_message_passing_forward.16} parent=0 // pred_fallthru
    _
  %p18 = scmp.eq.s32.totalorder 0, 0
  // Predicated region
  $region18: #{qagnn_message_passing_forward.16} parent=0 // pred_check
    %p19 = pneg %p18
  $region19: #{qagnn_message_passing_forward.16} parent=0 // pred_check_branch
    %21 = sbr.rel (%p19) target = $region21
  $region20: #{qagnn_message_passing_forward.16} parent=0 // pred_region
    %vm22 = vcmask 31744
    %23 = vst.msk [vmem:[%s4] sm:$0xff] %vm22, 0.0
    %24 = vst.msk [vmem:[%s4 + $0x8] sm:$0xff] %vm22, 0.0
    %25 = vst.msk [vmem:[%s4 + $0x10] sm:$0xff] %vm22, 0.0
    %26 = vst.msk [vmem:[%s4 + $0x18] sm:$0xff] %vm22, 0.0
    %27 = vst.msk [vmem:[%s4 + $0x20] sm:$0xff] %vm22, 0.0
    %28 = vst.msk [vmem:[%s4 + $0x28] sm:$0xff] %vm22, 0.0
    %29 = vst.msk [vmem:[%s4 + $0x30] sm:$0xff] %vm22, 0.0
    %30 = vst.msk [vmem:[%s4 + $0x38] sm:$0xff] %vm22, 0.0
    %31 = vst.msk [vmem:[%s4 + $0x40] sm:$0xff] %vm22, 0.0
    %32 = vst.msk [vmem:[%s4 + $0x48] sm:$0xff] %vm22, 0.0
    %33 = vst.msk [vmem:[%s4 + $0x50] sm:$0xff] %vm22, 0.0
    %34 = vst.msk [vmem:[%s4 + $0x58] sm:$0xff] %vm22, 0.0
    %35 = vst.msk [vmem:[%s4 + $0x60] sm:$0xff] %vm22, 0.0
    %36 = vst.msk [vmem:[%s4 + $0x68] sm:$0xff] %vm22, 0.0
    %37 = vst.msk [vmem:[%s4 + $0x70] sm:$0xff] %vm22, 0.0
    %38 = vst.msk [vmem:[%s4 + $0x78] sm:$0xff] %vm22, 0.0
  $region21: #{qagnn_message_passing_forward.16} parent=0 // pred_fallthru
    _
  %v39 = vld [vmem:[%s0] sm:$0xff]
  %v40 = vld [vmem:[%s0 + $0x8] sm:$0xff]
  %v41 = vld [vmem:[%s0 + $0x10] sm:$0xff]
  %v42 = vld [vmem:[%s0 + $0x18] sm:$0xff]
  %v43 = vld [vmem:[%s0 + $0x20] sm:$0xff]
  %v44 = vld [vmem:[%s3] sm:$0x1]
  %v46 = vperm.slane %v44, 0
  %v48 = vsub.f32 %v39, %v46
  %v49 = vsub.f32 %v40, %v46
  %v50 = vsub.f32 %v41, %v46
  %v51 = vsub.f32 %v42, %v46
  %v52 = vsub.f32 %v43, %v46
  %v53 = vmul.f32 %v48, 1.442695
  %v54 = vpow.pop %v53
  %v55 = vmul.f32 %v49, 1.442695
  %v56 = vpow.pop %v55
  %v57 = vmul.f32 %v50, 1.442695
  %v58 = vpow.pop %v57
  %v59 = vmul.f32 %v51, 1.442695
  %v60 = vpow.pop %v59
  %v61 = vmul.f32 %v52, 1.442695
  %v62 = vpow.pop %v61
  %v63 = vpack.c.bf16 %v56, %v54
  %v64 = vpack.c.bf16 %v60, %v58
  %v65 = vpack.c.bf16 %v62, %v62
  %v66 = vld [vmem:[%s4] sm:$0xff]
  %v67 = vld [vmem:[%s4 + $0x8] sm:$0xff]
  %v68 = vld [vmem:[%s4 + $0x10] sm:$0xff]
  %v69 = vld [vmem:[%s4 + $0x18] sm:$0xff]
  %v70 = vld [vmem:[%s4 + $0x20] sm:$0xff]
  %v71 = vld [vmem:[%s4 + $0x28] sm:$0xff]
  %v72 = vld [vmem:[%s4 + $0x30] sm:$0xff]
  %v73 = vld [vmem:[%s4 + $0x38] sm:$0xff]
  %v74 = vld [vmem:[%s4 + $0x40] sm:$0xff]
  %v75 = vld [vmem:[%s4 + $0x48] sm:$0xff]
  %v76 = vld [vmem:[%s4 + $0x50] sm:$0xff]
  %v77 = vld [vmem:[%s4 + $0x58] sm:$0xff]
  %v78 = vld [vmem:[%s4 + $0x60] sm:$0xff]
  %v79 = vld [vmem:[%s4 + $0x68] sm:$0xff]
  %v80 = vld [vmem:[%s4 + $0x70] sm:$0xff]
  %v81 = vld [vmem:[%s4 + $0x78] sm:$0xff]
  %v82 = vld [vmem:[%s1] sm:$0xf]
  %v83 = vld [vmem:[%s1 + $0x4] sm:$0xf]
  %v84 = vld [vmem:[%s1 + $0x8] sm:$0xf]
  %v85 = vld [vmem:[%s1 + $0xc] sm:$0xf]
  %v86 = vld [vmem:[%s1 + $0x10] sm:$0xf]
  %v92 = vunpack.c.l.b16 %v82
  %v93 = vunpack.c.l.b16 %v83
  %v94 = vunpack.c.l.b16 %v84
  %v95 = vunpack.c.l.b16 %v85
  %v96 = vunpack.c.l.b16 %v86
  %v97 = vpack.c.b16 %v93, %v92
  %v98 = vpack.c.b16 %v95, %v94
  %v99 = vpack.c.b16 %v96, %v96
  %103 = vxpose.xlu0.c.b16.start [1/8] %v97, 128
  %104 = vxpose.xlu0.c.b16.cont [2/8] %v98, 128
  %105 = vxpose.xlu0.c.b16.cont [3/8] %v99, 128
  %106 = vxpose.xlu0.c.b16.cont [4/8] 0, 128
  %107 = vxpose.xlu0.c.b16.cont [5/8] 0, 128
  %108 = vxpose.xlu0.c.b16.cont [6/8] 0, 128
  %109 = vxpose.xlu0.c.b16.cont [7/8] 0, 128
  %110 = vxpose.xlu0.c.b16.end [8/8] 0, 128
  %v111 = vpop.trf.xlu0
  %v112 = vpop.trf.xlu0
  %v113 = vpop.trf.xlu0
  %v114 = vpop.trf.xlu0
  %v115 = vpop.trf.xlu0
  %v116 = vpop.trf.xlu0
  %v117 = vpop.trf.xlu0
  %v118 = vpop.trf.xlu0
  %vm119 = vcmask 326656
  %v121 = vsel %vm119, %v111, 0
  %v124 = vsel %vm119, %v112, 0
  %v127 = vsel %vm119, %v113, 0
  %v130 = vsel %vm119, %v114, 0
  %v133 = vsel %vm119, %v115, 0
  %v136 = vsel %vm119, %v116, 0
  %v139 = vsel %vm119, %v117, 0
  %v142 = vsel %vm119, %v118, 0
  %vm144 = vcmask 1043456
  %v146 = vsel %vm144, %v65, 0
  %148 = vmatpush.bf16.msra.mxu0 0
  %149 = vmatpush.bf16.msra.mxu0 0
  %150 = vmatpush.bf16.msra.mxu0 0
  %151 = vmatpush.bf16.msra.mxu0 0
  %152 = vmatpush.bf16.msra.mxu0 0
  %153 = vmatpush.bf16.msra.mxu0 %v146
  %154 = vmatpush.bf16.msra.mxu0 %v64
  %155 = vmatpush.bf16.msra.mxu0 %v63
  %156 = vmatmul.bf16.gmra.mxu0 %v121
  %v157 = vpop.f32.mrf.mxu0
  %v158 = vadd.f32 0.0, %v157
  %v159 = vpop.f32.mrf.mxu0
  %v160 = vadd.f32 0.0, %v159
  %161 = vmatmul.bf16.gmra.mxu0 %v124
  %v162 = vpop.f32.mrf.mxu0
  %v163 = vadd.f32 0.0, %v162
  %v164 = vpop.f32.mrf.mxu0
  %v165 = vadd.f32 0.0, %v164
  %166 = vmatmul.bf16.gmra.mxu0 %v127
  %v167 = vpop.f32.mrf.mxu0
  %v168 = vadd.f32 0.0, %v167
  %v169 = vpop.f32.mrf.mxu0
  %v170 = vadd.f32 0.0, %v169
  %171 = vmatmul.bf16.gmra.mxu0 %v130
  %v172 = vpop.f32.mrf.mxu0
  %v173 = vadd.f32 0.0, %v172
  %v174 = vpop.f32.mrf.mxu0
  %v175 = vadd.f32 0.0, %v174
  %176 = vmatmul.bf16.gmra.mxu0 %v133
  %v177 = vpop.f32.mrf.mxu0
  %v178 = vadd.f32 0.0, %v177
  %v179 = vpop.f32.mrf.mxu0
  %v180 = vadd.f32 0.0, %v179
  %181 = vmatmul.bf16.gmra.mxu0 %v136
  %v182 = vpop.f32.mrf.mxu0
  %v183 = vadd.f32 0.0, %v182
  %v184 = vpop.f32.mrf.mxu0
  %v185 = vadd.f32 0.0, %v184
  %186 = vmatmul.bf16.gmra.mxu0 %v139
  %v187 = vpop.f32.mrf.mxu0
  %v188 = vadd.f32 0.0, %v187
  %v189 = vpop.f32.mrf.mxu0
  %v190 = vadd.f32 0.0, %v189
  %191 = vmatmul.bf16.gmra.mxu0 %v142
  %v192 = vpop.f32.mrf.mxu0
  %v193 = vadd.f32 0.0, %v192
  %v194 = vpop.f32.mrf.mxu0
  %v195 = vadd.f32 0.0, %v194
  %196 = vdwg.mxu0
  %v197 = vadd.f32 %v66, %v158
  %v198 = vadd.f32 %v67, %v160
  %v199 = vadd.f32 %v68, %v163
  %v200 = vadd.f32 %v69, %v165
  %v201 = vadd.f32 %v70, %v168
  %v202 = vadd.f32 %v71, %v170
  %v203 = vadd.f32 %v72, %v173
  %v204 = vadd.f32 %v73, %v175
  %v205 = vadd.f32 %v74, %v178
  %v206 = vadd.f32 %v75, %v180
  %v207 = vadd.f32 %v76, %v183
  %v208 = vadd.f32 %v77, %v185
  %v209 = vadd.f32 %v78, %v188
  %v210 = vadd.f32 %v79, %v190
  %v211 = vadd.f32 %v80, %v193
  %v212 = vadd.f32 %v81, %v195
  %vm213 = vcmask 31744
  %214 = vst.msk [vmem:[%s4] sm:$0xff] %vm213, %v197
  %215 = vst.msk [vmem:[%s4 + $0x8] sm:$0xff] %vm213, %v198
  %216 = vst.msk [vmem:[%s4 + $0x10] sm:$0xff] %vm213, %v199
  %217 = vst.msk [vmem:[%s4 + $0x18] sm:$0xff] %vm213, %v200
  %218 = vst.msk [vmem:[%s4 + $0x20] sm:$0xff] %vm213, %v201
  %219 = vst.msk [vmem:[%s4 + $0x28] sm:$0xff] %vm213, %v202
  %220 = vst.msk [vmem:[%s4 + $0x30] sm:$0xff] %vm213, %v203
  %221 = vst.msk [vmem:[%s4 + $0x38] sm:$0xff] %vm213, %v204
  %222 = vst.msk [vmem:[%s4 + $0x40] sm:$0xff] %vm213, %v205
  %223 = vst.msk [vmem:[%s4 + $0x48] sm:$0xff] %vm213, %v206
  %224 = vst.msk [vmem:[%s4 + $0x50] sm:$0xff] %vm213, %v207
  %225 = vst.msk [vmem:[%s4 + $0x58] sm:$0xff] %vm213, %v208
  %226 = vst.msk [vmem:[%s4 + $0x60] sm:$0xff] %vm213, %v209
  %227 = vst.msk [vmem:[%s4 + $0x68] sm:$0xff] %vm213, %v210
  %228 = vst.msk [vmem:[%s4 + $0x70] sm:$0xff] %vm213, %v211
  %229 = vst.msk [vmem:[%s4 + $0x78] sm:$0xff] %vm213, %v212
  // Predicated region
  $region22: #{qagnn_message_passing_forward.16} parent=0 // pred_check
    %p230 = pneg %p18
  $region23: #{qagnn_message_passing_forward.16} parent=0 // pred_check_branch
    %232 = sbr.rel (%p230) target = $region25
  $region24: #{qagnn_message_passing_forward.16} parent=0 // pred_region
    %v233 = vld [vmem:[%s4] sm:$0xff]
    %v234 = vld [vmem:[%s4 + $0x8] sm:$0xff]
    %v235 = vld [vmem:[%s4 + $0x10] sm:$0xff]
    %v236 = vld [vmem:[%s4 + $0x18] sm:$0xff]
    %v237 = vld [vmem:[%s4 + $0x20] sm:$0xff]
    %v238 = vld [vmem:[%s4 + $0x28] sm:$0xff]
    %v239 = vld [vmem:[%s4 + $0x30] sm:$0xff]
    %v240 = vld [vmem:[%s4 + $0x38] sm:$0xff]
    %v241 = vld [vmem:[%s4 + $0x40] sm:$0xff]
    %v242 = vld [vmem:[%s4 + $0x48] sm:$0xff]
    %v243 = vld [vmem:[%s4 + $0x50] sm:$0xff]
    %v244 = vld [vmem:[%s4 + $0x58] sm:$0xff]
    %v245 = vld [vmem:[%s4 + $0x60] sm:$0xff]
    %v246 = vld [vmem:[%s4 + $0x68] sm:$0xff]
    %v247 = vld [vmem:[%s4 + $0x70] sm:$0xff]
    %v248 = vld [vmem:[%s4 + $0x78] sm:$0xff]
    %v249 = vld [vmem:[%s2] sm:$0xff]
    %v250 = vld [vmem:[%s2 + $0x8] sm:$0xff]
    %v251 = vld [vmem:[%s2 + $0x10] sm:$0xff]
    %v252 = vld [vmem:[%s2 + $0x18] sm:$0xff]
    %v253 = vld [vmem:[%s2 + $0x20] sm:$0xff]
    %v254 = vld [vmem:[%s2 + $0x28] sm:$0xff]
    %v255 = vld [vmem:[%s2 + $0x30] sm:$0xff]
    %v256 = vld [vmem:[%s2 + $0x38] sm:$0xff]
    %v257 = vld [vmem:[%s2 + $0x40] sm:$0xff]
    %v258 = vld [vmem:[%s2 + $0x48] sm:$0xff]
    %v259 = vld [vmem:[%s2 + $0x50] sm:$0xff]
    %v260 = vld [vmem:[%s2 + $0x58] sm:$0xff]
    %v261 = vld [vmem:[%s2 + $0x60] sm:$0xff]
    %v262 = vld [vmem:[%s2 + $0x68] sm:$0xff]
    %v263 = vld [vmem:[%s2 + $0x70] sm:$0xff]
    %v264 = vld [vmem:[%s2 + $0x78] sm:$0xff]
    %v265 = vrcp.pop %v233
    %v266 = vrcp.pop %v234
    %v267 = vrcp.pop %v235
    %v268 = vrcp.pop %v236
    %v269 = vrcp.pop %v237
    %v270 = vrcp.pop %v238
    %v271 = vrcp.pop %v239
    %v272 = vrcp.pop %v240
    %v273 = vrcp.pop %v241
    %v274 = vrcp.pop %v242
    %v275 = vrcp.pop %v243
    %v276 = vrcp.pop %v244
    %v277 = vrcp.pop %v245
    %v278 = vrcp.pop %v246
    %v279 = vrcp.pop %v247
    %v280 = vrcp.pop %v248
    %282 = vset.pattern.permute.xlu0 0
    %283 = vperm.xlu0 %282, %v249
    %v284 = vpop.permute.xlu0 %283
    %287 = vset.pattern.permute.xlu0 0
    %288 = vperm.xlu0 %287, %v250
    %v289 = vpop.permute.xlu0 %288
    %292 = vset.pattern.permute.xlu0 0
    %293 = vperm.xlu0 %292, %v251
    %v294 = vpop.permute.xlu0 %293
    %297 = vset.pattern.permute.xlu0 0
    %298 = vperm.xlu0 %297, %v252
    %v299 = vpop.permute.xlu0 %298
    %302 = vset.pattern.permute.xlu0 0
    %303 = vperm.xlu0 %302, %v253
    %v304 = vpop.permute.xlu0 %303
    %307 = vset.pattern.permute.xlu0 0
    %308 = vperm.xlu0 %307, %v254
    %v309 = vpop.permute.xlu0 %308
    %312 = vset.pattern.permute.xlu0 0
    %313 = vperm.xlu0 %312, %v255
    %v314 = vpop.permute.xlu0 %313
    %317 = vset.pattern.permute.xlu0 0
    %318 = vperm.xlu0 %317, %v256
    %v319 = vpop.permute.xlu0 %318
    %322 = vset.pattern.permute.xlu0 0
    %323 = vperm.xlu0 %322, %v257
    %v324 = vpop.permute.xlu0 %323
    %327 = vset.pattern.permute.xlu0 0
    %328 = vperm.xlu0 %327, %v258
    %v329 = vpop.permute.xlu0 %328
    %332 = vset.pattern.permute.xlu0 0
    %333 = vperm.xlu0 %332, %v259
    %v334 = vpop.permute.xlu0 %333
    %337 = vset.pattern.permute.xlu0 0
    %338 = vperm.xlu0 %337, %v260
    %v339 = vpop.permute.xlu0 %338
    %342 = vset.pattern.permute.xlu0 0
    %343 = vperm.xlu0 %342, %v261
    %v344 = vpop.permute.xlu0 %343
    %347 = vset.pattern.permute.xlu0 0
    %348 = vperm.xlu0 %347, %v262
    %v349 = vpop.permute.xlu0 %348
    %352 = vset.pattern.permute.xlu0 0
    %353 = vperm.xlu0 %352, %v263
    %v354 = vpop.permute.xlu0 %353
    %357 = vset.pattern.permute.xlu0 0
    %358 = vperm.xlu0 %357, %v264
    %v359 = vpop.permute.xlu0 %358
    %v361 = vmul.f32 %v284, %v265
    %v362 = vmul.f32 %v289, %v266
    %v363 = vmul.f32 %v294, %v267
    %v364 = vmul.f32 %v299, %v268
    %v365 = vmul.f32 %v304, %v269
    %v366 = vmul.f32 %v309, %v270
    %v367 = vmul.f32 %v314, %v271
    %v368 = vmul.f32 %v319, %v272
    %v369 = vmul.f32 %v324, %v273
    %v370 = vmul.f32 %v329, %v274
    %v371 = vmul.f32 %v334, %v275
    %v372 = vmul.f32 %v339, %v276
    %v373 = vmul.f32 %v344, %v277
    %v374 = vmul.f32 %v349, %v278
    %v375 = vmul.f32 %v354, %v279
    %v376 = vmul.f32 %v359, %v280
    %vm377 = vcmp.gt.f32.partialorder %v233, 0.0
    %vm378 = vcmp.gt.f32.partialorder %v234, 0.0
    %vm379 = vcmp.gt.f32.partialorder %v235, 0.0
    %vm380 = vcmp.gt.f32.partialorder %v236, 0.0
    %vm381 = vcmp.gt.f32.partialorder %v237, 0.0
    %vm382 = vcmp.gt.f32.partialorder %v238, 0.0
    %vm383 = vcmp.gt.f32.partialorder %v239, 0.0
    %vm384 = vcmp.gt.f32.partialorder %v240, 0.0
    %vm385 = vcmp.gt.f32.partialorder %v241, 0.0
    %vm386 = vcmp.gt.f32.partialorder %v242, 0.0
    %vm387 = vcmp.gt.f32.partialorder %v243, 0.0
    %vm388 = vcmp.gt.f32.partialorder %v244, 0.0
    %vm389 = vcmp.gt.f32.partialorder %v245, 0.0
    %vm390 = vcmp.gt.f32.partialorder %v246, 0.0
    %vm391 = vcmp.gt.f32.partialorder %v247, 0.0
    %vm392 = vcmp.gt.f32.partialorder %v248, 0.0
    %v393 = vsel %vm377, %v361, 0.0
    %v394 = vsel %vm378, %v362, 0.0
    %v395 = vsel %vm379, %v363, 0.0
    %v396 = vsel %vm380, %v364, 0.0
    %v397 = vsel %vm381, %v365, 0.0
    %v398 = vsel %vm382, %v366, 0.0
    %v399 = vsel %vm383, %v367, 0.0
    %v400 = vsel %vm384, %v368, 0.0
    %v401 = vsel %vm385, %v369, 0.0
    %v402 = vsel %vm386, %v370, 0.0
    %v403 = vsel %vm387, %v371, 0.0
    %v404 = vsel %vm388, %v372, 0.0
    %v405 = vsel %vm389, %v373, 0.0
    %v406 = vsel %vm390, %v374, 0.0
    %v407 = vsel %vm391, %v375, 0.0
    %v408 = vsel %vm392, %v376, 0.0
    %409 = vst.msk [vmem:[%s4] sm:$0xff] %vm213, %v393
    %410 = vst.msk [vmem:[%s4 + $0x8] sm:$0xff] %vm213, %v394
    %411 = vst.msk [vmem:[%s4 + $0x10] sm:$0xff] %vm213, %v395
    %412 = vst.msk [vmem:[%s4 + $0x18] sm:$0xff] %vm213, %v396
    %413 = vst.msk [vmem:[%s4 + $0x20] sm:$0xff] %vm213, %v397
    %414 = vst.msk [vmem:[%s4 + $0x28] sm:$0xff] %vm213, %v398
    %415 = vst.msk [vmem:[%s4 + $0x30] sm:$0xff] %vm213, %v399
    %416 = vst.msk [vmem:[%s4 + $0x38] sm:$0xff] %vm213, %v400
    %417 = vst.msk [vmem:[%s4 + $0x40] sm:$0xff] %vm213, %v401
    %418 = vst.msk [vmem:[%s4 + $0x48] sm:$0xff] %vm213, %v402
    %419 = vst.msk [vmem:[%s4 + $0x50] sm:$0xff] %vm213, %v403
    %420 = vst.msk [vmem:[%s4 + $0x58] sm:$0xff] %vm213, %v404
    %421 = vst.msk [vmem:[%s4 + $0x60] sm:$0xff] %vm213, %v405
    %422 = vst.msk [vmem:[%s4 + $0x68] sm:$0xff] %vm213, %v406
    %423 = vst.msk [vmem:[%s4 + $0x70] sm:$0xff] %vm213, %v407
    %424 = vst.msk [vmem:[%s4 + $0x78] sm:$0xff] %vm213, %v408
  $region25: #{qagnn_message_passing_forward.16} parent=0 // pred_fallthru
    _
  // Predicated region
  $region26: #{qagnn_message_passing_forward.16} parent=0 // pred_check
    _
  $region27: #{qagnn_message_passing_forward.16} parent=0 // pred_check_branch
    %426 = sbr.rel (0) target = $region29
  $region28: #{qagnn_message_passing_forward.16} parent=0 // pred_region
    _
  $region29: #{qagnn_message_passing_forward.16} parent=0 // pred_fallthru
    _
  // Predicated region
  $region30: #{qagnn_message_passing_forward.16} parent=0 // pred_check
    _
  $region31: #{qagnn_message_passing_forward.16} parent=0 // pred_check_branch
    %428 = sbr.rel (0) target = $region33
  $region32: #{qagnn_message_passing_forward.16} parent=0 // pred_region
    _
  $region33: #{qagnn_message_passing_forward.16} parent=0 // pred_fallthru
    _

// kernel: qagnn_message_passing_forward.17
$region0: #{qagnn_message_passing_forward.17}
  #allocation0 [shape = 'u32[]', space=smem, size = 0x4, offset = 0x4, fixed_abs, tag = 'smem constant byte address 0x4 - core index']
  #allocation1 [shape = 'u32[72,128]{1,0:T(1,128)}', space=vmem, size = 0x9000, scoped, tag = 'internal scratch']
  %s0 = inlined_call_operand.vmem [shape: f32[40,4], index: 0, kind: input, shape index: {}]
  %s1 = inlined_call_operand.vmem [shape: f32[40,4], index: 1, kind: input, shape index: {}]
  %s2 = inlined_call_operand.vmem [shape: f32[1,4], index: 2, kind: input, shape index: {}]
  %s3 = inlined_call_operand.vmem [shape: bf16[40,32], index: 3, kind: input, shape index: {}]
  %s4 = inlined_call_operand.vmem [shape: f32[4,32], index: 4, kind: input, shape index: {}]
  %s5 = inlined_call_operand.vmem [shape: bf16[40,32], index: 5, kind: output, shape index: {}]
  %s6 = sld [smem:[#allocation0]]
  $region30: #{qagnn_message_passing_forward.17} parent=0
    _
  %s8 = ssub.s32 1, %s6
  %s9 = scalar_select 0, %s8, %s6
  // Predicated region
  $region2: #{qagnn_message_passing_forward.17} parent=0 // pred_check
    _
  $region3: #{qagnn_message_passing_forward.17} parent=0 // pred_check_branch
    %11 = sbr.rel (0) target = $region5
  $region4: #{qagnn_message_passing_forward.17} parent=0 // pred_region
    _
  $region5: #{qagnn_message_passing_forward.17} parent=0 // pred_fallthru
    _
  // Predicated region
  $region6: #{qagnn_message_passing_forward.17} parent=0 // pred_check
    _
  $region7: #{qagnn_message_passing_forward.17} parent=0 // pred_check_branch
    %13 = sbr.rel (0) target = $region9
  $region8: #{qagnn_message_passing_forward.17} parent=0 // pred_region
    _
  $region9: #{qagnn_message_passing_forward.17} parent=0 // pred_fallthru
    _
  // Predicated region
  $region10: #{qagnn_message_passing_forward.17} parent=0 // pred_check
    _
  $region11: #{qagnn_message_passing_forward.17} parent=0 // pred_check_branch
    %15 = sbr.rel (0) target = $region13
  $region12: #{qagnn_message_passing_forward.17} parent=0 // pred_region
    _
  $region13: #{qagnn_message_passing_forward.17} parent=0 // pred_fallthru
    _
  // Predicated region
  $region14: #{qagnn_message_passing_forward.17} parent=0 // pred_check
    _
  $region15: #{qagnn_message_passing_forward.17} parent=0 // pred_check_branch
    %17 = sbr.rel (0) target = $region17
  $region16: #{qagnn_message_passing_forward.17} parent=0 // pred_region
    _
  $region17: #{qagnn_message_passing_forward.17} parent=0 // pred_fallthru
    _
  // Predicated region
  $region18: #{qagnn_message_passing_forward.17} parent=0 // pred_check
    _
  $region19: #{qagnn_message_passing_forward.17} parent=0 // pred_check_branch
    %19 = sbr.rel (0) target = $region21
  $region20: #{qagnn_message_passing_forward.17} parent=0 // pred_region
    _
  $region21: #{qagnn_message_passing_forward.17} parent=0 // pred_fallthru
    _
  %v20 = vld [vmem:[%s0] sm:$0xff]
  %v21 = vld [vmem:[%s0 + $0x8] sm:$0xff]
  %v22 = vld [vmem:[%s0 + $0x10] sm:$0xff]
  %v23 = vld [vmem:[%s0 + $0x18] sm:$0xff]
  %v24 = vld [vmem:[%s0 + $0x20] sm:$0xff]
  %v25 = vld [vmem:[%s2] sm:$0x1]
  %v27 = vperm.slane %v25, 0
  %v29 = vsub.f32 %v20, %v27
  %v30 = vsub.f32 %v21, %v27
  %v31 = vsub.f32 %v22, %v27
  %v32 = vsub.f32 %v23, %v27
  %v33 = vsub.f32 %v24, %v27
  %v34 = vmul.f32 %v29, 1.442695
  %v35 = vpow.pop %v34
  %v36 = vmul.f32 %v30, 1.442695
  %v37 = vpow.pop %v36
  %v38 = vmul.f32 %v31, 1.442695
  %v39 = vpow.pop %v38
  %v40 = vmul.f32 %v32, 1.442695
  %v41 = vpow.pop %v40
  %v42 = vmul.f32 %v33, 1.442695
  %v43 = vpow.pop %v42
  %v44 = vld [vmem:[%s1] sm:$0xff]
  %v45 = vld [vmem:[%s1 + $0x8] sm:$0xff]
  %v46 = vld [vmem:[%s1 + $0x10] sm:$0xff]
  %v47 = vld [vmem:[%s1 + $0x18] sm:$0xff]
  %v48 = vld [vmem:[%s1 + $0x20] sm:$0xff]
  %v49 = vmul.f32 %v35, %v44
  %v50 = vmul.f32 %v37, %v45
  %v51 = vmul.f32 %v39, %v46
  %v52 = vmul.f32 %v41, %v47
  %v53 = vmul.f32 %v43, %v48
  %v54 = vld [vmem:[%s4] sm:$0xf]
  %vm55 = vcmask 31744
  %v57 = vsel %vm55, %v49, 0
  %v60 = vsel %vm55, %v50, 0
  %v63 = vsel %vm55, %v51, 0
  %v66 = vsel %vm55, %v52, 0
  %v69 = vsel %vm55, %v53, 0
  %vm71 = vcmask 1043456
  %v73 = vsel %vm71, %v54, 0
  %75 = vmatpush.msra.mxu0 0.0
  %76 = vmatpush.msra.mxu0 0.0
  %77 = vmatpush.msra.mxu0 0.0
  %78 = vmatpush.msra.mxu0 0.0
  %79 = vmatpush.msra.mxu0 0.0
  %80 = vmatpush.msra.mxu0 0.0
  %81 = vmatpush.msra.mxu0 0.0
  %82 = vmatpush.msra.mxu0 0.0
  %83 = vmatpush.msra.mxu0 0.0
  %84 = vmatpush.msra.mxu0 0.0
  %85 = vmatpush.msra.mxu0 0.0
  %86 = vmatpush.msra.mxu0 0.0
  %87 = vmatpush.msra.mxu0 0.0
  %88 = vmatpush.msra.mxu0 0.0
  %89 = vmatpush.msra.mxu0 0.0
  %90 = vmatpush.msra.mxu0 %v73
  %91 = vmatmul.f32.gmra.mxu0 %v57
  %v92 = vpop.f32.mrf.mxu0
  %v93 = vadd.f32 0.0, %v92
  %94 = vmatmul.f32.gmra.mxu0 %v60
  %v95 = vpop.f32.mrf.mxu0
  %v96 = vadd.f32 0.0, %v95
  %97 = vmatmul.f32.gmra.mxu0 %v63
  %v98 = vpop.f32.mrf.mxu0
  %v99 = vadd.f32 0.0, %v98
  %100 = vmatmul.f32.gmra.mxu0 %v66
  %v101 = vpop.f32.mrf.mxu0
  %v102 = vadd.f32 0.0, %v101
  %103 = vmatmul.f32.gmra.mxu0 %v69
  %v104 = vpop.f32.mrf.mxu0
  %v105 = vadd.f32 0.0, %v104
  %106 = vdwg.mxu0
  %v107 = vld [vmem:[%s3] sm:$0xf]
  %v108 = vld [vmem:[%s3 + $0x4] sm:$0xf]
  %v109 = vld [vmem:[%s3 + $0x8] sm:$0xf]
  %v110 = vld [vmem:[%s3 + $0xc] sm:$0xf]
  %v111 = vld [vmem:[%s3 + $0x10] sm:$0xf]
  %v112 = vunpack.c.l.bf16 %v107
  %v113 = vunpack.c.l.bf16 %v108
  %v114 = vunpack.c.l.bf16 %v109
  %v115 = vunpack.c.l.bf16 %v110
  %v116 = vunpack.c.l.bf16 %v111
  %v117 = vmul.f32 %v112, %v93
  %v118 = vmul.f32 %v113, %v96
  %v119 = vmul.f32 %v114, %v99
  %v120 = vmul.f32 %v115, %v102
  %v121 = vmul.f32 %v116, %v105
  %v122 = vpack.c.bf16 %v117, %v117
  %v123 = vpack.c.bf16 %v118, %v118
  %v124 = vpack.c.bf16 %v119, %v119
  %v125 = vpack.c.bf16 %v120, %v120
  %v126 = vpack.c.bf16 %v121, %v121
  %vm127 = vcmask 257024
  %128 = vst.msk [vmem:[%s5] sm:$0xf] %vm127, %v122
  %129 = vst.msk [vmem:[%s5 + $0x4] sm:$0xf] %vm127, %v123
  %130 = vst.msk [vmem:[%s5 + $0x8] sm:$0xf] %vm127, %v124
  %131 = vst.msk [vmem:[%s5 + $0xc] sm:$0xf] %vm127, %v125
  %132 = vst.msk [vmem:[%s5 + $0x10] sm:$0xf] %vm127, %v126
  // Predicated region
  $region22: #{qagnn_message_passing_forward.17} parent=0 // pred_check
    _
  $region23: #{qagnn_message_passing_forward.17} parent=0 // pred_check_branch
    %134 = sbr.rel (0) target = $region25
  $region24: #{qagnn_message_passing_forward.17} parent=0 // pred_region
    _
  $region25: #{qagnn_message_passing_forward.17} parent=0 // pred_fallthru
    _
  // Predicated region
  $region26: #{qagnn_message_passing_forward.17} parent=0 // pred_check
    _
  $region27: #{qagnn_message_passing_forward.17} parent=0 // pred_check_branch
    %136 = sbr.rel (0) target = $region29
  $region28: #{qagnn_message_passing_forward.17} parent=0 // pred_region
    _
  $region29: #{qagnn_message_passing_forward.17} parent=0 // pred_fallthru
    _

// kernel: qagnn_message_passing_forward.18
$region0: #{qagnn_message_passing_forward.18}
  #allocation0 [shape = 'u32[]', space=smem, size = 0x4, offset = 0x4, fixed_abs, tag = 'smem constant byte address 0x4 - core index']
  #allocation1 [shape = 'u32[72,128]{1,0:T(1,128)}', space=vmem, size = 0x9000, scoped, tag = 'internal scratch']
  %s0 = inlined_call_operand.vmem [shape: bf16[40,32], index: 0, kind: input, shape index: {}]
  %s1 = inlined_call_operand.vmem [shape: bf16[40,128], index: 1, kind: input, shape index: {}]
  %s2 = inlined_call_operand.vmem [shape: f32[128,32], index: 2, kind: output, shape index: {}]
  %s3 = sld [smem:[#allocation0]]
  $region22: #{qagnn_message_passing_forward.18} parent=0
    _
  %s5 = ssub.s32 1, %s3
  %s6 = scalar_select 0, %s5, %s3
  // Predicated region
  $region2: #{qagnn_message_passing_forward.18} parent=0 // pred_check
    _
  $region3: #{qagnn_message_passing_forward.18} parent=0 // pred_check_branch
    %8 = sbr.rel (0) target = $region5
  $region4: #{qagnn_message_passing_forward.18} parent=0 // pred_region
    _
  $region5: #{qagnn_message_passing_forward.18} parent=0 // pred_fallthru
    _
  // Predicated region
  $region6: #{qagnn_message_passing_forward.18} parent=0 // pred_check
    _
  $region7: #{qagnn_message_passing_forward.18} parent=0 // pred_check_branch
    %10 = sbr.rel (0) target = $region9
  $region8: #{qagnn_message_passing_forward.18} parent=0 // pred_region
    _
  $region9: #{qagnn_message_passing_forward.18} parent=0 // pred_fallthru
    _
  %p12 = scmp.eq.s32.totalorder 0, 0
  // Predicated region
  $region10: #{qagnn_message_passing_forward.18} parent=0 // pred_check
    %p13 = pneg %p12
  $region11: #{qagnn_message_passing_forward.18} parent=0 // pred_check_branch
    %15 = sbr.rel (%p13) target = $region13
  $region12: #{qagnn_message_passing_forward.18} parent=0 // pred_region
    %vm16 = vcmask 261120
    %17 = vst.msk [vmem:[%s2] sm:$0xff] %vm16, 0.0
    %18 = vst.msk [vmem:[%s2 + $0x8] sm:$0xff] %vm16, 0.0
    %19 = vst.msk [vmem:[%s2 + $0x10] sm:$0xff] %vm16, 0.0
    %20 = vst.msk [vmem:[%s2 + $0x18] sm:$0xff] %vm16, 0.0
    %21 = vst.msk [vmem:[%s2 + $0x20] sm:$0xff] %vm16, 0.0
    %22 = vst.msk [vmem:[%s2 + $0x28] sm:$0xff] %vm16, 0.0
    %23 = vst.msk [vmem:[%s2 + $0x30] sm:$0xff] %vm16, 0.0
    %24 = vst.msk [vmem:[%s2 + $0x38] sm:$0xff] %vm16, 0.0
    %25 = vst.msk [vmem:[%s2 + $0x40] sm:$0xff] %vm16, 0.0
    %26 = vst.msk [vmem:[%s2 + $0x48] sm:$0xff] %vm16, 0.0
    %27 = vst.msk [vmem:[%s2 + $0x50] sm:$0xff] %vm16, 0.0
    %28 = vst.msk [vmem:[%s2 + $0x58] sm:$0xff] %vm16, 0.0
    %29 = vst.msk [vmem:[%s2 + $0x60] sm:$0xff] %vm16, 0.0
    %30 = vst.msk [vmem:[%s2 + $0x68] sm:$0xff] %vm16, 0.0
    %31 = vst.msk [vmem:[%s2 + $0x70] sm:$0xff] %vm16, 0.0
    %32 = vst.msk [vmem:[%s2 + $0x78] sm:$0xff] %vm16, 0.0
  $region13: #{qagnn_message_passing_forward.18} parent=0 // pred_fallthru
    _
  %v33 = vld [vmem:[%s2] sm:$0xff]
  %v34 = vld [vmem:[%s2 + $0x8] sm:$0xff]
  %v35 = vld [vmem:[%s2 + $0x10] sm:$0xff]
  %v36 = vld [vmem:[%s2 + $0x18] sm:$0xff]
  %v37 = vld [vmem:[%s2 + $0x20] sm:$0xff]
  %v38 = vld [vmem:[%s2 + $0x28] sm:$0xff]
  %v39 = vld [vmem:[%s2 + $0x30] sm:$0xff]
  %v40 = vld [vmem:[%s2 + $0x38] sm:$0xff]
  %v41 = vld [vmem:[%s2 + $0x40] sm:$0xff]
  %v42 = vld [vmem:[%s2 + $0x48] sm:$0xff]
  %v43 = vld [vmem:[%s2 + $0x50] sm:$0xff]
  %v44 = vld [vmem:[%s2 + $0x58] sm:$0xff]
  %v45 = vld [vmem:[%s2 + $0x60] sm:$0xff]
  %v46 = vld [vmem:[%s2 + $0x68] sm:$0xff]
  %v47 = vld [vmem:[%s2 + $0x70] sm:$0xff]
  %v48 = vld [vmem:[%s2 + $0x78] sm:$0xff]
  %v49 = vld [vmem:[%s1] sm:$0xf]
  %v50 = vld [vmem:[%s1 + $0x4] sm:$0xf]
  %v51 = vld [vmem:[%s1 + $0x8] sm:$0xf]
  %v52 = vld [vmem:[%s1 + $0xc] sm:$0xf]
  %v53 = vld [vmem:[%s1 + $0x10] sm:$0xf]
  %v54 = vld [vmem:[%s0] sm:$0xf]
  %v55 = vld [vmem:[%s0 + $0x4] sm:$0xf]
  %v56 = vld [vmem:[%s0 + $0x8] sm:$0xf]
  %v57 = vld [vmem:[%s0 + $0xc] sm:$0xf]
  %v58 = vld [vmem:[%s0 + $0x10] sm:$0xf]
  %v64 = vunpack.c.l.b16 %v49
  %v65 = vunpack.c.l.b16 %v50
  %v66 = vunpack.c.l.b16 %v51
  %v67 = vunpack.c.l.b16 %v52
  %v68 = vunpack.c.l.b16 %v53
  %v69 = vpack.c.b16 %v65, %v64
  %v70 = vpack.c.b16 %v67, %v66
  %v71 = vpack.c.b16 %v68, %v68
  %75 = vxpose.xlu0.c.b16.start [1/8] %v69, 128
  %76 = vxpose.xlu0.c.b16.cont [2/8] %v70, 128
  %77 = vxpose.xlu0.c.b16.cont [3/8] %v71, 128
  %78 = vxpose.xlu0.c.b16.cont [4/8] 0, 128
  %79 = vxpose.xlu0.c.b16.cont [5/8] 0, 128
  %80 = vxpose.xlu0.c.b16.cont [6/8] 0, 128
  %81 = vxpose.xlu0.c.b16.cont [7/8] 0, 128
  %82 = vxpose.xlu0.c.b16.end [8/8] 0, 128
  %v83 = vpop.trf.xlu0
  %v84 = vpop.trf.xlu0
  %v85 = vpop.trf.xlu0
  %v86 = vpop.trf.xlu0
  %v87 = vpop.trf.xlu0
  %v88 = vpop.trf.xlu0
  %v89 = vpop.trf.xlu0
  %v90 = vpop.trf.xlu0
  %v96 = vunpack.c.l.b16 %v54
  %v97 = vunpack.c.l.b16 %v55
  %v98 = vunpack.c.l.b16 %v56
  %v99 = vunpack.c.l.b16 %v57
  %v100 = vunpack.c.l.b16 %v58
  %v101 = vpack.c.b16 %v97, %v96
  %v102 = vpack.c.b16 %v99, %v98
  %v103 = vpack.c.b16 %v100, %v100
  %vm106 = vcmask 326656
  %v108 = vsel %vm106, %v83, 0
  %v111 = vsel %vm106, %v84, 0
  %v114 = vsel %vm106, %v85, 0
  %v117 = vsel %vm106, %v86, 0
  %v120 = vsel %vm106, %v87, 0
  %v123 = vsel %vm106, %v88, 0
  %v126 = vsel %vm106, %v89, 0
  %v129 = vsel %vm106, %v90, 0
  %vm131 = vcmask 1043456
  %v133 = vsel %vm131, %v103, 0
  %135 = vmatpush.bf16.msra.mxu0 0
  %136 = vmatpush.bf16.msra.mxu0 0
  %137 = vmatpush.bf16.msra.mxu0 0
  %138 = vmatpush.bf16.msra.mxu0 0
  %139 = vmatpush.bf16.msra.mxu0 0
  %140 = vmatpush.bf16.msra.mxu0 %v133
  %141 = vmatpush.bf16.msra.mxu0 %v102
  %142 = vmatpush.bf16.msra.mxu0 %v101
  %143 = vmatmul.bf16.gmra.mxu0 %v108
  %v144 = vpop.f32.mrf.mxu0
  %v145 = vadd.f32 0.0, %v144
  %v146 = vpop.f32.mrf.mxu0
  %v147 = vadd.f32 0.0, %v146
  %148 = vmatmul.bf16.gmra.mxu0 %v111
  %v149 = vpop.f32.mrf.mxu0
  %v150 = vadd.f32 0.0, %v149
  %v151 = vpop.f32.mrf.mxu0
  %v152 = vadd.f32 0.0, %v151
  %153 = vmatmul.bf16.gmra.mxu0 %v114
  %v154 = vpop.f32.mrf.mxu0
  %v155 = vadd.f32 0.0, %v154
  %v156 = vpop.f32.mrf.mxu0
  %v157 = vadd.f32 0.0, %v156
  %158 = vmatmul.bf16.gmra.mxu0 %v117
  %v159 = vpop.f32.mrf.mxu0
  %v160 = vadd.f32 0.0, %v159
  %v161 = vpop.f32.mrf.mxu0
  %v162 = vadd.f32 0.0, %v161
  %163 = vmatmul.bf16.gmra.mxu0 %v120
  %v164 = vpop.f32.mrf.mxu0
  %v165 = vadd.f32 0.0, %v164
  %v166 = vpop.f32.mrf.mxu0
  %v167 = vadd.f32 0.0, %v166
  %168 = vmatmul.bf16.gmra.mxu0 %v123
  %v169 = vpop.f32.mrf.mxu0
  %v170 = vadd.f32 0.0, %v169
  %v171 = vpop.f32.mrf.mxu0
  %v172 = vadd.f32 0.0, %v171
  %173 = vmatmul.bf16.gmra.mxu0 %v126
  %v174 = vpop.f32.mrf.mxu0
  %v175 = vadd.f32 0.0, %v174
  %v176 = vpop.f32.mrf.mxu0
  %v177 = vadd.f32 0.0, %v176
  %178 = vmatmul.bf16.gmra.mxu0 %v129
  %v179 = vpop.f32.mrf.mxu0
  %v180 = vadd.f32 0.0, %v179
  %v181 = vpop.f32.mrf.mxu0
  %v182 = vadd.f32 0.0, %v181
  %183 = vdwg.mxu0
  %v184 = vadd.f32 %v33, %v145
  %v185 = vadd.f32 %v34, %v147
  %v186 = vadd.f32 %v35, %v150
  %v187 = vadd.f32 %v36, %v152
  %v188 = vadd.f32 %v37, %v155
  %v189 = vadd.f32 %v38, %v157
  %v190 = vadd.f32 %v39, %v160
  %v191 = vadd.f32 %v40, %v162
  %v192 = vadd.f32 %v41, %v165
  %v193 = vadd.f32 %v42, %v167
  %v194 = vadd.f32 %v43, %v170
  %v195 = vadd.f32 %v44, %v172
  %v196 = vadd.f32 %v45, %v175
  %v197 = vadd.f32 %v46, %v177
  %v198 = vadd.f32 %v47, %v180
  %v199 = vadd.f32 %v48, %v182
  %vm200 = vcmask 261120
  %201 = vst.msk [vmem:[%s2] sm:$0xff] %vm200, %v184
  %202 = vst.msk [vmem:[%s2 + $0x8] sm:$0xff] %vm200, %v185
  %203 = vst.msk [vmem:[%s2 + $0x10] sm:$0xff] %vm200, %v186
  %204 = vst.msk [vmem:[%s2 + $0x18] sm:$0xff] %vm200, %v187
  %205 = vst.msk [vmem:[%s2 + $0x20] sm:$0xff] %vm200, %v188
  %206 = vst.msk [vmem:[%s2 + $0x28] sm:$0xff] %vm200, %v189
  %207 = vst.msk [vmem:[%s2 + $0x30] sm:$0xff] %vm200, %v190
  %208 = vst.msk [vmem:[%s2 + $0x38] sm:$0xff] %vm200, %v191
  %209 = vst.msk [vmem:[%s2 + $0x40] sm:$0xff] %vm200, %v192
  %210 = vst.msk [vmem:[%s2 + $0x48] sm:$0xff] %vm200, %v193
  %211 = vst.msk [vmem:[%s2 + $0x50] sm:$0xff] %vm200, %v194
  %212 = vst.msk [vmem:[%s2 + $0x58] sm:$0xff] %vm200, %v195
  %213 = vst.msk [vmem:[%s2 + $0x60] sm:$0xff] %vm200, %v196
  %214 = vst.msk [vmem:[%s2 + $0x68] sm:$0xff] %vm200, %v197
  %215 = vst.msk [vmem:[%s2 + $0x70] sm:$0xff] %vm200, %v198
  %216 = vst.msk [vmem:[%s2 + $0x78] sm:$0xff] %vm200, %v199
  // Predicated region
  $region14: #{qagnn_message_passing_forward.18} parent=0 // pred_check
    _
  $region15: #{qagnn_message_passing_forward.18} parent=0 // pred_check_branch
    %218 = sbr.rel (0) target = $region17
  $region16: #{qagnn_message_passing_forward.18} parent=0 // pred_region
    _
  $region17: #{qagnn_message_passing_forward.18} parent=0 // pred_fallthru
    _
  // Predicated region
  $region18: #{qagnn_message_passing_forward.18} parent=0 // pred_check
    _
  $region19: #{qagnn_message_passing_forward.18} parent=0 // pred_check_branch
    %220 = sbr.rel (0) target = $region21
  $region20: #{qagnn_message_passing_forward.18} parent=0 // pred_region
    _
  $region21: #{qagnn_message_passing_forward.18} parent=0 // pred_fallthru
    _

// kernel: qagnn_message_passing_forward.19
$region0: #{qagnn_message_passing_forward.19}
  #allocation0 [shape = 'u32[]', space=smem, size = 0x4, offset = 0x4, fixed_abs, tag = 'smem constant byte address 0x4 - core index']
  #allocation1 [shape = 'u32[72,128]{1,0:T(1,128)}', space=vmem, size = 0x9000, scoped, tag = 'internal scratch']
  %s0 = inlined_call_operand.vmem [shape: f32[128,32], index: 0, kind: input, shape index: {}]
  %s1 = inlined_call_operand.vmem [shape: bf16[32,32], index: 1, kind: input, shape index: {}]
  %s2 = inlined_call_operand.vmem [shape: f32[1,32], index: 2, kind: input, shape index: {}]
  %s3 = inlined_call_operand.vmem [shape: f32[1,32], index: 3, kind: input, shape index: {}]
  %s4 = inlined_call_operand.vmem [shape: f32[1,32], index: 4, kind: input, shape index: {}]
  %s5 = inlined_call_operand.vmem [shape: bf16[32,32], index: 5, kind: input, shape index: {}]
  %s6 = inlined_call_operand.vmem [shape: f32[1,32], index: 6, kind: input, shape index: {}]
  %s7 = inlined_call_operand.vmem [shape: bf16[128,32], index: 7, kind: output, shape index: {}]
  %s8 = sld [smem:[#allocation0]]
  $region38: #{qagnn_message_passing_forward.19} parent=0
    _
  %s10 = ssub.s32 1, %s8
  %s11 = scalar_select 0, %s10, %s8
  // Predicated region
  $region2: #{qagnn_message_passing_forward.19} parent=0 // pred_check
    _
  $region3: #{qagnn_message_passing_forward.19} parent=0 // pred_check_branch
    %13 = sbr.rel (0) target = $region5
  $region4: #{qagnn_message_passing_forward.19} parent=0 // pred_region
    _
  $region5: #{qagnn_message_passing_forward.19} parent=0 // pred_fallthru
    _
  // Predicated region
  $region6: #{qagnn_message_passing_forward.19} parent=0 // pred_check
    _
  $region7: #{qagnn_message_passing_forward.19} parent=0 // pred_check_branch
    %15 = sbr.rel (0) target = $region9
  $region8: #{qagnn_message_passing_forward.19} parent=0 // pred_region
    _
  $region9: #{qagnn_message_passing_forward.19} parent=0 // pred_fallthru
    _
  // Predicated region
  $region10: #{qagnn_message_passing_forward.19} parent=0 // pred_check
    _
  $region11: #{qagnn_message_passing_forward.19} parent=0 // pred_check_branch
    %17 = sbr.rel (0) target = $region13
  $region12: #{qagnn_message_passing_forward.19} parent=0 // pred_region
    _
  $region13: #{qagnn_message_passing_forward.19} parent=0 // pred_fallthru
    _
  // Predicated region
  $region14: #{qagnn_message_passing_forward.19} parent=0 // pred_check
    _
  $region15: #{qagnn_message_passing_forward.19} parent=0 // pred_check_branch
    %19 = sbr.rel (0) target = $region17
  $region16: #{qagnn_message_passing_forward.19} parent=0 // pred_region
    _
  $region17: #{qagnn_message_passing_forward.19} parent=0 // pred_fallthru
    _
  // Predicated region
  $region18: #{qagnn_message_passing_forward.19} parent=0 // pred_check
    _
  $region19: #{qagnn_message_passing_forward.19} parent=0 // pred_check_branch
    %21 = sbr.rel (0) target = $region21
  $region20: #{qagnn_message_passing_forward.19} parent=0 // pred_region
    _
  $region21: #{qagnn_message_passing_forward.19} parent=0 // pred_fallthru
    _
  // Predicated region
  $region22: #{qagnn_message_passing_forward.19} parent=0 // pred_check
    _
  $region23: #{qagnn_message_passing_forward.19} parent=0 // pred_check_branch
    %23 = sbr.rel (0) target = $region25
  $region24: #{qagnn_message_passing_forward.19} parent=0 // pred_region
    _
  $region25: #{qagnn_message_passing_forward.19} parent=0 // pred_fallthru
    _
  // Predicated region
  $region26: #{qagnn_message_passing_forward.19} parent=0 // pred_check
    _
  $region27: #{qagnn_message_passing_forward.19} parent=0 // pred_check_branch
    %25 = sbr.rel (0) target = $region29
  $region28: #{qagnn_message_passing_forward.19} parent=0 // pred_region
    _
  $region29: #{qagnn_message_passing_forward.19} parent=0 // pred_fallthru
    _
  %v27 = vld [vmem:[%s0] sm:$0xff]
  %v28 = vld [vmem:[%s0 + $0x8] sm:$0xff]
  %v29 = vld [vmem:[%s0 + $0x10] sm:$0xff]
  %v30 = vld [vmem:[%s0 + $0x18] sm:$0xff]
  %v31 = vld [vmem:[%s0 + $0x20] sm:$0xff]
  %v32 = vld [vmem:[%s0 + $0x28] sm:$0xff]
  %v33 = vld [vmem:[%s0 + $0x30] sm:$0xff]
  %v34 = vld [vmem:[%s0 + $0x38] sm:$0xff]
  %v35 = vld [vmem:[%s0 + $0x40] sm:$0xff]
  %v36 = vld [vmem:[%s0 + $0x48] sm:$0xff]
  %v37 = vld [vmem:[%s0 + $0x50] sm:$0xff]
  %v38 = vld [vmem:[%s0 + $0x58] sm:$0xff]
  %v39 = vld [vmem:[%s0 + $0x60] sm:$0xff]
  %v40 = vld [vmem:[%s0 + $0x68] sm:$0xff]
  %v41 = vld [vmem:[%s0 + $0x70] sm:$0xff]
  %v42 = vld [vmem:[%s0 + $0x78] sm:$0xff]
  %v43 = vpack.c.bf16 %v28, %v27
  %v44 = vpack.c.bf16 %v30, %v29
  %v45 = vpack.c.bf16 %v32, %v31
  %v46 = vpack.c.bf16 %v34, %v33
  %v47 = vpack.c.bf16 %v36, %v35
  %v48 = vpack.c.bf16 %v38, %v37
  %v49 = vpack.c.bf16 %v40, %v39
  %v50 = vpack.c.bf16 %v42, %v41
  %v51 = vld [vmem:[%s1] sm:$0xf]
  %v52 = vld [vmem:[%s1 + $0x4] sm:$0xf]
  %v53 = vld [vmem:[%s1 + $0x8] sm:$0xf]
  %v54 = vld [vmem:[%s1 + $0xc] sm:$0xf]
  %v55 = vld [vmem:[%s2] sm:$0x1]
  %v57 = vperm.slane %v55, 0
  %v63 = vunpack.c.l.b16 %v51
  %v64 = vunpack.c.l.b16 %v52
  %v65 = vunpack.c.l.b16 %v53
  %v66 = vunpack.c.l.b16 %v54
  %v67 = vpack.c.b16 %v64, %v63
  %v68 = vpack.c.b16 %v66, %v65
  %vm71 = vcmask 261120
  %v73 = vsel %vm71, %v43, 0
  %v76 = vsel %vm71, %v44, 0
  %v79 = vsel %vm71, %v45, 0
  %v82 = vsel %vm71, %v46, 0
  %v85 = vsel %vm71, %v47, 0
  %v88 = vsel %vm71, %v48, 0
  %v91 = vsel %vm71, %v49, 0
  %v94 = vsel %vm71, %v50, 0
  %96 = vmatpush.bf16.msra.mxu0 0
  %97 = vmatpush.bf16.msra.mxu0 0
  %98 = vmatpush.bf16.msra.mxu0 0
  %99 = vmatpush.bf16.msra.mxu0 0
  %100 = vmatpush.bf16.msra.mxu0 0
  %101 = vmatpush.bf16.msra.mxu0 0
  %102 = vmatpush.bf16.msra.mxu0 %v68
  %103 = vmatpush.bf16.msra.mxu0 %v67
  %104 = vmatmul.bf16.gmra.mxu0 %v73
  %v105 = vpop.f32.mrf.mxu0
  %v106 = vadd.f32 %v57, %v105
  %v107 = vpop.f32.mrf.mxu0
  %v108 = vadd.f32 %v57, %v107
  %109 = vmatmul.bf16.gmra.mxu0 %v76
  %v110 = vpop.f32.mrf.mxu0
  %v111 = vadd.f32 %v57, %v110
  %v112 = vpop.f32.mrf.mxu0
  %v113 = vadd.f32 %v57, %v112
  %114 = vmatmul.bf16.gmra.mxu0 %v79
  %v115 = vpop.f32.mrf.mxu0
  %v116 = vadd.f32 %v57, %v115
  %v117 = vpop.f32.mrf.mxu0
  %v118 = vadd.f32 %v57, %v117
  %119 = vmatmul.bf16.gmra.mxu0 %v82
  %v120 = vpop.f32.mrf.mxu0
  %v121 = vadd.f32 %v57, %v120
  %v122 = vpop.f32.mrf.mxu0
  %v123 = vadd.f32 %v57, %v122
  %124 = vmatmul.bf16.gmra.mxu0 %v85
  %v125 = vpop.f32.mrf.mxu0
  %v126 = vadd.f32 %v57, %v125
  %v127 = vpop.f32.mrf.mxu0
  %v128 = vadd.f32 %v57, %v127
  %129 = vmatmul.bf16.gmra.mxu0 %v88
  %v130 = vpop.f32.mrf.mxu0
  %v131 = vadd.f32 %v57, %v130
  %v132 = vpop.f32.mrf.mxu0
  %v133 = vadd.f32 %v57, %v132
  %134 = vmatmul.bf16.gmra.mxu0 %v91
  %v135 = vpop.f32.mrf.mxu0
  %v136 = vadd.f32 %v57, %v135
  %v137 = vpop.f32.mrf.mxu0
  %v138 = vadd.f32 %v57, %v137
  %139 = vmatmul.bf16.gmra.mxu0 %v94
  %v140 = vpop.f32.mrf.mxu0
  %v141 = vadd.f32 %v57, %v140
  %v142 = vpop.f32.mrf.mxu0
  %v143 = vadd.f32 %v57, %v142
  %144 = vdwg.mxu0
  %v145 = vld [vmem:[%s3] sm:$0x1]
  %v147 = vperm.slane %v145, 0
  %v149 = vmul.f32 %v106, %v147
  %v150 = vmul.f32 %v108, %v147
  %v151 = vmul.f32 %v111, %v147
  %v152 = vmul.f32 %v113, %v147
  %v153 = vmul.f32 %v116, %v147
  %v154 = vmul.f32 %v118, %v147
  %v155 = vmul.f32 %v121, %v147
  %v156 = vmul.f32 %v123, %v147
  %v157 = vmul.f32 %v126, %v147
  %v158 = vmul.f32 %v128, %v147
  %v159 = vmul.f32 %v131, %v147
  %v160 = vmul.f32 %v133, %v147
  %v161 = vmul.f32 %v136, %v147
  %v162 = vmul.f32 %v138, %v147
  %v163 = vmul.f32 %v141, %v147
  %v164 = vmul.f32 %v143, %v147
  %v165 = vld [vmem:[%s4] sm:$0x1]
  %v167 = vperm.slane %v165, 0
  %v169 = vadd.f32 %v149, %v167
  %v170 = vadd.f32 %v150, %v167
  %v171 = vadd.f32 %v151, %v167
  %v172 = vadd.f32 %v152, %v167
  %v173 = vadd.f32 %v153, %v167
  %v174 = vadd.f32 %v154, %v167
  %v175 = vadd.f32 %v155, %v167
  %v176 = vadd.f32 %v156, %v167
  %v177 = vadd.f32 %v157, %v167
  %v178 = vadd.f32 %v158, %v167
  %v179 = vadd.f32 %v159, %v167
  %v180 = vadd.f32 %v160, %v167
  %v181 = vadd.f32 %v161, %v167
  %v182 = vadd.f32 %v162, %v167
  %v183 = vadd.f32 %v163, %v167
  %v184 = vadd.f32 %v164, %v167
  %v185 = vmax.f32 %v169, 0.0
  %v186 = vmax.f32 %v170, 0.0
  %v187 = vmax.f32 %v171, 0.0
  %v188 = vmax.f32 %v172, 0.0
  %v189 = vmax.f32 %v173, 0.0
  %v190 = vmax.f32 %v174, 0.0
  %v191 = vmax.f32 %v175, 0.0
  %v192 = vmax.f32 %v176, 0.0
  %v193 = vmax.f32 %v177, 0.0
  %v194 = vmax.f32 %v178, 0.0
  %v195 = vmax.f32 %v179, 0.0
  %v196 = vmax.f32 %v180, 0.0
  %v197 = vmax.f32 %v181, 0.0
  %v198 = vmax.f32 %v182, 0.0
  %v199 = vmax.f32 %v183, 0.0
  %v200 = vmax.f32 %v184, 0.0
  %v201 = vpack.c.bf16 %v186, %v185
  %v202 = vpack.c.bf16 %v188, %v187
  %v203 = vpack.c.bf16 %v190, %v189
  %v204 = vpack.c.bf16 %v192, %v191
  %v205 = vpack.c.bf16 %v194, %v193
  %v206 = vpack.c.bf16 %v196, %v195
  %v207 = vpack.c.bf16 %v198, %v197
  %v208 = vpack.c.bf16 %v200, %v199
  %v209 = vld [vmem:[%s5] sm:$0xf]
  %v210 = vld [vmem:[%s5 + $0x4] sm:$0xf]
  %v211 = vld [vmem:[%s5 + $0x8] sm:$0xf]
  %v212 = vld [vmem:[%s5 + $0xc] sm:$0xf]
  %v213 = vld [vmem:[%s6] sm:$0x1]
  %v215 = vperm.slane %v213, 0
  %v221 = vunpack.c.l.b16 %v209
  %v222 = vunpack.c.l.b16 %v210
  %v223 = vunpack.c.l.b16 %v211
  %v224 = vunpack.c.l.b16 %v212
  %v225 = vpack.c.b16 %v222, %v221
  %v226 = vpack.c.b16 %v224, %v223
  %v230 = vsel %vm71, %v201, 0
  %v233 = vsel %vm71, %v202, 0
  %v236 = vsel %vm71, %v203, 0
  %v239 = vsel %vm71, %v204, 0
  %v242 = vsel %vm71, %v205, 0
  %v245 = vsel %vm71, %v206, 0
  %v248 = vsel %vm71, %v207, 0
  %v251 = vsel %vm71, %v208, 0
  %253 = vmatpush.bf16.msra.mxu0 0
  %254 = vmatpush.bf16.msra.mxu0 0
  %255 = vmatpush.bf16.msra.mxu0 0
  %256 = vmatpush.bf16.msra.mxu0 0
  %257 = vmatpush.bf16.msra.mxu0 0
  %258 = vmatpush.bf16.msra.mxu0 0
  %259 = vmatpush.bf16.msra.mxu0 %v226
  %260 = vmatpush.bf16.msra.mxu0 %v225
  %261 = vmatmul.bf16.gmra.mxu0 %v230
  %v262 = vpop.f32.mrf.mxu0
  %v263 = vadd.f32 %v215, %v262
  %v264 = vpop.f32.mrf.mxu0
  %v265 = vadd.f32 %v215, %v264
  %266 = vmatmul.bf16.gmra.mxu0 %v233
  %v267 = vpop.f32.mrf.mxu0
  %v268 = vadd.f32 %v215, %v267
  %v269 = vpop.f32.mrf.mxu0
  %v270 = vadd.f32 %v215, %v269
  %271 = vmatmul.bf16.gmra.mxu0 %v236
  %v272 = vpop.f32.mrf.mxu0
  %v273 = vadd.f32 %v215, %v272
  %v274 = vpop.f32.mrf.mxu0
  %v275 = vadd.f32 %v215, %v274
  %276 = vmatmul.bf16.gmra.mxu0 %v239
  %v277 = vpop.f32.mrf.mxu0
  %v278 = vadd.f32 %v215, %v277
  %v279 = vpop.f32.mrf.mxu0
  %v280 = vadd.f32 %v215, %v279
  %281 = vmatmul.bf16.gmra.mxu0 %v242
  %v282 = vpop.f32.mrf.mxu0
  %v283 = vadd.f32 %v215, %v282
  %v284 = vpop.f32.mrf.mxu0
  %v285 = vadd.f32 %v215, %v284
  %286 = vmatmul.bf16.gmra.mxu0 %v245
  %v287 = vpop.f32.mrf.mxu0
  %v288 = vadd.f32 %v215, %v287
  %v289 = vpop.f32.mrf.mxu0
  %v290 = vadd.f32 %v215, %v289
  %291 = vmatmul.bf16.gmra.mxu0 %v248
  %v292 = vpop.f32.mrf.mxu0
  %v293 = vadd.f32 %v215, %v292
  %v294 = vpop.f32.mrf.mxu0
  %v295 = vadd.f32 %v215, %v294
  %296 = vmatmul.bf16.gmra.mxu0 %v251
  %v297 = vpop.f32.mrf.mxu0
  %v298 = vadd.f32 %v215, %v297
  %v299 = vpop.f32.mrf.mxu0
  %v300 = vadd.f32 %v215, %v299
  %301 = vdwg.mxu0
  %v302 = vmul.f32 %v263, 0.5
  %v303 = vmul.f32 %v265, 0.5
  %v304 = vmul.f32 %v268, 0.5
  %v305 = vmul.f32 %v270, 0.5
  %v306 = vmul.f32 %v273, 0.5
  %v307 = vmul.f32 %v275, 0.5
  %v308 = vmul.f32 %v278, 0.5
  %v309 = vmul.f32 %v280, 0.5
  %v310 = vmul.f32 %v283, 0.5
  %v311 = vmul.f32 %v285, 0.5
  %v312 = vmul.f32 %v288, 0.5
  %v313 = vmul.f32 %v290, 0.5
  %v314 = vmul.f32 %v293, 0.5
  %v315 = vmul.f32 %v295, 0.5
  %v316 = vmul.f32 %v298, 0.5
  %v317 = vmul.f32 %v300, 0.5
  %v318 = vmul.f32 %v263, 0.044715
  %v319 = vmul.f32 %v265, 0.044715
  %v320 = vmul.f32 %v268, 0.044715
  %v321 = vmul.f32 %v270, 0.044715
  %v322 = vmul.f32 %v273, 0.044715
  %v323 = vmul.f32 %v275, 0.044715
  %v324 = vmul.f32 %v278, 0.044715
  %v325 = vmul.f32 %v280, 0.044715
  %v326 = vmul.f32 %v283, 0.044715
  %v327 = vmul.f32 %v285, 0.044715
  %v328 = vmul.f32 %v288, 0.044715
  %v329 = vmul.f32 %v290, 0.044715
  %v330 = vmul.f32 %v293, 0.044715
  %v331 = vmul.f32 %v295, 0.044715
  %v332 = vmul.f32 %v298, 0.044715
  %v333 = vmul.f32 %v300, 0.044715
  %v334 = vmul.f32 %v318, %v263
  %v335 = vmul.f32 %v319, %v265
  %v336 = vmul.f32 %v320, %v268
  %v337 = vmul.f32 %v321, %v270
  %v338 = vmul.f32 %v322, %v273
  %v339 = vmul.f32 %v323, %v275
  %v340 = vmul.f32 %v324, %v278
  %v341 = vmul.f32 %v325, %v280
  %v342 = vmul.f32 %v326, %v283
  %v343 = vmul.f32 %v327, %v285
  %v344 = vmul.f32 %v328, %v288
  %v345 = vmul.f32 %v329, %v290
  %v346 = vmul.f32 %v330, %v293
  %v347 = vmul.f32 %v331, %v295
  %v348 = vmul.f32 %v332, %v298
  %v349 = vmul.f32 %v333, %v300
  %v350 = vmul.f32 %v334, %v263
  %v351 = vmul.f32 %v335, %v265
  %v352 = vmul.f32 %v336, %v268
  %v353 = vmul.f32 %v337, %v270
  %v354 = vmul.f32 %v338, %v273
  %v355 = vmul.f32 %v339, %v275
  %v356 = vmul.f32 %v340, %v278
  %v357 = vmul.f32 %v341, %v280
  %v358 = vmul.f32 %v342, %v283
  %v359 = vmul.f32 %v343, %v285
  %v360 = vmul.f32 %v344, %v288
  %v361 = vmul.f32 %v345, %v290
  %v362 = vmul.f32 %v346, %v293
  %v363 = vmul.f32 %v347, %v295
  %v364 = vmul.f32 %v348, %v298
  %v365 = vmul.f32 %v349, %v300
  %v366 = vadd.f32 %v263, %v350
  %v367 = vadd.f32 %v265, %v351
  %v368 = vadd.f32 %v268, %v352
  %v369 = vadd.f32 %v270, %v353
  %v370 = vadd.f32 %v273, %v354
  %v371 = vadd.f32 %v275, %v355
  %v372 = vadd.f32 %v278, %v356
  %v373 = vadd.f32 %v280, %v357
  %v374 = vadd.f32 %v283, %v358
  %v375 = vadd.f32 %v285, %v359
  %v376 = vadd.f32 %v288, %v360
  %v377 = vadd.f32 %v290, %v361
  %v378 = vadd.f32 %v293, %v362
  %v379 = vadd.f32 %v295, %v363
  %v380 = vadd.f32 %v298, %v364
  %v381 = vadd.f32 %v300, %v365
  %v382 = vmul.f32 %v366, 0.7978846
  %v383 = vmul.f32 %v367, 0.7978846
  %v384 = vmul.f32 %v368, 0.7978846
  %v385 = vmul.f32 %v369, 0.7978846
  %v386 = vmul.f32 %v370, 0.7978846
  %v387 = vmul.f32 %v371, 0.7978846
  %v388 = vmul.f32 %v372, 0.7978846
  %v389 = vmul.f32 %v373, 0.7978846
  %v390 = vmul.f32 %v374, 0.7978846
  %v391 = vmul.f32 %v375, 0.7978846
  %v392 = vmul.f32 %v376, 0.7978846
  %v393 = vmul.f32 %v377, 0.7978846
  %v394 = vmul.f32 %v378, 0.7978846
  %v395 = vmul.f32 %v379, 0.7978846
  %v396 = vmul.f32 %v380, 0.7978846
  %v397 = vmul.f32 %v381, 0.7978846
  %v398 = vtanh.pop %v382
  %v399 = vtanh.pop %v383
  %v400 = vtanh.pop %v384
  %v401 = vtanh.pop %v385
  %v402 = vtanh.pop %v386
  %v403 = vtanh.pop %v387
  %v404 = vtanh.pop %v388
  %v405 = vtanh.pop %v389
  %v406 = vtanh.pop %v390
  %v407 = vtanh.pop %v391
  %v408 = vtanh.pop %v392
  %v409 = vtanh.pop %v393
  %v410 = vtanh.pop %v394
  %v411 = vtanh.pop %v395
  %v412 = vtanh.pop %v396
  %v413 = vtanh.pop %v397
  %v414 = vadd.f32 %v398, 1.0
  %v415 = vadd.f32 %v399, 1.0
  %v416 = vadd.f32 %v400, 1.0
  %v417 = vadd.f32 %v401, 1.0
  %v418 = vadd.f32 %v402, 1.0
  %v419 = vadd.f32 %v403, 1.0
  %v420 = vadd.f32 %v404, 1.0
  %v421 = vadd.f32 %v405, 1.0
  %v422 = vadd.f32 %v406, 1.0
  %v423 = vadd.f32 %v407, 1.0
  %v424 = vadd.f32 %v408, 1.0
  %v425 = vadd.f32 %v409, 1.0
  %v426 = vadd.f32 %v410, 1.0
  %v427 = vadd.f32 %v411, 1.0
  %v428 = vadd.f32 %v412, 1.0
  %v429 = vadd.f32 %v413, 1.0
  %v430 = vmul.f32 %v302, %v414
  %v431 = vmul.f32 %v303, %v415
  %v432 = vmul.f32 %v304, %v416
  %v433 = vmul.f32 %v305, %v417
  %v434 = vmul.f32 %v306, %v418
  %v435 = vmul.f32 %v307, %v419
  %v436 = vmul.f32 %v308, %v420
  %v437 = vmul.f32 %v309, %v421
  %v438 = vmul.f32 %v310, %v422
  %v439 = vmul.f32 %v311, %v423
  %v440 = vmul.f32 %v312, %v424
  %v441 = vmul.f32 %v313, %v425
  %v442 = vmul.f32 %v314, %v426
  %v443 = vmul.f32 %v315, %v427
  %v444 = vmul.f32 %v316, %v428
  %v445 = vmul.f32 %v317, %v429
  %v446 = vpack.c.bf16 %v430, %v430
  %v447 = vpack.c.bf16 %v431, %v431
  %v448 = vpack.c.bf16 %v432, %v432
  %v449 = vpack.c.bf16 %v433, %v433
  %v450 = vpack.c.bf16 %v434, %v434
  %v451 = vpack.c.bf16 %v435, %v435
  %v452 = vpack.c.bf16 %v436, %v436
  %v453 = vpack.c.bf16 %v437, %v437
  %v454 = vpack.c.bf16 %v438, %v438
  %v455 = vpack.c.bf16 %v439, %v439
  %v456 = vpack.c.bf16 %v440, %v440
  %v457 = vpack.c.bf16 %v441, %v441
  %v458 = vpack.c.bf16 %v442, %v442
  %v459 = vpack.c.bf16 %v443, %v443
  %v460 = vpack.c.bf16 %v444, %v444
  %v461 = vpack.c.bf16 %v445, %v445
  %vm462 = vcmask 257024
  %463 = vst.msk [vmem:[%s7] sm:$0xf] %vm462, %v446
  %464 = vst.msk [vmem:[%s7 + $0x4] sm:$0xf] %vm462, %v447
  %465 = vst.msk [vmem:[%s7 + $0x8] sm:$0xf] %vm462, %v448
  %466 = vst.msk [vmem:[%s7 + $0xc] sm:$0xf] %vm462, %v449
  %467 = vst.msk [vmem:[%s7 + $0x10] sm:$0xf] %vm462, %v450
  %468 = vst.msk [vmem:[%s7 + $0x14] sm:$0xf] %vm462, %v451
  %469 = vst.msk [vmem:[%s7 + $0x18] sm:$0xf] %vm462, %v452
  %470 = vst.msk [vmem:[%s7 + $0x1c] sm:$0xf] %vm462, %v453
  %471 = vst.msk [vmem:[%s7 + $0x20] sm:$0xf] %vm462, %v454
  %472 = vst.msk [vmem:[%s7 + $0x24] sm:$0xf] %vm462, %v455
  %473 = vst.msk [vmem:[%s7 + $0x28] sm:$0xf] %vm462, %v456
  %474 = vst.msk [vmem:[%s7 + $0x2c] sm:$0xf] %vm462, %v457
  %475 = vst.msk [vmem:[%s7 + $0x30] sm:$0xf] %vm462, %v458
  %476 = vst.msk [vmem:[%s7 + $0x34] sm:$0xf] %vm462, %v459
  %477 = vst.msk [vmem:[%s7 + $0x38] sm:$0xf] %vm462, %v460
  %478 = vst.msk [vmem:[%s7 + $0x3c] sm:$0xf] %vm462, %v461
  // Predicated region
  $region30: #{qagnn_message_passing_forward.19} parent=0 // pred_check
    _
  $region31: #{qagnn_message_passing_forward.19} parent=0 // pred_check_branch
    %480 = sbr.rel (0) target = $region33
  $region32: #{qagnn_message_passing_forward.19} parent=0 // pred_region
    _
  $region33: #{qagnn_message_passing_forward.19} parent=0 // pred_fallthru
    _
  // Predicated region
  $region34: #{qagnn_message_passing_forward.19} parent=0 // pred_check
    _
  $region35: #{qagnn_message_passing_forward.19} parent=0 // pred_check_branch
    %482 = sbr.rel (0) target = $region37
  $region36: #{qagnn_message_passing_forward.19} parent=0 // pred_region
    _
  $region37: #{qagnn_message_passing_forward.19} parent=0 // pred_fallthru
    _

// kernel: qagnn_message_passing_forward.25
$region0: #{qagnn_message_passing_forward.25}
  #allocation0 [shape = 'u32[]', space=smem, size = 0x4, offset = 0x4, fixed_abs, tag = 'smem constant byte address 0x4 - core index']
  #allocation1 [shape = 'u32[72,128]{1,0:T(1,128)}', space=vmem, size = 0x9000, scoped, tag = 'internal scratch']
  %s0 = inlined_call_operand.vmem [shape: bf16[128,32], index: 0, kind: input, shape index: {}]
  %s1 = inlined_call_operand.vmem [shape: bf16[128,32], index: 1, kind: input, shape index: {}]
  %s2 = inlined_call_operand.vmem [shape: bf16[32,32], index: 2, kind: input, shape index: {}]
  %s3 = inlined_call_operand.vmem [shape: f32[1,32], index: 3, kind: input, shape index: {}]
  %s4 = inlined_call_operand.vmem [shape: bf16[32,32], index: 4, kind: input, shape index: {}]
  %s5 = inlined_call_operand.vmem [shape: f32[1,32], index: 5, kind: input, shape index: {}]
  %s6 = inlined_call_operand.vmem [shape: f32[128,32], index: 6, kind: output, shape index: {}]
  %s7 = sld [smem:[#allocation0]]
  $region34: #{qagnn_message_passing_forward.25} parent=0
    _
  %s9 = ssub.s32 1, %s7
  %s10 = scalar_select 0, %s9, %s7
  // Predicated region
  $region2: #{qagnn_message_passing_forward.25} parent=0 // pred_check
    _
  $region3: #{qagnn_message_passing_forward.25} parent=0 // pred_check_branch
    %12 = sbr.rel (0) target = $region5
  $region4: #{qagnn_message_passing_forward.25} parent=0 // pred_region
    _
  $region5: #{qagnn_message_passing_forward.25} parent=0 // pred_fallthru
    _
  // Predicated region
  $region6: #{qagnn_message_passing_forward.25} parent=0 // pred_check
    _
  $region7: #{qagnn_message_passing_forward.25} parent=0 // pred_check_branch
    %14 = sbr.rel (0) target = $region9
  $region8: #{qagnn_message_passing_forward.25} parent=0 // pred_region
    _
  $region9: #{qagnn_message_passing_forward.25} parent=0 // pred_fallthru
    _
  // Predicated region
  $region10: #{qagnn_message_passing_forward.25} parent=0 // pred_check
    _
  $region11: #{qagnn_message_passing_forward.25} parent=0 // pred_check_branch
    %16 = sbr.rel (0) target = $region13
  $region12: #{qagnn_message_passing_forward.25} parent=0 // pred_region
    _
  $region13: #{qagnn_message_passing_forward.25} parent=0 // pred_fallthru
    _
  // Predicated region
  $region14: #{qagnn_message_passing_forward.25} parent=0 // pred_check
    _
  $region15: #{qagnn_message_passing_forward.25} parent=0 // pred_check_branch
    %18 = sbr.rel (0) target = $region17
  $region16: #{qagnn_message_passing_forward.25} parent=0 // pred_region
    _
  $region17: #{qagnn_message_passing_forward.25} parent=0 // pred_fallthru
    _
  // Predicated region
  $region18: #{qagnn_message_passing_forward.25} parent=0 // pred_check
    _
  $region19: #{qagnn_message_passing_forward.25} parent=0 // pred_check_branch
    %20 = sbr.rel (0) target = $region21
  $region20: #{qagnn_message_passing_forward.25} parent=0 // pred_region
    _
  $region21: #{qagnn_message_passing_forward.25} parent=0 // pred_fallthru
    _
  // Predicated region
  $region22: #{qagnn_message_passing_forward.25} parent=0 // pred_check
    _
  $region23: #{qagnn_message_passing_forward.25} parent=0 // pred_check_branch
    %22 = sbr.rel (0) target = $region25
  $region24: #{qagnn_message_passing_forward.25} parent=0 // pred_region
    _
  $region25: #{qagnn_message_passing_forward.25} parent=0 // pred_fallthru
    _
  %v24 = vld [vmem:[%s0] sm:$0xf]
  %v25 = vld [vmem:[%s0 + $0x4] sm:$0xf]
  %v26 = vld [vmem:[%s0 + $0x8] sm:$0xf]
  %v27 = vld [vmem:[%s0 + $0xc] sm:$0xf]
  %v28 = vld [vmem:[%s0 + $0x10] sm:$0xf]
  %v29 = vld [vmem:[%s0 + $0x14] sm:$0xf]
  %v30 = vld [vmem:[%s0 + $0x18] sm:$0xf]
  %v31 = vld [vmem:[%s0 + $0x1c] sm:$0xf]
  %v32 = vld [vmem:[%s0 + $0x20] sm:$0xf]
  %v33 = vld [vmem:[%s0 + $0x24] sm:$0xf]
  %v34 = vld [vmem:[%s0 + $0x28] sm:$0xf]
  %v35 = vld [vmem:[%s0 + $0x2c] sm:$0xf]
  %v36 = vld [vmem:[%s0 + $0x30] sm:$0xf]
  %v37 = vld [vmem:[%s0 + $0x34] sm:$0xf]
  %v38 = vld [vmem:[%s0 + $0x38] sm:$0xf]
  %v39 = vld [vmem:[%s0 + $0x3c] sm:$0xf]
  %v40 = vld [vmem:[%s2] sm:$0xf]
  %v41 = vld [vmem:[%s2 + $0x4] sm:$0xf]
  %v42 = vld [vmem:[%s2 + $0x8] sm:$0xf]
  %v43 = vld [vmem:[%s2 + $0xc] sm:$0xf]
  %v44 = vld [vmem:[%s3] sm:$0x1]
  %v46 = vperm.slane %v44, 0
  %v64 = vunpack.c.l.b16 %v24
  %v65 = vunpack.c.l.b16 %v25
  %v66 = vunpack.c.l.b16 %v26
  %v67 = vunpack.c.l.b16 %v27
  %v68 = vunpack.c.l.b16 %v28
  %v69 = vunpack.c.l.b16 %v29
  %v70 = vunpack.c.l.b16 %v30
  %v71 = vunpack.c.l.b16 %v31
  %v72 = vunpack.c.l.b16 %v32
  %v73 = vunpack.c.l.b16 %v33
  %v74 = vunpack.c.l.b16 %v34
  %v75 = vunpack.c.l.b16 %v35
  %v76 = vunpack.c.l.b16 %v36
  %v77 = vunpack.c.l.b16 %v37
  %v78 = vunpack.c.l.b16 %v38
  %v79 = vunpack.c.l.b16 %v39
  %v80 = vpack.c.b16 %v65, %v64
  %v81 = vpack.c.b16 %v67, %v66
  %v82 = vpack.c.b16 %v69, %v68
  %v83 = vpack.c.b16 %v71, %v70
  %v84 = vpack.c.b16 %v73, %v72
  %v85 = vpack.c.b16 %v75, %v74
  %v86 = vpack.c.b16 %v77, %v76
  %v87 = vpack.c.b16 %v79, %v78
  %v92 = vunpack.c.l.b16 %v40
  %v93 = vunpack.c.l.b16 %v41
  %v94 = vunpack.c.l.b16 %v42
  %v95 = vunpack.c.l.b16 %v43
  %v96 = vpack.c.b16 %v93, %v92
  %v97 = vpack.c.b16 %v95, %v94
  %vm100 = vcmask 261120
  %v102 = vsel %vm100, %v80, 0
  %v105 = vsel %vm100, %v81, 0
  %v108 = vsel %vm100, %v82, 0
  %v111 = vsel %vm100, %v83, 0
  %v114 = vsel %vm100, %v84, 0
  %v117 = vsel %vm100, %v85, 0
  %v120 = vsel %vm100, %v86, 0
  %v123 = vsel %vm100, %v87, 0
  %125 = vmatpush.bf16.msra.mxu0 0
  %126 = vmatpush.bf16.msra.mxu0 0
  %127 = vmatpush.bf16.msra.mxu0 0
  %128 = vmatpush.bf16.msra.mxu0 0
  %129 = vmatpush.bf16.msra.mxu0 0
  %130 = vmatpush.bf16.msra.mxu0 0
  %131 = vmatpush.bf16.msra.mxu0 %v97
  %132 = vmatpush.bf16.msra.mxu0 %v96
  %133 = vmatmul.bf16.gmra.mxu0 %v102
  %v134 = vpop.f32.mrf.mxu0
  %v135 = vadd.f32 %v46, %v134
  %v136 = vpop.f32.mrf.mxu0
  %v137 = vadd.f32 %v46, %v136
  %138 = vmatmul.bf16.gmra.mxu0 %v105
  %v139 = vpop.f32.mrf.mxu0
  %v140 = vadd.f32 %v46, %v139
  %v141 = vpop.f32.mrf.mxu0
  %v142 = vadd.f32 %v46, %v141
  %143 = vmatmul.bf16.gmra.mxu0 %v108
  %v144 = vpop.f32.mrf.mxu0
  %v145 = vadd.f32 %v46, %v144
  %v146 = vpop.f32.mrf.mxu0
  %v147 = vadd.f32 %v46, %v146
  %148 = vmatmul.bf16.gmra.mxu0 %v111
  %v149 = vpop.f32.mrf.mxu0
  %v150 = vadd.f32 %v46, %v149
  %v151 = vpop.f32.mrf.mxu0
  %v152 = vadd.f32 %v46, %v151
  %153 = vmatmul.bf16.gmra.mxu0 %v114
  %v154 = vpop.f32.mrf.mxu0
  %v155 = vadd.f32 %v46, %v154
  %v156 = vpop.f32.mrf.mxu0
  %v157 = vadd.f32 %v46, %v156
  %158 = vmatmul.bf16.gmra.mxu0 %v117
  %v159 = vpop.f32.mrf.mxu0
  %v160 = vadd.f32 %v46, %v159
  %v161 = vpop.f32.mrf.mxu0
  %v162 = vadd.f32 %v46, %v161
  %163 = vmatmul.bf16.gmra.mxu0 %v120
  %v164 = vpop.f32.mrf.mxu0
  %v165 = vadd.f32 %v46, %v164
  %v166 = vpop.f32.mrf.mxu0
  %v167 = vadd.f32 %v46, %v166
  %168 = vmatmul.bf16.gmra.mxu0 %v123
  %v169 = vpop.f32.mrf.mxu0
  %v170 = vadd.f32 %v46, %v169
  %v171 = vpop.f32.mrf.mxu0
  %v172 = vadd.f32 %v46, %v171
  %173 = vdwg.mxu0
  %v174 = vld [vmem:[%s1] sm:$0xf]
  %v175 = vld [vmem:[%s1 + $0x4] sm:$0xf]
  %v176 = vld [vmem:[%s1 + $0x8] sm:$0xf]
  %v177 = vld [vmem:[%s1 + $0xc] sm:$0xf]
  %v178 = vld [vmem:[%s1 + $0x10] sm:$0xf]
  %v179 = vld [vmem:[%s1 + $0x14] sm:$0xf]
  %v180 = vld [vmem:[%s1 + $0x18] sm:$0xf]
  %v181 = vld [vmem:[%s1 + $0x1c] sm:$0xf]
  %v182 = vld [vmem:[%s1 + $0x20] sm:$0xf]
  %v183 = vld [vmem:[%s1 + $0x24] sm:$0xf]
  %v184 = vld [vmem:[%s1 + $0x28] sm:$0xf]
  %v185 = vld [vmem:[%s1 + $0x2c] sm:$0xf]
  %v186 = vld [vmem:[%s1 + $0x30] sm:$0xf]
  %v187 = vld [vmem:[%s1 + $0x34] sm:$0xf]
  %v188 = vld [vmem:[%s1 + $0x38] sm:$0xf]
  %v189 = vld [vmem:[%s1 + $0x3c] sm:$0xf]
  %v190 = vld [vmem:[%s4] sm:$0xf]
  %v191 = vld [vmem:[%s4 + $0x4] sm:$0xf]
  %v192 = vld [vmem:[%s4 + $0x8] sm:$0xf]
  %v193 = vld [vmem:[%s4 + $0xc] sm:$0xf]
  %v210 = vunpack.c.l.b16 %v174
  %v211 = vunpack.c.l.b16 %v175
  %v212 = vunpack.c.l.b16 %v176
  %v213 = vunpack.c.l.b16 %v177
  %v214 = vunpack.c.l.b16 %v178
  %v215 = vunpack.c.l.b16 %v179
  %v216 = vunpack.c.l.b16 %v180
  %v217 = vunpack.c.l.b16 %v181
  %v218 = vunpack.c.l.b16 %v182
  %v219 = vunpack.c.l.b16 %v183
  %v220 = vunpack.c.l.b16 %v184
  %v221 = vunpack.c.l.b16 %v185
  %v222 = vunpack.c.l.b16 %v186
  %v223 = vunpack.c.l.b16 %v187
  %v224 = vunpack.c.l.b16 %v188
  %v225 = vunpack.c.l.b16 %v189
  %v226 = vpack.c.b16 %v211, %v210
  %v227 = vpack.c.b16 %v213, %v212
  %v228 = vpack.c.b16 %v215, %v214
  %v229 = vpack.c.b16 %v217, %v216
  %v230 = vpack.c.b16 %v219, %v218
  %v231 = vpack.c.b16 %v221, %v220
  %v232 = vpack.c.b16 %v223, %v222
  %v233 = vpack.c.b16 %v225, %v224
  %v238 = vunpack.c.l.b16 %v190
  %v239 = vunpack.c.l.b16 %v191
  %v240 = vunpack.c.l.b16 %v192
  %v241 = vunpack.c.l.b16 %v193
  %v242 = vpack.c.b16 %v239, %v238
  %v243 = vpack.c.b16 %v241, %v240
  %v247 = vsel %vm100, %v226, 0
  %v250 = vsel %vm100, %v227, 0
  %v253 = vsel %vm100, %v228, 0
  %v256 = vsel %vm100, %v229, 0
  %v259 = vsel %vm100, %v230, 0
  %v262 = vsel %vm100, %v231, 0
  %v265 = vsel %vm100, %v232, 0
  %v268 = vsel %vm100, %v233, 0
  %270 = vmatpush.bf16.msra.mxu0 0
  %271 = vmatpush.bf16.msra.mxu0 0
  %272 = vmatpush.bf16.msra.mxu0 0
  %273 = vmatpush.bf16.msra.mxu0 0
  %274 = vmatpush.bf16.msra.mxu0 0
  %275 = vmatpush.bf16.msra.mxu0 0
  %276 = vmatpush.bf16.msra.mxu0 %v243
  %277 = vmatpush.bf16.msra.mxu0 %v242
  %278 = vmatmul.bf16.gmra.mxu0 %v247
  %v279 = vpop.f32.mrf.mxu0
  %v280 = vadd.f32 0.0, %v279
  %v281 = vpop.f32.mrf.mxu0
  %v282 = vadd.f32 0.0, %v281
  %283 = vmatmul.bf16.gmra.mxu0 %v250
  %v284 = vpop.f32.mrf.mxu0
  %v285 = vadd.f32 0.0, %v284
  %v286 = vpop.f32.mrf.mxu0
  %v287 = vadd.f32 0.0, %v286
  %288 = vmatmul.bf16.gmra.mxu0 %v253
  %v289 = vpop.f32.mrf.mxu0
  %v290 = vadd.f32 0.0, %v289
  %v291 = vpop.f32.mrf.mxu0
  %v292 = vadd.f32 0.0, %v291
  %293 = vmatmul.bf16.gmra.mxu0 %v256
  %v294 = vpop.f32.mrf.mxu0
  %v295 = vadd.f32 0.0, %v294
  %v296 = vpop.f32.mrf.mxu0
  %v297 = vadd.f32 0.0, %v296
  %298 = vmatmul.bf16.gmra.mxu0 %v259
  %v299 = vpop.f32.mrf.mxu0
  %v300 = vadd.f32 0.0, %v299
  %v301 = vpop.f32.mrf.mxu0
  %v302 = vadd.f32 0.0, %v301
  %303 = vmatmul.bf16.gmra.mxu0 %v262
  %v304 = vpop.f32.mrf.mxu0
  %v305 = vadd.f32 0.0, %v304
  %v306 = vpop.f32.mrf.mxu0
  %v307 = vadd.f32 0.0, %v306
  %308 = vmatmul.bf16.gmra.mxu0 %v265
  %v309 = vpop.f32.mrf.mxu0
  %v310 = vadd.f32 0.0, %v309
  %v311 = vpop.f32.mrf.mxu0
  %v312 = vadd.f32 0.0, %v311
  %313 = vmatmul.bf16.gmra.mxu0 %v268
  %v314 = vpop.f32.mrf.mxu0
  %v315 = vadd.f32 0.0, %v314
  %v316 = vpop.f32.mrf.mxu0
  %v317 = vadd.f32 0.0, %v316
  %318 = vdwg.mxu0
  %v319 = vadd.f32 %v135, %v280
  %v320 = vadd.f32 %v137, %v282
  %v321 = vadd.f32 %v140, %v285
  %v322 = vadd.f32 %v142, %v287
  %v323 = vadd.f32 %v145, %v290
  %v324 = vadd.f32 %v147, %v292
  %v325 = vadd.f32 %v150, %v295
  %v326 = vadd.f32 %v152, %v297
  %v327 = vadd.f32 %v155, %v300
  %v328 = vadd.f32 %v157, %v302
  %v329 = vadd.f32 %v160, %v305
  %v330 = vadd.f32 %v162, %v307
  %v331 = vadd.f32 %v165, %v310
  %v332 = vadd.f32 %v167, %v312
  %v333 = vadd.f32 %v170, %v315
  %v334 = vadd.f32 %v172, %v317
  %v335 = vld [vmem:[%s5] sm:$0x1]
  %v337 = vperm.slane %v335, 0
  %v339 = vadd.f32 %v319, %v337
  %v340 = vadd.f32 %v320, %v337
  %v341 = vadd.f32 %v321, %v337
  %v342 = vadd.f32 %v322, %v337
  %v343 = vadd.f32 %v323, %v337
  %v344 = vadd.f32 %v324, %v337
  %v345 = vadd.f32 %v325, %v337
  %v346 = vadd.f32 %v326, %v337
  %v347 = vadd.f32 %v327, %v337
  %v348 = vadd.f32 %v328, %v337
  %v349 = vadd.f32 %v329, %v337
  %v350 = vadd.f32 %v330, %v337
  %v351 = vadd.f32 %v331, %v337
  %v352 = vadd.f32 %v332, %v337
  %v353 = vadd.f32 %v333, %v337
  %v354 = vadd.f32 %v334, %v337
  %v355 = vmul.f32 %v339, 0.5
  %v356 = vmul.f32 %v340, 0.5
  %v357 = vmul.f32 %v341, 0.5
  %v358 = vmul.f32 %v342, 0.5
  %v359 = vmul.f32 %v343, 0.5
  %v360 = vmul.f32 %v344, 0.5
  %v361 = vmul.f32 %v345, 0.5
  %v362 = vmul.f32 %v346, 0.5
  %v363 = vmul.f32 %v347, 0.5
  %v364 = vmul.f32 %v348, 0.5
  %v365 = vmul.f32 %v349, 0.5
  %v366 = vmul.f32 %v350, 0.5
  %v367 = vmul.f32 %v351, 0.5
  %v368 = vmul.f32 %v352, 0.5
  %v369 = vmul.f32 %v353, 0.5
  %v370 = vmul.f32 %v354, 0.5
  %v371 = vmul.f32 %v339, 0.044715
  %v372 = vmul.f32 %v340, 0.044715
  %v373 = vmul.f32 %v341, 0.044715
  %v374 = vmul.f32 %v342, 0.044715
  %v375 = vmul.f32 %v343, 0.044715
  %v376 = vmul.f32 %v344, 0.044715
  %v377 = vmul.f32 %v345, 0.044715
  %v378 = vmul.f32 %v346, 0.044715
  %v379 = vmul.f32 %v347, 0.044715
  %v380 = vmul.f32 %v348, 0.044715
  %v381 = vmul.f32 %v349, 0.044715
  %v382 = vmul.f32 %v350, 0.044715
  %v383 = vmul.f32 %v351, 0.044715
  %v384 = vmul.f32 %v352, 0.044715
  %v385 = vmul.f32 %v353, 0.044715
  %v386 = vmul.f32 %v354, 0.044715
  %v387 = vmul.f32 %v371, %v339
  %v388 = vmul.f32 %v372, %v340
  %v389 = vmul.f32 %v373, %v341
  %v390 = vmul.f32 %v374, %v342
  %v391 = vmul.f32 %v375, %v343
  %v392 = vmul.f32 %v376, %v344
  %v393 = vmul.f32 %v377, %v345
  %v394 = vmul.f32 %v378, %v346
  %v395 = vmul.f32 %v379, %v347
  %v396 = vmul.f32 %v380, %v348
  %v397 = vmul.f32 %v381, %v349
  %v398 = vmul.f32 %v382, %v350
  %v399 = vmul.f32 %v383, %v351
  %v400 = vmul.f32 %v384, %v352
  %v401 = vmul.f32 %v385, %v353
  %v402 = vmul.f32 %v386, %v354
  %v403 = vmul.f32 %v387, %v339
  %v404 = vmul.f32 %v388, %v340
  %v405 = vmul.f32 %v389, %v341
  %v406 = vmul.f32 %v390, %v342
  %v407 = vmul.f32 %v391, %v343
  %v408 = vmul.f32 %v392, %v344
  %v409 = vmul.f32 %v393, %v345
  %v410 = vmul.f32 %v394, %v346
  %v411 = vmul.f32 %v395, %v347
  %v412 = vmul.f32 %v396, %v348
  %v413 = vmul.f32 %v397, %v349
  %v414 = vmul.f32 %v398, %v350
  %v415 = vmul.f32 %v399, %v351
  %v416 = vmul.f32 %v400, %v352
  %v417 = vmul.f32 %v401, %v353
  %v418 = vmul.f32 %v402, %v354
  %v419 = vadd.f32 %v339, %v403
  %v420 = vadd.f32 %v340, %v404
  %v421 = vadd.f32 %v341, %v405
  %v422 = vadd.f32 %v342, %v406
  %v423 = vadd.f32 %v343, %v407
  %v424 = vadd.f32 %v344, %v408
  %v425 = vadd.f32 %v345, %v409
  %v426 = vadd.f32 %v346, %v410
  %v427 = vadd.f32 %v347, %v411
  %v428 = vadd.f32 %v348, %v412
  %v429 = vadd.f32 %v349, %v413
  %v430 = vadd.f32 %v350, %v414
  %v431 = vadd.f32 %v351, %v415
  %v432 = vadd.f32 %v352, %v416
  %v433 = vadd.f32 %v353, %v417
  %v434 = vadd.f32 %v354, %v418
  %v435 = vmul.f32 %v419, 0.7978846
  %v436 = vmul.f32 %v420, 0.7978846
  %v437 = vmul.f32 %v421, 0.7978846
  %v438 = vmul.f32 %v422, 0.7978846
  %v439 = vmul.f32 %v423, 0.7978846
  %v440 = vmul.f32 %v424, 0.7978846
  %v441 = vmul.f32 %v425, 0.7978846
  %v442 = vmul.f32 %v426, 0.7978846
  %v443 = vmul.f32 %v427, 0.7978846
  %v444 = vmul.f32 %v428, 0.7978846
  %v445 = vmul.f32 %v429, 0.7978846
  %v446 = vmul.f32 %v430, 0.7978846
  %v447 = vmul.f32 %v431, 0.7978846
  %v448 = vmul.f32 %v432, 0.7978846
  %v449 = vmul.f32 %v433, 0.7978846
  %v450 = vmul.f32 %v434, 0.7978846
  %v451 = vtanh.pop %v435
  %v452 = vtanh.pop %v436
  %v453 = vtanh.pop %v437
  %v454 = vtanh.pop %v438
  %v455 = vtanh.pop %v439
  %v456 = vtanh.pop %v440
  %v457 = vtanh.pop %v441
  %v458 = vtanh.pop %v442
  %v459 = vtanh.pop %v443
  %v460 = vtanh.pop %v444
  %v461 = vtanh.pop %v445
  %v462 = vtanh.pop %v446
  %v463 = vtanh.pop %v447
  %v464 = vtanh.pop %v448
  %v465 = vtanh.pop %v449
  %v466 = vtanh.pop %v450
  %v467 = vadd.f32 %v451, 1.0
  %v468 = vadd.f32 %v452, 1.0
  %v469 = vadd.f32 %v453, 1.0
  %v470 = vadd.f32 %v454, 1.0
  %v471 = vadd.f32 %v455, 1.0
  %v472 = vadd.f32 %v456, 1.0
  %v473 = vadd.f32 %v457, 1.0
  %v474 = vadd.f32 %v458, 1.0
  %v475 = vadd.f32 %v459, 1.0
  %v476 = vadd.f32 %v460, 1.0
  %v477 = vadd.f32 %v461, 1.0
  %v478 = vadd.f32 %v462, 1.0
  %v479 = vadd.f32 %v463, 1.0
  %v480 = vadd.f32 %v464, 1.0
  %v481 = vadd.f32 %v465, 1.0
  %v482 = vadd.f32 %v466, 1.0
  %v483 = vmul.f32 %v355, %v467
  %v484 = vmul.f32 %v356, %v468
  %v485 = vmul.f32 %v357, %v469
  %v486 = vmul.f32 %v358, %v470
  %v487 = vmul.f32 %v359, %v471
  %v488 = vmul.f32 %v360, %v472
  %v489 = vmul.f32 %v361, %v473
  %v490 = vmul.f32 %v362, %v474
  %v491 = vmul.f32 %v363, %v475
  %v492 = vmul.f32 %v364, %v476
  %v493 = vmul.f32 %v365, %v477
  %v494 = vmul.f32 %v366, %v478
  %v495 = vmul.f32 %v367, %v479
  %v496 = vmul.f32 %v368, %v480
  %v497 = vmul.f32 %v369, %v481
  %v498 = vmul.f32 %v370, %v482
  %499 = vst.msk [vmem:[%s6] sm:$0xff] %vm100, %v483
  %500 = vst.msk [vmem:[%s6 + $0x8] sm:$0xff] %vm100, %v484
  %501 = vst.msk [vmem:[%s6 + $0x10] sm:$0xff] %vm100, %v485
  %502 = vst.msk [vmem:[%s6 + $0x18] sm:$0xff] %vm100, %v486
  %503 = vst.msk [vmem:[%s6 + $0x20] sm:$0xff] %vm100, %v487
  %504 = vst.msk [vmem:[%s6 + $0x28] sm:$0xff] %vm100, %v488
  %505 = vst.msk [vmem:[%s6 + $0x30] sm:$0xff] %vm100, %v489
  %506 = vst.msk [vmem:[%s6 + $0x38] sm:$0xff] %vm100, %v490
  %507 = vst.msk [vmem:[%s6 + $0x40] sm:$0xff] %vm100, %v491
  %508 = vst.msk [vmem:[%s6 + $0x48] sm:$0xff] %vm100, %v492
  %509 = vst.msk [vmem:[%s6 + $0x50] sm:$0xff] %vm100, %v493
  %510 = vst.msk [vmem:[%s6 + $0x58] sm:$0xff] %vm100, %v494
  %511 = vst.msk [vmem:[%s6 + $0x60] sm:$0xff] %vm100, %v495
  %512 = vst.msk [vmem:[%s6 + $0x68] sm:$0xff] %vm100, %v496
  %513 = vst.msk [vmem:[%s6 + $0x70] sm:$0xff] %vm100, %v497
  %514 = vst.msk [vmem:[%s6 + $0x78] sm:$0xff] %vm100, %v498
  // Predicated region
  $region26: #{qagnn_message_passing_forward.25} parent=0 // pred_check
    _
  $region27: #{qagnn_message_passing_forward.25} parent=0 // pred_check_branch
    %516 = sbr.rel (0) target = $region29
  $region28: #{qagnn_message_passing_forward.25} parent=0 // pred_region
    _
  $region29: #{qagnn_message_passing_forward.25} parent=0 // pred_fallthru
    _
  // Predicated region
  $region30: #{qagnn_message_passing_forward.25} parent=0 // pred_check
    _
  $region31: #{qagnn_message_passing_forward.25} parent=0 // pred_check_branch
    %518 = sbr.rel (0) target = $region33
  $region32: #{qagnn_message_passing_forward.25} parent=0 // pred_region
    _
  $region33: #{qagnn_message_passing_forward.25} parent=0 // pred_fallthru
    _

</llo_original>
